<compile_context>
chip_gen: v7x
topology: tpu7x:2x2x1
jax: 0.10.0
libtpu: 0.0.40
codegen_flags: <defaults>
</compile_context>

<pallas_src>
import functools

import jax
import jax.numpy as jnp
from jax.experimental import pallas as pl
from jax.experimental.pallas import tpu as pltpu

BN_EPS = 1e-5
LANE = 128
SUBLANE = 8
HALO_L = 8          # left spatial halo  -> interior starts at an aligned column
HALO_R = 8          # right spatial halo -> Wp stays a multiple of 8


def _round_up(x, m):
    return ((x + m - 1) // m) * m


# -----------------------------------------------------------------------------
# Pallas kernel (one image per grid step)
# -----------------------------------------------------------------------------
def _res_block_kernel(has_projection, w_real,
                      xp_ref, w1_ref, s1_ref, b1_ref,
                      w2_ref, s2_ref, b2_ref, *rest):
    """
    xp_ref : (1, H+2, Wp, Cpi)  padded NHWC input (Wp = W_eff + 16)
    w1_ref : (3, 3*Cpi, Cpo)    conv1 weights, column taps folded into K
    s1/b1  : (1, Cpo)           folded BN1 scale / shift (f32)
    w2_ref : (3, 3*Cpo, Cpo)    conv2 weights
    s2/b2  : (1, Cpo)           folded BN2 scale / shift (f32)
    [proj]  ws (Cpi, Cpo), ss/bs (1, Cpo): 1x1 shortcut conv + folded BN
    out_ref: (1, H, W_eff, Cpo) output block (compute dtype, bf16 by default)
    h1p_ref: VMEM (H+2, Wp, Cpo) padded relu(bn1(conv1(x))) intermediate
    """
    if has_projection:
        ws_ref, ss_ref, bs_ref, out_ref, h1p_ref = rest
    else:
        out_ref, h1p_ref = rest

    _, Hp, Wp, Cpi = xp_ref.shape
    H = Hp - 2
    W_eff = Wp - (HALO_L + HALO_R)
    Cpo = out_ref.shape[3]
    M = H * W_eff
    cdt = h1p_ref.dtype

    def conv3x3(slab_fn, w_ref, C):
        # 3 MXU matmuls (one per kernel row); the 3 column taps are folded into
        # the contraction axis (K = 3*C).  Contributions are accumulated as
        # f32 values - no scratch read-modify-write passes.
        acc = None
        for dy in range(3):
            slab = slab_fn(dy)                                        # (H, Wp, C)
            taps = jnp.concatenate(
                [slab[:, HALO_L - 1 + dx:HALO_L - 1 + dx + W_eff, :]  # offsets 7,8,9
                 for dx in range(3)], axis=-1)                        # (H, W_eff, 3C)
            contrib = jnp.dot(taps.reshape(M, 3 * C), w_ref[dy],
                              preferred_element_type=jnp.float32)
            acc = contrib if acc is None else acc + contrib
        return acc                                                    # (M, Cpo) f32

    # ---- conv1 (3x3, pad 1) + BN1 + ReLU --------------------------------------
    acc1 = conv3x3(lambda dy: xp_ref[0, dy:dy + H, :, :], w1_ref, Cpi)
    h1 = jnp.maximum(acc1 * s1_ref[...] + b1_ref[...], 0.0)

    # ---- padded intermediate: zero only the halo that conv2 actually reads ----
    zrow = jnp.zeros((1, Wp, Cpo), cdt)
    h1p_ref[0:1, :, :] = zrow                                         # top row
    h1p_ref[Hp - 1:Hp, :, :] = zrow                                   # bottom row
    h1p_ref[:, 0:HALO_L, :] = jnp.zeros((Hp, HALO_L, Cpo), cdt)       # aligned
    h1p_ref[:, HALO_L + W_eff:HALO_L + W_eff + 1, :] = jnp.zeros((Hp, 1, Cpo), cdt)
    # interior write starts at the sublane-aligned column HALO_L (unmasked vst)
    h1p_ref[1:1 + H, HALO_L:HALO_L + W_eff, :] = \
        h1.astype(cdt).reshape(H, W_eff, Cpo)
    if w_real < W_eff:   # W not a multiple of 8: keep the pad columns exactly zero
        h1p_ref[1:1 + H, HALO_L + w_real:HALO_L + W_eff, :] = \
            jnp.zeros((H, W_eff - w_real, Cpo), cdt)

    # ---- conv2 (3x3, pad 1) + BN2 ---------------------------------------------
    acc2 = conv3x3(lambda dy: h1p_ref[dy:dy + H, :, :], w2_ref, Cpo)
    h2 = acc2 * s2_ref[...] + b2_ref[...]

    # ---- shortcut + residual add + final ReLU (store in compute dtype) --------
    if has_projection:
        x2d = xp_ref[0, 1:1 + H, HALO_L:HALO_L + W_eff, :].reshape(M, Cpi)  # aligned
        sc = jnp.dot(x2d, ws_ref[...], preferred_element_type=jnp.float32)
        sc = sc * ss_ref[...] + bs_ref[...]
        out = jnp.maximum(h2 + sc, 0.0)
        out_ref[0] = out.astype(out_ref.dtype).reshape(H, W_eff, Cpo)
    else:
        # identity shortcut: add in (H, W, C) space, no flatten / f32 copy of x
        x3d = xp_ref[0, 1:1 + H, HALO_L:HALO_L + W_eff, :]                  # aligned
        out3d = jnp.maximum(h2.reshape(H, W_eff, Cpo) + x3d, 0.0)
        out_ref[0] = out3d.astype(out_ref.dtype)


# -----------------------------------------------------------------------------
# Parameter folding / packing helpers
# -----------------------------------------------------------------------------
def _fold_bn(gamma, beta, mean, var, bias, cpo):
    scale = gamma / jnp.sqrt(var + BN_EPS)
    shift = beta + (bias - mean) * scale
    pad = (0, cpo - gamma.shape[0])
    return (jnp.pad(scale, pad).reshape(1, cpo).astype(jnp.float32),
            jnp.pad(shift, pad).reshape(1, cpo).astype(jnp.float32))


def _pack_conv3x3(w_oihw, cpi, cpo, dtype):
    o, i, kh, kw = w_oihw.shape
    assert kh == 3 and kw == 3
    w = jnp.transpose(w_oihw, (2, 3, 1, 0))                 # HWIO: (3, 3, I, O)
    w = jnp.pad(w, ((0, 0), (0, 0), (0, cpi - i), (0, cpo - o)))
    return w.reshape(3, 3 * cpi, cpo).astype(dtype)         # K index = dx*cpi + cin


def _vmem_limit_bytes():
    # Use most of the chip's VMEM (128 MiB on v5e/v6e, 64 MiB on v7x), w/ headroom.
    try:
        cap = int(pltpu.get_tpu_info().vmem_capacity_bytes)
    except Exception:
        cap = 64 * 1024 * 1024
    return int(min(cap * 3 // 4, 100 * 1024 * 1024))


# -----------------------------------------------------------------------------
# Wrapper
# -----------------------------------------------------------------------------
def residual_block_forward(x_nchw, params, stride=1, compute_dtype=jnp.bfloat16):
    assert stride == 1, "only stride=1 is implemented in the Pallas kernel"
    N, Cin, H, W = x_nchw.shape
    Cout = params["conv1_w"].shape[0]
    W_eff = _round_up(W, SUBLANE)
    Hp, Wp = H + 2, W_eff + HALO_L + HALO_R
    Cpi = _round_up(Cin, LANE)
    Cpo = _round_up(Cout, LANE)
    has_projection = "sc_w" in params
    if not has_projection:
        assert Cin == Cout

    # Parameter packing (tiny one-time XLA ops).
    w1 = _pack_conv3x3(params["conv1_w"], Cpi, Cpo, compute_dtype)
    w2 = _pack_conv3x3(params["conv2_w"], Cpo, Cpo, compute_dtype)
    s1, b1 = _fold_bn(params["bn1_gamma"], params["bn1_beta"],
                      params["bn1_mean"], params["bn1_var"], params["conv1_b"], Cpo)
    s2, b2 = _fold_bn(params["bn2_gamma"], params["bn2_beta"],
                      params["bn2_mean"], params["bn2_var"], params["conv2_b"], Cpo)

    # NCHW -> NHWC, sublane-aligned halo (8 left / >=8 right, 1 top/bottom),
    # channels zero-padded to a multiple of 128, cast to the compute dtype.
    x_nhwc = jnp.transpose(x_nchw, (0, 2, 3, 1))
    xp = jnp.pad(x_nhwc, ((0, 0), (1, 1),
                          (HALO_L, Wp - HALO_L - W),
                          (0, Cpi - Cin))).astype(compute_dtype)

    operands = [xp, w1, s1, b1, w2, s2, b2]
    in_specs = [
        pl.BlockSpec((1, Hp, Wp, Cpi), lambda n: (n, 0, 0, 0)),
        pl.BlockSpec((3, 3 * Cpi, Cpo), lambda n: (0, 0, 0)),
        pl.BlockSpec((1, Cpo), lambda n: (0, 0)),
        pl.BlockSpec((1, Cpo), lambda n: (0, 0)),
        pl.BlockSpec((3, 3 * Cpo, Cpo), lambda n: (0, 0, 0)),
        pl.BlockSpec((1, Cpo), lambda n: (0, 0)),
        pl.BlockSpec((1, Cpo), lambda n: (0, 0)),
    ]
    if has_projection:
        ws = jnp.transpose(params["sc_w"][:, :, 0, 0])       # (Cin, Cout)
        ws = jnp.pad(ws, ((0, Cpi - Cin), (0, Cpo - Cout))).astype(compute_dtype)
        ss, bs = _fold_bn(params["sc_gamma"], params["sc_beta"],
                          params["sc_mean"], params["sc_var"], params["sc_b"], Cpo)
        operands += [ws, ss, bs]
        in_specs += [
            pl.BlockSpec((Cpi, Cpo), lambda n: (0, 0)),
            pl.BlockSpec((1, Cpo), lambda n: (0, 0)),
            pl.BlockSpec((1, Cpo), lambda n: (0, 0)),
        ]

    # Advisory cost estimate with REAL (unpadded) channel counts.
    flops = 2 * N * H * W * (9 * Cin * Cout + 9 * Cout * Cout
                             + (Cin * Cout if has_projection else 0))
    bytes_accessed = int(sum(int(op.size) * op.dtype.itemsize for op in operands)
                         + N * H * W_eff * Cpo * jnp.dtype(compute_dtype).itemsize)

    kernel = functools.partial(_res_block_kernel, bool(has_projection), W)

    out_nhwc = pl.pallas_call(
        kernel,
        grid=(N,),                                           # one image per step
        out_shape=jax.ShapeDtypeStruct((N, H, W_eff, Cpo), compute_dtype),
        in_specs=in_specs,
        out_specs=pl.BlockSpec((1, H, W_eff, Cpo), lambda n: (n, 0, 0, 0)),
        scratch_shapes=[
            pltpu.VMEM((Hp, Wp, Cpo), compute_dtype),        # padded conv1 intermediate
        ],
        compiler_params=pltpu.CompilerParams(
            dimension_semantics=("parallel",),               # batch across TCs on v7x
            vmem_limit_bytes=_vmem_limit_bytes(),
        ),
        cost_estimate=pl.CostEstimate(flops=flops, transcendentals=0,
                                      bytes_accessed=bytes_accessed),
    )(*operands)

    # Fused slice + transpose back to NCHW, kept in the compute dtype.
    return jnp.transpose(out_nhwc[:, :, :W, :Cout], (0, 3, 1, 2))


# -----------------------------------------------------------------------------
# Pure-JAX reference (eval-mode BN), for correctness checking only
# -----------------------------------------------------------------------------
def _conv2d_nchw(x, w, b, stride, padding):
    y = jax.lax.conv_general_dilated(
        x, w, window_strides=(stride, stride),
        padding=[(padding, padding), (padding, padding)],
        dimension_numbers=("NCHW", "OIHW", "NCHW"))
    return y + b[None, :, None, None]


def _bn_nchw(x, gamma, beta, mean, var):
    inv = gamma / jnp.sqrt(var + BN_EPS)
    return (x - mean[None, :, None, None]) * inv[None, :, None, None] \
        + beta[None, :, None, None]


def residual_block_reference(x, p, stride=1):
    out = jax.nn.relu(_bn_nchw(_conv2d_nchw(x, p["conv1_w"], p["conv1_b"], stride, 1),
                               p["bn1_gamma"], p["bn1_beta"], p["bn1_mean"], p["bn1_var"]))
    out = _bn_nchw(_conv2d_nchw(out, p["conv2_w"], p["conv2_b"], 1, 1),
                   p["bn2_gamma"], p["bn2_beta"], p["bn2_mean"], p["bn2_var"])
    if "sc_w" in p:
        sc = _bn_nchw(_conv2d_nchw(x, p["sc_w"], p["sc_b"], stride, 0),
                      p["sc_gamma"], p["sc_beta"], p["sc_mean"], p["sc_var"])
    else:
        sc = x
    return jax.nn.relu(out + sc)


# -----------------------------------------------------------------------------
# Deterministic parameter construction (synthetic, no checkpoint)
# -----------------------------------------------------------------------------
def make_params(key, in_c, out_c, stride=1):
    ks = jax.random.split(key, 12)
    p = {
        "conv1_w": 0.2 * jax.random.normal(ks[0], (out_c, in_c, 3, 3), jnp.float32),
        "conv1_b": 0.1 * jax.random.normal(ks[1], (out_c,), jnp.float32),
        "bn1_gamma": 1.0 + 0.1 * jax.random.normal(ks[2], (out_c,), jnp.float32),
        "bn1_beta": 0.1 * jax.random.normal(ks[3], (out_c,), jnp.float32),
        "bn1_mean": 0.1 * jax.random.normal(ks[4], (out_c,), jnp.float32),
        "bn1_var": jax.random.uniform(ks[5], (out_c,), jnp.float32, 0.5, 1.5),
        "conv2_w": 0.2 * jax.random.normal(ks[6], (out_c, out_c, 3, 3), jnp.float32),
        "conv2_b": 0.1 * jax.random.normal(ks[7], (out_c,), jnp.float32),
        "bn2_gamma": 1.0 + 0.1 * jax.random.normal(ks[8], (out_c,), jnp.float32),
        "bn2_beta": 0.1 * jax.random.normal(ks[9], (out_c,), jnp.float32),
        "bn2_mean": 0.1 * jax.random.normal(ks[10], (out_c,), jnp.float32),
        "bn2_var": jax.random.uniform(ks[11], (out_c,), jnp.float32, 0.5, 1.5),
    }
    if stride != 1 or in_c != out_c:
        ks2 = jax.random.split(jax.random.fold_in(key, 1), 6)
        p.update({
            "sc_w": 0.2 * jax.random.normal(ks2[0], (out_c, in_c, 1, 1), jnp.float32),
            "sc_b": 0.1 * jax.random.normal(ks2[1], (out_c,), jnp.float32),
            "sc_gamma": 1.0 + 0.1 * jax.random.normal(ks2[2], (out_c,), jnp.float32),
            "sc_beta": 0.1 * jax.random.normal(ks2[3], (out_c,), jnp.float32),
            "sc_mean": 0.1 * jax.random.normal(ks2[4], (out_c,), jnp.float32),
            "sc_var": jax.random.uniform(ks2[5], (out_c,), jnp.float32, 0.5, 1.5),
        })
    return p


if __name__ == "__main__":
    key = jax.random.PRNGKey(0)
    kx, kp, kp_id = jax.random.split(key, 3)

    # --- projection-shortcut variant (Cin != Cout), bf16 compute ---------------
    N, Cin, Cout, H, W = 2, 4, 8, 16, 16
    x = jax.random.normal(kx, (N, Cin, H, W), jnp.float32)
    params = make_params(kp, Cin, Cout, stride=1)

    out_bf16 = jax.block_until_ready(residual_block_forward(x, params))
    assert out_bf16.shape == (N, Cout, H, W)
    ref = residual_block_reference(x, params)
    err_bf16 = float(jnp.max(jnp.abs(out_bf16.astype(jnp.float32) - ref)))
    # bf16 weights/activations + bf16 conv1 intermediate + bf16 output store.
    assert err_bf16 < 2e-1, f"bf16 projection-path mismatch: max abs err {err_bf16}"

    # --- same variant with f32 compute/output (tight structural check) ---------
    out_f32 = jax.block_until_ready(
        residual_block_forward(x, params, compute_dtype=jnp.float32))
    err_f32 = float(jnp.max(jnp.abs(out_f32 - ref)))
    assert err_f32 < 1e-3, f"f32 projection-path mismatch: max abs err {err_f32}"

    # --- identity-shortcut variant (Cin == Cout), bf16 compute -----------------
    params_id = make_params(kp_id, Cout, Cout, stride=1)
    x_id = jax.random.normal(jax.random.fold_in(kx, 1), (N, Cout, H, W), jnp.float32)
    out_id = jax.block_until_ready(residual_block_forward(x_id, params_id))
    ref_id = residual_block_reference(x_id, params_id)
    err_id = float(jnp.max(jnp.abs(out_id.astype(jnp.float32) - ref_id)))
    assert err_id < 2e-1, f"bf16 identity-path mismatch: max abs err {err_id}"

    print("KERNEL_OK")
</pallas_src>

<mosaic_0001>
module attributes {stable_mosaic.version = 11 : i64} {
  func.func @_res_block_kernel(%arg0: i32, %arg1: memref<1x18x32x128xbf16, #tpu.memory_space<vmem>>, %arg2: memref<3x384x128xbf16, #tpu.memory_space<vmem>>, %arg3: memref<1x128xf32, #tpu.memory_space<vmem>>, %arg4: memref<1x128xf32, #tpu.memory_space<vmem>>, %arg5: memref<3x384x128xbf16, #tpu.memory_space<vmem>>, %arg6: memref<1x128xf32, #tpu.memory_space<vmem>>, %arg7: memref<1x128xf32, #tpu.memory_space<vmem>>, %arg8: memref<128x128xbf16, #tpu.memory_space<vmem>>, %arg9: memref<1x128xf32, #tpu.memory_space<vmem>>, %arg10: memref<1x128xf32, #tpu.memory_space<vmem>>, %arg11: memref<1x16x16x128xbf16, #tpu.memory_space<vmem>>, %arg12: memref<18x32x128xbf16, #tpu.memory_space<vmem>>) attributes {dimension_semantics = [#tpu.dimension_semantics<parallel>], iteration_bounds = array<i64: 2>, scalar_prefetch = 0 : i64, scratch_operands = 1 : i64, tpu.core_type = #tpu.core_type<tc>, window_params = [{transform_indices = @transform_0, window_bounds = array<i64: 1, 18, 32, 128>}, {pipeline_mode = #tpu.pipeline_mode<synchronous>, transform_indices = @transform_1, window_bounds = array<i64: 3, 384, 128>}, {pipeline_mode = #tpu.pipeline_mode<synchronous>, transform_indices = @transform_2, window_bounds = array<i64: 1, 128>}, {pipeline_mode = #tpu.pipeline_mode<synchronous>, transform_indices = @transform_3, window_bounds = array<i64: 1, 128>}, {pipeline_mode = #tpu.pipeline_mode<synchronous>, transform_indices = @transform_4, window_bounds = array<i64: 3, 384, 128>}, {pipeline_mode = #tpu.pipeline_mode<synchronous>, transform_indices = @transform_5, window_bounds = array<i64: 1, 128>}, {pipeline_mode = #tpu.pipeline_mode<synchronous>, transform_indices = @transform_6, window_bounds = array<i64: 1, 128>}, {pipeline_mode = #tpu.pipeline_mode<synchronous>, transform_indices = @transform_7, window_bounds = array<i64: 128, 128>}, {pipeline_mode = #tpu.pipeline_mode<synchronous>, transform_indices = @transform_8, window_bounds = array<i64: 1, 128>}, {pipeline_mode = #tpu.pipeline_mode<synchronous>, transform_indices = @transform_9, window_bounds = array<i64: 1, 128>}, {transform_indices = @transform_10, window_bounds = array<i64: 1, 16, 16, 128>}]} {
    %c0 = arith.constant 0 : index
    %c0_0 = arith.constant 0 : index
    %c0_1 = arith.constant 0 : index
    %c0_2 = arith.constant 0 : index
    %0 = vector.load %arg1[%c0, %c0_0, %c0_1, %c0_2] : memref<1x18x32x128xbf16, #tpu.memory_space<vmem>>, vector<1x16x32x128xbf16>
    %1 = vector.shape_cast %0 : vector<1x16x32x128xbf16> to vector<16x32x128xbf16>
    %2 = vector.extract_strided_slice %1 {offsets = [0, 7, 0], sizes = [16, 16, 128], strides = [1, 1, 1]} : vector<16x32x128xbf16> to vector<16x16x128xbf16>
    %3 = vector.extract_strided_slice %1 {offsets = [0, 8, 0], sizes = [16, 16, 128], strides = [1, 1, 1]} : vector<16x32x128xbf16> to vector<16x16x128xbf16>
    %4 = vector.extract_strided_slice %1 {offsets = [0, 9, 0], sizes = [16, 16, 128], strides = [1, 1, 1]} : vector<16x32x128xbf16> to vector<16x16x128xbf16>
    %5 = tpu.concatenate %2, %3, %4 in 2 : vector<16x16x128xbf16>, vector<16x16x128xbf16>, vector<16x16x128xbf16> -> vector<16x16x384xbf16>
    %6 = vector.shape_cast %5 : vector<16x16x384xbf16> to vector<256x384xbf16>
    %c0_3 = arith.constant 0 : index
    %c0_4 = arith.constant 0 : index
    %c0_5 = arith.constant 0 : index
    %7 = vector.load %arg2[%c0_3, %c0_4, %c0_5] : memref<3x384x128xbf16, #tpu.memory_space<vmem>>, vector<1x384x128xbf16>
    %8 = vector.shape_cast %7 : vector<1x384x128xbf16> to vector<384x128xbf16>
    %cst = arith.constant dense<0.000000e+00> : vector<256x128xf32>
    %9 = tpu.matmul %6, %8, %cst {dimension_numbers = #tpu.dot_dimension_numbers<[1], [0], [0], [1], [0, 0, 1, 1], [], []>} : vector<256x384xbf16>, vector<384x128xbf16>, vector<256x128xf32> -> vector<256x128xf32>
    %c0_6 = arith.constant 0 : index
    %c1 = arith.constant 1 : index
    %c0_7 = arith.constant 0 : index
    %c0_8 = arith.constant 0 : index
    %10 = vector.load %arg1[%c0_6, %c1, %c0_7, %c0_8] : memref<1x18x32x128xbf16, #tpu.memory_space<vmem>>, vector<1x16x32x128xbf16>
    %11 = vector.shape_cast %10 : vector<1x16x32x128xbf16> to vector<16x32x128xbf16>
    %12 = vector.extract_strided_slice %11 {offsets = [0, 7, 0], sizes = [16, 16, 128], strides = [1, 1, 1]} : vector<16x32x128xbf16> to vector<16x16x128xbf16>
    %13 = vector.extract_strided_slice %11 {offsets = [0, 8, 0], sizes = [16, 16, 128], strides = [1, 1, 1]} : vector<16x32x128xbf16> to vector<16x16x128xbf16>
    %14 = vector.extract_strided_slice %11 {offsets = [0, 9, 0], sizes = [16, 16, 128], strides = [1, 1, 1]} : vector<16x32x128xbf16> to vector<16x16x128xbf16>
    %15 = tpu.concatenate %12, %13, %14 in 2 : vector<16x16x128xbf16>, vector<16x16x128xbf16>, vector<16x16x128xbf16> -> vector<16x16x384xbf16>
    %16 = vector.shape_cast %15 : vector<16x16x384xbf16> to vector<256x384xbf16>
    %c1_9 = arith.constant 1 : index
    %c0_10 = arith.constant 0 : index
    %c0_11 = arith.constant 0 : index
    %17 = vector.load %arg2[%c1_9, %c0_10, %c0_11] : memref<3x384x128xbf16, #tpu.memory_space<vmem>>, vector<1x384x128xbf16>
    %18 = vector.shape_cast %17 : vector<1x384x128xbf16> to vector<384x128xbf16>
    %cst_12 = arith.constant dense<0.000000e+00> : vector<256x128xf32>
    %19 = tpu.matmul %16, %18, %cst_12 {dimension_numbers = #tpu.dot_dimension_numbers<[1], [0], [0], [1], [0, 0, 1, 1], [], []>} : vector<256x384xbf16>, vector<384x128xbf16>, vector<256x128xf32> -> vector<256x128xf32>
    %20 = arith.addf %9, %19 : vector<256x128xf32>
    %c0_13 = arith.constant 0 : index
    %c2 = arith.constant 2 : index
    %c0_14 = arith.constant 0 : index
    %c0_15 = arith.constant 0 : index
    %21 = vector.load %arg1[%c0_13, %c2, %c0_14, %c0_15] : memref<1x18x32x128xbf16, #tpu.memory_space<vmem>>, vector<1x16x32x128xbf16>
    %22 = vector.shape_cast %21 : vector<1x16x32x128xbf16> to vector<16x32x128xbf16>
    %23 = vector.extract_strided_slice %22 {offsets = [0, 7, 0], sizes = [16, 16, 128], strides = [1, 1, 1]} : vector<16x32x128xbf16> to vector<16x16x128xbf16>
    %24 = vector.extract_strided_slice %22 {offsets = [0, 8, 0], sizes = [16, 16, 128], strides = [1, 1, 1]} : vector<16x32x128xbf16> to vector<16x16x128xbf16>
    %25 = vector.extract_strided_slice %22 {offsets = [0, 9, 0], sizes = [16, 16, 128], strides = [1, 1, 1]} : vector<16x32x128xbf16> to vector<16x16x128xbf16>
    %26 = tpu.concatenate %23, %24, %25 in 2 : vector<16x16x128xbf16>, vector<16x16x128xbf16>, vector<16x16x128xbf16> -> vector<16x16x384xbf16>
    %27 = vector.shape_cast %26 : vector<16x16x384xbf16> to vector<256x384xbf16>
    %c2_16 = arith.constant 2 : index
    %c0_17 = arith.constant 0 : index
    %c0_18 = arith.constant 0 : index
    %28 = vector.load %arg2[%c2_16, %c0_17, %c0_18] : memref<3x384x128xbf16, #tpu.memory_space<vmem>>, vector<1x384x128xbf16>
    %29 = vector.shape_cast %28 : vector<1x384x128xbf16> to vector<384x128xbf16>
    %cst_19 = arith.constant dense<0.000000e+00> : vector<256x128xf32>
    %30 = tpu.matmul %27, %29, %cst_19 {dimension_numbers = #tpu.dot_dimension_numbers<[1], [0], [0], [1], [0, 0, 1, 1], [], []>} : vector<256x384xbf16>, vector<384x128xbf16>, vector<256x128xf32> -> vector<256x128xf32>
    %31 = arith.addf %20, %30 : vector<256x128xf32>
    %c0_20 = arith.constant 0 : index
    %c0_21 = arith.constant 0 : index
    %32 = vector.load %arg3[%c0_20, %c0_21] : memref<1x128xf32, #tpu.memory_space<vmem>>, vector<1x128xf32>
    %33 = vector.broadcast %32 : vector<1x128xf32> to vector<256x128xf32>
    %34 = arith.mulf %31, %33 : vector<256x128xf32>
    %c0_22 = arith.constant 0 : index
    %c0_23 = arith.constant 0 : index
    %35 = vector.load %arg4[%c0_22, %c0_23] : memref<1x128xf32, #tpu.memory_space<vmem>>, vector<1x128xf32>
    %36 = vector.broadcast %35 : vector<1x128xf32> to vector<256x128xf32>
    %37 = arith.addf %34, %36 : vector<256x128xf32>
    %cst_24 = arith.constant 0.000000e+00 : f32
    %38 = vector.broadcast %cst_24 : f32 to vector<256x128xf32>
    %39 = arith.maximumf %37, %38 : vector<256x128xf32>
    %cst_25 = arith.constant 0.000000e+00 : bf16
    %40 = vector.broadcast %cst_25 : bf16 to vector<1x32x128xbf16>
    %c0_26 = arith.constant 0 : index
    %c0_27 = arith.constant 0 : index
    %c0_28 = arith.constant 0 : index
    %41 = vector.load %arg12[%c0_26, %c0_27, %c0_28] : memref<18x32x128xbf16, #tpu.memory_space<vmem>>, vector<1x32x128xbf16>
    tpu.vector_store %arg12[%c0_26, %c0_27, %c0_28], %40 {strides = array<i32>} : memref<18x32x128xbf16, #tpu.memory_space<vmem>>, vector<1x32x128xbf16>,
    %c17 = arith.constant 17 : index
    %c0_29 = arith.constant 0 : index
    %c0_30 = arith.constant 0 : index
    %42 = vector.load %arg12[%c17, %c0_29, %c0_30] : memref<18x32x128xbf16, #tpu.memory_space<vmem>>, vector<1x32x128xbf16>
    tpu.vector_store %arg12[%c17, %c0_29, %c0_30], %40 {strides = array<i32>} : memref<18x32x128xbf16, #tpu.memory_space<vmem>>, vector<1x32x128xbf16>,
    %cst_31 = arith.constant 0.000000e+00 : bf16
    %43 = vector.broadcast %cst_31 : bf16 to vector<18x8x128xbf16>
    %c0_32 = arith.constant 0 : index
    %c0_33 = arith.constant 0 : index
    %c0_34 = arith.constant 0 : index
    %44 = vector.load %arg12[%c0_32, %c0_33, %c0_34] : memref<18x32x128xbf16, #tpu.memory_space<vmem>>, vector<18x8x128xbf16>
    tpu.vector_store %arg12[%c0_32, %c0_33, %c0_34], %43 {strides = array<i32>} : memref<18x32x128xbf16, #tpu.memory_space<vmem>>, vector<18x8x128xbf16>,
    %cst_35 = arith.constant 0.000000e+00 : bf16
    %45 = vector.broadcast %cst_35 : bf16 to vector<18x1x128xbf16>
    %c0_36 = arith.constant 0 : index
    %c24 = arith.constant 24 : index
    %c0_37 = arith.constant 0 : index
    %46 = vector.load %arg12[%c0_36, %c24, %c0_37] : memref<18x32x128xbf16, #tpu.memory_space<vmem>>, vector<18x1x128xbf16>
    tpu.vector_store %arg12[%c0_36, %c24, %c0_37], %45 {strides = array<i32>} : memref<18x32x128xbf16, #tpu.memory_space<vmem>>, vector<18x1x128xbf16>,
    %47 = arith.truncf %39 : vector<256x128xf32> to vector<256x128xbf16>
    %48 = vector.shape_cast %47 : vector<256x128xbf16> to vector<16x16x128xbf16>
    %c1_38 = arith.constant 1 : index
    %c8 = arith.constant 8 : index
    %c0_39 = arith.constant 0 : index
    %49 = vector.load %arg12[%c1_38, %c8, %c0_39] : memref<18x32x128xbf16, #tpu.memory_space<vmem>>, vector<16x16x128xbf16>
    tpu.vector_store %arg12[%c1_38, %c8, %c0_39], %48 {strides = array<i32>} : memref<18x32x128xbf16, #tpu.memory_space<vmem>>, vector<16x16x128xbf16>,
    %c0_40 = arith.constant 0 : index
    %c0_41 = arith.constant 0 : index
    %c0_42 = arith.constant 0 : index
    %50 = vector.load %arg12[%c0_40, %c0_41, %c0_42] : memref<18x32x128xbf16, #tpu.memory_space<vmem>>, vector<16x32x128xbf16>
    %51 = vector.extract_strided_slice %50 {offsets = [0, 7, 0], sizes = [16, 16, 128], strides = [1, 1, 1]} : vector<16x32x128xbf16> to vector<16x16x128xbf16>
    %52 = vector.extract_strided_slice %50 {offsets = [0, 8, 0], sizes = [16, 16, 128], strides = [1, 1, 1]} : vector<16x32x128xbf16> to vector<16x16x128xbf16>
    %53 = vector.extract_strided_slice %50 {offsets = [0, 9, 0], sizes = [16, 16, 128], strides = [1, 1, 1]} : vector<16x32x128xbf16> to vector<16x16x128xbf16>
    %54 = tpu.concatenate %51, %52, %53 in 2 : vector<16x16x128xbf16>, vector<16x16x128xbf16>, vector<16x16x128xbf16> -> vector<16x16x384xbf16>
    %55 = vector.shape_cast %54 : vector<16x16x384xbf16> to vector<256x384xbf16>
    %c0_43 = arith.constant 0 : index
    %c0_44 = arith.constant 0 : index
    %c0_45 = arith.constant 0 : index
    %56 = vector.load %arg5[%c0_43, %c0_44, %c0_45] : memref<3x384x128xbf16, #tpu.memory_space<vmem>>, vector<1x384x128xbf16>
    %57 = vector.shape_cast %56 : vector<1x384x128xbf16> to vector<384x128xbf16>
    %cst_46 = arith.constant dense<0.000000e+00> : vector<256x128xf32>
    %58 = tpu.matmul %55, %57, %cst_46 {dimension_numbers = #tpu.dot_dimension_numbers<[1], [0], [0], [1], [0, 0, 1, 1], [], []>} : vector<256x384xbf16>, vector<384x128xbf16>, vector<256x128xf32> -> vector<256x128xf32>
    %c1_47 = arith.constant 1 : index
    %c0_48 = arith.constant 0 : index
    %c0_49 = arith.constant 0 : index
    %59 = vector.load %arg12[%c1_47, %c0_48, %c0_49] : memref<18x32x128xbf16, #tpu.memory_space<vmem>>, vector<16x32x128xbf16>
    %60 = vector.extract_strided_slice %59 {offsets = [0, 7, 0], sizes = [16, 16, 128], strides = [1, 1, 1]} : vector<16x32x128xbf16> to vector<16x16x128xbf16>
    %61 = vector.extract_strided_slice %59 {offsets = [0, 8, 0], sizes = [16, 16, 128], strides = [1, 1, 1]} : vector<16x32x128xbf16> to vector<16x16x128xbf16>
    %62 = vector.extract_strided_slice %59 {offsets = [0, 9, 0], sizes = [16, 16, 128], strides = [1, 1, 1]} : vector<16x32x128xbf16> to vector<16x16x128xbf16>
    %63 = tpu.concatenate %60, %61, %62 in 2 : vector<16x16x128xbf16>, vector<16x16x128xbf16>, vector<16x16x128xbf16> -> vector<16x16x384xbf16>
    %64 = vector.shape_cast %63 : vector<16x16x384xbf16> to vector<256x384xbf16>
    %c1_50 = arith.constant 1 : index
    %c0_51 = arith.constant 0 : index
    %c0_52 = arith.constant 0 : index
    %65 = vector.load %arg5[%c1_50, %c0_51, %c0_52] : memref<3x384x128xbf16, #tpu.memory_space<vmem>>, vector<1x384x128xbf16>
    %66 = vector.shape_cast %65 : vector<1x384x128xbf16> to vector<384x128xbf16>
    %cst_53 = arith.constant dense<0.000000e+00> : vector<256x128xf32>
    %67 = tpu.matmul %64, %66, %cst_53 {dimension_numbers = #tpu.dot_dimension_numbers<[1], [0], [0], [1], [0, 0, 1, 1], [], []>} : vector<256x384xbf16>, vector<384x128xbf16>, vector<256x128xf32> -> vector<256x128xf32>
    %68 = arith.addf %58, %67 : vector<256x128xf32>
    %c2_54 = arith.constant 2 : index
    %c0_55 = arith.constant 0 : index
    %c0_56 = arith.constant 0 : index
    %69 = vector.load %arg12[%c2_54, %c0_55, %c0_56] : memref<18x32x128xbf16, #tpu.memory_space<vmem>>, vector<16x32x128xbf16>
    %70 = vector.extract_strided_slice %69 {offsets = [0, 7, 0], sizes = [16, 16, 128], strides = [1, 1, 1]} : vector<16x32x128xbf16> to vector<16x16x128xbf16>
    %71 = vector.extract_strided_slice %69 {offsets = [0, 8, 0], sizes = [16, 16, 128], strides = [1, 1, 1]} : vector<16x32x128xbf16> to vector<16x16x128xbf16>
    %72 = vector.extract_strided_slice %69 {offsets = [0, 9, 0], sizes = [16, 16, 128], strides = [1, 1, 1]} : vector<16x32x128xbf16> to vector<16x16x128xbf16>
    %73 = tpu.concatenate %70, %71, %72 in 2 : vector<16x16x128xbf16>, vector<16x16x128xbf16>, vector<16x16x128xbf16> -> vector<16x16x384xbf16>
    %74 = vector.shape_cast %73 : vector<16x16x384xbf16> to vector<256x384xbf16>
    %c2_57 = arith.constant 2 : index
    %c0_58 = arith.constant 0 : index
    %c0_59 = arith.constant 0 : index
    %75 = vector.load %arg5[%c2_57, %c0_58, %c0_59] : memref<3x384x128xbf16, #tpu.memory_space<vmem>>, vector<1x384x128xbf16>
    %76 = vector.shape_cast %75 : vector<1x384x128xbf16> to vector<384x128xbf16>
    %cst_60 = arith.constant dense<0.000000e+00> : vector<256x128xf32>
    %77 = tpu.matmul %74, %76, %cst_60 {dimension_numbers = #tpu.dot_dimension_numbers<[1], [0], [0], [1], [0, 0, 1, 1], [], []>} : vector<256x384xbf16>, vector<384x128xbf16>, vector<256x128xf32> -> vector<256x128xf32>
    %78 = arith.addf %68, %77 : vector<256x128xf32>
    %c0_61 = arith.constant 0 : index
    %c0_62 = arith.constant 0 : index
    %79 = vector.load %arg6[%c0_61, %c0_62] : memref<1x128xf32, #tpu.memory_space<vmem>>, vector<1x128xf32>
    %80 = vector.broadcast %79 : vector<1x128xf32> to vector<256x128xf32>
    %81 = arith.mulf %78, %80 : vector<256x128xf32>
    %c0_63 = arith.constant 0 : index
    %c0_64 = arith.constant 0 : index
    %82 = vector.load %arg7[%c0_63, %c0_64] : memref<1x128xf32, #tpu.memory_space<vmem>>, vector<1x128xf32>
    %83 = vector.broadcast %82 : vector<1x128xf32> to vector<256x128xf32>
    %84 = arith.addf %81, %83 : vector<256x128xf32>
    %c0_65 = arith.constant 0 : index
    %c1_66 = arith.constant 1 : index
    %c8_67 = arith.constant 8 : index
    %c0_68 = arith.constant 0 : index
    %85 = vector.load %arg1[%c0_65, %c1_66, %c8_67, %c0_68] : memref<1x18x32x128xbf16, #tpu.memory_space<vmem>>, vector<1x16x16x128xbf16>
    %86 = vector.shape_cast %85 : vector<1x16x16x128xbf16> to vector<16x16x128xbf16>
    %87 = vector.shape_cast %86 : vector<16x16x128xbf16> to vector<256x128xbf16>
    %c0_69 = arith.constant 0 : index
    %c0_70 = arith.constant 0 : index
    %88 = vector.load %arg8[%c0_69, %c0_70] : memref<128x128xbf16, #tpu.memory_space<vmem>>, vector<128x128xbf16>
    %cst_71 = arith.constant dense<0.000000e+00> : vector<256x128xf32>
    %89 = tpu.matmul %87, %88, %cst_71 {dimension_numbers = #tpu.dot_dimension_numbers<[1], [0], [0], [1], [0, 0, 1, 1], [], []>} : vector<256x128xbf16>, vector<128x128xbf16>, vector<256x128xf32> -> vector<256x128xf32>
    %c0_72 = arith.constant 0 : index
    %c0_73 = arith.constant 0 : index
    %90 = vector.load %arg9[%c0_72, %c0_73] : memref<1x128xf32, #tpu.memory_space<vmem>>, vector<1x128xf32>
    %91 = vector.broadcast %90 : vector<1x128xf32> to vector<256x128xf32>
    %92 = arith.mulf %89, %91 : vector<256x128xf32>
    %c0_74 = arith.constant 0 : index
    %c0_75 = arith.constant 0 : index
    %93 = vector.load %arg10[%c0_74, %c0_75] : memref<1x128xf32, #tpu.memory_space<vmem>>, vector<1x128xf32>
    %94 = vector.broadcast %93 : vector<1x128xf32> to vector<256x128xf32>
    %95 = arith.addf %92, %94 : vector<256x128xf32>
    %96 = arith.addf %84, %95 : vector<256x128xf32>
    %cst_76 = arith.constant 0.000000e+00 : f32
    %97 = vector.broadcast %cst_76 : f32 to vector<256x128xf32>
    %98 = arith.maximumf %96, %97 : vector<256x128xf32>
    %99 = arith.truncf %98 : vector<256x128xf32> to vector<256x128xbf16>
    %100 = vector.shape_cast %99 : vector<256x128xbf16> to vector<16x16x128xbf16>
    %c0_77 = arith.constant 0 : index
    %c0_78 = arith.constant 0 : index
    %c0_79 = arith.constant 0 : index
    %c0_80 = arith.constant 0 : index
    %101 = vector.load %arg11[%c0_77, %c0_78, %c0_79, %c0_80] : memref<1x16x16x128xbf16, #tpu.memory_space<vmem>>, vector<1x16x16x128xbf16>
    %102 = vector.shape_cast %101 : vector<1x16x16x128xbf16> to vector<16x16x128xbf16>
    %103 = vector.shape_cast %100 : vector<16x16x128xbf16> to vector<1x16x16x128xbf16>
    tpu.vector_store %arg11[%c0_77, %c0_78, %c0_79, %c0_80], %103 {strides = array<i32>} : memref<1x16x16x128xbf16, #tpu.memory_space<vmem>>, vector<1x16x16x128xbf16>,
    return
  }
  func.func @transform_0(%arg0: i32) -> (i32, i32, i32, i32) {
    %c0_i32 = arith.constant 0 : i32
    %c0_i32_0 = arith.constant 0 : i32
    %c0_i32_1 = arith.constant 0 : i32
    %c0_i32_2 = arith.constant 0 : i32
    return %arg0, %c0_i32, %c0_i32_0, %c0_i32_1 : i32, i32, i32, i32
  }
  func.func @transform_1(%arg0: i32) -> (i32, i32, i32) {
    %c0_i32 = arith.constant 0 : i32
    %c0_i32_0 = arith.constant 0 : i32
    %c0_i32_1 = arith.constant 0 : i32
    %c0_i32_2 = arith.constant 0 : i32
    return %c0_i32, %c0_i32_0, %c0_i32_1 : i32, i32, i32
  }
  func.func @transform_2(%arg0: i32) -> (i32, i32) {
    %c0_i32 = arith.constant 0 : i32
    %c0_i32_0 = arith.constant 0 : i32
    %c0_i32_1 = arith.constant 0 : i32
    return %c0_i32, %c0_i32_0 : i32, i32
  }
  func.func @transform_3(%arg0: i32) -> (i32, i32) {
    %c0_i32 = arith.constant 0 : i32
    %c0_i32_0 = arith.constant 0 : i32
    %c0_i32_1 = arith.constant 0 : i32
    return %c0_i32, %c0_i32_0 : i32, i32
  }
  func.func @transform_4(%arg0: i32) -> (i32, i32, i32) {
    %c0_i32 = arith.constant 0 : i32
    %c0_i32_0 = arith.constant 0 : i32
    %c0_i32_1 = arith.constant 0 : i32
    %c0_i32_2 = arith.constant 0 : i32
    return %c0_i32, %c0_i32_0, %c0_i32_1 : i32, i32, i32
  }
  func.func @transform_5(%arg0: i32) -> (i32, i32) {
    %c0_i32 = arith.constant 0 : i32
    %c0_i32_0 = arith.constant 0 : i32
    %c0_i32_1 = arith.constant 0 : i32
    return %c0_i32, %c0_i32_0 : i32, i32
  }
  func.func @transform_6(%arg0: i32) -> (i32, i32) {
    %c0_i32 = arith.constant 0 : i32
    %c0_i32_0 = arith.constant 0 : i32
    %c0_i32_1 = arith.constant 0 : i32
    return %c0_i32, %c0_i32_0 : i32, i32
  }
  func.func @transform_7(%arg0: i32) -> (i32, i32) {
    %c0_i32 = arith.constant 0 : i32
    %c0_i32_0 = arith.constant 0 : i32
    %c0_i32_1 = arith.constant 0 : i32
    return %c0_i32, %c0_i32_0 : i32, i32
  }
  func.func @transform_8(%arg0: i32) -> (i32, i32) {
    %c0_i32 = arith.constant 0 : i32
    %c0_i32_0 = arith.constant 0 : i32
    %c0_i32_1 = arith.constant 0 : i32
    return %c0_i32, %c0_i32_0 : i32, i32
  }
  func.func @transform_9(%arg0: i32) -> (i32, i32) {
    %c0_i32 = arith.constant 0 : i32
    %c0_i32_0 = arith.constant 0 : i32
    %c0_i32_1 = arith.constant 0 : i32
    return %c0_i32, %c0_i32_0 : i32, i32
  }
  func.func @transform_10(%arg0: i32) -> (i32, i32, i32, i32) {
    %c0_i32 = arith.constant 0 : i32
    %c0_i32_0 = arith.constant 0 : i32
    %c0_i32_1 = arith.constant 0 : i32
    %c0_i32_2 = arith.constant 0 : i32
    return %arg0, %c0_i32, %c0_i32_0, %c0_i32_1 : i32, i32, i32, i32
  }
}

</mosaic_0001>

<llo_original>
// kernel: tpu_custom_call.1
$region0: #{tpu_custom_call.1}
  #allocation0 [shape = 'u32[]', space=smem, size = 0x4, offset = 0x4, fixed_abs, tag = 'smem constant byte address 0x4 - core index']
  #allocation1 [shape = 'u32[144,128]{1,0:T(1,128)}', space=vmem, size = 0x12000, scoped, tag = 'internal scratch']
  #allocation2 [shape = 'bf16[18,32,128]{2,1,0:T(16,128)(2,1)}', space=vmem, size = 0x24000, scoped, tag = 'scratch operand']
  %s0 = inlined_call_operand.hbm [shape: bf16[2,18,32,128], index: 0, kind: input, shape index: {}]
  %s1 = inlined_call_operand.hbm [shape: bf16[3,384,128], index: 1, kind: input, shape index: {}]
  %s2 = inlined_call_operand.vmem [shape: f32[1,128], index: 2, kind: input, shape index: {}]
  %s3 = inlined_call_operand.vmem [shape: f32[1,128], index: 3, kind: input, shape index: {}]
  %s4 = inlined_call_operand.hbm [shape: bf16[3,384,128], index: 4, kind: input, shape index: {}]
  %s5 = inlined_call_operand.vmem [shape: f32[1,128], index: 5, kind: input, shape index: {}]
  %s6 = inlined_call_operand.vmem [shape: f32[1,128], index: 6, kind: input, shape index: {}]
  %s7 = inlined_call_operand.hbm [shape: bf16[128,128], index: 7, kind: input, shape index: {}]
  %s8 = inlined_call_operand.vmem [shape: f32[1,128], index: 8, kind: input, shape index: {}]
  %s9 = inlined_call_operand.vmem [shape: f32[1,128], index: 9, kind: input, shape index: {}]
  %s10 = inlined_call_operand.hbm [shape: bf16[2,16,16,128], index: 10, kind: output, shape index: {}]
  %s11 = sld [smem:[#allocation0]]
  $region89: #{tpu_custom_call.1} parent=0
    _
  %s13 = ssub.s32 1, %s11
  %s14 = scalar_select 0, %s13, %s11
  $region1: #{tpu_custom_call.1} parent=0
    #allocation3 [shape = 'u8[294912]{0}', space=vmem, size = 0x48000, scoped, tag = 'input window, operand 0']
    #allocation4 [shape = 's32[2]{0}', space=sflag, size = 0x8, scoped, tag = 'scoped memory for tpu_custom_call.1']
    #allocation5 [shape = 's32[2]{0}', space=sflag, size = 0x8, scoped, tag = 'scoped memory for tpu_custom_call.1']
    #allocation6 [shape = 'u8[294912]{0}', space=vmem, size = 0x48000, scoped, tag = 'input window, operand 1, single buffered']
    #allocation7 [shape = 's32[1]{0}', space=sflag, size = 0x4, scoped, tag = 'scoped memory for tpu_custom_call.1']
    #allocation8 [shape = 'u8[294912]{0}', space=vmem, size = 0x48000, scoped, tag = 'input window, operand 4, single buffered']
    #allocation9 [shape = 'u8[32768]{0}', space=vmem, size = 0x8000, scoped, tag = 'input window, operand 7, single buffered']
    #allocation10 [shape = 's32[1]{0}', space=sflag, size = 0x4, scoped, tag = 'scoped memory for tpu_custom_call.1']
    #allocation11 [shape = 'u8[131072]{0}', space=vmem, size = 0x20000, scoped, tag = 'output window, operand 0']
    %15 = vsyncpa [#allocation4], 0
    %s16 = scalar_lea.sflag [#allocation4], 1
    %17 = vsyncpa %s16, 0
    %18 = vsyncpa [#allocation7], 0
    %19 = vsyncpa [#allocation10], 0
    %20 = vsyncpa [#allocation5], 0
    %s21 = scalar_lea.sflag [#allocation5], 1
    %22 = vsyncpa %s21, 0
    loop: start=0, step=1, limit=4
    $region2: #{tpu_custom_call.1} parent=1 // loop_pre_header
      _
    $region3: #{tpu_custom_call.1} parent=1 // loop_header
      %s24 = sphi 0, %s28
      %p25 = scmp.ge.s32.totalorder %s24, 4
      %s34 = sphi 0, %s36
      %s37 = sphi 0, %s34
      %s38 = sphi 0, %s37
      %s54 = sphi 0, %s38
      %s58 = sphi 0, %s58
      %s60 = sphi 0, %s58
      %s61 = sphi 0, %s60
      %s75 = sphi 0, %s61
      %s79 = sphi 0, %s79
      %s81 = sphi 0, %s79
      %s82 = sphi 0, %s81
      %s96 = sphi 0, %s82
      %s100 = sphi 0, %s100
      %s102 = sphi 0, %s100
      %s103 = sphi 0, %s102
      %s117 = sphi 0, %s103
      %s121 = sphi 0, %s121
      %s123 = sphi 0, %s121
      %s124 = sphi 0, %s123
      %s138 = sphi 0, %s124
      %s142 = sphi 0, %s142
      %s144 = sphi 0, %s142
      %s145 = sphi 0, %s144
      %s159 = sphi 0, %s145
      %s163 = sphi 0, %s163
      %s165 = sphi 0, %s163
      %s166 = sphi 0, %s165
      %s180 = sphi 0, %s166
      %s184 = sphi 0, %s184
      %s186 = sphi 0, %s184
      %s187 = sphi 0, %s186
      %s201 = sphi 0, %s187
      %s205 = sphi 0, %s205
      %s207 = sphi 0, %s205
      %s208 = sphi 0, %s207
      %s222 = sphi 0, %s208
      %s226 = sphi 0, %s226
      %s228 = sphi 0, %s226
      %s229 = sphi 0, %s228
      %s243 = sphi 0, %s229
      %s249 = sphi 0, %s251
      %s252 = sphi 0, %s249
      %s253 = sphi 0, %s252
      %s269 = sphi 0, %s253
    $region4: #{tpu_custom_call.1} parent=1 // loop_header_branch
      %27 = sbr.rel (%p25) target = $region8
    $region5: #{tpu_custom_call.1} parent=1 // loop_body
      %s29 = ssub.s32 %s24, 1
      %s30 = ssub.s32 %s24, 2
      %s31 = sadd.s32 %s24, 1
      %s32 = ssub.s32 %s24, %s31
      %p33 = scmp.eq.s32.totalorder %s32, 0
      %s35 = sadd.s32 %s34, 1
      %s36 = scalar_select %p33, %s34, %s35
      %p39 = pneg %p33
      %p40 = scmp.eq.s32.totalorder %s24, 1
      %p41 = por %p39, %p40
      %p42 = scmp.ne.s32.totalorder %s34, %s37
      %p43 = scmp.eq.s32.totalorder %s24, 0
      %p44 = por %p42, %p43
      %p45 = scmp.ne.s32.totalorder %s34, %s37
      %p46 = scmp.eq.s32.totalorder %s29, 1
      %p47 = por %p45, %p46
      %p48 = scmp.ne.s32.totalorder %s37, %s38
      %p49 = scmp.eq.s32.totalorder %s29, 0
      %p50 = por %p48, %p49
      %p51 = scmp.ne.s32.totalorder %s37, %s38
      %p52 = scmp.eq.s32.totalorder %s30, 1
      %p53 = por %p51, %p52
      %p55 = scmp.ne.s32.totalorder %s38, %s54
      %p56 = scmp.eq.s32.totalorder %s30, 0
      %p57 = por %p55, %p56
      %s59 = sadd.s32 %s58, 1
      %p62 = scmp.eq.s32.totalorder %s24, 1
      %p63 = scmp.ne.s32.totalorder %s58, %s60
      %p64 = scmp.eq.s32.totalorder %s24, 0
      %p65 = por %p63, %p64
      %p66 = scmp.ne.s32.totalorder %s58, %s60
      %p67 = scmp.eq.s32.totalorder %s29, 1
      %p68 = por %p66, %p67
      %p69 = scmp.ne.s32.totalorder %s60, %s61
      %p70 = scmp.eq.s32.totalorder %s29, 0
      %p71 = por %p69, %p70
      %p72 = scmp.ne.s32.totalorder %s60, %s61
      %p73 = scmp.eq.s32.totalorder %s30, 1
      %p74 = por %p72, %p73
      %p76 = scmp.ne.s32.totalorder %s61, %s75
      %p77 = scmp.eq.s32.totalorder %s30, 0
      %p78 = por %p76, %p77
      %s80 = sadd.s32 %s79, 1
      %p83 = scmp.eq.s32.totalorder %s24, 1
      %p84 = scmp.ne.s32.totalorder %s79, %s81
      %p85 = scmp.eq.s32.totalorder %s24, 0
      %p86 = por %p84, %p85
      %p87 = scmp.ne.s32.totalorder %s79, %s81
      %p88 = scmp.eq.s32.totalorder %s29, 1
      %p89 = por %p87, %p88
      %p90 = scmp.ne.s32.totalorder %s81, %s82
      %p91 = scmp.eq.s32.totalorder %s29, 0
      %p92 = por %p90, %p91
      %p93 = scmp.ne.s32.totalorder %s81, %s82
      %p94 = scmp.eq.s32.totalorder %s30, 1
      %p95 = por %p93, %p94
      %p97 = scmp.ne.s32.totalorder %s82, %s96
      %p98 = scmp.eq.s32.totalorder %s30, 0
      %p99 = por %p97, %p98
      %s101 = sadd.s32 %s100, 1
      %p104 = scmp.eq.s32.totalorder %s24, 1
      %p105 = scmp.ne.s32.totalorder %s100, %s102
      %p106 = scmp.eq.s32.totalorder %s24, 0
      %p107 = por %p105, %p106
      %p108 = scmp.ne.s32.totalorder %s100, %s102
      %p109 = scmp.eq.s32.totalorder %s29, 1
      %p110 = por %p108, %p109
      %p111 = scmp.ne.s32.totalorder %s102, %s103
      %p112 = scmp.eq.s32.totalorder %s29, 0
      %p113 = por %p111, %p112
      %p114 = scmp.ne.s32.totalorder %s102, %s103
      %p115 = scmp.eq.s32.totalorder %s30, 1
      %p116 = por %p114, %p115
      %p118 = scmp.ne.s32.totalorder %s103, %s117
      %p119 = scmp.eq.s32.totalorder %s30, 0
      %p120 = por %p118, %p119
      %s122 = sadd.s32 %s121, 1
      %p125 = scmp.eq.s32.totalorder %s24, 1
      %p126 = scmp.ne.s32.totalorder %s121, %s123
      %p127 = scmp.eq.s32.totalorder %s24, 0
      %p128 = por %p126, %p127
      %p129 = scmp.ne.s32.totalorder %s121, %s123
      %p130 = scmp.eq.s32.totalorder %s29, 1
      %p131 = por %p129, %p130
      %p132 = scmp.ne.s32.totalorder %s123, %s124
      %p133 = scmp.eq.s32.totalorder %s29, 0
      %p134 = por %p132, %p133
      %p135 = scmp.ne.s32.totalorder %s123, %s124
      %p136 = scmp.eq.s32.totalorder %s30, 1
      %p137 = por %p135, %p136
      %p139 = scmp.ne.s32.totalorder %s124, %s138
      %p140 = scmp.eq.s32.totalorder %s30, 0
      %p141 = por %p139, %p140
      %s143 = sadd.s32 %s142, 1
      %p146 = scmp.eq.s32.totalorder %s24, 1
      %p147 = scmp.ne.s32.totalorder %s142, %s144
      %p148 = scmp.eq.s32.totalorder %s24, 0
      %p149 = por %p147, %p148
      %p150 = scmp.ne.s32.totalorder %s142, %s144
      %p151 = scmp.eq.s32.totalorder %s29, 1
      %p152 = por %p150, %p151
      %p153 = scmp.ne.s32.totalorder %s144, %s145
      %p154 = scmp.eq.s32.totalorder %s29, 0
      %p155 = por %p153, %p154
      %p156 = scmp.ne.s32.totalorder %s144, %s145
      %p157 = scmp.eq.s32.totalorder %s30, 1
      %p158 = por %p156, %p157
      %p160 = scmp.ne.s32.totalorder %s145, %s159
      %p161 = scmp.eq.s32.totalorder %s30, 0
      %p162 = por %p160, %p161
      %s164 = sadd.s32 %s163, 1
      %p167 = scmp.eq.s32.totalorder %s24, 1
      %p168 = scmp.ne.s32.totalorder %s163, %s165
      %p169 = scmp.eq.s32.totalorder %s24, 0
      %p170 = por %p168, %p169
      %p171 = scmp.ne.s32.totalorder %s163, %s165
      %p172 = scmp.eq.s32.totalorder %s29, 1
      %p173 = por %p171, %p172
      %p174 = scmp.ne.s32.totalorder %s165, %s166
      %p175 = scmp.eq.s32.totalorder %s29, 0
      %p176 = por %p174, %p175
      %p177 = scmp.ne.s32.totalorder %s165, %s166
      %p178 = scmp.eq.s32.totalorder %s30, 1
      %p179 = por %p177, %p178
      %p181 = scmp.ne.s32.totalorder %s166, %s180
      %p182 = scmp.eq.s32.totalorder %s30, 0
      %p183 = por %p181, %p182
      %s185 = sadd.s32 %s184, 1
      %p188 = scmp.eq.s32.totalorder %s24, 1
      %p189 = scmp.ne.s32.totalorder %s184, %s186
      %p190 = scmp.eq.s32.totalorder %s24, 0
      %p191 = por %p189, %p190
      %p192 = scmp.ne.s32.totalorder %s184, %s186
      %p193 = scmp.eq.s32.totalorder %s29, 1
      %p194 = por %p192, %p193
      %p195 = scmp.ne.s32.totalorder %s186, %s187
      %p196 = scmp.eq.s32.totalorder %s29, 0
      %p197 = por %p195, %p196
      %p198 = scmp.ne.s32.totalorder %s186, %s187
      %p199 = scmp.eq.s32.totalorder %s30, 1
      %p200 = por %p198, %p199
      %p202 = scmp.ne.s32.totalorder %s187, %s201
      %p203 = scmp.eq.s32.totalorder %s30, 0
      %p204 = por %p202, %p203
      %s206 = sadd.s32 %s205, 1
      %p209 = scmp.eq.s32.totalorder %s24, 1
      %p210 = scmp.ne.s32.totalorder %s205, %s207
      %p211 = scmp.eq.s32.totalorder %s24, 0
      %p212 = por %p210, %p211
      %p213 = scmp.ne.s32.totalorder %s205, %s207
      %p214 = scmp.eq.s32.totalorder %s29, 1
      %p215 = por %p213, %p214
      %p216 = scmp.ne.s32.totalorder %s207, %s208
      %p217 = scmp.eq.s32.totalorder %s29, 0
      %p218 = por %p216, %p217
      %p219 = scmp.ne.s32.totalorder %s207, %s208
      %p220 = scmp.eq.s32.totalorder %s30, 1
      %p221 = por %p219, %p220
      %p223 = scmp.ne.s32.totalorder %s208, %s222
      %p224 = scmp.eq.s32.totalorder %s30, 0
      %p225 = por %p223, %p224
      %s227 = sadd.s32 %s226, 1
      %p230 = scmp.eq.s32.totalorder %s24, 1
      %p231 = scmp.ne.s32.totalorder %s226, %s228
      %p232 = scmp.eq.s32.totalorder %s24, 0
      %p233 = por %p231, %p232
      %p234 = scmp.ne.s32.totalorder %s226, %s228
      %p235 = scmp.eq.s32.totalorder %s29, 1
      %p236 = por %p234, %p235
      %p237 = scmp.ne.s32.totalorder %s228, %s229
      %p238 = scmp.eq.s32.totalorder %s29, 0
      %p239 = por %p237, %p238
      %p240 = scmp.ne.s32.totalorder %s228, %s229
      %p241 = scmp.eq.s32.totalorder %s30, 1
      %p242 = por %p240, %p241
      %p244 = scmp.ne.s32.totalorder %s229, %s243
      %p245 = scmp.eq.s32.totalorder %s30, 0
      %p246 = por %p244, %p245
      %s247 = ssub.s32 %s24, %s31
      %p248 = scmp.eq.s32.totalorder %s247, 0
      %s250 = sadd.s32 %s249, 1
      %s251 = scalar_select %p248, %s249, %s250
      %p254 = pneg %p248
      %p255 = scmp.eq.s32.totalorder %s24, 1
      %p256 = por %p254, %p255
      %p257 = scmp.ne.s32.totalorder %s249, %s252
      %p258 = scmp.eq.s32.totalorder %s24, 0
      %p259 = por %p257, %p258
      %p260 = scmp.ne.s32.totalorder %s249, %s252
      %p261 = scmp.eq.s32.totalorder %s29, 1
      %p262 = por %p260, %p261
      %p263 = scmp.ne.s32.totalorder %s252, %s253
      %p264 = scmp.eq.s32.totalorder %s29, 0
      %p265 = por %p263, %p264
      %p266 = scmp.ne.s32.totalorder %s252, %s253
      %p267 = scmp.eq.s32.totalorder %s30, 1
      %p268 = por %p266, %p267
      %p270 = scmp.ne.s32.totalorder %s253, %s269
      %p271 = scmp.eq.s32.totalorder %s30, 0
      %p272 = por %p270, %p271
      %p273 = scmp.le.s32.totalorder 1, %s24
      %p274 = scmp.lt.s32.totalorder %s24, 3
      %p275 = pnand %p273, %p274
      %p276 = pneg %p275
      // Predicated region
      $region9: #{tpu_custom_call.1} parent=5 // pred_check
        _
      $region10: #{tpu_custom_call.1} parent=5 // pred_check_branch
        %278 = sbr.rel (%p275) target = $region12
      $region11: #{tpu_custom_call.1} parent=5 // pred_region
        %s279 = ssub.s32 %s24, 1
        // Predicated region
        $region13: #{tpu_custom_call.1} parent=11 // pred_check
          %p280 = pneg %p71
        $region14: #{tpu_custom_call.1} parent=11 // pred_check_branch
          %282 = sbr.rel (%p280) target = $region16
        $region15: #{tpu_custom_call.1} parent=11 // pred_region
          %s284 = ssub.s32 9216, 9216
          %285 = vsyncadd [#allocation7], %s284
          %s286 = sshll.u32 [#allocation6], 4
          %s287 = int_to_ptr.vmem [resolvable:$true] %s286
          %292 = dma.hbm_to_vmem [thread:$0]  %s1, 9216, %s287, [#allocation7], 64, 64, 4
        $region16: #{tpu_custom_call.1} parent=11 // pred_fallthru
          _
        // Predicated region
        $region17: #{tpu_custom_call.1} parent=11 // pred_check
          %p293 = pneg %p92
        $region18: #{tpu_custom_call.1} parent=11 // pred_check_branch
          %295 = sbr.rel (%p293) target = $region20
        $region19: #{tpu_custom_call.1} parent=11 // pred_region
          _
        $region20: #{tpu_custom_call.1} parent=11 // pred_fallthru
          _
        // Predicated region
        $region21: #{tpu_custom_call.1} parent=11 // pred_check
          %p296 = pneg %p113
        $region22: #{tpu_custom_call.1} parent=11 // pred_check_branch
          %298 = sbr.rel (%p296) target = $region24
        $region23: #{tpu_custom_call.1} parent=11 // pred_region
          _
        $region24: #{tpu_custom_call.1} parent=11 // pred_fallthru
          _
        // Predicated region
        $region25: #{tpu_custom_call.1} parent=11 // pred_check
          %p299 = pneg %p134
        $region26: #{tpu_custom_call.1} parent=11 // pred_check_branch
          %301 = sbr.rel (%p299) target = $region28
        $region27: #{tpu_custom_call.1} parent=11 // pred_region
          %s303 = ssub.s32 9216, 9216
          %304 = vsyncadd [#allocation7], %s303
          %s305 = sshll.u32 [#allocation8], 4
          %s306 = int_to_ptr.vmem [resolvable:$true] %s305
          %311 = dma.hbm_to_vmem [thread:$0]  %s4, 9216, %s306, [#allocation7], 64, 64, 4
        $region28: #{tpu_custom_call.1} parent=11 // pred_fallthru
          _
        // Predicated region
        $region29: #{tpu_custom_call.1} parent=11 // pred_check
          %p312 = pneg %p155
        $region30: #{tpu_custom_call.1} parent=11 // pred_check_branch
          %314 = sbr.rel (%p312) target = $region32
        $region31: #{tpu_custom_call.1} parent=11 // pred_region
          _
        $region32: #{tpu_custom_call.1} parent=11 // pred_fallthru
          _
        // Predicated region
        $region33: #{tpu_custom_call.1} parent=11 // pred_check
          %p315 = pneg %p176
        $region34: #{tpu_custom_call.1} parent=11 // pred_check_branch
          %317 = sbr.rel (%p315) target = $region36
        $region35: #{tpu_custom_call.1} parent=11 // pred_region
          _
        $region36: #{tpu_custom_call.1} parent=11 // pred_fallthru
          _
        // Predicated region
        $region37: #{tpu_custom_call.1} parent=11 // pred_check
          %p318 = pneg %p197
        $region38: #{tpu_custom_call.1} parent=11 // pred_check_branch
          %320 = sbr.rel (%p318) target = $region40
        $region39: #{tpu_custom_call.1} parent=11 // pred_region
          %s322 = ssub.s32 1024, 1024
          %323 = vsyncadd [#allocation10], %s322
          %s324 = sshll.u32 [#allocation9], 4
          %s325 = int_to_ptr.vmem [resolvable:$true] %s324
          %330 = dma.hbm_to_vmem [thread:$0]  %s7, 1024, %s325, [#allocation10], 64, 64, 4
        $region40: #{tpu_custom_call.1} parent=11 // pred_fallthru
          _
        // Predicated region
        $region41: #{tpu_custom_call.1} parent=11 // pred_check
          %p331 = pneg %p218
        $region42: #{tpu_custom_call.1} parent=11 // pred_check_branch
          %333 = sbr.rel (%p331) target = $region44
        $region43: #{tpu_custom_call.1} parent=11 // pred_region
          _
        $region44: #{tpu_custom_call.1} parent=11 // pred_fallthru
          _
        // Predicated region
        $region45: #{tpu_custom_call.1} parent=11 // pred_check
          %p334 = pneg %p239
        $region46: #{tpu_custom_call.1} parent=11 // pred_check_branch
          %336 = sbr.rel (%p334) target = $region48
        $region47: #{tpu_custom_call.1} parent=11 // pred_region
          _
        $region48: #{tpu_custom_call.1} parent=11 // pred_fallthru
          _
      $region12: #{tpu_custom_call.1} parent=5 // pred_fallthru
        _
      %p337 = scmp.lt.s32.totalorder %s24, 2
      // Predicated region
      $region49: #{tpu_custom_call.1} parent=5 // pred_check
        %p338 = pneg %p337
      $region50: #{tpu_custom_call.1} parent=5 // pred_check_branch
        %340 = sbr.rel (%p338) target = $region52
      $region51: #{tpu_custom_call.1} parent=5 // pred_region
        // Predicated region
        $region53: #{tpu_custom_call.1} parent=51 // pred_check
          %p341 = pneg %p44
        $region54: #{tpu_custom_call.1} parent=51 // pred_check_branch
          %343 = sbr.rel (%p341) target = $region56
        $region55: #{tpu_custom_call.1} parent=51 // pred_region
          %s344 = sand.u32 %s34, 1
          %s345 = scalar_lea.sflag [#allocation4], %s344
          %s346 = sand.u32 %s34, 1
          %s347 = smul.addr %s346, 288
          %s348 = scalar_lea.vmem [#allocation3], %s347
          %s350 = ssub.s32 4608, 4608
          %351 = vsyncadd %s345, %s350
          %s352 = smul.addr %s24, 72
          %s353 = smul.addr %s352, 64
          %s354 = scalar_lea.hbm %s0, %s353
          %s355 = sshll.u32 %s348, 4
          %s356 = int_to_ptr.vmem [resolvable:$true] %s355
          %361 = dma.hbm_to_vmem [thread:$0]  %s354, 4608, %s356, %s345, 64, 64, 4
        $region56: #{tpu_custom_call.1} parent=51 // pred_fallthru
          _
      $region52: #{tpu_custom_call.1} parent=5 // pred_fallthru
        _
      %p362 = scmp.le.s32.totalorder 1, %s24
      %p363 = scmp.lt.s32.totalorder %s24, 3
      %p364 = pnand %p362, %p363
      %p365 = pneg %p364
      // Predicated region
      $region57: #{tpu_custom_call.1} parent=5 // pred_check
        _
      $region58: #{tpu_custom_call.1} parent=5 // pred_check_branch
        %367 = sbr.rel (%p364) target = $region60
      $region59: #{tpu_custom_call.1} parent=5 // pred_region
        %s368 = ssub.s32 %s24, 1
        %s369 = sand.u32 %s37, 1
        %s370 = scalar_lea.sflag [#allocation4], %s369
        %s371 = sand.u32 %s37, 1
        %s372 = smul.addr %s371, 288
        %s373 = scalar_lea.vmem [#allocation3], %s372
        // Predicated region
        $region61: #{tpu_custom_call.1} parent=59 // pred_check
          %p374 = pneg %p50
        $region62: #{tpu_custom_call.1} parent=59 // pred_check_branch
          %376 = sbr.rel (%p374) target = $region64
        $region63: #{tpu_custom_call.1} parent=59 // pred_region
          %377 = dma.done %s370, 4608
        $region64: #{tpu_custom_call.1} parent=59 // pred_fallthru
          _
        // Predicated region
        $region65: #{tpu_custom_call.1} parent=59 // pred_check
          %p378 = pneg %p71
        $region66: #{tpu_custom_call.1} parent=59 // pred_check_branch
          %380 = sbr.rel (%p378) target = $region68
        $region67: #{tpu_custom_call.1} parent=59 // pred_region
          %381 = dma.done [#allocation7], 9216
        $region68: #{tpu_custom_call.1} parent=59 // pred_fallthru
          _
        // Predicated region
        $region69: #{tpu_custom_call.1} parent=59 // pred_check
          %p382 = pneg %p134
        $region70: #{tpu_custom_call.1} parent=59 // pred_check_branch
          %384 = sbr.rel (%p382) target = $region72
        $region71: #{tpu_custom_call.1} parent=59 // pred_region
          %385 = dma.done [#allocation7], 9216
        $region72: #{tpu_custom_call.1} parent=59 // pred_fallthru
          _
        // Predicated region
        $region73: #{tpu_custom_call.1} parent=59 // pred_check
          %p386 = pneg %p197
        $region74: #{tpu_custom_call.1} parent=59 // pred_check_branch
          %388 = sbr.rel (%p386) target = $region76
        $region75: #{tpu_custom_call.1} parent=59 // pred_region
          %389 = dma.done [#allocation10], 1024
        $region76: #{tpu_custom_call.1} parent=59 // pred_fallthru
          _
        %s390 = sand.u32 %s37, 1
        %s391 = scalar_lea.sflag [#allocation4], %s390
        %s392 = sand.u32 %s37, 1
        %s393 = smul.addr %s392, 288
        %s394 = scalar_lea.vmem [#allocation3], %s393
        %p395 = pneg %p50
        %p396 = pneg %p47
        %p397 = pneg %p71
        %p398 = pneg %p68
        %p399 = pneg %p92
        %p400 = pneg %p89
        %p401 = pneg %p113
        %p402 = pneg %p110
        %p403 = pneg %p134
        %p404 = pneg %p131
        %p405 = pneg %p155
        %p406 = pneg %p152
        %p407 = pneg %p176
        %p408 = pneg %p173
        %p409 = pneg %p197
        %p410 = pneg %p194
        %p411 = pneg %p218
        %p412 = pneg %p215
        %p413 = pneg %p239
        %p414 = pneg %p236
        %p415 = pneg %p265
        %p416 = pneg %p262
        %s417 = sand.u32 %s252, 1
        %s418 = scalar_lea.sflag [#allocation5], %s417
        %s419 = sand.u32 %s252, 1
        %s420 = smul.addr %s419, 128
        %s421 = scalar_lea.vmem [#allocation11], %s420
        %v423 = vld [vmem:[%s373] sm:$0xf]
        %v424 = vld [vmem:[%s373 + $0x4] sm:$0xf]
        %v425 = vld [vmem:[%s373 + $0x8] sm:$0xf]
        %v426 = vld [vmem:[%s373 + $0xc] sm:$0xf]
        %v427 = vld [vmem:[%s373 + $0x10] sm:$0xf]
        %v428 = vld [vmem:[%s373 + $0x14] sm:$0xf]
        %v429 = vld [vmem:[%s373 + $0x18] sm:$0xf]
        %v430 = vld [vmem:[%s373 + $0x1c] sm:$0xf]
        %v431 = vld [vmem:[%s373 + $0x20] sm:$0xf]
        %v432 = vld [vmem:[%s373 + $0x24] sm:$0xf]
        %v433 = vld [vmem:[%s373 + $0x28] sm:$0xf]
        %v434 = vld [vmem:[%s373 + $0x2c] sm:$0xf]
        %v435 = vld [vmem:[%s373 + $0x30] sm:$0xf]
        %v436 = vld [vmem:[%s373 + $0x34] sm:$0xf]
        %v437 = vld [vmem:[%s373 + $0x38] sm:$0xf]
        %v438 = vld [vmem:[%s373 + $0x3c] sm:$0xf]
        %v439 = vld [vmem:[%s373 + $0x40] sm:$0xf]
        %v440 = vld [vmem:[%s373 + $0x44] sm:$0xf]
        %v441 = vld [vmem:[%s373 + $0x48] sm:$0xf]
        %v442 = vld [vmem:[%s373 + $0x4c] sm:$0xf]
        %v443 = vld [vmem:[%s373 + $0x50] sm:$0xf]
        %v444 = vld [vmem:[%s373 + $0x54] sm:$0xf]
        %v445 = vld [vmem:[%s373 + $0x58] sm:$0xf]
        %v446 = vld [vmem:[%s373 + $0x5c] sm:$0xf]
        %v447 = vld [vmem:[%s373 + $0x60] sm:$0xf]
        %v448 = vld [vmem:[%s373 + $0x64] sm:$0xf]
        %v449 = vld [vmem:[%s373 + $0x68] sm:$0xf]
        %v450 = vld [vmem:[%s373 + $0x6c] sm:$0xf]
        %v451 = vld [vmem:[%s373 + $0x70] sm:$0xf]
        %v452 = vld [vmem:[%s373 + $0x74] sm:$0xf]
        %v453 = vld [vmem:[%s373 + $0x78] sm:$0xf]
        %v454 = vld [vmem:[%s373 + $0x7c] sm:$0xf]
        %v455 = vld [vmem:[%s373 + $0x80] sm:$0xf]
        %v456 = vld [vmem:[%s373 + $0x84] sm:$0xf]
        %v457 = vld [vmem:[%s373 + $0x88] sm:$0xf]
        %v458 = vld [vmem:[%s373 + $0x8c] sm:$0xf]
        %v459 = vld [vmem:[%s373 + $0x90] sm:$0xf]
        %v460 = vld [vmem:[%s373 + $0x94] sm:$0xf]
        %v461 = vld [vmem:[%s373 + $0x98] sm:$0xf]
        %v462 = vld [vmem:[%s373 + $0x9c] sm:$0xf]
        %v463 = vld [vmem:[%s373 + $0xa0] sm:$0xf]
        %v464 = vld [vmem:[%s373 + $0xa4] sm:$0xf]
        %v465 = vld [vmem:[%s373 + $0xa8] sm:$0xf]
        %v466 = vld [vmem:[%s373 + $0xac] sm:$0xf]
        %v467 = vld [vmem:[%s373 + $0xb0] sm:$0xf]
        %v468 = vld [vmem:[%s373 + $0xb4] sm:$0xf]
        %v469 = vld [vmem:[%s373 + $0xb8] sm:$0xf]
        %v470 = vld [vmem:[%s373 + $0xbc] sm:$0xf]
        %v471 = vld [vmem:[%s373 + $0xc0] sm:$0xf]
        %v472 = vld [vmem:[%s373 + $0xc4] sm:$0xf]
        %v473 = vld [vmem:[%s373 + $0xc8] sm:$0xf]
        %v474 = vld [vmem:[%s373 + $0xcc] sm:$0xf]
        %v475 = vld [vmem:[%s373 + $0xd0] sm:$0xf]
        %v476 = vld [vmem:[%s373 + $0xd4] sm:$0xf]
        %v477 = vld [vmem:[%s373 + $0xd8] sm:$0xf]
        %v478 = vld [vmem:[%s373 + $0xdc] sm:$0xf]
        %v479 = vld [vmem:[%s373 + $0xe0] sm:$0xf]
        %v480 = vld [vmem:[%s373 + $0xe4] sm:$0xf]
        %v481 = vld [vmem:[%s373 + $0xe8] sm:$0xf]
        %v482 = vld [vmem:[%s373 + $0xec] sm:$0xf]
        %v483 = vld [vmem:[%s373 + $0xf0] sm:$0xf]
        %v484 = vld [vmem:[%s373 + $0xf4] sm:$0xf]
        %v485 = vld [vmem:[%s373 + $0xf8] sm:$0xf]
        %v486 = vld [vmem:[%s373 + $0xfc] sm:$0xf]
        %v535 = vunpack.c.l.b16 %v423
        %v536 = vunpack.c.l.b16 %v424
        %v537 = vunpack.c.l.b16 %v425
        %v538 = vunpack.c.l.b16 %v427
        %v539 = vunpack.c.l.b16 %v428
        %v540 = vunpack.c.l.b16 %v429
        %v541 = vunpack.c.l.b16 %v431
        %v542 = vunpack.c.l.b16 %v432
        %v543 = vunpack.c.l.b16 %v433
        %v544 = vunpack.c.l.b16 %v435
        %v545 = vunpack.c.l.b16 %v436
        %v546 = vunpack.c.l.b16 %v437
        %v547 = vunpack.c.l.b16 %v439
        %v548 = vunpack.c.l.b16 %v440
        %v549 = vunpack.c.l.b16 %v441
        %v550 = vunpack.c.l.b16 %v443
        %v551 = vunpack.c.l.b16 %v444
        %v552 = vunpack.c.l.b16 %v445
        %v553 = vunpack.c.l.b16 %v447
        %v554 = vunpack.c.l.b16 %v448
        %v555 = vunpack.c.l.b16 %v449
        %v556 = vunpack.c.l.b16 %v451
        %v557 = vunpack.c.l.b16 %v452
        %v558 = vunpack.c.l.b16 %v453
        %v559 = vunpack.c.l.b16 %v455
        %v560 = vunpack.c.l.b16 %v456
        %v561 = vunpack.c.l.b16 %v457
        %v562 = vunpack.c.l.b16 %v459
        %v563 = vunpack.c.l.b16 %v460
        %v564 = vunpack.c.l.b16 %v461
        %v565 = vunpack.c.l.b16 %v463
        %v566 = vunpack.c.l.b16 %v464
        %v567 = vunpack.c.l.b16 %v465
        %v568 = vunpack.c.l.b16 %v467
        %v569 = vunpack.c.l.b16 %v468
        %v570 = vunpack.c.l.b16 %v469
        %v571 = vunpack.c.l.b16 %v471
        %v572 = vunpack.c.l.b16 %v472
        %v573 = vunpack.c.l.b16 %v473
        %v574 = vunpack.c.l.b16 %v475
        %v575 = vunpack.c.l.b16 %v476
        %v576 = vunpack.c.l.b16 %v477
        %v577 = vunpack.c.l.b16 %v479
        %v578 = vunpack.c.l.b16 %v480
        %v579 = vunpack.c.l.b16 %v481
        %v580 = vunpack.c.l.b16 %v483
        %v581 = vunpack.c.l.b16 %v484
        %v582 = vunpack.c.l.b16 %v485
        %v583 = vpack.c.b16 %v536, %v535
        %v584 = vpack.c.b16 %v537, %v537
        %v585 = vpack.c.b16 %v539, %v538
        %v586 = vpack.c.b16 %v540, %v540
        %v587 = vpack.c.b16 %v542, %v541
        %v588 = vpack.c.b16 %v543, %v543
        %v589 = vpack.c.b16 %v545, %v544
        %v590 = vpack.c.b16 %v546, %v546
        %v591 = vpack.c.b16 %v548, %v547
        %v592 = vpack.c.b16 %v549, %v549
        %v593 = vpack.c.b16 %v551, %v550
        %v594 = vpack.c.b16 %v552, %v552
        %v595 = vpack.c.b16 %v554, %v553
        %v596 = vpack.c.b16 %v555, %v555
        %v597 = vpack.c.b16 %v557, %v556
        %v598 = vpack.c.b16 %v558, %v558
        %v599 = vpack.c.b16 %v560, %v559
        %v600 = vpack.c.b16 %v561, %v561
        %v601 = vpack.c.b16 %v563, %v562
        %v602 = vpack.c.b16 %v564, %v564
        %v603 = vpack.c.b16 %v566, %v565
        %v604 = vpack.c.b16 %v567, %v567
        %v605 = vpack.c.b16 %v569, %v568
        %v606 = vpack.c.b16 %v570, %v570
        %v607 = vpack.c.b16 %v572, %v571
        %v608 = vpack.c.b16 %v573, %v573
        %v609 = vpack.c.b16 %v575, %v574
        %v610 = vpack.c.b16 %v576, %v576
        %v611 = vpack.c.b16 %v578, %v577
        %v612 = vpack.c.b16 %v579, %v579
        %v613 = vpack.c.b16 %v581, %v580
        %v614 = vpack.c.b16 %v582, %v582
        %v615 = vpack.c.b16 %v537, %v536
        %v616 = vpack.c.b16 %v540, %v539
        %v617 = vpack.c.b16 %v543, %v542
        %v618 = vpack.c.b16 %v546, %v545
        %v619 = vpack.c.b16 %v549, %v548
        %v620 = vpack.c.b16 %v552, %v551
        %v621 = vpack.c.b16 %v555, %v554
        %v622 = vpack.c.b16 %v558, %v557
        %v623 = vpack.c.b16 %v561, %v560
        %v624 = vpack.c.b16 %v564, %v563
        %v625 = vpack.c.b16 %v567, %v566
        %v626 = vpack.c.b16 %v570, %v569
        %v627 = vpack.c.b16 %v573, %v572
        %v628 = vpack.c.b16 %v576, %v575
        %v629 = vpack.c.b16 %v579, %v578
        %v630 = vpack.c.b16 %v582, %v581
        %v632 = vshrl.u32 %v615, 16
        %v634 = vrot.slane %v632, 4
        %v635 = vshll.u32 %v615, 16
        %v637 = vrot.slane %v635, 5
        %v638 = vor.u32 %v634, %v637
        %v640 = vshrl.u32 %v616, 16
        %v642 = vrot.slane %v640, 4
        %v643 = vshll.u32 %v616, 16
        %v645 = vrot.slane %v643, 5
        %v646 = vor.u32 %v642, %v645
        %v648 = vshrl.u32 %v617, 16
        %v650 = vrot.slane %v648, 4
        %v651 = vshll.u32 %v617, 16
        %v653 = vrot.slane %v651, 5
        %v654 = vor.u32 %v650, %v653
        %v656 = vshrl.u32 %v618, 16
        %v658 = vrot.slane %v656, 4
        %v659 = vshll.u32 %v618, 16
        %v661 = vrot.slane %v659, 5
        %v662 = vor.u32 %v658, %v661
        %v664 = vshrl.u32 %v619, 16
        %v666 = vrot.slane %v664, 4
        %v667 = vshll.u32 %v619, 16
        %v669 = vrot.slane %v667, 5
        %v670 = vor.u32 %v666, %v669
        %v672 = vshrl.u32 %v620, 16
        %v674 = vrot.slane %v672, 4
        %v675 = vshll.u32 %v620, 16
        %v677 = vrot.slane %v675, 5
        %v678 = vor.u32 %v674, %v677
        %v680 = vshrl.u32 %v621, 16
        %v682 = vrot.slane %v680, 4
        %v683 = vshll.u32 %v621, 16
        %v685 = vrot.slane %v683, 5
        %v686 = vor.u32 %v682, %v685
        %v688 = vshrl.u32 %v622, 16
        %v690 = vrot.slane %v688, 4
        %v691 = vshll.u32 %v622, 16
        %v693 = vrot.slane %v691, 5
        %v694 = vor.u32 %v690, %v693
        %v696 = vshrl.u32 %v623, 16
        %v698 = vrot.slane %v696, 4
        %v699 = vshll.u32 %v623, 16
        %v701 = vrot.slane %v699, 5
        %v702 = vor.u32 %v698, %v701
        %v704 = vshrl.u32 %v624, 16
        %v706 = vrot.slane %v704, 4
        %v707 = vshll.u32 %v624, 16
        %v709 = vrot.slane %v707, 5
        %v710 = vor.u32 %v706, %v709
        %v712 = vshrl.u32 %v625, 16
        %v714 = vrot.slane %v712, 4
        %v715 = vshll.u32 %v625, 16
        %v717 = vrot.slane %v715, 5
        %v718 = vor.u32 %v714, %v717
        %v720 = vshrl.u32 %v626, 16
        %v722 = vrot.slane %v720, 4
        %v723 = vshll.u32 %v626, 16
        %v725 = vrot.slane %v723, 5
        %v726 = vor.u32 %v722, %v725
        %v728 = vshrl.u32 %v627, 16
        %v730 = vrot.slane %v728, 4
        %v731 = vshll.u32 %v627, 16
        %v733 = vrot.slane %v731, 5
        %v734 = vor.u32 %v730, %v733
        %v736 = vshrl.u32 %v628, 16
        %v738 = vrot.slane %v736, 4
        %v739 = vshll.u32 %v628, 16
        %v741 = vrot.slane %v739, 5
        %v742 = vor.u32 %v738, %v741
        %v744 = vshrl.u32 %v629, 16
        %v746 = vrot.slane %v744, 4
        %v747 = vshll.u32 %v629, 16
        %v749 = vrot.slane %v747, 5
        %v750 = vor.u32 %v746, %v749
        %v752 = vshrl.u32 %v630, 16
        %v754 = vrot.slane %v752, 4
        %v755 = vshll.u32 %v630, 16
        %v757 = vrot.slane %v755, 5
        %v758 = vor.u32 %v754, %v757
        %v775 = vunpack.c.l.b16 %v426
        %v776 = vunpack.c.l.b16 %v430
        %v777 = vunpack.c.l.b16 %v434
        %v778 = vunpack.c.l.b16 %v438
        %v779 = vunpack.c.l.b16 %v442
        %v780 = vunpack.c.l.b16 %v446
        %v781 = vunpack.c.l.b16 %v450
        %v782 = vunpack.c.l.b16 %v454
        %v783 = vunpack.c.l.b16 %v458
        %v784 = vunpack.c.l.b16 %v462
        %v785 = vunpack.c.l.b16 %v466
        %v786 = vunpack.c.l.b16 %v470
        %v787 = vunpack.c.l.b16 %v474
        %v788 = vunpack.c.l.b16 %v478
        %v789 = vunpack.c.l.b16 %v482
        %v790 = vunpack.c.l.b16 %v486
        %v791 = vpack.c.b16 %v775, %v775
        %v792 = vpack.c.b16 %v776, %v776
        %v793 = vpack.c.b16 %v777, %v777
        %v794 = vpack.c.b16 %v778, %v778
        %v795 = vpack.c.b16 %v779, %v779
        %v796 = vpack.c.b16 %v780, %v780
        %v797 = vpack.c.b16 %v781, %v781
        %v798 = vpack.c.b16 %v782, %v782
        %v799 = vpack.c.b16 %v783, %v783
        %v800 = vpack.c.b16 %v784, %v784
        %v801 = vpack.c.b16 %v785, %v785
        %v802 = vpack.c.b16 %v786, %v786
        %v803 = vpack.c.b16 %v787, %v787
        %v804 = vpack.c.b16 %v788, %v788
        %v805 = vpack.c.b16 %v789, %v789
        %v806 = vpack.c.b16 %v790, %v790
        %vm807 = vcmask 1042432
        %v808 = vrot.slane %v615, 5
        %v809 = vrot.slane %v791, 5
        %v810 = vsel %vm807, %v808, %v809
        %v811 = vrot.slane %v616, 5
        %v812 = vrot.slane %v792, 5
        %v813 = vsel %vm807, %v811, %v812
        %v814 = vrot.slane %v617, 5
        %v815 = vrot.slane %v793, 5
        %v816 = vsel %vm807, %v814, %v815
        %v817 = vrot.slane %v618, 5
        %v818 = vrot.slane %v794, 5
        %v819 = vsel %vm807, %v817, %v818
        %v820 = vrot.slane %v619, 5
        %v821 = vrot.slane %v795, 5
        %v822 = vsel %vm807, %v820, %v821
        %v823 = vrot.slane %v620, 5
        %v824 = vrot.slane %v796, 5
        %v825 = vsel %vm807, %v823, %v824
        %v826 = vrot.slane %v621, 5
        %v827 = vrot.slane %v797, 5
        %v828 = vsel %vm807, %v826, %v827
        %v829 = vrot.slane %v622, 5
        %v830 = vrot.slane %v798, 5
        %v831 = vsel %vm807, %v829, %v830
        %v832 = vrot.slane %v623, 5
        %v833 = vrot.slane %v799, 5
        %v834 = vsel %vm807, %v832, %v833
        %v835 = vrot.slane %v624, 5
        %v836 = vrot.slane %v800, 5
        %v837 = vsel %vm807, %v835, %v836
        %v838 = vrot.slane %v625, 5
        %v839 = vrot.slane %v801, 5
        %v840 = vsel %vm807, %v838, %v839
        %v841 = vrot.slane %v626, 5
        %v842 = vrot.slane %v802, 5
        %v843 = vsel %vm807, %v841, %v842
        %v844 = vrot.slane %v627, 5
        %v845 = vrot.slane %v803, 5
        %v846 = vsel %vm807, %v844, %v845
        %v847 = vrot.slane %v628, 5
        %v848 = vrot.slane %v804, 5
        %v849 = vsel %vm807, %v847, %v848
        %v850 = vrot.slane %v629, 5
        %v851 = vrot.slane %v805, 5
        %v852 = vsel %vm807, %v850, %v851
        %v853 = vrot.slane %v630, 5
        %v854 = vrot.slane %v806, 5
        %v855 = vsel %vm807, %v853, %v854
        %vm856 = vsmask.f32 4352
        %v858 = vshrl.u32 %v583, 16
        %v860 = vrot.slane %v858, 3
        %v861 = vshll.u32 %v583, 16
        %v863 = vrot.slane %v861, 4
        %v864 = vor.u32 %v860, %v863
        %v866 = vshrl.u32 %v584, 16
        %v868 = vrot.slane %v866, 3
        %v869 = vshll.u32 %v584, 16
        %v871 = vrot.slane %v869, 4
        %v872 = vor.u32 %v868, %v871
        %v873 = vsel %vm856, %v864, %v872
        %v875 = vshrl.u32 %v638, 16
        %v877 = vrot.slane %v875, 3
        %v878 = vshll.u32 %v638, 16
        %v880 = vrot.slane %v878, 4
        %v881 = vor.u32 %v877, %v880
        %v882 = vsel %vm856, %v881, %v881
        %v884 = vshrl.u32 %v808, 16
        %v886 = vrot.slane %v884, 3
        %v887 = vshll.u32 %v808, 16
        %v889 = vrot.slane %v887, 4
        %v890 = vor.u32 %v886, %v889
        %v892 = vshrl.u32 %v810, 16
        %v894 = vrot.slane %v892, 3
        %v895 = vshll.u32 %v810, 16
        %v897 = vrot.slane %v895, 4
        %v898 = vor.u32 %v894, %v897
        %v899 = vsel %vm856, %v890, %v898
        %v901 = vshrl.u32 %v585, 16
        %v903 = vrot.slane %v901, 3
        %v904 = vshll.u32 %v585, 16
        %v906 = vrot.slane %v904, 4
        %v907 = vor.u32 %v903, %v906
        %v909 = vshrl.u32 %v586, 16
        %v911 = vrot.slane %v909, 3
        %v912 = vshll.u32 %v586, 16
        %v914 = vrot.slane %v912, 4
        %v915 = vor.u32 %v911, %v914
        %v916 = vsel %vm856, %v907, %v915
        %v918 = vshrl.u32 %v646, 16
        %v920 = vrot.slane %v918, 3
        %v921 = vshll.u32 %v646, 16
        %v923 = vrot.slane %v921, 4
        %v924 = vor.u32 %v920, %v923
        %v925 = vsel %vm856, %v924, %v924
        %v927 = vshrl.u32 %v811, 16
        %v929 = vrot.slane %v927, 3
        %v930 = vshll.u32 %v811, 16
        %v932 = vrot.slane %v930, 4
        %v933 = vor.u32 %v929, %v932
        %v935 = vshrl.u32 %v813, 16
        %v937 = vrot.slane %v935, 3
        %v938 = vshll.u32 %v813, 16
        %v940 = vrot.slane %v938, 4
        %v941 = vor.u32 %v937, %v940
        %v942 = vsel %vm856, %v933, %v941
        %v944 = vshrl.u32 %v587, 16
        %v946 = vrot.slane %v944, 3
        %v947 = vshll.u32 %v587, 16
        %v949 = vrot.slane %v947, 4
        %v950 = vor.u32 %v946, %v949
        %v952 = vshrl.u32 %v588, 16
        %v954 = vrot.slane %v952, 3
        %v955 = vshll.u32 %v588, 16
        %v957 = vrot.slane %v955, 4
        %v958 = vor.u32 %v954, %v957
        %v959 = vsel %vm856, %v950, %v958
        %v961 = vshrl.u32 %v654, 16
        %v963 = vrot.slane %v961, 3
        %v964 = vshll.u32 %v654, 16
        %v966 = vrot.slane %v964, 4
        %v967 = vor.u32 %v963, %v966
        %v968 = vsel %vm856, %v967, %v967
        %v970 = vshrl.u32 %v814, 16
        %v972 = vrot.slane %v970, 3
        %v973 = vshll.u32 %v814, 16
        %v975 = vrot.slane %v973, 4
        %v976 = vor.u32 %v972, %v975
        %v978 = vshrl.u32 %v816, 16
        %v980 = vrot.slane %v978, 3
        %v981 = vshll.u32 %v816, 16
        %v983 = vrot.slane %v981, 4
        %v984 = vor.u32 %v980, %v983
        %v985 = vsel %vm856, %v976, %v984
        %v987 = vshrl.u32 %v589, 16
        %v989 = vrot.slane %v987, 3
        %v990 = vshll.u32 %v589, 16
        %v992 = vrot.slane %v990, 4
        %v993 = vor.u32 %v989, %v992
        %v995 = vshrl.u32 %v590, 16
        %v997 = vrot.slane %v995, 3
        %v998 = vshll.u32 %v590, 16
        %v1000 = vrot.slane %v998, 4
        %v1001 = vor.u32 %v997, %v1000
        %v1002 = vsel %vm856, %v993, %v1001
        %v1004 = vshrl.u32 %v662, 16
        %v1006 = vrot.slane %v1004, 3
        %v1007 = vshll.u32 %v662, 16
        %v1009 = vrot.slane %v1007, 4
        %v1010 = vor.u32 %v1006, %v1009
        %v1011 = vsel %vm856, %v1010, %v1010
        %v1013 = vshrl.u32 %v817, 16
        %v1015 = vrot.slane %v1013, 3
        %v1016 = vshll.u32 %v817, 16
        %v1018 = vrot.slane %v1016, 4
        %v1019 = vor.u32 %v1015, %v1018
        %v1021 = vshrl.u32 %v819, 16
        %v1023 = vrot.slane %v1021, 3
        %v1024 = vshll.u32 %v819, 16
        %v1026 = vrot.slane %v1024, 4
        %v1027 = vor.u32 %v1023, %v1026
        %v1028 = vsel %vm856, %v1019, %v1027
        %v1030 = vshrl.u32 %v591, 16
        %v1032 = vrot.slane %v1030, 3
        %v1033 = vshll.u32 %v591, 16
        %v1035 = vrot.slane %v1033, 4
        %v1036 = vor.u32 %v1032, %v1035
        %v1038 = vshrl.u32 %v592, 16
        %v1040 = vrot.slane %v1038, 3
        %v1041 = vshll.u32 %v592, 16
        %v1043 = vrot.slane %v1041, 4
        %v1044 = vor.u32 %v1040, %v1043
        %v1045 = vsel %vm856, %v1036, %v1044
        %v1047 = vshrl.u32 %v670, 16
        %v1049 = vrot.slane %v1047, 3
        %v1050 = vshll.u32 %v670, 16
        %v1052 = vrot.slane %v1050, 4
        %v1053 = vor.u32 %v1049, %v1052
        %v1054 = vsel %vm856, %v1053, %v1053
        %v1056 = vshrl.u32 %v820, 16
        %v1058 = vrot.slane %v1056, 3
        %v1059 = vshll.u32 %v820, 16
        %v1061 = vrot.slane %v1059, 4
        %v1062 = vor.u32 %v1058, %v1061
        %v1064 = vshrl.u32 %v822, 16
        %v1066 = vrot.slane %v1064, 3
        %v1067 = vshll.u32 %v822, 16
        %v1069 = vrot.slane %v1067, 4
        %v1070 = vor.u32 %v1066, %v1069
        %v1071 = vsel %vm856, %v1062, %v1070
        %v1073 = vshrl.u32 %v593, 16
        %v1075 = vrot.slane %v1073, 3
        %v1076 = vshll.u32 %v593, 16
        %v1078 = vrot.slane %v1076, 4
        %v1079 = vor.u32 %v1075, %v1078
        %v1081 = vshrl.u32 %v594, 16
        %v1083 = vrot.slane %v1081, 3
        %v1084 = vshll.u32 %v594, 16
        %v1086 = vrot.slane %v1084, 4
        %v1087 = vor.u32 %v1083, %v1086
        %v1088 = vsel %vm856, %v1079, %v1087
        %v1090 = vshrl.u32 %v678, 16
        %v1092 = vrot.slane %v1090, 3
        %v1093 = vshll.u32 %v678, 16
        %v1095 = vrot.slane %v1093, 4
        %v1096 = vor.u32 %v1092, %v1095
        %v1097 = vsel %vm856, %v1096, %v1096
        %v1099 = vshrl.u32 %v823, 16
        %v1101 = vrot.slane %v1099, 3
        %v1102 = vshll.u32 %v823, 16
        %v1104 = vrot.slane %v1102, 4
        %v1105 = vor.u32 %v1101, %v1104
        %v1107 = vshrl.u32 %v825, 16
        %v1109 = vrot.slane %v1107, 3
        %v1110 = vshll.u32 %v825, 16
        %v1112 = vrot.slane %v1110, 4
        %v1113 = vor.u32 %v1109, %v1112
        %v1114 = vsel %vm856, %v1105, %v1113
        %v1116 = vshrl.u32 %v595, 16
        %v1118 = vrot.slane %v1116, 3
        %v1119 = vshll.u32 %v595, 16
        %v1121 = vrot.slane %v1119, 4
        %v1122 = vor.u32 %v1118, %v1121
        %v1124 = vshrl.u32 %v596, 16
        %v1126 = vrot.slane %v1124, 3
        %v1127 = vshll.u32 %v596, 16
        %v1129 = vrot.slane %v1127, 4
        %v1130 = vor.u32 %v1126, %v1129
        %v1131 = vsel %vm856, %v1122, %v1130
        %v1133 = vshrl.u32 %v686, 16
        %v1135 = vrot.slane %v1133, 3
        %v1136 = vshll.u32 %v686, 16
        %v1138 = vrot.slane %v1136, 4
        %v1139 = vor.u32 %v1135, %v1138
        %v1140 = vsel %vm856, %v1139, %v1139
        %v1142 = vshrl.u32 %v826, 16
        %v1144 = vrot.slane %v1142, 3
        %v1145 = vshll.u32 %v826, 16
        %v1147 = vrot.slane %v1145, 4
        %v1148 = vor.u32 %v1144, %v1147
        %v1150 = vshrl.u32 %v828, 16
        %v1152 = vrot.slane %v1150, 3
        %v1153 = vshll.u32 %v828, 16
        %v1155 = vrot.slane %v1153, 4
        %v1156 = vor.u32 %v1152, %v1155
        %v1157 = vsel %vm856, %v1148, %v1156
        %v1159 = vshrl.u32 %v597, 16
        %v1161 = vrot.slane %v1159, 3
        %v1162 = vshll.u32 %v597, 16
        %v1164 = vrot.slane %v1162, 4
        %v1165 = vor.u32 %v1161, %v1164
        %v1167 = vshrl.u32 %v598, 16
        %v1169 = vrot.slane %v1167, 3
        %v1170 = vshll.u32 %v598, 16
        %v1172 = vrot.slane %v1170, 4
        %v1173 = vor.u32 %v1169, %v1172
        %v1174 = vsel %vm856, %v1165, %v1173
        %v1176 = vshrl.u32 %v694, 16
        %v1178 = vrot.slane %v1176, 3
        %v1179 = vshll.u32 %v694, 16
        %v1181 = vrot.slane %v1179, 4
        %v1182 = vor.u32 %v1178, %v1181
        %v1183 = vsel %vm856, %v1182, %v1182
        %v1185 = vshrl.u32 %v829, 16
        %v1187 = vrot.slane %v1185, 3
        %v1188 = vshll.u32 %v829, 16
        %v1190 = vrot.slane %v1188, 4
        %v1191 = vor.u32 %v1187, %v1190
        %v1193 = vshrl.u32 %v831, 16
        %v1195 = vrot.slane %v1193, 3
        %v1196 = vshll.u32 %v831, 16
        %v1198 = vrot.slane %v1196, 4
        %v1199 = vor.u32 %v1195, %v1198
        %v1200 = vsel %vm856, %v1191, %v1199
        %v1202 = vshrl.u32 %v599, 16
        %v1204 = vrot.slane %v1202, 3
        %v1205 = vshll.u32 %v599, 16
        %v1207 = vrot.slane %v1205, 4
        %v1208 = vor.u32 %v1204, %v1207
        %v1210 = vshrl.u32 %v600, 16
        %v1212 = vrot.slane %v1210, 3
        %v1213 = vshll.u32 %v600, 16
        %v1215 = vrot.slane %v1213, 4
        %v1216 = vor.u32 %v1212, %v1215
        %v1217 = vsel %vm856, %v1208, %v1216
        %v1219 = vshrl.u32 %v702, 16
        %v1221 = vrot.slane %v1219, 3
        %v1222 = vshll.u32 %v702, 16
        %v1224 = vrot.slane %v1222, 4
        %v1225 = vor.u32 %v1221, %v1224
        %v1226 = vsel %vm856, %v1225, %v1225
        %v1228 = vshrl.u32 %v832, 16
        %v1230 = vrot.slane %v1228, 3
        %v1231 = vshll.u32 %v832, 16
        %v1233 = vrot.slane %v1231, 4
        %v1234 = vor.u32 %v1230, %v1233
        %v1236 = vshrl.u32 %v834, 16
        %v1238 = vrot.slane %v1236, 3
        %v1239 = vshll.u32 %v834, 16
        %v1241 = vrot.slane %v1239, 4
        %v1242 = vor.u32 %v1238, %v1241
        %v1243 = vsel %vm856, %v1234, %v1242
        %v1245 = vshrl.u32 %v601, 16
        %v1247 = vrot.slane %v1245, 3
        %v1248 = vshll.u32 %v601, 16
        %v1250 = vrot.slane %v1248, 4
        %v1251 = vor.u32 %v1247, %v1250
        %v1253 = vshrl.u32 %v602, 16
        %v1255 = vrot.slane %v1253, 3
        %v1256 = vshll.u32 %v602, 16
        %v1258 = vrot.slane %v1256, 4
        %v1259 = vor.u32 %v1255, %v1258
        %v1260 = vsel %vm856, %v1251, %v1259
        %v1262 = vshrl.u32 %v710, 16
        %v1264 = vrot.slane %v1262, 3
        %v1265 = vshll.u32 %v710, 16
        %v1267 = vrot.slane %v1265, 4
        %v1268 = vor.u32 %v1264, %v1267
        %v1269 = vsel %vm856, %v1268, %v1268
        %v1271 = vshrl.u32 %v835, 16
        %v1273 = vrot.slane %v1271, 3
        %v1274 = vshll.u32 %v835, 16
        %v1276 = vrot.slane %v1274, 4
        %v1277 = vor.u32 %v1273, %v1276
        %v1279 = vshrl.u32 %v837, 16
        %v1281 = vrot.slane %v1279, 3
        %v1282 = vshll.u32 %v837, 16
        %v1284 = vrot.slane %v1282, 4
        %v1285 = vor.u32 %v1281, %v1284
        %v1286 = vsel %vm856, %v1277, %v1285
        %v1288 = vshrl.u32 %v603, 16
        %v1290 = vrot.slane %v1288, 3
        %v1291 = vshll.u32 %v603, 16
        %v1293 = vrot.slane %v1291, 4
        %v1294 = vor.u32 %v1290, %v1293
        %v1296 = vshrl.u32 %v604, 16
        %v1298 = vrot.slane %v1296, 3
        %v1299 = vshll.u32 %v604, 16
        %v1301 = vrot.slane %v1299, 4
        %v1302 = vor.u32 %v1298, %v1301
        %v1303 = vsel %vm856, %v1294, %v1302
        %v1305 = vshrl.u32 %v718, 16
        %v1307 = vrot.slane %v1305, 3
        %v1308 = vshll.u32 %v718, 16
        %v1310 = vrot.slane %v1308, 4
        %v1311 = vor.u32 %v1307, %v1310
        %v1312 = vsel %vm856, %v1311, %v1311
        %v1314 = vshrl.u32 %v838, 16
        %v1316 = vrot.slane %v1314, 3
        %v1317 = vshll.u32 %v838, 16
        %v1319 = vrot.slane %v1317, 4
        %v1320 = vor.u32 %v1316, %v1319
        %v1322 = vshrl.u32 %v840, 16
        %v1324 = vrot.slane %v1322, 3
        %v1325 = vshll.u32 %v840, 16
        %v1327 = vrot.slane %v1325, 4
        %v1328 = vor.u32 %v1324, %v1327
        %v1329 = vsel %vm856, %v1320, %v1328
        %v1331 = vshrl.u32 %v605, 16
        %v1333 = vrot.slane %v1331, 3
        %v1334 = vshll.u32 %v605, 16
        %v1336 = vrot.slane %v1334, 4
        %v1337 = vor.u32 %v1333, %v1336
        %v1339 = vshrl.u32 %v606, 16
        %v1341 = vrot.slane %v1339, 3
        %v1342 = vshll.u32 %v606, 16
        %v1344 = vrot.slane %v1342, 4
        %v1345 = vor.u32 %v1341, %v1344
        %v1346 = vsel %vm856, %v1337, %v1345
        %v1348 = vshrl.u32 %v726, 16
        %v1350 = vrot.slane %v1348, 3
        %v1351 = vshll.u32 %v726, 16
        %v1353 = vrot.slane %v1351, 4
        %v1354 = vor.u32 %v1350, %v1353
        %v1355 = vsel %vm856, %v1354, %v1354
        %v1357 = vshrl.u32 %v841, 16
        %v1359 = vrot.slane %v1357, 3
        %v1360 = vshll.u32 %v841, 16
        %v1362 = vrot.slane %v1360, 4
        %v1363 = vor.u32 %v1359, %v1362
        %v1365 = vshrl.u32 %v843, 16
        %v1367 = vrot.slane %v1365, 3
        %v1368 = vshll.u32 %v843, 16
        %v1370 = vrot.slane %v1368, 4
        %v1371 = vor.u32 %v1367, %v1370
        %v1372 = vsel %vm856, %v1363, %v1371
        %v1374 = vshrl.u32 %v607, 16
        %v1376 = vrot.slane %v1374, 3
        %v1377 = vshll.u32 %v607, 16
        %v1379 = vrot.slane %v1377, 4
        %v1380 = vor.u32 %v1376, %v1379
        %v1382 = vshrl.u32 %v608, 16
        %v1384 = vrot.slane %v1382, 3
        %v1385 = vshll.u32 %v608, 16
        %v1387 = vrot.slane %v1385, 4
        %v1388 = vor.u32 %v1384, %v1387
        %v1389 = vsel %vm856, %v1380, %v1388
        %v1391 = vshrl.u32 %v734, 16
        %v1393 = vrot.slane %v1391, 3
        %v1394 = vshll.u32 %v734, 16
        %v1396 = vrot.slane %v1394, 4
        %v1397 = vor.u32 %v1393, %v1396
        %v1398 = vsel %vm856, %v1397, %v1397
        %v1400 = vshrl.u32 %v844, 16
        %v1402 = vrot.slane %v1400, 3
        %v1403 = vshll.u32 %v844, 16
        %v1405 = vrot.slane %v1403, 4
        %v1406 = vor.u32 %v1402, %v1405
        %v1408 = vshrl.u32 %v846, 16
        %v1410 = vrot.slane %v1408, 3
        %v1411 = vshll.u32 %v846, 16
        %v1413 = vrot.slane %v1411, 4
        %v1414 = vor.u32 %v1410, %v1413
        %v1415 = vsel %vm856, %v1406, %v1414
        %v1417 = vshrl.u32 %v609, 16
        %v1419 = vrot.slane %v1417, 3
        %v1420 = vshll.u32 %v609, 16
        %v1422 = vrot.slane %v1420, 4
        %v1423 = vor.u32 %v1419, %v1422
        %v1425 = vshrl.u32 %v610, 16
        %v1427 = vrot.slane %v1425, 3
        %v1428 = vshll.u32 %v610, 16
        %v1430 = vrot.slane %v1428, 4
        %v1431 = vor.u32 %v1427, %v1430
        %v1432 = vsel %vm856, %v1423, %v1431
        %v1434 = vshrl.u32 %v742, 16
        %v1436 = vrot.slane %v1434, 3
        %v1437 = vshll.u32 %v742, 16
        %v1439 = vrot.slane %v1437, 4
        %v1440 = vor.u32 %v1436, %v1439
        %v1441 = vsel %vm856, %v1440, %v1440
        %v1443 = vshrl.u32 %v847, 16
        %v1445 = vrot.slane %v1443, 3
        %v1446 = vshll.u32 %v847, 16
        %v1448 = vrot.slane %v1446, 4
        %v1449 = vor.u32 %v1445, %v1448
        %v1451 = vshrl.u32 %v849, 16
        %v1453 = vrot.slane %v1451, 3
        %v1454 = vshll.u32 %v849, 16
        %v1456 = vrot.slane %v1454, 4
        %v1457 = vor.u32 %v1453, %v1456
        %v1458 = vsel %vm856, %v1449, %v1457
        %v1460 = vshrl.u32 %v611, 16
        %v1462 = vrot.slane %v1460, 3
        %v1463 = vshll.u32 %v611, 16
        %v1465 = vrot.slane %v1463, 4
        %v1466 = vor.u32 %v1462, %v1465
        %v1468 = vshrl.u32 %v612, 16
        %v1470 = vrot.slane %v1468, 3
        %v1471 = vshll.u32 %v612, 16
        %v1473 = vrot.slane %v1471, 4
        %v1474 = vor.u32 %v1470, %v1473
        %v1475 = vsel %vm856, %v1466, %v1474
        %v1477 = vshrl.u32 %v750, 16
        %v1479 = vrot.slane %v1477, 3
        %v1480 = vshll.u32 %v750, 16
        %v1482 = vrot.slane %v1480, 4
        %v1483 = vor.u32 %v1479, %v1482
        %v1484 = vsel %vm856, %v1483, %v1483
        %v1486 = vshrl.u32 %v850, 16
        %v1488 = vrot.slane %v1486, 3
        %v1489 = vshll.u32 %v850, 16
        %v1491 = vrot.slane %v1489, 4
        %v1492 = vor.u32 %v1488, %v1491
        %v1494 = vshrl.u32 %v852, 16
        %v1496 = vrot.slane %v1494, 3
        %v1497 = vshll.u32 %v852, 16
        %v1499 = vrot.slane %v1497, 4
        %v1500 = vor.u32 %v1496, %v1499
        %v1501 = vsel %vm856, %v1492, %v1500
        %v1503 = vshrl.u32 %v613, 16
        %v1505 = vrot.slane %v1503, 3
        %v1506 = vshll.u32 %v613, 16
        %v1508 = vrot.slane %v1506, 4
        %v1509 = vor.u32 %v1505, %v1508
        %v1511 = vshrl.u32 %v614, 16
        %v1513 = vrot.slane %v1511, 3
        %v1514 = vshll.u32 %v614, 16
        %v1516 = vrot.slane %v1514, 4
        %v1517 = vor.u32 %v1513, %v1516
        %v1518 = vsel %vm856, %v1509, %v1517
        %v1520 = vshrl.u32 %v758, 16
        %v1522 = vrot.slane %v1520, 3
        %v1523 = vshll.u32 %v758, 16
        %v1525 = vrot.slane %v1523, 4
        %v1526 = vor.u32 %v1522, %v1525
        %v1527 = vsel %vm856, %v1526, %v1526
        %v1529 = vshrl.u32 %v853, 16
        %v1531 = vrot.slane %v1529, 3
        %v1532 = vshll.u32 %v853, 16
        %v1534 = vrot.slane %v1532, 4
        %v1535 = vor.u32 %v1531, %v1534
        %v1537 = vshrl.u32 %v855, 16
        %v1539 = vrot.slane %v1537, 3
        %v1540 = vshll.u32 %v855, 16
        %v1542 = vrot.slane %v1540, 4
        %v1543 = vor.u32 %v1539, %v1542
        %v1544 = vsel %vm856, %v1535, %v1543
        %v1593 = vld [vmem:[#allocation6] sm:$0xf]
        %v1594 = vld [vmem:[#allocation6 + $0x4] sm:$0xf]
        %v1595 = vld [vmem:[#allocation6 + $0x8] sm:$0xf]
        %v1596 = vld [vmem:[#allocation6 + $0xc] sm:$0xf]
        %v1597 = vld [vmem:[#allocation6 + $0x10] sm:$0xf]
        %v1598 = vld [vmem:[#allocation6 + $0x14] sm:$0xf]
        %v1599 = vld [vmem:[#allocation6 + $0x18] sm:$0xf]
        %v1600 = vld [vmem:[#allocation6 + $0x1c] sm:$0xf]
        %v1601 = vld [vmem:[#allocation6 + $0x20] sm:$0xf]
        %v1602 = vld [vmem:[#allocation6 + $0x24] sm:$0xf]
        %v1603 = vld [vmem:[#allocation6 + $0x28] sm:$0xf]
        %v1604 = vld [vmem:[#allocation6 + $0x2c] sm:$0xf]
        %v1605 = vld [vmem:[#allocation6 + $0x30] sm:$0xf]
        %v1606 = vld [vmem:[#allocation6 + $0x34] sm:$0xf]
        %v1607 = vld [vmem:[#allocation6 + $0x38] sm:$0xf]
        %v1608 = vld [vmem:[#allocation6 + $0x3c] sm:$0xf]
        %v1609 = vld [vmem:[#allocation6 + $0x40] sm:$0xf]
        %v1610 = vld [vmem:[#allocation6 + $0x44] sm:$0xf]
        %v1611 = vld [vmem:[#allocation6 + $0x48] sm:$0xf]
        %v1612 = vld [vmem:[#allocation6 + $0x4c] sm:$0xf]
        %v1613 = vld [vmem:[#allocation6 + $0x50] sm:$0xf]
        %v1614 = vld [vmem:[#allocation6 + $0x54] sm:$0xf]
        %v1615 = vld [vmem:[#allocation6 + $0x58] sm:$0xf]
        %v1616 = vld [vmem:[#allocation6 + $0x5c] sm:$0xf]
        %v1617 = vld [vmem:[#allocation6 + $0x60] sm:$0xf]
        %v1618 = vld [vmem:[#allocation6 + $0x64] sm:$0xf]
        %v1619 = vld [vmem:[#allocation6 + $0x68] sm:$0xf]
        %v1620 = vld [vmem:[#allocation6 + $0x6c] sm:$0xf]
        %v1621 = vld [vmem:[#allocation6 + $0x70] sm:$0xf]
        %v1622 = vld [vmem:[#allocation6 + $0x74] sm:$0xf]
        %v1623 = vld [vmem:[#allocation6 + $0x78] sm:$0xf]
        %v1624 = vld [vmem:[#allocation6 + $0x7c] sm:$0xf]
        %v1625 = vld [vmem:[#allocation6 + $0x80] sm:$0xf]
        %v1626 = vld [vmem:[#allocation6 + $0x84] sm:$0xf]
        %v1627 = vld [vmem:[#allocation6 + $0x88] sm:$0xf]
        %v1628 = vld [vmem:[#allocation6 + $0x8c] sm:$0xf]
        %v1629 = vld [vmem:[#allocation6 + $0x90] sm:$0xf]
        %v1630 = vld [vmem:[#allocation6 + $0x94] sm:$0xf]
        %v1631 = vld [vmem:[#allocation6 + $0x98] sm:$0xf]
        %v1632 = vld [vmem:[#allocation6 + $0x9c] sm:$0xf]
        %v1633 = vld [vmem:[#allocation6 + $0xa0] sm:$0xf]
        %v1634 = vld [vmem:[#allocation6 + $0xa4] sm:$0xf]
        %v1635 = vld [vmem:[#allocation6 + $0xa8] sm:$0xf]
        %v1636 = vld [vmem:[#allocation6 + $0xac] sm:$0xf]
        %v1637 = vld [vmem:[#allocation6 + $0xb0] sm:$0xf]
        %v1638 = vld [vmem:[#allocation6 + $0xb4] sm:$0xf]
        %v1639 = vld [vmem:[#allocation6 + $0xb8] sm:$0xf]
        %v1640 = vld [vmem:[#allocation6 + $0xbc] sm:$0xf]
        %s1641 = scalar_lea.vmem %s373, 16 [#allocation3]
        %v1642 = vld [vmem:[%s1641] sm:$0xf]
        %v1643 = vld [vmem:[%s1641 + $0x4] sm:$0xf]
        %v1644 = vld [vmem:[%s1641 + $0x8] sm:$0xf]
        %v1645 = vld [vmem:[%s1641 + $0xc] sm:$0xf]
        %v1646 = vld [vmem:[%s1641 + $0x10] sm:$0xf]
        %v1647 = vld [vmem:[%s1641 + $0x14] sm:$0xf]
        %v1648 = vld [vmem:[%s1641 + $0x18] sm:$0xf]
        %v1649 = vld [vmem:[%s1641 + $0x1c] sm:$0xf]
        %v1650 = vld [vmem:[%s1641 + $0x20] sm:$0xf]
        %v1651 = vld [vmem:[%s1641 + $0x24] sm:$0xf]
        %v1652 = vld [vmem:[%s1641 + $0x28] sm:$0xf]
        %v1653 = vld [vmem:[%s1641 + $0x2c] sm:$0xf]
        %v1654 = vld [vmem:[%s1641 + $0x30] sm:$0xf]
        %v1655 = vld [vmem:[%s1641 + $0x34] sm:$0xf]
        %v1656 = vld [vmem:[%s1641 + $0x38] sm:$0xf]
        %v1657 = vld [vmem:[%s1641 + $0x3c] sm:$0xf]
        %v1658 = vld [vmem:[%s1641 + $0x40] sm:$0xf]
        %v1659 = vld [vmem:[%s1641 + $0x44] sm:$0xf]
        %v1660 = vld [vmem:[%s1641 + $0x48] sm:$0xf]
        %v1661 = vld [vmem:[%s1641 + $0x4c] sm:$0xf]
        %v1662 = vld [vmem:[%s1641 + $0x50] sm:$0xf]
        %v1663 = vld [vmem:[%s1641 + $0x54] sm:$0xf]
        %v1664 = vld [vmem:[%s1641 + $0x58] sm:$0xf]
        %v1665 = vld [vmem:[%s1641 + $0x5c] sm:$0xf]
        %v1666 = vld [vmem:[%s1641 + $0x60] sm:$0xf]
        %v1667 = vld [vmem:[%s1641 + $0x64] sm:$0xf]
        %v1668 = vld [vmem:[%s1641 + $0x68] sm:$0xf]
        %v1669 = vld [vmem:[%s1641 + $0x6c] sm:$0xf]
        %v1670 = vld [vmem:[%s1641 + $0x70] sm:$0xf]
        %v1671 = vld [vmem:[%s1641 + $0x74] sm:$0xf]
        %v1672 = vld [vmem:[%s1641 + $0x78] sm:$0xf]
        %v1673 = vld [vmem:[%s1641 + $0x7c] sm:$0xf]
        %v1674 = vld [vmem:[%s1641 + $0x80] sm:$0xf]
        %v1675 = vld [vmem:[%s1641 + $0x84] sm:$0xf]
        %v1676 = vld [vmem:[%s1641 + $0x88] sm:$0xf]
        %v1677 = vld [vmem:[%s1641 + $0x8c] sm:$0xf]
        %v1678 = vld [vmem:[%s1641 + $0x90] sm:$0xf]
        %v1679 = vld [vmem:[%s1641 + $0x94] sm:$0xf]
        %v1680 = vld [vmem:[%s1641 + $0x98] sm:$0xf]
        %v1681 = vld [vmem:[%s1641 + $0x9c] sm:$0xf]
        %v1682 = vld [vmem:[%s1641 + $0xa0] sm:$0xf]
        %v1683 = vld [vmem:[%s1641 + $0xa4] sm:$0xf]
        %v1684 = vld [vmem:[%s1641 + $0xa8] sm:$0xf]
        %v1685 = vld [vmem:[%s1641 + $0xac] sm:$0xf]
        %v1686 = vld [vmem:[%s1641 + $0xb0] sm:$0xf]
        %v1687 = vld [vmem:[%s1641 + $0xb4] sm:$0xf]
        %v1688 = vld [vmem:[%s1641 + $0xb8] sm:$0xf]
        %v1689 = vld [vmem:[%s1641 + $0xbc] sm:$0xf]
        %v1690 = vld [vmem:[%s1641 + $0xc0] sm:$0xf]
        %v1691 = vld [vmem:[%s1641 + $0xc4] sm:$0xf]
        %v1692 = vld [vmem:[%s1641 + $0xc8] sm:$0xf]
        %v1693 = vld [vmem:[%s1641 + $0xcc] sm:$0xf]
        %v1694 = vld [vmem:[%s1641 + $0xd0] sm:$0xf]
        %v1695 = vld [vmem:[%s1641 + $0xd4] sm:$0xf]
        %v1696 = vld [vmem:[%s1641 + $0xd8] sm:$0xf]
        %v1697 = vld [vmem:[%s1641 + $0xdc] sm:$0xf]
        %v1698 = vld [vmem:[%s1641 + $0xe0] sm:$0xf]
        %v1699 = vld [vmem:[%s1641 + $0xe4] sm:$0xf]
        %v1700 = vld [vmem:[%s1641 + $0xe8] sm:$0xf]
        %v1701 = vld [vmem:[%s1641 + $0xec] sm:$0xf]
        %v1702 = vld [vmem:[%s1641 + $0xf0] sm:$0xf]
        %v1703 = vld [vmem:[%s1641 + $0xf4] sm:$0xf]
        %v1704 = vld [vmem:[%s1641 + $0xf8] sm:$0xf]
        %v1705 = vld [vmem:[%s1641 + $0xfc] sm:$0xf]
        %v1754 = vunpack.c.l.b16 %v1642
        %v1755 = vunpack.c.l.b16 %v1643
        %v1756 = vunpack.c.l.b16 %v1644
        %v1757 = vunpack.c.l.b16 %v1646
        %v1758 = vunpack.c.l.b16 %v1647
        %v1759 = vunpack.c.l.b16 %v1648
        %v1760 = vunpack.c.l.b16 %v1650
        %v1761 = vunpack.c.l.b16 %v1651
        %v1762 = vunpack.c.l.b16 %v1652
        %v1763 = vunpack.c.l.b16 %v1654
        %v1764 = vunpack.c.l.b16 %v1655
        %v1765 = vunpack.c.l.b16 %v1656
        %v1766 = vunpack.c.l.b16 %v1658
        %v1767 = vunpack.c.l.b16 %v1659
        %v1768 = vunpack.c.l.b16 %v1660
        %v1769 = vunpack.c.l.b16 %v1662
        %v1770 = vunpack.c.l.b16 %v1663
        %v1771 = vunpack.c.l.b16 %v1664
        %v1772 = vunpack.c.l.b16 %v1666
        %v1773 = vunpack.c.l.b16 %v1667
        %v1774 = vunpack.c.l.b16 %v1668
        %v1775 = vunpack.c.l.b16 %v1670
        %v1776 = vunpack.c.l.b16 %v1671
        %v1777 = vunpack.c.l.b16 %v1672
        %v1778 = vunpack.c.l.b16 %v1674
        %v1779 = vunpack.c.l.b16 %v1675
        %v1780 = vunpack.c.l.b16 %v1676
        %v1781 = vunpack.c.l.b16 %v1678
        %v1782 = vunpack.c.l.b16 %v1679
        %v1783 = vunpack.c.l.b16 %v1680
        %v1784 = vunpack.c.l.b16 %v1682
        %v1785 = vunpack.c.l.b16 %v1683
        %v1786 = vunpack.c.l.b16 %v1684
        %v1787 = vunpack.c.l.b16 %v1686
        %v1788 = vunpack.c.l.b16 %v1687
        %v1789 = vunpack.c.l.b16 %v1688
        %v1790 = vunpack.c.l.b16 %v1690
        %v1791 = vunpack.c.l.b16 %v1691
        %v1792 = vunpack.c.l.b16 %v1692
        %v1793 = vunpack.c.l.b16 %v1694
        %v1794 = vunpack.c.l.b16 %v1695
        %v1795 = vunpack.c.l.b16 %v1696
        %v1796 = vunpack.c.l.b16 %v1698
        %v1797 = vunpack.c.l.b16 %v1699
        %v1798 = vunpack.c.l.b16 %v1700
        %v1799 = vunpack.c.l.b16 %v1702
        %v1800 = vunpack.c.l.b16 %v1703
        %v1801 = vunpack.c.l.b16 %v1704
        %v1802 = vpack.c.b16 %v1755, %v1754
        %v1803 = vpack.c.b16 %v1756, %v1756
        %v1804 = vpack.c.b16 %v1758, %v1757
        %v1805 = vpack.c.b16 %v1759, %v1759
        %v1806 = vpack.c.b16 %v1761, %v1760
        %v1807 = vpack.c.b16 %v1762, %v1762
        %v1808 = vpack.c.b16 %v1764, %v1763
        %v1809 = vpack.c.b16 %v1765, %v1765
        %v1810 = vpack.c.b16 %v1767, %v1766
        %v1811 = vpack.c.b16 %v1768, %v1768
        %v1812 = vpack.c.b16 %v1770, %v1769
        %v1813 = vpack.c.b16 %v1771, %v1771
        %v1814 = vpack.c.b16 %v1773, %v1772
        %v1815 = vpack.c.b16 %v1774, %v1774
        %v1816 = vpack.c.b16 %v1776, %v1775
        %v1817 = vpack.c.b16 %v1777, %v1777
        %v1818 = vpack.c.b16 %v1779, %v1778
        %v1819 = vpack.c.b16 %v1780, %v1780
        %v1820 = vpack.c.b16 %v1782, %v1781
        %v1821 = vpack.c.b16 %v1783, %v1783
        %v1822 = vpack.c.b16 %v1785, %v1784
        %v1823 = vpack.c.b16 %v1786, %v1786
        %v1824 = vpack.c.b16 %v1788, %v1787
        %v1825 = vpack.c.b16 %v1789, %v1789
        %v1826 = vpack.c.b16 %v1791, %v1790
        %v1827 = vpack.c.b16 %v1792, %v1792
        %v1828 = vpack.c.b16 %v1794, %v1793
        %v1829 = vpack.c.b16 %v1795, %v1795
        %v1830 = vpack.c.b16 %v1797, %v1796
        %v1831 = vpack.c.b16 %v1798, %v1798
        %v1832 = vpack.c.b16 %v1800, %v1799
        %v1833 = vpack.c.b16 %v1801, %v1801
        %v1834 = vpack.c.b16 %v1756, %v1755
        %v1835 = vpack.c.b16 %v1759, %v1758
        %v1836 = vpack.c.b16 %v1762, %v1761
        %v1837 = vpack.c.b16 %v1765, %v1764
        %v1838 = vpack.c.b16 %v1768, %v1767
        %v1839 = vpack.c.b16 %v1771, %v1770
        %v1840 = vpack.c.b16 %v1774, %v1773
        %v1841 = vpack.c.b16 %v1777, %v1776
        %v1842 = vpack.c.b16 %v1780, %v1779
        %v1843 = vpack.c.b16 %v1783, %v1782
        %v1844 = vpack.c.b16 %v1786, %v1785
        %v1845 = vpack.c.b16 %v1789, %v1788
        %v1846 = vpack.c.b16 %v1792, %v1791
        %v1847 = vpack.c.b16 %v1795, %v1794
        %v1848 = vpack.c.b16 %v1798, %v1797
        %v1849 = vpack.c.b16 %v1801, %v1800
        %v1851 = vshrl.u32 %v1834, 16
        %v1853 = vrot.slane %v1851, 4
        %v1854 = vshll.u32 %v1834, 16
        %v1856 = vrot.slane %v1854, 5
        %v1857 = vor.u32 %v1853, %v1856
        %v1859 = vshrl.u32 %v1835, 16
        %v1861 = vrot.slane %v1859, 4
        %v1862 = vshll.u32 %v1835, 16
        %v1864 = vrot.slane %v1862, 5
        %v1865 = vor.u32 %v1861, %v1864
        %v1867 = vshrl.u32 %v1836, 16
        %v1869 = vrot.slane %v1867, 4
        %v1870 = vshll.u32 %v1836, 16
        %v1872 = vrot.slane %v1870, 5
        %v1873 = vor.u32 %v1869, %v1872
        %v1875 = vshrl.u32 %v1837, 16
        %v1877 = vrot.slane %v1875, 4
        %v1878 = vshll.u32 %v1837, 16
        %v1880 = vrot.slane %v1878, 5
        %v1881 = vor.u32 %v1877, %v1880
        %v1883 = vshrl.u32 %v1838, 16
        %v1885 = vrot.slane %v1883, 4
        %v1886 = vshll.u32 %v1838, 16
        %v1888 = vrot.slane %v1886, 5
        %v1889 = vor.u32 %v1885, %v1888
        %v1891 = vshrl.u32 %v1839, 16
        %v1893 = vrot.slane %v1891, 4
        %v1894 = vshll.u32 %v1839, 16
        %v1896 = vrot.slane %v1894, 5
        %v1897 = vor.u32 %v1893, %v1896
        %v1899 = vshrl.u32 %v1840, 16
        %v1901 = vrot.slane %v1899, 4
        %v1902 = vshll.u32 %v1840, 16
        %v1904 = vrot.slane %v1902, 5
        %v1905 = vor.u32 %v1901, %v1904
        %v1907 = vshrl.u32 %v1841, 16
        %v1909 = vrot.slane %v1907, 4
        %v1910 = vshll.u32 %v1841, 16
        %v1912 = vrot.slane %v1910, 5
        %v1913 = vor.u32 %v1909, %v1912
        %v1915 = vshrl.u32 %v1842, 16
        %v1917 = vrot.slane %v1915, 4
        %v1918 = vshll.u32 %v1842, 16
        %v1920 = vrot.slane %v1918, 5
        %v1921 = vor.u32 %v1917, %v1920
        %v1923 = vshrl.u32 %v1843, 16
        %v1925 = vrot.slane %v1923, 4
        %v1926 = vshll.u32 %v1843, 16
        %v1928 = vrot.slane %v1926, 5
        %v1929 = vor.u32 %v1925, %v1928
        %v1931 = vshrl.u32 %v1844, 16
        %v1933 = vrot.slane %v1931, 4
        %v1934 = vshll.u32 %v1844, 16
        %v1936 = vrot.slane %v1934, 5
        %v1937 = vor.u32 %v1933, %v1936
        %v1939 = vshrl.u32 %v1845, 16
        %v1941 = vrot.slane %v1939, 4
        %v1942 = vshll.u32 %v1845, 16
        %v1944 = vrot.slane %v1942, 5
        %v1945 = vor.u32 %v1941, %v1944
        %v1947 = vshrl.u32 %v1846, 16
        %v1949 = vrot.slane %v1947, 4
        %v1950 = vshll.u32 %v1846, 16
        %v1952 = vrot.slane %v1950, 5
        %v1953 = vor.u32 %v1949, %v1952
        %v1955 = vshrl.u32 %v1847, 16
        %v1957 = vrot.slane %v1955, 4
        %v1958 = vshll.u32 %v1847, 16
        %v1960 = vrot.slane %v1958, 5
        %v1961 = vor.u32 %v1957, %v1960
        %v1963 = vshrl.u32 %v1848, 16
        %v1965 = vrot.slane %v1963, 4
        %v1966 = vshll.u32 %v1848, 16
        %v1968 = vrot.slane %v1966, 5
        %v1969 = vor.u32 %v1965, %v1968
        %v1971 = vshrl.u32 %v1849, 16
        %v1973 = vrot.slane %v1971, 4
        %v1974 = vshll.u32 %v1849, 16
        %v1976 = vrot.slane %v1974, 5
        %v1977 = vor.u32 %v1973, %v1976
        %v1994 = vunpack.c.l.b16 %v1645
        %v1995 = vunpack.c.l.b16 %v1649
        %v1996 = vunpack.c.l.b16 %v1653
        %v1997 = vunpack.c.l.b16 %v1657
        %v1998 = vunpack.c.l.b16 %v1661
        %v1999 = vunpack.c.l.b16 %v1665
        %v2000 = vunpack.c.l.b16 %v1669
        %v2001 = vunpack.c.l.b16 %v1673
        %v2002 = vunpack.c.l.b16 %v1677
        %v2003 = vunpack.c.l.b16 %v1681
        %v2004 = vunpack.c.l.b16 %v1685
        %v2005 = vunpack.c.l.b16 %v1689
        %v2006 = vunpack.c.l.b16 %v1693
        %v2007 = vunpack.c.l.b16 %v1697
        %v2008 = vunpack.c.l.b16 %v1701
        %v2009 = vunpack.c.l.b16 %v1705
        %v2010 = vpack.c.b16 %v1994, %v1994
        %v2011 = vpack.c.b16 %v1995, %v1995
        %v2012 = vpack.c.b16 %v1996, %v1996
        %v2013 = vpack.c.b16 %v1997, %v1997
        %v2014 = vpack.c.b16 %v1998, %v1998
        %v2015 = vpack.c.b16 %v1999, %v1999
        %v2016 = vpack.c.b16 %v2000, %v2000
        %v2017 = vpack.c.b16 %v2001, %v2001
        %v2018 = vpack.c.b16 %v2002, %v2002
        %v2019 = vpack.c.b16 %v2003, %v2003
        %v2020 = vpack.c.b16 %v2004, %v2004
        %v2021 = vpack.c.b16 %v2005, %v2005
        %v2022 = vpack.c.b16 %v2006, %v2006
        %v2023 = vpack.c.b16 %v2007, %v2007
        %v2024 = vpack.c.b16 %v2008, %v2008
        %v2025 = vpack.c.b16 %v2009, %v2009
        %v2026 = vrot.slane %v1834, 5
        %v2027 = vrot.slane %v2010, 5
        %v2028 = vsel %vm807, %v2026, %v2027
        %v2029 = vrot.slane %v1835, 5
        %v2030 = vrot.slane %v2011, 5
        %v2031 = vsel %vm807, %v2029, %v2030
        %v2032 = vrot.slane %v1836, 5
        %v2033 = vrot.slane %v2012, 5
        %v2034 = vsel %vm807, %v2032, %v2033
        %v2035 = vrot.slane %v1837, 5
        %v2036 = vrot.slane %v2013, 5
        %v2037 = vsel %vm807, %v2035, %v2036
        %v2038 = vrot.slane %v1838, 5
        %v2039 = vrot.slane %v2014, 5
        %v2040 = vsel %vm807, %v2038, %v2039
        %v2041 = vrot.slane %v1839, 5
        %v2042 = vrot.slane %v2015, 5
        %v2043 = vsel %vm807, %v2041, %v2042
        %v2044 = vrot.slane %v1840, 5
        %v2045 = vrot.slane %v2016, 5
        %v2046 = vsel %vm807, %v2044, %v2045
        %v2047 = vrot.slane %v1841, 5
        %v2048 = vrot.slane %v2017, 5
        %v2049 = vsel %vm807, %v2047, %v2048
        %v2050 = vrot.slane %v1842, 5
        %v2051 = vrot.slane %v2018, 5
        %v2052 = vsel %vm807, %v2050, %v2051
        %v2053 = vrot.slane %v1843, 5
        %v2054 = vrot.slane %v2019, 5
        %v2055 = vsel %vm807, %v2053, %v2054
        %v2056 = vrot.slane %v1844, 5
        %v2057 = vrot.slane %v2020, 5
        %v2058 = vsel %vm807, %v2056, %v2057
        %v2059 = vrot.slane %v1845, 5
        %v2060 = vrot.slane %v2021, 5
        %v2061 = vsel %vm807, %v2059, %v2060
        %v2062 = vrot.slane %v1846, 5
        %v2063 = vrot.slane %v2022, 5
        %v2064 = vsel %vm807, %v2062, %v2063
        %v2065 = vrot.slane %v1847, 5
        %v2066 = vrot.slane %v2023, 5
        %v2067 = vsel %vm807, %v2065, %v2066
        %v2068 = vrot.slane %v1848, 5
        %v2069 = vrot.slane %v2024, 5
        %v2070 = vsel %vm807, %v2068, %v2069
        %v2071 = vrot.slane %v1849, 5
        %v2072 = vrot.slane %v2025, 5
        %v2073 = vsel %vm807, %v2071, %v2072
        %v2075 = vshrl.u32 %v1802, 16
        %v2077 = vrot.slane %v2075, 3
        %v2078 = vshll.u32 %v1802, 16
        %v2080 = vrot.slane %v2078, 4
        %v2081 = vor.u32 %v2077, %v2080
        %v2083 = vshrl.u32 %v1803, 16
        %v2085 = vrot.slane %v2083, 3
        %v2086 = vshll.u32 %v1803, 16
        %v2088 = vrot.slane %v2086, 4
        %v2089 = vor.u32 %v2085, %v2088
        %v2090 = vsel %vm856, %v2081, %v2089
        %v2092 = vshrl.u32 %v1857, 16
        %v2094 = vrot.slane %v2092, 3
        %v2095 = vshll.u32 %v1857, 16
        %v2097 = vrot.slane %v2095, 4
        %v2098 = vor.u32 %v2094, %v2097
        %v2099 = vsel %vm856, %v2098, %v2098
        %v2101 = vshrl.u32 %v2026, 16
        %v2103 = vrot.slane %v2101, 3
        %v2104 = vshll.u32 %v2026, 16
        %v2106 = vrot.slane %v2104, 4
        %v2107 = vor.u32 %v2103, %v2106
        %v2109 = vshrl.u32 %v2028, 16
        %v2111 = vrot.slane %v2109, 3
        %v2112 = vshll.u32 %v2028, 16
        %v2114 = vrot.slane %v2112, 4
        %v2115 = vor.u32 %v2111, %v2114
        %v2116 = vsel %vm856, %v2107, %v2115
        %v2118 = vshrl.u32 %v1804, 16
        %v2120 = vrot.slane %v2118, 3
        %v2121 = vshll.u32 %v1804, 16
        %v2123 = vrot.slane %v2121, 4
        %v2124 = vor.u32 %v2120, %v2123
        %v2126 = vshrl.u32 %v1805, 16
        %v2128 = vrot.slane %v2126, 3
        %v2129 = vshll.u32 %v1805, 16
        %v2131 = vrot.slane %v2129, 4
        %v2132 = vor.u32 %v2128, %v2131
        %v2133 = vsel %vm856, %v2124, %v2132
        %v2135 = vshrl.u32 %v1865, 16
        %v2137 = vrot.slane %v2135, 3
        %v2138 = vshll.u32 %v1865, 16
        %v2140 = vrot.slane %v2138, 4
        %v2141 = vor.u32 %v2137, %v2140
        %v2142 = vsel %vm856, %v2141, %v2141
        %v2144 = vshrl.u32 %v2029, 16
        %v2146 = vrot.slane %v2144, 3
        %v2147 = vshll.u32 %v2029, 16
        %v2149 = vrot.slane %v2147, 4
        %v2150 = vor.u32 %v2146, %v2149
        %v2152 = vshrl.u32 %v2031, 16
        %v2154 = vrot.slane %v2152, 3
        %v2155 = vshll.u32 %v2031, 16
        %v2157 = vrot.slane %v2155, 4
        %v2158 = vor.u32 %v2154, %v2157
        %v2159 = vsel %vm856, %v2150, %v2158
        %v2161 = vshrl.u32 %v1806, 16
        %v2163 = vrot.slane %v2161, 3
        %v2164 = vshll.u32 %v1806, 16
        %v2166 = vrot.slane %v2164, 4
        %v2167 = vor.u32 %v2163, %v2166
        %v2169 = vshrl.u32 %v1807, 16
        %v2171 = vrot.slane %v2169, 3
        %v2172 = vshll.u32 %v1807, 16
        %v2174 = vrot.slane %v2172, 4
        %v2175 = vor.u32 %v2171, %v2174
        %v2176 = vsel %vm856, %v2167, %v2175
        %v2178 = vshrl.u32 %v1873, 16
        %v2180 = vrot.slane %v2178, 3
        %v2181 = vshll.u32 %v1873, 16
        %v2183 = vrot.slane %v2181, 4
        %v2184 = vor.u32 %v2180, %v2183
        %v2185 = vsel %vm856, %v2184, %v2184
        %v2187 = vshrl.u32 %v2032, 16
        %v2189 = vrot.slane %v2187, 3
        %v2190 = vshll.u32 %v2032, 16
        %v2192 = vrot.slane %v2190, 4
        %v2193 = vor.u32 %v2189, %v2192
        %v2195 = vshrl.u32 %v2034, 16
        %v2197 = vrot.slane %v2195, 3
        %v2198 = vshll.u32 %v2034, 16
        %v2200 = vrot.slane %v2198, 4
        %v2201 = vor.u32 %v2197, %v2200
        %v2202 = vsel %vm856, %v2193, %v2201
        %v2204 = vshrl.u32 %v1808, 16
        %v2206 = vrot.slane %v2204, 3
        %v2207 = vshll.u32 %v1808, 16
        %v2209 = vrot.slane %v2207, 4
        %v2210 = vor.u32 %v2206, %v2209
        %v2212 = vshrl.u32 %v1809, 16
        %v2214 = vrot.slane %v2212, 3
        %v2215 = vshll.u32 %v1809, 16
        %v2217 = vrot.slane %v2215, 4
        %v2218 = vor.u32 %v2214, %v2217
        %v2219 = vsel %vm856, %v2210, %v2218
        %v2221 = vshrl.u32 %v1881, 16
        %v2223 = vrot.slane %v2221, 3
        %v2224 = vshll.u32 %v1881, 16
        %v2226 = vrot.slane %v2224, 4
        %v2227 = vor.u32 %v2223, %v2226
        %v2228 = vsel %vm856, %v2227, %v2227
        %v2230 = vshrl.u32 %v2035, 16
        %v2232 = vrot.slane %v2230, 3
        %v2233 = vshll.u32 %v2035, 16
        %v2235 = vrot.slane %v2233, 4
        %v2236 = vor.u32 %v2232, %v2235
        %v2238 = vshrl.u32 %v2037, 16
        %v2240 = vrot.slane %v2238, 3
        %v2241 = vshll.u32 %v2037, 16
        %v2243 = vrot.slane %v2241, 4
        %v2244 = vor.u32 %v2240, %v2243
        %v2245 = vsel %vm856, %v2236, %v2244
        %v2247 = vshrl.u32 %v1810, 16
        %v2249 = vrot.slane %v2247, 3
        %v2250 = vshll.u32 %v1810, 16
        %v2252 = vrot.slane %v2250, 4
        %v2253 = vor.u32 %v2249, %v2252
        %v2255 = vshrl.u32 %v1811, 16
        %v2257 = vrot.slane %v2255, 3
        %v2258 = vshll.u32 %v1811, 16
        %v2260 = vrot.slane %v2258, 4
        %v2261 = vor.u32 %v2257, %v2260
        %v2262 = vsel %vm856, %v2253, %v2261
        %v2264 = vshrl.u32 %v1889, 16
        %v2266 = vrot.slane %v2264, 3
        %v2267 = vshll.u32 %v1889, 16
        %v2269 = vrot.slane %v2267, 4
        %v2270 = vor.u32 %v2266, %v2269
        %v2271 = vsel %vm856, %v2270, %v2270
        %v2273 = vshrl.u32 %v2038, 16
        %v2275 = vrot.slane %v2273, 3
        %v2276 = vshll.u32 %v2038, 16
        %v2278 = vrot.slane %v2276, 4
        %v2279 = vor.u32 %v2275, %v2278
        %v2281 = vshrl.u32 %v2040, 16
        %v2283 = vrot.slane %v2281, 3
        %v2284 = vshll.u32 %v2040, 16
        %v2286 = vrot.slane %v2284, 4
        %v2287 = vor.u32 %v2283, %v2286
        %v2288 = vsel %vm856, %v2279, %v2287
        %v2290 = vshrl.u32 %v1812, 16
        %v2292 = vrot.slane %v2290, 3
        %v2293 = vshll.u32 %v1812, 16
        %v2295 = vrot.slane %v2293, 4
        %v2296 = vor.u32 %v2292, %v2295
        %v2298 = vshrl.u32 %v1813, 16
        %v2300 = vrot.slane %v2298, 3
        %v2301 = vshll.u32 %v1813, 16
        %v2303 = vrot.slane %v2301, 4
        %v2304 = vor.u32 %v2300, %v2303
        %v2305 = vsel %vm856, %v2296, %v2304
        %v2307 = vshrl.u32 %v1897, 16
        %v2309 = vrot.slane %v2307, 3
        %v2310 = vshll.u32 %v1897, 16
        %v2312 = vrot.slane %v2310, 4
        %v2313 = vor.u32 %v2309, %v2312
        %v2314 = vsel %vm856, %v2313, %v2313
        %v2316 = vshrl.u32 %v2041, 16
        %v2318 = vrot.slane %v2316, 3
        %v2319 = vshll.u32 %v2041, 16
        %v2321 = vrot.slane %v2319, 4
        %v2322 = vor.u32 %v2318, %v2321
        %v2324 = vshrl.u32 %v2043, 16
        %v2326 = vrot.slane %v2324, 3
        %v2327 = vshll.u32 %v2043, 16
        %v2329 = vrot.slane %v2327, 4
        %v2330 = vor.u32 %v2326, %v2329
        %v2331 = vsel %vm856, %v2322, %v2330
        %v2333 = vshrl.u32 %v1814, 16
        %v2335 = vrot.slane %v2333, 3
        %v2336 = vshll.u32 %v1814, 16
        %v2338 = vrot.slane %v2336, 4
        %v2339 = vor.u32 %v2335, %v2338
        %v2341 = vshrl.u32 %v1815, 16
        %v2343 = vrot.slane %v2341, 3
        %v2344 = vshll.u32 %v1815, 16
        %v2346 = vrot.slane %v2344, 4
        %v2347 = vor.u32 %v2343, %v2346
        %v2348 = vsel %vm856, %v2339, %v2347
        %v2350 = vshrl.u32 %v1905, 16
        %v2352 = vrot.slane %v2350, 3
        %v2353 = vshll.u32 %v1905, 16
        %v2355 = vrot.slane %v2353, 4
        %v2356 = vor.u32 %v2352, %v2355
        %v2357 = vsel %vm856, %v2356, %v2356
        %v2359 = vshrl.u32 %v2044, 16
        %v2361 = vrot.slane %v2359, 3
        %v2362 = vshll.u32 %v2044, 16
        %v2364 = vrot.slane %v2362, 4
        %v2365 = vor.u32 %v2361, %v2364
        %v2367 = vshrl.u32 %v2046, 16
        %v2369 = vrot.slane %v2367, 3
        %v2370 = vshll.u32 %v2046, 16
        %v2372 = vrot.slane %v2370, 4
        %v2373 = vor.u32 %v2369, %v2372
        %v2374 = vsel %vm856, %v2365, %v2373
        %v2376 = vshrl.u32 %v1816, 16
        %v2378 = vrot.slane %v2376, 3
        %v2379 = vshll.u32 %v1816, 16
        %v2381 = vrot.slane %v2379, 4
        %v2382 = vor.u32 %v2378, %v2381
        %v2384 = vshrl.u32 %v1817, 16
        %v2386 = vrot.slane %v2384, 3
        %v2387 = vshll.u32 %v1817, 16
        %v2389 = vrot.slane %v2387, 4
        %v2390 = vor.u32 %v2386, %v2389
        %v2391 = vsel %vm856, %v2382, %v2390
        %v2393 = vshrl.u32 %v1913, 16
        %v2395 = vrot.slane %v2393, 3
        %v2396 = vshll.u32 %v1913, 16
        %v2398 = vrot.slane %v2396, 4
        %v2399 = vor.u32 %v2395, %v2398
        %v2400 = vsel %vm856, %v2399, %v2399
        %v2402 = vshrl.u32 %v2047, 16
        %v2404 = vrot.slane %v2402, 3
        %v2405 = vshll.u32 %v2047, 16
        %v2407 = vrot.slane %v2405, 4
        %v2408 = vor.u32 %v2404, %v2407
        %v2410 = vshrl.u32 %v2049, 16
        %v2412 = vrot.slane %v2410, 3
        %v2413 = vshll.u32 %v2049, 16
        %v2415 = vrot.slane %v2413, 4
        %v2416 = vor.u32 %v2412, %v2415
        %v2417 = vsel %vm856, %v2408, %v2416
        %v2419 = vshrl.u32 %v1818, 16
        %v2421 = vrot.slane %v2419, 3
        %v2422 = vshll.u32 %v1818, 16
        %v2424 = vrot.slane %v2422, 4
        %v2425 = vor.u32 %v2421, %v2424
        %v2427 = vshrl.u32 %v1819, 16
        %v2429 = vrot.slane %v2427, 3
        %v2430 = vshll.u32 %v1819, 16
        %v2432 = vrot.slane %v2430, 4
        %v2433 = vor.u32 %v2429, %v2432
        %v2434 = vsel %vm856, %v2425, %v2433
        %v2436 = vshrl.u32 %v1921, 16
        %v2438 = vrot.slane %v2436, 3
        %v2439 = vshll.u32 %v1921, 16
        %v2441 = vrot.slane %v2439, 4
        %v2442 = vor.u32 %v2438, %v2441
        %v2443 = vsel %vm856, %v2442, %v2442
        %v2445 = vshrl.u32 %v2050, 16
        %v2447 = vrot.slane %v2445, 3
        %v2448 = vshll.u32 %v2050, 16
        %v2450 = vrot.slane %v2448, 4
        %v2451 = vor.u32 %v2447, %v2450
        %v2453 = vshrl.u32 %v2052, 16
        %v2455 = vrot.slane %v2453, 3
        %v2456 = vshll.u32 %v2052, 16
        %v2458 = vrot.slane %v2456, 4
        %v2459 = vor.u32 %v2455, %v2458
        %v2460 = vsel %vm856, %v2451, %v2459
        %v2462 = vshrl.u32 %v1820, 16
        %v2464 = vrot.slane %v2462, 3
        %v2465 = vshll.u32 %v1820, 16
        %v2467 = vrot.slane %v2465, 4
        %v2468 = vor.u32 %v2464, %v2467
        %v2470 = vshrl.u32 %v1821, 16
        %v2472 = vrot.slane %v2470, 3
        %v2473 = vshll.u32 %v1821, 16
        %v2475 = vrot.slane %v2473, 4
        %v2476 = vor.u32 %v2472, %v2475
        %v2477 = vsel %vm856, %v2468, %v2476
        %v2479 = vshrl.u32 %v1929, 16
        %v2481 = vrot.slane %v2479, 3
        %v2482 = vshll.u32 %v1929, 16
        %v2484 = vrot.slane %v2482, 4
        %v2485 = vor.u32 %v2481, %v2484
        %v2486 = vsel %vm856, %v2485, %v2485
        %v2488 = vshrl.u32 %v2053, 16
        %v2490 = vrot.slane %v2488, 3
        %v2491 = vshll.u32 %v2053, 16
        %v2493 = vrot.slane %v2491, 4
        %v2494 = vor.u32 %v2490, %v2493
        %v2496 = vshrl.u32 %v2055, 16
        %v2498 = vrot.slane %v2496, 3
        %v2499 = vshll.u32 %v2055, 16
        %v2501 = vrot.slane %v2499, 4
        %v2502 = vor.u32 %v2498, %v2501
        %v2503 = vsel %vm856, %v2494, %v2502
        %v2505 = vshrl.u32 %v1822, 16
        %v2507 = vrot.slane %v2505, 3
        %v2508 = vshll.u32 %v1822, 16
        %v2510 = vrot.slane %v2508, 4
        %v2511 = vor.u32 %v2507, %v2510
        %v2513 = vshrl.u32 %v1823, 16
        %v2515 = vrot.slane %v2513, 3
        %v2516 = vshll.u32 %v1823, 16
        %v2518 = vrot.slane %v2516, 4
        %v2519 = vor.u32 %v2515, %v2518
        %v2520 = vsel %vm856, %v2511, %v2519
        %v2522 = vshrl.u32 %v1937, 16
        %v2524 = vrot.slane %v2522, 3
        %v2525 = vshll.u32 %v1937, 16
        %v2527 = vrot.slane %v2525, 4
        %v2528 = vor.u32 %v2524, %v2527
        %v2529 = vsel %vm856, %v2528, %v2528
        %v2531 = vshrl.u32 %v2056, 16
        %v2533 = vrot.slane %v2531, 3
        %v2534 = vshll.u32 %v2056, 16
        %v2536 = vrot.slane %v2534, 4
        %v2537 = vor.u32 %v2533, %v2536
        %v2539 = vshrl.u32 %v2058, 16
        %v2541 = vrot.slane %v2539, 3
        %v2542 = vshll.u32 %v2058, 16
        %v2544 = vrot.slane %v2542, 4
        %v2545 = vor.u32 %v2541, %v2544
        %v2546 = vsel %vm856, %v2537, %v2545
        %v2548 = vshrl.u32 %v1824, 16
        %v2550 = vrot.slane %v2548, 3
        %v2551 = vshll.u32 %v1824, 16
        %v2553 = vrot.slane %v2551, 4
        %v2554 = vor.u32 %v2550, %v2553
        %v2556 = vshrl.u32 %v1825, 16
        %v2558 = vrot.slane %v2556, 3
        %v2559 = vshll.u32 %v1825, 16
        %v2561 = vrot.slane %v2559, 4
        %v2562 = vor.u32 %v2558, %v2561
        %v2563 = vsel %vm856, %v2554, %v2562
        %v2565 = vshrl.u32 %v1945, 16
        %v2567 = vrot.slane %v2565, 3
        %v2568 = vshll.u32 %v1945, 16
        %v2570 = vrot.slane %v2568, 4
        %v2571 = vor.u32 %v2567, %v2570
        %v2572 = vsel %vm856, %v2571, %v2571
        %v2574 = vshrl.u32 %v2059, 16
        %v2576 = vrot.slane %v2574, 3
        %v2577 = vshll.u32 %v2059, 16
        %v2579 = vrot.slane %v2577, 4
        %v2580 = vor.u32 %v2576, %v2579
        %v2582 = vshrl.u32 %v2061, 16
        %v2584 = vrot.slane %v2582, 3
        %v2585 = vshll.u32 %v2061, 16
        %v2587 = vrot.slane %v2585, 4
        %v2588 = vor.u32 %v2584, %v2587
        %v2589 = vsel %vm856, %v2580, %v2588
        %v2591 = vshrl.u32 %v1826, 16
        %v2593 = vrot.slane %v2591, 3
        %v2594 = vshll.u32 %v1826, 16
        %v2596 = vrot.slane %v2594, 4
        %v2597 = vor.u32 %v2593, %v2596
        %v2599 = vshrl.u32 %v1827, 16
        %v2601 = vrot.slane %v2599, 3
        %v2602 = vshll.u32 %v1827, 16
        %v2604 = vrot.slane %v2602, 4
        %v2605 = vor.u32 %v2601, %v2604
        %v2606 = vsel %vm856, %v2597, %v2605
        %v2608 = vshrl.u32 %v1953, 16
        %v2610 = vrot.slane %v2608, 3
        %v2611 = vshll.u32 %v1953, 16
        %v2613 = vrot.slane %v2611, 4
        %v2614 = vor.u32 %v2610, %v2613
        %v2615 = vsel %vm856, %v2614, %v2614
        %v2617 = vshrl.u32 %v2062, 16
        %v2619 = vrot.slane %v2617, 3
        %v2620 = vshll.u32 %v2062, 16
        %v2622 = vrot.slane %v2620, 4
        %v2623 = vor.u32 %v2619, %v2622
        %v2625 = vshrl.u32 %v2064, 16
        %v2627 = vrot.slane %v2625, 3
        %v2628 = vshll.u32 %v2064, 16
        %v2630 = vrot.slane %v2628, 4
        %v2631 = vor.u32 %v2627, %v2630
        %v2632 = vsel %vm856, %v2623, %v2631
        %v2634 = vshrl.u32 %v1828, 16
        %v2636 = vrot.slane %v2634, 3
        %v2637 = vshll.u32 %v1828, 16
        %v2639 = vrot.slane %v2637, 4
        %v2640 = vor.u32 %v2636, %v2639
        %v2642 = vshrl.u32 %v1829, 16
        %v2644 = vrot.slane %v2642, 3
        %v2645 = vshll.u32 %v1829, 16
        %v2647 = vrot.slane %v2645, 4
        %v2648 = vor.u32 %v2644, %v2647
        %v2649 = vsel %vm856, %v2640, %v2648
        %v2651 = vshrl.u32 %v1961, 16
        %v2653 = vrot.slane %v2651, 3
        %v2654 = vshll.u32 %v1961, 16
        %v2656 = vrot.slane %v2654, 4
        %v2657 = vor.u32 %v2653, %v2656
        %v2658 = vsel %vm856, %v2657, %v2657
        %v2660 = vshrl.u32 %v2065, 16
        %v2662 = vrot.slane %v2660, 3
        %v2663 = vshll.u32 %v2065, 16
        %v2665 = vrot.slane %v2663, 4
        %v2666 = vor.u32 %v2662, %v2665
        %v2668 = vshrl.u32 %v2067, 16
        %v2670 = vrot.slane %v2668, 3
        %v2671 = vshll.u32 %v2067, 16
        %v2673 = vrot.slane %v2671, 4
        %v2674 = vor.u32 %v2670, %v2673
        %v2675 = vsel %vm856, %v2666, %v2674
        %v2677 = vshrl.u32 %v1830, 16
        %v2679 = vrot.slane %v2677, 3
        %v2680 = vshll.u32 %v1830, 16
        %v2682 = vrot.slane %v2680, 4
        %v2683 = vor.u32 %v2679, %v2682
        %v2685 = vshrl.u32 %v1831, 16
        %v2687 = vrot.slane %v2685, 3
        %v2688 = vshll.u32 %v1831, 16
        %v2690 = vrot.slane %v2688, 4
        %v2691 = vor.u32 %v2687, %v2690
        %v2692 = vsel %vm856, %v2683, %v2691
        %v2694 = vshrl.u32 %v1969, 16
        %v2696 = vrot.slane %v2694, 3
        %v2697 = vshll.u32 %v1969, 16
        %v2699 = vrot.slane %v2697, 4
        %v2700 = vor.u32 %v2696, %v2699
        %v2701 = vsel %vm856, %v2700, %v2700
        %v2703 = vshrl.u32 %v2068, 16
        %v2705 = vrot.slane %v2703, 3
        %v2706 = vshll.u32 %v2068, 16
        %v2708 = vrot.slane %v2706, 4
        %v2709 = vor.u32 %v2705, %v2708
        %v2711 = vshrl.u32 %v2070, 16
        %v2713 = vrot.slane %v2711, 3
        %v2714 = vshll.u32 %v2070, 16
        %v2716 = vrot.slane %v2714, 4
        %v2717 = vor.u32 %v2713, %v2716
        %v2718 = vsel %vm856, %v2709, %v2717
        %v2720 = vshrl.u32 %v1832, 16
        %v2722 = vrot.slane %v2720, 3
        %v2723 = vshll.u32 %v1832, 16
        %v2725 = vrot.slane %v2723, 4
        %v2726 = vor.u32 %v2722, %v2725
        %v2728 = vshrl.u32 %v1833, 16
        %v2730 = vrot.slane %v2728, 3
        %v2731 = vshll.u32 %v1833, 16
        %v2733 = vrot.slane %v2731, 4
        %v2734 = vor.u32 %v2730, %v2733
        %v2735 = vsel %vm856, %v2726, %v2734
        %v2737 = vshrl.u32 %v1977, 16
        %v2739 = vrot.slane %v2737, 3
        %v2740 = vshll.u32 %v1977, 16
        %v2742 = vrot.slane %v2740, 4
        %v2743 = vor.u32 %v2739, %v2742
        %v2744 = vsel %vm856, %v2743, %v2743
        %v2746 = vshrl.u32 %v2071, 16
        %v2748 = vrot.slane %v2746, 3
        %v2749 = vshll.u32 %v2071, 16
        %v2751 = vrot.slane %v2749, 4
        %v2752 = vor.u32 %v2748, %v2751
        %v2754 = vshrl.u32 %v2073, 16
        %v2756 = vrot.slane %v2754, 3
        %v2757 = vshll.u32 %v2073, 16
        %v2759 = vrot.slane %v2757, 4
        %v2760 = vor.u32 %v2756, %v2759
        %v2761 = vsel %vm856, %v2752, %v2760
        %s2810 = scalar_lea.vmem [#allocation6], 192
        %v2811 = vld [vmem:[%s2810] sm:$0xf]
        %v2812 = vld [vmem:[%s2810 + $0x4] sm:$0xf]
        %v2813 = vld [vmem:[%s2810 + $0x8] sm:$0xf]
        %v2814 = vld [vmem:[%s2810 + $0xc] sm:$0xf]
        %v2815 = vld [vmem:[%s2810 + $0x10] sm:$0xf]
        %v2816 = vld [vmem:[%s2810 + $0x14] sm:$0xf]
        %v2817 = vld [vmem:[%s2810 + $0x18] sm:$0xf]
        %v2818 = vld [vmem:[%s2810 + $0x1c] sm:$0xf]
        %v2819 = vld [vmem:[%s2810 + $0x20] sm:$0xf]
        %v2820 = vld [vmem:[%s2810 + $0x24] sm:$0xf]
        %v2821 = vld [vmem:[%s2810 + $0x28] sm:$0xf]
        %v2822 = vld [vmem:[%s2810 + $0x2c] sm:$0xf]
        %v2823 = vld [vmem:[%s2810 + $0x30] sm:$0xf]
        %v2824 = vld [vmem:[%s2810 + $0x34] sm:$0xf]
        %v2825 = vld [vmem:[%s2810 + $0x38] sm:$0xf]
        %v2826 = vld [vmem:[%s2810 + $0x3c] sm:$0xf]
        %v2827 = vld [vmem:[%s2810 + $0x40] sm:$0xf]
        %v2828 = vld [vmem:[%s2810 + $0x44] sm:$0xf]
        %v2829 = vld [vmem:[%s2810 + $0x48] sm:$0xf]
        %v2830 = vld [vmem:[%s2810 + $0x4c] sm:$0xf]
        %v2831 = vld [vmem:[%s2810 + $0x50] sm:$0xf]
        %v2832 = vld [vmem:[%s2810 + $0x54] sm:$0xf]
        %v2833 = vld [vmem:[%s2810 + $0x58] sm:$0xf]
        %v2834 = vld [vmem:[%s2810 + $0x5c] sm:$0xf]
        %v2835 = vld [vmem:[%s2810 + $0x60] sm:$0xf]
        %v2836 = vld [vmem:[%s2810 + $0x64] sm:$0xf]
        %v2837 = vld [vmem:[%s2810 + $0x68] sm:$0xf]
        %v2838 = vld [vmem:[%s2810 + $0x6c] sm:$0xf]
        %v2839 = vld [vmem:[%s2810 + $0x70] sm:$0xf]
        %v2840 = vld [vmem:[%s2810 + $0x74] sm:$0xf]
        %v2841 = vld [vmem:[%s2810 + $0x78] sm:$0xf]
        %v2842 = vld [vmem:[%s2810 + $0x7c] sm:$0xf]
        %v2843 = vld [vmem:[%s2810 + $0x80] sm:$0xf]
        %v2844 = vld [vmem:[%s2810 + $0x84] sm:$0xf]
        %v2845 = vld [vmem:[%s2810 + $0x88] sm:$0xf]
        %v2846 = vld [vmem:[%s2810 + $0x8c] sm:$0xf]
        %v2847 = vld [vmem:[%s2810 + $0x90] sm:$0xf]
        %v2848 = vld [vmem:[%s2810 + $0x94] sm:$0xf]
        %v2849 = vld [vmem:[%s2810 + $0x98] sm:$0xf]
        %v2850 = vld [vmem:[%s2810 + $0x9c] sm:$0xf]
        %v2851 = vld [vmem:[%s2810 + $0xa0] sm:$0xf]
        %v2852 = vld [vmem:[%s2810 + $0xa4] sm:$0xf]
        %v2853 = vld [vmem:[%s2810 + $0xa8] sm:$0xf]
        %v2854 = vld [vmem:[%s2810 + $0xac] sm:$0xf]
        %v2855 = vld [vmem:[%s2810 + $0xb0] sm:$0xf]
        %v2856 = vld [vmem:[%s2810 + $0xb4] sm:$0xf]
        %v2857 = vld [vmem:[%s2810 + $0xb8] sm:$0xf]
        %v2858 = vld [vmem:[%s2810 + $0xbc] sm:$0xf]
        %v2907 = vunpack.c.l.b16 %v2811
        %v2908 = vunpack.c.l.b16 %v2812
        %v2909 = vunpack.c.l.b16 %v2813
        %v2910 = vunpack.c.l.b16 %v2814
        %v2911 = vunpack.c.l.b16 %v2815
        %v2912 = vunpack.c.l.b16 %v2816
        %v2913 = vunpack.c.l.b16 %v2817
        %v2914 = vunpack.c.l.b16 %v2818
        %v2915 = vunpack.c.l.b16 %v2819
        %v2916 = vunpack.c.l.b16 %v2820
        %v2917 = vunpack.c.l.b16 %v2821
        %v2918 = vunpack.c.l.b16 %v2822
        %v2919 = vunpack.c.l.b16 %v2823
        %v2920 = vunpack.c.l.b16 %v2824
        %v2921 = vunpack.c.l.b16 %v2825
        %v2922 = vunpack.c.l.b16 %v2826
        %v2923 = vunpack.c.l.b16 %v2827
        %v2924 = vunpack.c.l.b16 %v2828
        %v2925 = vunpack.c.l.b16 %v2829
        %v2926 = vunpack.c.l.b16 %v2830
        %v2927 = vunpack.c.l.b16 %v2831
        %v2928 = vunpack.c.l.b16 %v2832
        %v2929 = vunpack.c.l.b16 %v2833
        %v2930 = vunpack.c.l.b16 %v2834
        %v2931 = vunpack.c.l.b16 %v2835
        %v2932 = vunpack.c.l.b16 %v2836
        %v2933 = vunpack.c.l.b16 %v2837
        %v2934 = vunpack.c.l.b16 %v2838
        %v2935 = vunpack.c.l.b16 %v2839
        %v2936 = vunpack.c.l.b16 %v2840
        %v2937 = vunpack.c.l.b16 %v2841
        %v2938 = vunpack.c.l.b16 %v2842
        %v2939 = vunpack.c.l.b16 %v2843
        %v2940 = vunpack.c.l.b16 %v2844
        %v2941 = vunpack.c.l.b16 %v2845
        %v2942 = vunpack.c.l.b16 %v2846
        %v2943 = vunpack.c.l.b16 %v2847
        %v2944 = vunpack.c.l.b16 %v2848
        %v2945 = vunpack.c.l.b16 %v2849
        %v2946 = vunpack.c.l.b16 %v2850
        %v2947 = vunpack.c.l.b16 %v2851
        %v2948 = vunpack.c.l.b16 %v2852
        %v2949 = vunpack.c.l.b16 %v2853
        %v2950 = vunpack.c.l.b16 %v2854
        %v2951 = vunpack.c.l.b16 %v2855
        %v2952 = vunpack.c.l.b16 %v2856
        %v2953 = vunpack.c.l.b16 %v2857
        %v2954 = vunpack.c.l.b16 %v2858
        %v2955 = vpack.c.b16 %v2908, %v2907
        %v2956 = vpack.c.b16 %v2910, %v2909
        %v2957 = vpack.c.b16 %v2912, %v2911
        %v2958 = vpack.c.b16 %v2914, %v2913
        %v2959 = vpack.c.b16 %v2916, %v2915
        %v2960 = vpack.c.b16 %v2918, %v2917
        %v2961 = vpack.c.b16 %v2920, %v2919
        %v2962 = vpack.c.b16 %v2922, %v2921
        %v2963 = vpack.c.b16 %v2924, %v2923
        %v2964 = vpack.c.b16 %v2926, %v2925
        %v2965 = vpack.c.b16 %v2928, %v2927
        %v2966 = vpack.c.b16 %v2930, %v2929
        %v2967 = vpack.c.b16 %v2932, %v2931
        %v2968 = vpack.c.b16 %v2934, %v2933
        %v2969 = vpack.c.b16 %v2936, %v2935
        %v2970 = vpack.c.b16 %v2938, %v2937
        %v2971 = vpack.c.b16 %v2940, %v2939
        %v2972 = vpack.c.b16 %v2942, %v2941
        %v2973 = vpack.c.b16 %v2944, %v2943
        %v2974 = vpack.c.b16 %v2946, %v2945
        %v2975 = vpack.c.b16 %v2948, %v2947
        %v2976 = vpack.c.b16 %v2950, %v2949
        %v2977 = vpack.c.b16 %v2952, %v2951
        %v2978 = vpack.c.b16 %v2954, %v2953
        %3003 = vmatprep.subr.bf16.mxu0 0
        %3004 = vmatpush1.bf16.msra.mxu0 %v2955
        %3005 = vmatprep.subr.bf16.mxu0 0
        %3006 = vmatpush1.bf16.msra.mxu0 %v2956
        %3007 = vmatprep.subr.bf16.mxu0 0
        %3008 = vmatpush1.bf16.msra.mxu0 %v2957
        %3009 = vmatprep.subr.bf16.mxu0 0
        %3010 = vmatpush1.bf16.msra.mxu0 %v2958
        %3011 = vmatprep.subr.bf16.mxu0 0
        %3012 = vmatpush1.bf16.msra.mxu0 %v2959
        %3013 = vmatprep.subr.bf16.mxu0 0
        %3014 = vmatpush1.bf16.msra.mxu0 %v2960
        %3015 = vmatprep.subr.bf16.mxu0 0
        %3016 = vmatpush1.bf16.msra.mxu0 %v2961
        %3017 = vmatprep.subr.bf16.mxu0 0
        %3018 = vmatpush1.bf16.msra.mxu0 %v2962
        %3019 = vmatprep.subr.bf16.mxu0 0
        %3020 = vmatpush1.bf16.msra.mxu0 %v2963
        %3021 = vmatprep.subr.bf16.mxu0 0
        %3022 = vmatpush1.bf16.msra.mxu0 %v2964
        %3023 = vmatprep.subr.bf16.mxu0 0
        %3024 = vmatpush1.bf16.msra.mxu0 %v2965
        %3025 = vmatprep.subr.bf16.mxu0 0
        %3026 = vmatpush1.bf16.msra.mxu0 %v2966
        %3027 = vmatprep.subr.bf16.mxu0 0
        %3028 = vmatpush1.bf16.msra.mxu0 %v2967
        %3029 = vmatprep.subr.bf16.mxu0 0
        %3030 = vmatpush1.bf16.msra.mxu0 %v2968
        %3031 = vmatprep.subr.bf16.mxu0 0
        %3032 = vmatpush1.bf16.msra.mxu0 %v2969
        %3033 = vmatprep.subr.bf16.mxu0 0
        %3034 = vmatpush1.bf16.msra.mxu0 %v2970
        %3035 = vmatprep.mubr.bf16.mxu0 %v2099
        %3036 = vmatmul.mubr.bf16.gmra.mrb[0].mxu0 %v2090
        %v3037 = vpop.f32.mrb[0].mxu0
        %v3038 = vadd.f32 0.0, %v3037
        %v3039 = vpop.f32.mrb[0].mxu0
        %v3040 = vpop.f32.mrb[0].mxu0
        %v3041 = vadd.f32 0.0, %v3040
        %v3042 = vpop.f32.mrb[0].mxu0
        %3043 = vmatprep.mubr.bf16.mxu0 %v2142
        %3044 = vmatmul.mubr.bf16.gmra.mrb[0].mxu0 %v2133
        %v3045 = vpop.f32.mrb[0].mxu0
        %v3046 = vadd.f32 0.0, %v3045
        %v3047 = vpop.f32.mrb[0].mxu0
        %v3048 = vpop.f32.mrb[0].mxu0
        %v3049 = vadd.f32 0.0, %v3048
        %v3050 = vpop.f32.mrb[0].mxu0
        %3051 = vmatprep.mubr.bf16.mxu0 %v2185
        %3052 = vmatmul.mubr.bf16.gmra.mrb[0].mxu0 %v2176
        %v3053 = vpop.f32.mrb[0].mxu0
        %v3054 = vadd.f32 0.0, %v3053
        %v3055 = vpop.f32.mrb[0].mxu0
        %v3056 = vpop.f32.mrb[0].mxu0
        %v3057 = vadd.f32 0.0, %v3056
        %v3058 = vpop.f32.mrb[0].mxu0
        %3059 = vmatprep.mubr.bf16.mxu0 %v2228
        %3060 = vmatmul.mubr.bf16.gmra.mrb[0].mxu0 %v2219
        %v3061 = vpop.f32.mrb[0].mxu0
        %v3062 = vadd.f32 0.0, %v3061
        %v3063 = vpop.f32.mrb[0].mxu0
        %v3064 = vpop.f32.mrb[0].mxu0
        %v3065 = vadd.f32 0.0, %v3064
        %v3066 = vpop.f32.mrb[0].mxu0
        %3067 = vmatprep.mubr.bf16.mxu0 %v2271
        %3068 = vmatmul.mubr.bf16.gmra.mrb[0].mxu0 %v2262
        %v3069 = vpop.f32.mrb[0].mxu0
        %v3070 = vadd.f32 0.0, %v3069
        %v3071 = vpop.f32.mrb[0].mxu0
        %v3072 = vpop.f32.mrb[0].mxu0
        %v3073 = vadd.f32 0.0, %v3072
        %v3074 = vpop.f32.mrb[0].mxu0
        %3075 = vmatprep.mubr.bf16.mxu0 %v2314
        %3076 = vmatmul.mubr.bf16.gmra.mrb[0].mxu0 %v2305
        %v3077 = vpop.f32.mrb[0].mxu0
        %v3078 = vadd.f32 0.0, %v3077
        %v3079 = vpop.f32.mrb[0].mxu0
        %v3080 = vpop.f32.mrb[0].mxu0
        %v3081 = vadd.f32 0.0, %v3080
        %v3082 = vpop.f32.mrb[0].mxu0
        %3083 = vmatprep.mubr.bf16.mxu0 %v2357
        %3084 = vmatmul.mubr.bf16.gmra.mrb[0].mxu0 %v2348
        %v3085 = vpop.f32.mrb[0].mxu0
        %v3086 = vadd.f32 0.0, %v3085
        %v3087 = vpop.f32.mrb[0].mxu0
        %v3088 = vpop.f32.mrb[0].mxu0
        %v3089 = vadd.f32 0.0, %v3088
        %v3090 = vpop.f32.mrb[0].mxu0
        %3091 = vmatprep.mubr.bf16.mxu0 %v2400
        %3092 = vmatmul.mubr.bf16.gmra.mrb[0].mxu0 %v2391
        %v3093 = vpop.f32.mrb[0].mxu0
        %v3094 = vadd.f32 0.0, %v3093
        %v3095 = vpop.f32.mrb[0].mxu0
        %v3096 = vpop.f32.mrb[0].mxu0
        %v3097 = vadd.f32 0.0, %v3096
        %v3098 = vpop.f32.mrb[0].mxu0
        %3099 = vmatprep.mubr.bf16.mxu0 %v2443
        %3100 = vmatmul.mubr.bf16.gmra.mrb[0].mxu0 %v2434
        %v3101 = vpop.f32.mrb[0].mxu0
        %v3102 = vadd.f32 0.0, %v3101
        %v3103 = vpop.f32.mrb[0].mxu0
        %v3104 = vpop.f32.mrb[0].mxu0
        %v3105 = vadd.f32 0.0, %v3104
        %v3106 = vpop.f32.mrb[0].mxu0
        %3107 = vmatprep.mubr.bf16.mxu0 %v2486
        %3108 = vmatmul.mubr.bf16.gmra.mrb[0].mxu0 %v2477
        %v3109 = vpop.f32.mrb[0].mxu0
        %v3110 = vadd.f32 0.0, %v3109
        %v3111 = vpop.f32.mrb[0].mxu0
        %v3112 = vpop.f32.mrb[0].mxu0
        %v3113 = vadd.f32 0.0, %v3112
        %v3114 = vpop.f32.mrb[0].mxu0
        %3115 = vmatprep.mubr.bf16.mxu0 %v2529
        %3116 = vmatmul.mubr.bf16.gmra.mrb[0].mxu0 %v2520
        %v3117 = vpop.f32.mrb[0].mxu0
        %v3118 = vadd.f32 0.0, %v3117
        %v3119 = vpop.f32.mrb[0].mxu0
        %v3120 = vpop.f32.mrb[0].mxu0
        %v3121 = vadd.f32 0.0, %v3120
        %v3122 = vpop.f32.mrb[0].mxu0
        %3123 = vmatprep.mubr.bf16.mxu0 %v2572
        %3124 = vmatmul.mubr.bf16.gmra.mrb[0].mxu0 %v2563
        %v3125 = vpop.f32.mrb[0].mxu0
        %v3126 = vadd.f32 0.0, %v3125
        %v3127 = vpop.f32.mrb[0].mxu0
        %v3128 = vpop.f32.mrb[0].mxu0
        %v3129 = vadd.f32 0.0, %v3128
        %v3130 = vpop.f32.mrb[0].mxu0
        %3131 = vmatprep.mubr.bf16.mxu0 %v2615
        %3132 = vmatmul.mubr.bf16.gmra.mrb[0].mxu0 %v2606
        %v3133 = vpop.f32.mrb[0].mxu0
        %v3134 = vadd.f32 0.0, %v3133
        %v3135 = vpop.f32.mrb[0].mxu0
        %v3136 = vpop.f32.mrb[0].mxu0
        %v3137 = vadd.f32 0.0, %v3136
        %v3138 = vpop.f32.mrb[0].mxu0
        %3139 = vmatprep.mubr.bf16.mxu0 %v2658
        %3140 = vmatmul.mubr.bf16.gmra.mrb[0].mxu0 %v2649
        %v3141 = vpop.f32.mrb[0].mxu0
        %v3142 = vadd.f32 0.0, %v3141
        %v3143 = vpop.f32.mrb[0].mxu0
        %v3144 = vpop.f32.mrb[0].mxu0
        %v3145 = vadd.f32 0.0, %v3144
        %v3146 = vpop.f32.mrb[0].mxu0
        %3147 = vmatprep.mubr.bf16.mxu0 %v2701
        %3148 = vmatmul.mubr.bf16.gmra.mrb[0].mxu0 %v2692
        %v3149 = vpop.f32.mrb[0].mxu0
        %v3150 = vadd.f32 0.0, %v3149
        %v3151 = vpop.f32.mrb[0].mxu0
        %v3152 = vpop.f32.mrb[0].mxu0
        %v3153 = vadd.f32 0.0, %v3152
        %v3154 = vpop.f32.mrb[0].mxu0
        %3155 = vmatprep.mubr.bf16.mxu0 %v2744
        %3156 = vmatmul.mubr.bf16.gmra.mrb[0].mxu0 %v2735
        %v3157 = vpop.f32.mrb[0].mxu0
        %v3158 = vadd.f32 0.0, %v3157
        %v3159 = vpop.f32.mrb[0].mxu0
        %v3160 = vpop.f32.mrb[0].mxu0
        %v3161 = vadd.f32 0.0, %v3160
        %v3162 = vpop.f32.mrb[0].mxu0
        %3163 = vdwg.mxu0
        %3164 = vmatprep.subr.bf16.mxu0 0
        %3165 = vmatpush1.bf16.msra.mxu0 %v2971
        %3166 = vmatprep.subr.bf16.mxu0 0
        %3167 = vmatpush1.bf16.msra.mxu0 %v2972
        %3168 = vmatprep.subr.bf16.mxu0 0
        %3169 = vmatpush1.bf16.msra.mxu0 %v2973
        %3170 = vmatprep.subr.bf16.mxu0 0
        %3171 = vmatpush1.bf16.msra.mxu0 %v2974
        %3172 = vmatprep.subr.bf16.mxu0 0
        %3173 = vmatpush1.bf16.msra.mxu0 %v2975
        %3174 = vmatprep.subr.bf16.mxu0 0
        %3175 = vmatpush1.bf16.msra.mxu0 %v2976
        %3176 = vmatprep.subr.bf16.mxu0 0
        %3177 = vmatpush1.bf16.msra.mxu0 %v2977
        %3178 = vmatprep.subr.bf16.mxu0 0
        %3179 = vmatpush1.bf16.msra.mxu0 %v2978
        %3180 = vmatprep.subr.bf16.mxu0 0
        %3181 = vmatpush1.bf16.msra.mxu0 0
        %3182 = vmatprep.subr.bf16.mxu0 0
        %3183 = vmatpush1.bf16.msra.mxu0 0
        %3184 = vmatprep.subr.bf16.mxu0 0
        %3185 = vmatpush1.bf16.msra.mxu0 0
        %3186 = vmatprep.subr.bf16.mxu0 0
        %3187 = vmatpush1.bf16.msra.mxu0 0
        %3188 = vmatprep.subr.bf16.mxu0 0
        %3189 = vmatpush1.bf16.msra.mxu0 0
        %3190 = vmatprep.subr.bf16.mxu0 0
        %3191 = vmatpush1.bf16.msra.mxu0 0
        %3192 = vmatprep.subr.bf16.mxu0 0
        %3193 = vmatpush1.bf16.msra.mxu0 0
        %3194 = vmatprep.subr.bf16.mxu0 0
        %3195 = vmatpush1.bf16.msra.mxu0 0
        %3196 = vmatprep.mubr.bf16.mxu0 0
        %3197 = vmatmul.mubr.bf16.gmra.mrb[0].mxu0 %v2116
        %v3198 = vpop.f32.mrb[0].mxu0
        %v3199 = vadd.f32 %v3038, %v3198
        %v3200 = vpop.f32.mrb[0].mxu0
        %v3201 = vpop.f32.mrb[0].mxu0
        %v3202 = vadd.f32 %v3041, %v3201
        %v3203 = vpop.f32.mrb[0].mxu0
        %3204 = vmatprep.mubr.bf16.mxu0 0
        %3205 = vmatmul.mubr.bf16.gmra.mrb[0].mxu0 %v2159
        %v3206 = vpop.f32.mrb[0].mxu0
        %v3207 = vadd.f32 %v3046, %v3206
        %v3208 = vpop.f32.mrb[0].mxu0
        %v3209 = vpop.f32.mrb[0].mxu0
        %v3210 = vadd.f32 %v3049, %v3209
        %v3211 = vpop.f32.mrb[0].mxu0
        %3212 = vmatprep.mubr.bf16.mxu0 0
        %3213 = vmatmul.mubr.bf16.gmra.mrb[0].mxu0 %v2202
        %v3214 = vpop.f32.mrb[0].mxu0
        %v3215 = vadd.f32 %v3054, %v3214
        %v3216 = vpop.f32.mrb[0].mxu0
        %v3217 = vpop.f32.mrb[0].mxu0
        %v3218 = vadd.f32 %v3057, %v3217
        %v3219 = vpop.f32.mrb[0].mxu0
        %3220 = vmatprep.mubr.bf16.mxu0 0
        %3221 = vmatmul.mubr.bf16.gmra.mrb[0].mxu0 %v2245
        %v3222 = vpop.f32.mrb[0].mxu0
        %v3223 = vadd.f32 %v3062, %v3222
        %v3224 = vpop.f32.mrb[0].mxu0
        %v3225 = vpop.f32.mrb[0].mxu0
        %v3226 = vadd.f32 %v3065, %v3225
        %v3227 = vpop.f32.mrb[0].mxu0
        %3228 = vmatprep.mubr.bf16.mxu0 0
        %3229 = vmatmul.mubr.bf16.gmra.mrb[0].mxu0 %v2288
        %v3230 = vpop.f32.mrb[0].mxu0
        %v3231 = vadd.f32 %v3070, %v3230
        %v3232 = vpop.f32.mrb[0].mxu0
        %v3233 = vpop.f32.mrb[0].mxu0
        %v3234 = vadd.f32 %v3073, %v3233
        %v3235 = vpop.f32.mrb[0].mxu0
        %3236 = vmatprep.mubr.bf16.mxu0 0
        %3237 = vmatmul.mubr.bf16.gmra.mrb[0].mxu0 %v2331
        %v3238 = vpop.f32.mrb[0].mxu0
        %v3239 = vadd.f32 %v3078, %v3238
        %v3240 = vpop.f32.mrb[0].mxu0
        %v3241 = vpop.f32.mrb[0].mxu0
        %v3242 = vadd.f32 %v3081, %v3241
        %v3243 = vpop.f32.mrb[0].mxu0
        %3244 = vmatprep.mubr.bf16.mxu0 0
        %3245 = vmatmul.mubr.bf16.gmra.mrb[0].mxu0 %v2374
        %v3246 = vpop.f32.mrb[0].mxu0
        %v3247 = vadd.f32 %v3086, %v3246
        %v3248 = vpop.f32.mrb[0].mxu0
        %v3249 = vpop.f32.mrb[0].mxu0
        %v3250 = vadd.f32 %v3089, %v3249
        %v3251 = vpop.f32.mrb[0].mxu0
        %3252 = vmatprep.mubr.bf16.mxu0 0
        %3253 = vmatmul.mubr.bf16.gmra.mrb[0].mxu0 %v2417
        %v3254 = vpop.f32.mrb[0].mxu0
        %v3255 = vadd.f32 %v3094, %v3254
        %v3256 = vpop.f32.mrb[0].mxu0
        %v3257 = vpop.f32.mrb[0].mxu0
        %v3258 = vadd.f32 %v3097, %v3257
        %v3259 = vpop.f32.mrb[0].mxu0
        %3260 = vmatprep.mubr.bf16.mxu0 0
        %3261 = vmatmul.mubr.bf16.gmra.mrb[0].mxu0 %v2460
        %v3262 = vpop.f32.mrb[0].mxu0
        %v3263 = vadd.f32 %v3102, %v3262
        %v3264 = vpop.f32.mrb[0].mxu0
        %v3265 = vpop.f32.mrb[0].mxu0
        %v3266 = vadd.f32 %v3105, %v3265
        %v3267 = vpop.f32.mrb[0].mxu0
        %3268 = vmatprep.mubr.bf16.mxu0 0
        %3269 = vmatmul.mubr.bf16.gmra.mrb[0].mxu0 %v2503
        %v3270 = vpop.f32.mrb[0].mxu0
        %v3271 = vadd.f32 %v3110, %v3270
        %v3272 = vpop.f32.mrb[0].mxu0
        %v3273 = vpop.f32.mrb[0].mxu0
        %v3274 = vadd.f32 %v3113, %v3273
        %v3275 = vpop.f32.mrb[0].mxu0
        %3276 = vmatprep.mubr.bf16.mxu0 0
        %3277 = vmatmul.mubr.bf16.gmra.mrb[0].mxu0 %v2546
        %v3278 = vpop.f32.mrb[0].mxu0
        %v3279 = vadd.f32 %v3118, %v3278
        %v3280 = vpop.f32.mrb[0].mxu0
        %v3281 = vpop.f32.mrb[0].mxu0
        %v3282 = vadd.f32 %v3121, %v3281
        %v3283 = vpop.f32.mrb[0].mxu0
        %3284 = vmatprep.mubr.bf16.mxu0 0
        %3285 = vmatmul.mubr.bf16.gmra.mrb[0].mxu0 %v2589
        %v3286 = vpop.f32.mrb[0].mxu0
        %v3287 = vadd.f32 %v3126, %v3286
        %v3288 = vpop.f32.mrb[0].mxu0
        %v3289 = vpop.f32.mrb[0].mxu0
        %v3290 = vadd.f32 %v3129, %v3289
        %v3291 = vpop.f32.mrb[0].mxu0
        %3292 = vmatprep.mubr.bf16.mxu0 0
        %3293 = vmatmul.mubr.bf16.gmra.mrb[0].mxu0 %v2632
        %v3294 = vpop.f32.mrb[0].mxu0
        %v3295 = vadd.f32 %v3134, %v3294
        %v3296 = vpop.f32.mrb[0].mxu0
        %v3297 = vpop.f32.mrb[0].mxu0
        %v3298 = vadd.f32 %v3137, %v3297
        %v3299 = vpop.f32.mrb[0].mxu0
        %3300 = vmatprep.mubr.bf16.mxu0 0
        %3301 = vmatmul.mubr.bf16.gmra.mrb[0].mxu0 %v2675
        %v3302 = vpop.f32.mrb[0].mxu0
        %v3303 = vadd.f32 %v3142, %v3302
        %v3304 = vpop.f32.mrb[0].mxu0
        %v3305 = vpop.f32.mrb[0].mxu0
        %v3306 = vadd.f32 %v3145, %v3305
        %v3307 = vpop.f32.mrb[0].mxu0
        %3308 = vmatprep.mubr.bf16.mxu0 0
        %3309 = vmatmul.mubr.bf16.gmra.mrb[0].mxu0 %v2718
        %v3310 = vpop.f32.mrb[0].mxu0
        %v3311 = vadd.f32 %v3150, %v3310
        %v3312 = vpop.f32.mrb[0].mxu0
        %v3313 = vpop.f32.mrb[0].mxu0
        %v3314 = vadd.f32 %v3153, %v3313
        %v3315 = vpop.f32.mrb[0].mxu0
        %3316 = vmatprep.mubr.bf16.mxu0 0
        %3317 = vmatmul.mubr.bf16.gmra.mrb[0].mxu0 %v2761
        %v3318 = vpop.f32.mrb[0].mxu0
        %v3319 = vadd.f32 %v3158, %v3318
        %v3320 = vpop.f32.mrb[0].mxu0
        %v3321 = vpop.f32.mrb[0].mxu0
        %v3322 = vadd.f32 %v3161, %v3321
        %v3323 = vpop.f32.mrb[0].mxu0
        %3324 = vdwg.mxu0
        %v3373 = vunpack.c.l.b16 %v1593
        %v3374 = vunpack.c.l.b16 %v1594
        %v3375 = vunpack.c.l.b16 %v1595
        %v3376 = vunpack.c.l.b16 %v1596
        %v3377 = vunpack.c.l.b16 %v1597
        %v3378 = vunpack.c.l.b16 %v1598
        %v3379 = vunpack.c.l.b16 %v1599
        %v3380 = vunpack.c.l.b16 %v1600
        %v3381 = vunpack.c.l.b16 %v1601
        %v3382 = vunpack.c.l.b16 %v1602
        %v3383 = vunpack.c.l.b16 %v1603
        %v3384 = vunpack.c.l.b16 %v1604
        %v3385 = vunpack.c.l.b16 %v1605
        %v3386 = vunpack.c.l.b16 %v1606
        %v3387 = vunpack.c.l.b16 %v1607
        %v3388 = vunpack.c.l.b16 %v1608
        %v3389 = vunpack.c.l.b16 %v1609
        %v3390 = vunpack.c.l.b16 %v1610
        %v3391 = vunpack.c.l.b16 %v1611
        %v3392 = vunpack.c.l.b16 %v1612
        %v3393 = vunpack.c.l.b16 %v1613
        %v3394 = vunpack.c.l.b16 %v1614
        %v3395 = vunpack.c.l.b16 %v1615
        %v3396 = vunpack.c.l.b16 %v1616
        %v3397 = vunpack.c.l.b16 %v1617
        %v3398 = vunpack.c.l.b16 %v1618
        %v3399 = vunpack.c.l.b16 %v1619
        %v3400 = vunpack.c.l.b16 %v1620
        %v3401 = vunpack.c.l.b16 %v1621
        %v3402 = vunpack.c.l.b16 %v1622
        %v3403 = vunpack.c.l.b16 %v1623
        %v3404 = vunpack.c.l.b16 %v1624
        %v3405 = vunpack.c.l.b16 %v1625
        %v3406 = vunpack.c.l.b16 %v1626
        %v3407 = vunpack.c.l.b16 %v1627
        %v3408 = vunpack.c.l.b16 %v1628
        %v3409 = vunpack.c.l.b16 %v1629
        %v3410 = vunpack.c.l.b16 %v1630
        %v3411 = vunpack.c.l.b16 %v1631
        %v3412 = vunpack.c.l.b16 %v1632
        %v3413 = vunpack.c.l.b16 %v1633
        %v3414 = vunpack.c.l.b16 %v1634
        %v3415 = vunpack.c.l.b16 %v1635
        %v3416 = vunpack.c.l.b16 %v1636
        %v3417 = vunpack.c.l.b16 %v1637
        %v3418 = vunpack.c.l.b16 %v1638
        %v3419 = vunpack.c.l.b16 %v1639
        %v3420 = vunpack.c.l.b16 %v1640
        %v3421 = vpack.c.b16 %v3374, %v3373
        %v3422 = vpack.c.b16 %v3376, %v3375
        %v3423 = vpack.c.b16 %v3378, %v3377
        %v3424 = vpack.c.b16 %v3380, %v3379
        %v3425 = vpack.c.b16 %v3382, %v3381
        %v3426 = vpack.c.b16 %v3384, %v3383
        %v3427 = vpack.c.b16 %v3386, %v3385
        %v3428 = vpack.c.b16 %v3388, %v3387
        %v3429 = vpack.c.b16 %v3390, %v3389
        %v3430 = vpack.c.b16 %v3392, %v3391
        %v3431 = vpack.c.b16 %v3394, %v3393
        %v3432 = vpack.c.b16 %v3396, %v3395
        %v3433 = vpack.c.b16 %v3398, %v3397
        %v3434 = vpack.c.b16 %v3400, %v3399
        %v3435 = vpack.c.b16 %v3402, %v3401
        %v3436 = vpack.c.b16 %v3404, %v3403
        %v3437 = vpack.c.b16 %v3406, %v3405
        %v3438 = vpack.c.b16 %v3408, %v3407
        %v3439 = vpack.c.b16 %v3410, %v3409
        %v3440 = vpack.c.b16 %v3412, %v3411
        %v3441 = vpack.c.b16 %v3414, %v3413
        %v3442 = vpack.c.b16 %v3416, %v3415
        %v3443 = vpack.c.b16 %v3418, %v3417
        %v3444 = vpack.c.b16 %v3420, %v3419
        %3469 = vmatprep.subr.bf16.mxu0 0
        %3470 = vmatpush1.bf16.msra.mxu0 %v3421
        %3471 = vmatprep.subr.bf16.mxu0 0
        %3472 = vmatpush1.bf16.msra.mxu0 %v3422
        %3473 = vmatprep.subr.bf16.mxu0 0
        %3474 = vmatpush1.bf16.msra.mxu0 %v3423
        %3475 = vmatprep.subr.bf16.mxu0 0
        %3476 = vmatpush1.bf16.msra.mxu0 %v3424
        %3477 = vmatprep.subr.bf16.mxu0 0
        %3478 = vmatpush1.bf16.msra.mxu0 %v3425
        %3479 = vmatprep.subr.bf16.mxu0 0
        %3480 = vmatpush1.bf16.msra.mxu0 %v3426
        %3481 = vmatprep.subr.bf16.mxu0 0
        %3482 = vmatpush1.bf16.msra.mxu0 %v3427
        %3483 = vmatprep.subr.bf16.mxu0 0
        %3484 = vmatpush1.bf16.msra.mxu0 %v3428
        %3485 = vmatprep.subr.bf16.mxu0 0
        %3486 = vmatpush1.bf16.msra.mxu0 %v3429
        %3487 = vmatprep.subr.bf16.mxu0 0
        %3488 = vmatpush1.bf16.msra.mxu0 %v3430
        %3489 = vmatprep.subr.bf16.mxu0 0
        %3490 = vmatpush1.bf16.msra.mxu0 %v3431
        %3491 = vmatprep.subr.bf16.mxu0 0
        %3492 = vmatpush1.bf16.msra.mxu0 %v3432
        %3493 = vmatprep.subr.bf16.mxu0 0
        %3494 = vmatpush1.bf16.msra.mxu0 %v3433
        %3495 = vmatprep.subr.bf16.mxu0 0
        %3496 = vmatpush1.bf16.msra.mxu0 %v3434
        %3497 = vmatprep.subr.bf16.mxu0 0
        %3498 = vmatpush1.bf16.msra.mxu0 %v3435
        %3499 = vmatprep.subr.bf16.mxu0 0
        %3500 = vmatpush1.bf16.msra.mxu0 %v3436
        %3501 = vmatprep.mubr.bf16.mxu0 %v882
        %3502 = vmatmul.mubr.bf16.gmra.mrb[0].mxu0 %v873
        %v3503 = vpop.f32.mrb[0].mxu0
        %v3504 = vadd.f32 %v3199, %v3503
        %v3505 = vpop.f32.mrb[0].mxu0
        %v3506 = vpop.f32.mrb[0].mxu0
        %v3507 = vadd.f32 %v3202, %v3506
        %v3508 = vpop.f32.mrb[0].mxu0
        %3509 = vmatprep.mubr.bf16.mxu0 %v925
        %3510 = vmatmul.mubr.bf16.gmra.mrb[0].mxu0 %v916
        %v3511 = vpop.f32.mrb[0].mxu0
        %v3512 = vadd.f32 %v3207, %v3511
        %v3513 = vpop.f32.mrb[0].mxu0
        %v3514 = vpop.f32.mrb[0].mxu0
        %v3515 = vadd.f32 %v3210, %v3514
        %v3516 = vpop.f32.mrb[0].mxu0
        %3517 = vmatprep.mubr.bf16.mxu0 %v968
        %3518 = vmatmul.mubr.bf16.gmra.mrb[0].mxu0 %v959
        %v3519 = vpop.f32.mrb[0].mxu0
        %v3520 = vadd.f32 %v3215, %v3519
        %v3521 = vpop.f32.mrb[0].mxu0
        %v3522 = vpop.f32.mrb[0].mxu0
        %v3523 = vadd.f32 %v3218, %v3522
        %v3524 = vpop.f32.mrb[0].mxu0
        %3525 = vmatprep.mubr.bf16.mxu0 %v1011
        %3526 = vmatmul.mubr.bf16.gmra.mrb[0].mxu0 %v1002
        %v3527 = vpop.f32.mrb[0].mxu0
        %v3528 = vadd.f32 %v3223, %v3527
        %v3529 = vpop.f32.mrb[0].mxu0
        %v3530 = vpop.f32.mrb[0].mxu0
        %v3531 = vadd.f32 %v3226, %v3530
        %v3532 = vpop.f32.mrb[0].mxu0
        %3533 = vmatprep.mubr.bf16.mxu0 %v1054
        %3534 = vmatmul.mubr.bf16.gmra.mrb[0].mxu0 %v1045
        %v3535 = vpop.f32.mrb[0].mxu0
        %v3536 = vadd.f32 %v3231, %v3535
        %v3537 = vpop.f32.mrb[0].mxu0
        %v3538 = vpop.f32.mrb[0].mxu0
        %v3539 = vadd.f32 %v3234, %v3538
        %v3540 = vpop.f32.mrb[0].mxu0
        %3541 = vmatprep.mubr.bf16.mxu0 %v1097
        %3542 = vmatmul.mubr.bf16.gmra.mrb[0].mxu0 %v1088
        %v3543 = vpop.f32.mrb[0].mxu0
        %v3544 = vadd.f32 %v3239, %v3543
        %v3545 = vpop.f32.mrb[0].mxu0
        %v3546 = vpop.f32.mrb[0].mxu0
        %v3547 = vadd.f32 %v3242, %v3546
        %v3548 = vpop.f32.mrb[0].mxu0
        %3549 = vmatprep.mubr.bf16.mxu0 %v1140
        %3550 = vmatmul.mubr.bf16.gmra.mrb[0].mxu0 %v1131
        %v3551 = vpop.f32.mrb[0].mxu0
        %v3552 = vadd.f32 %v3247, %v3551
        %v3553 = vpop.f32.mrb[0].mxu0
        %v3554 = vpop.f32.mrb[0].mxu0
        %v3555 = vadd.f32 %v3250, %v3554
        %v3556 = vpop.f32.mrb[0].mxu0
        %3557 = vmatprep.mubr.bf16.mxu0 %v1183
        %3558 = vmatmul.mubr.bf16.gmra.mrb[0].mxu0 %v1174
        %v3559 = vpop.f32.mrb[0].mxu0
        %v3560 = vadd.f32 %v3255, %v3559
        %v3561 = vpop.f32.mrb[0].mxu0
        %v3562 = vpop.f32.mrb[0].mxu0
        %v3563 = vadd.f32 %v3258, %v3562
        %v3564 = vpop.f32.mrb[0].mxu0
        %3565 = vmatprep.mubr.bf16.mxu0 %v1226
        %3566 = vmatmul.mubr.bf16.gmra.mrb[0].mxu0 %v1217
        %v3567 = vpop.f32.mrb[0].mxu0
        %v3568 = vadd.f32 %v3263, %v3567
        %v3569 = vpop.f32.mrb[0].mxu0
        %v3570 = vpop.f32.mrb[0].mxu0
        %v3571 = vadd.f32 %v3266, %v3570
        %v3572 = vpop.f32.mrb[0].mxu0
        %3573 = vmatprep.mubr.bf16.mxu0 %v1269
        %3574 = vmatmul.mubr.bf16.gmra.mrb[0].mxu0 %v1260
        %v3575 = vpop.f32.mrb[0].mxu0
        %v3576 = vadd.f32 %v3271, %v3575
        %v3577 = vpop.f32.mrb[0].mxu0
        %v3578 = vpop.f32.mrb[0].mxu0
        %v3579 = vadd.f32 %v3274, %v3578
        %v3580 = vpop.f32.mrb[0].mxu0
        %3581 = vmatprep.mubr.bf16.mxu0 %v1312
        %3582 = vmatmul.mubr.bf16.gmra.mrb[0].mxu0 %v1303
        %v3583 = vpop.f32.mrb[0].mxu0
        %v3584 = vadd.f32 %v3279, %v3583
        %v3585 = vpop.f32.mrb[0].mxu0
        %v3586 = vpop.f32.mrb[0].mxu0
        %v3587 = vadd.f32 %v3282, %v3586
        %v3588 = vpop.f32.mrb[0].mxu0
        %3589 = vmatprep.mubr.bf16.mxu0 %v1355
        %3590 = vmatmul.mubr.bf16.gmra.mrb[0].mxu0 %v1346
        %v3591 = vpop.f32.mrb[0].mxu0
        %v3592 = vadd.f32 %v3287, %v3591
        %v3593 = vpop.f32.mrb[0].mxu0
        %v3594 = vpop.f32.mrb[0].mxu0
        %v3595 = vadd.f32 %v3290, %v3594
        %v3596 = vpop.f32.mrb[0].mxu0
        %3597 = vmatprep.mubr.bf16.mxu0 %v1398
        %3598 = vmatmul.mubr.bf16.gmra.mrb[0].mxu0 %v1389
        %v3599 = vpop.f32.mrb[0].mxu0
        %v3600 = vadd.f32 %v3295, %v3599
        %v3601 = vpop.f32.mrb[0].mxu0
        %v3602 = vpop.f32.mrb[0].mxu0
        %v3603 = vadd.f32 %v3298, %v3602
        %v3604 = vpop.f32.mrb[0].mxu0
        %3605 = vmatprep.mubr.bf16.mxu0 %v1441
        %3606 = vmatmul.mubr.bf16.gmra.mrb[0].mxu0 %v1432
        %v3607 = vpop.f32.mrb[0].mxu0
        %v3608 = vadd.f32 %v3303, %v3607
        %v3609 = vpop.f32.mrb[0].mxu0
        %v3610 = vpop.f32.mrb[0].mxu0
        %v3611 = vadd.f32 %v3306, %v3610
        %v3612 = vpop.f32.mrb[0].mxu0
        %3613 = vmatprep.mubr.bf16.mxu0 %v1484
        %3614 = vmatmul.mubr.bf16.gmra.mrb[0].mxu0 %v1475
        %v3615 = vpop.f32.mrb[0].mxu0
        %v3616 = vadd.f32 %v3311, %v3615
        %v3617 = vpop.f32.mrb[0].mxu0
        %v3618 = vpop.f32.mrb[0].mxu0
        %v3619 = vadd.f32 %v3314, %v3618
        %v3620 = vpop.f32.mrb[0].mxu0
        %3621 = vmatprep.mubr.bf16.mxu0 %v1527
        %3622 = vmatmul.mubr.bf16.gmra.mrb[0].mxu0 %v1518
        %v3623 = vpop.f32.mrb[0].mxu0
        %v3624 = vadd.f32 %v3319, %v3623
        %v3625 = vpop.f32.mrb[0].mxu0
        %v3626 = vpop.f32.mrb[0].mxu0
        %v3627 = vadd.f32 %v3322, %v3626
        %v3628 = vpop.f32.mrb[0].mxu0
        %3629 = vdwg.mxu0
        %3630 = vmatprep.subr.bf16.mxu0 0
        %3631 = vmatpush1.bf16.msra.mxu0 %v3437
        %3632 = vmatprep.subr.bf16.mxu0 0
        %3633 = vmatpush1.bf16.msra.mxu0 %v3438
        %3634 = vmatprep.subr.bf16.mxu0 0
        %3635 = vmatpush1.bf16.msra.mxu0 %v3439
        %3636 = vmatprep.subr.bf16.mxu0 0
        %3637 = vmatpush1.bf16.msra.mxu0 %v3440
        %3638 = vmatprep.subr.bf16.mxu0 0
        %3639 = vmatpush1.bf16.msra.mxu0 %v3441
        %3640 = vmatprep.subr.bf16.mxu0 0
        %3641 = vmatpush1.bf16.msra.mxu0 %v3442
        %3642 = vmatprep.subr.bf16.mxu0 0
        %3643 = vmatpush1.bf16.msra.mxu0 %v3443
        %3644 = vmatprep.subr.bf16.mxu0 0
        %3645 = vmatpush1.bf16.msra.mxu0 %v3444
        %3646 = vmatprep.subr.bf16.mxu0 0
        %3647 = vmatpush1.bf16.msra.mxu0 0
        %3648 = vmatprep.subr.bf16.mxu0 0
        %3649 = vmatpush1.bf16.msra.mxu0 0
        %3650 = vmatprep.subr.bf16.mxu0 0
        %3651 = vmatpush1.bf16.msra.mxu0 0
        %3652 = vmatprep.subr.bf16.mxu0 0
        %3653 = vmatpush1.bf16.msra.mxu0 0
        %3654 = vmatprep.subr.bf16.mxu0 0
        %3655 = vmatpush1.bf16.msra.mxu0 0
        %3656 = vmatprep.subr.bf16.mxu0 0
        %3657 = vmatpush1.bf16.msra.mxu0 0
        %3658 = vmatprep.subr.bf16.mxu0 0
        %3659 = vmatpush1.bf16.msra.mxu0 0
        %3660 = vmatprep.subr.bf16.mxu0 0
        %3661 = vmatpush1.bf16.msra.mxu0 0
        %3662 = vmatprep.mubr.bf16.mxu0 0
        %3663 = vmatmul.mubr.bf16.gmra.mrb[0].mxu0 %v899
        %v3664 = vpop.f32.mrb[0].mxu0
        %v3665 = vadd.f32 %v3504, %v3664
        %v3666 = vpop.f32.mrb[0].mxu0
        %v3667 = vpop.f32.mrb[0].mxu0
        %v3668 = vadd.f32 %v3507, %v3667
        %v3669 = vpop.f32.mrb[0].mxu0
        %3670 = vmatprep.mubr.bf16.mxu0 0
        %3671 = vmatmul.mubr.bf16.gmra.mrb[0].mxu0 %v942
        %v3672 = vpop.f32.mrb[0].mxu0
        %v3673 = vadd.f32 %v3512, %v3672
        %v3674 = vpop.f32.mrb[0].mxu0
        %v3675 = vpop.f32.mrb[0].mxu0
        %v3676 = vadd.f32 %v3515, %v3675
        %v3677 = vpop.f32.mrb[0].mxu0
        %3678 = vmatprep.mubr.bf16.mxu0 0
        %3679 = vmatmul.mubr.bf16.gmra.mrb[0].mxu0 %v985
        %v3680 = vpop.f32.mrb[0].mxu0
        %v3681 = vadd.f32 %v3520, %v3680
        %v3682 = vpop.f32.mrb[0].mxu0
        %v3683 = vpop.f32.mrb[0].mxu0
        %v3684 = vadd.f32 %v3523, %v3683
        %v3685 = vpop.f32.mrb[0].mxu0
        %3686 = vmatprep.mubr.bf16.mxu0 0
        %3687 = vmatmul.mubr.bf16.gmra.mrb[0].mxu0 %v1028
        %v3688 = vpop.f32.mrb[0].mxu0
        %v3689 = vadd.f32 %v3528, %v3688
        %v3690 = vpop.f32.mrb[0].mxu0
        %v3691 = vpop.f32.mrb[0].mxu0
        %v3692 = vadd.f32 %v3531, %v3691
        %v3693 = vpop.f32.mrb[0].mxu0
        %3694 = vmatprep.mubr.bf16.mxu0 0
        %3695 = vmatmul.mubr.bf16.gmra.mrb[0].mxu0 %v1071
        %v3696 = vpop.f32.mrb[0].mxu0
        %v3697 = vadd.f32 %v3536, %v3696
        %v3698 = vpop.f32.mrb[0].mxu0
        %v3699 = vpop.f32.mrb[0].mxu0
        %v3700 = vadd.f32 %v3539, %v3699
        %v3701 = vpop.f32.mrb[0].mxu0
        %3702 = vmatprep.mubr.bf16.mxu0 0
        %3703 = vmatmul.mubr.bf16.gmra.mrb[0].mxu0 %v1114
        %v3704 = vpop.f32.mrb[0].mxu0
        %v3705 = vadd.f32 %v3544, %v3704
        %v3706 = vpop.f32.mrb[0].mxu0
        %v3707 = vpop.f32.mrb[0].mxu0
        %v3708 = vadd.f32 %v3547, %v3707
        %v3709 = vpop.f32.mrb[0].mxu0
        %3710 = vmatprep.mubr.bf16.mxu0 0
        %3711 = vmatmul.mubr.bf16.gmra.mrb[0].mxu0 %v1157
        %v3712 = vpop.f32.mrb[0].mxu0
        %v3713 = vadd.f32 %v3552, %v3712
        %v3714 = vpop.f32.mrb[0].mxu0
        %v3715 = vpop.f32.mrb[0].mxu0
        %v3716 = vadd.f32 %v3555, %v3715
        %v3717 = vpop.f32.mrb[0].mxu0
        %3718 = vmatprep.mubr.bf16.mxu0 0
        %3719 = vmatmul.mubr.bf16.gmra.mrb[0].mxu0 %v1200
        %v3720 = vpop.f32.mrb[0].mxu0
        %v3721 = vadd.f32 %v3560, %v3720
        %v3722 = vpop.f32.mrb[0].mxu0
        %v3723 = vpop.f32.mrb[0].mxu0
        %v3724 = vadd.f32 %v3563, %v3723
        %v3725 = vpop.f32.mrb[0].mxu0
        %3726 = vmatprep.mubr.bf16.mxu0 0
        %3727 = vmatmul.mubr.bf16.gmra.mrb[0].mxu0 %v1243
        %v3728 = vpop.f32.mrb[0].mxu0
        %v3729 = vadd.f32 %v3568, %v3728
        %v3730 = vpop.f32.mrb[0].mxu0
        %v3731 = vpop.f32.mrb[0].mxu0
        %v3732 = vadd.f32 %v3571, %v3731
        %v3733 = vpop.f32.mrb[0].mxu0
        %3734 = vmatprep.mubr.bf16.mxu0 0
        %3735 = vmatmul.mubr.bf16.gmra.mrb[0].mxu0 %v1286
        %v3736 = vpop.f32.mrb[0].mxu0
        %v3737 = vadd.f32 %v3576, %v3736
        %v3738 = vpop.f32.mrb[0].mxu0
        %v3739 = vpop.f32.mrb[0].mxu0
        %v3740 = vadd.f32 %v3579, %v3739
        %v3741 = vpop.f32.mrb[0].mxu0
        %3742 = vmatprep.mubr.bf16.mxu0 0
        %3743 = vmatmul.mubr.bf16.gmra.mrb[0].mxu0 %v1329
        %v3744 = vpop.f32.mrb[0].mxu0
        %v3745 = vadd.f32 %v3584, %v3744
        %v3746 = vpop.f32.mrb[0].mxu0
        %v3747 = vpop.f32.mrb[0].mxu0
        %v3748 = vadd.f32 %v3587, %v3747
        %v3749 = vpop.f32.mrb[0].mxu0
        %3750 = vmatprep.mubr.bf16.mxu0 0
        %3751 = vmatmul.mubr.bf16.gmra.mrb[0].mxu0 %v1372
        %v3752 = vpop.f32.mrb[0].mxu0
        %v3753 = vadd.f32 %v3592, %v3752
        %v3754 = vpop.f32.mrb[0].mxu0
        %v3755 = vpop.f32.mrb[0].mxu0
        %v3756 = vadd.f32 %v3595, %v3755
        %v3757 = vpop.f32.mrb[0].mxu0
        %3758 = vmatprep.mubr.bf16.mxu0 0
        %3759 = vmatmul.mubr.bf16.gmra.mrb[0].mxu0 %v1415
        %v3760 = vpop.f32.mrb[0].mxu0
        %v3761 = vadd.f32 %v3600, %v3760
        %v3762 = vpop.f32.mrb[0].mxu0
        %v3763 = vpop.f32.mrb[0].mxu0
        %v3764 = vadd.f32 %v3603, %v3763
        %v3765 = vpop.f32.mrb[0].mxu0
        %3766 = vmatprep.mubr.bf16.mxu0 0
        %3767 = vmatmul.mubr.bf16.gmra.mrb[0].mxu0 %v1458
        %v3768 = vpop.f32.mrb[0].mxu0
        %v3769 = vadd.f32 %v3608, %v3768
        %v3770 = vpop.f32.mrb[0].mxu0
        %v3771 = vpop.f32.mrb[0].mxu0
        %v3772 = vadd.f32 %v3611, %v3771
        %v3773 = vpop.f32.mrb[0].mxu0
        %3774 = vmatprep.mubr.bf16.mxu0 0
        %3775 = vmatmul.mubr.bf16.gmra.mrb[0].mxu0 %v1501
        %v3776 = vpop.f32.mrb[0].mxu0
        %v3777 = vadd.f32 %v3616, %v3776
        %v3778 = vpop.f32.mrb[0].mxu0
        %v3779 = vpop.f32.mrb[0].mxu0
        %v3780 = vadd.f32 %v3619, %v3779
        %v3781 = vpop.f32.mrb[0].mxu0
        %3782 = vmatprep.mubr.bf16.mxu0 0
        %3783 = vmatmul.mubr.bf16.gmra.mrb[0].mxu0 %v1544
        %v3784 = vpop.f32.mrb[0].mxu0
        %v3785 = vadd.f32 %v3624, %v3784
        %v3786 = vpop.f32.mrb[0].mxu0
        %v3787 = vpop.f32.mrb[0].mxu0
        %v3788 = vadd.f32 %v3627, %v3787
        %v3789 = vpop.f32.mrb[0].mxu0
        %3790 = vdwg.mxu0
        %s3791 = scalar_lea.vmem %s373, 32 [#allocation3]
        %v3792 = vld [vmem:[%s3791] sm:$0xf]
        %v3793 = vld [vmem:[%s3791 + $0x4] sm:$0xf]
        %v3794 = vld [vmem:[%s3791 + $0x8] sm:$0xf]
        %v3795 = vld [vmem:[%s3791 + $0xc] sm:$0xf]
        %v3796 = vld [vmem:[%s3791 + $0x10] sm:$0xf]
        %v3797 = vld [vmem:[%s3791 + $0x14] sm:$0xf]
        %v3798 = vld [vmem:[%s3791 + $0x18] sm:$0xf]
        %v3799 = vld [vmem:[%s3791 + $0x1c] sm:$0xf]
        %v3800 = vld [vmem:[%s3791 + $0x20] sm:$0xf]
        %v3801 = vld [vmem:[%s3791 + $0x24] sm:$0xf]
        %v3802 = vld [vmem:[%s3791 + $0x28] sm:$0xf]
        %v3803 = vld [vmem:[%s3791 + $0x2c] sm:$0xf]
        %v3804 = vld [vmem:[%s3791 + $0x30] sm:$0xf]
        %v3805 = vld [vmem:[%s3791 + $0x34] sm:$0xf]
        %v3806 = vld [vmem:[%s3791 + $0x38] sm:$0xf]
        %v3807 = vld [vmem:[%s3791 + $0x3c] sm:$0xf]
        %v3808 = vld [vmem:[%s3791 + $0x40] sm:$0xf]
        %v3809 = vld [vmem:[%s3791 + $0x44] sm:$0xf]
        %v3810 = vld [vmem:[%s3791 + $0x48] sm:$0xf]
        %v3811 = vld [vmem:[%s3791 + $0x4c] sm:$0xf]
        %v3812 = vld [vmem:[%s3791 + $0x50] sm:$0xf]
        %v3813 = vld [vmem:[%s3791 + $0x54] sm:$0xf]
        %v3814 = vld [vmem:[%s3791 + $0x58] sm:$0xf]
        %v3815 = vld [vmem:[%s3791 + $0x5c] sm:$0xf]
        %v3816 = vld [vmem:[%s3791 + $0x60] sm:$0xf]
        %v3817 = vld [vmem:[%s3791 + $0x64] sm:$0xf]
        %v3818 = vld [vmem:[%s3791 + $0x68] sm:$0xf]
        %v3819 = vld [vmem:[%s3791 + $0x6c] sm:$0xf]
        %v3820 = vld [vmem:[%s3791 + $0x70] sm:$0xf]
        %v3821 = vld [vmem:[%s3791 + $0x74] sm:$0xf]
        %v3822 = vld [vmem:[%s3791 + $0x78] sm:$0xf]
        %v3823 = vld [vmem:[%s3791 + $0x7c] sm:$0xf]
        %v3824 = vld [vmem:[%s3791 + $0x80] sm:$0xf]
        %v3825 = vld [vmem:[%s3791 + $0x84] sm:$0xf]
        %v3826 = vld [vmem:[%s3791 + $0x88] sm:$0xf]
        %v3827 = vld [vmem:[%s3791 + $0x8c] sm:$0xf]
        %v3828 = vld [vmem:[%s3791 + $0x90] sm:$0xf]
        %v3829 = vld [vmem:[%s3791 + $0x94] sm:$0xf]
        %v3830 = vld [vmem:[%s3791 + $0x98] sm:$0xf]
        %v3831 = vld [vmem:[%s3791 + $0x9c] sm:$0xf]
        %v3832 = vld [vmem:[%s3791 + $0xa0] sm:$0xf]
        %v3833 = vld [vmem:[%s3791 + $0xa4] sm:$0xf]
        %v3834 = vld [vmem:[%s3791 + $0xa8] sm:$0xf]
        %v3835 = vld [vmem:[%s3791 + $0xac] sm:$0xf]
        %v3836 = vld [vmem:[%s3791 + $0xb0] sm:$0xf]
        %v3837 = vld [vmem:[%s3791 + $0xb4] sm:$0xf]
        %v3838 = vld [vmem:[%s3791 + $0xb8] sm:$0xf]
        %v3839 = vld [vmem:[%s3791 + $0xbc] sm:$0xf]
        %v3840 = vld [vmem:[%s3791 + $0xc0] sm:$0xf]
        %v3841 = vld [vmem:[%s3791 + $0xc4] sm:$0xf]
        %v3842 = vld [vmem:[%s3791 + $0xc8] sm:$0xf]
        %v3843 = vld [vmem:[%s3791 + $0xcc] sm:$0xf]
        %v3844 = vld [vmem:[%s3791 + $0xd0] sm:$0xf]
        %v3845 = vld [vmem:[%s3791 + $0xd4] sm:$0xf]
        %v3846 = vld [vmem:[%s3791 + $0xd8] sm:$0xf]
        %v3847 = vld [vmem:[%s3791 + $0xdc] sm:$0xf]
        %v3848 = vld [vmem:[%s3791 + $0xe0] sm:$0xf]
        %v3849 = vld [vmem:[%s3791 + $0xe4] sm:$0xf]
        %v3850 = vld [vmem:[%s3791 + $0xe8] sm:$0xf]
        %v3851 = vld [vmem:[%s3791 + $0xec] sm:$0xf]
        %v3852 = vld [vmem:[%s3791 + $0xf0] sm:$0xf]
        %v3853 = vld [vmem:[%s3791 + $0xf4] sm:$0xf]
        %v3854 = vld [vmem:[%s3791 + $0xf8] sm:$0xf]
        %v3855 = vld [vmem:[%s3791 + $0xfc] sm:$0xf]
        %v3904 = vunpack.c.l.b16 %v3792
        %v3905 = vunpack.c.l.b16 %v3793
        %v3906 = vunpack.c.l.b16 %v3794
        %v3907 = vunpack.c.l.b16 %v3796
        %v3908 = vunpack.c.l.b16 %v3797
        %v3909 = vunpack.c.l.b16 %v3798
        %v3910 = vunpack.c.l.b16 %v3800
        %v3911 = vunpack.c.l.b16 %v3801
        %v3912 = vunpack.c.l.b16 %v3802
        %v3913 = vunpack.c.l.b16 %v3804
        %v3914 = vunpack.c.l.b16 %v3805
        %v3915 = vunpack.c.l.b16 %v3806
        %v3916 = vunpack.c.l.b16 %v3808
        %v3917 = vunpack.c.l.b16 %v3809
        %v3918 = vunpack.c.l.b16 %v3810
        %v3919 = vunpack.c.l.b16 %v3812
        %v3920 = vunpack.c.l.b16 %v3813
        %v3921 = vunpack.c.l.b16 %v3814
        %v3922 = vunpack.c.l.b16 %v3816
        %v3923 = vunpack.c.l.b16 %v3817
        %v3924 = vunpack.c.l.b16 %v3818
        %v3925 = vunpack.c.l.b16 %v3820
        %v3926 = vunpack.c.l.b16 %v3821
        %v3927 = vunpack.c.l.b16 %v3822
        %v3928 = vunpack.c.l.b16 %v3824
        %v3929 = vunpack.c.l.b16 %v3825
        %v3930 = vunpack.c.l.b16 %v3826
        %v3931 = vunpack.c.l.b16 %v3828
        %v3932 = vunpack.c.l.b16 %v3829
        %v3933 = vunpack.c.l.b16 %v3830
        %v3934 = vunpack.c.l.b16 %v3832
        %v3935 = vunpack.c.l.b16 %v3833
        %v3936 = vunpack.c.l.b16 %v3834
        %v3937 = vunpack.c.l.b16 %v3836
        %v3938 = vunpack.c.l.b16 %v3837
        %v3939 = vunpack.c.l.b16 %v3838
        %v3940 = vunpack.c.l.b16 %v3840
        %v3941 = vunpack.c.l.b16 %v3841
        %v3942 = vunpack.c.l.b16 %v3842
        %v3943 = vunpack.c.l.b16 %v3844
        %v3944 = vunpack.c.l.b16 %v3845
        %v3945 = vunpack.c.l.b16 %v3846
        %v3946 = vunpack.c.l.b16 %v3848
        %v3947 = vunpack.c.l.b16 %v3849
        %v3948 = vunpack.c.l.b16 %v3850
        %v3949 = vunpack.c.l.b16 %v3852
        %v3950 = vunpack.c.l.b16 %v3853
        %v3951 = vunpack.c.l.b16 %v3854
        %v3952 = vpack.c.b16 %v3905, %v3904
        %v3953 = vpack.c.b16 %v3906, %v3906
        %v3954 = vpack.c.b16 %v3908, %v3907
        %v3955 = vpack.c.b16 %v3909, %v3909
        %v3956 = vpack.c.b16 %v3911, %v3910
        %v3957 = vpack.c.b16 %v3912, %v3912
        %v3958 = vpack.c.b16 %v3914, %v3913
        %v3959 = vpack.c.b16 %v3915, %v3915
        %v3960 = vpack.c.b16 %v3917, %v3916
        %v3961 = vpack.c.b16 %v3918, %v3918
        %v3962 = vpack.c.b16 %v3920, %v3919
        %v3963 = vpack.c.b16 %v3921, %v3921
        %v3964 = vpack.c.b16 %v3923, %v3922
        %v3965 = vpack.c.b16 %v3924, %v3924
        %v3966 = vpack.c.b16 %v3926, %v3925
        %v3967 = vpack.c.b16 %v3927, %v3927
        %v3968 = vpack.c.b16 %v3929, %v3928
        %v3969 = vpack.c.b16 %v3930, %v3930
        %v3970 = vpack.c.b16 %v3932, %v3931
        %v3971 = vpack.c.b16 %v3933, %v3933
        %v3972 = vpack.c.b16 %v3935, %v3934
        %v3973 = vpack.c.b16 %v3936, %v3936
        %v3974 = vpack.c.b16 %v3938, %v3937
        %v3975 = vpack.c.b16 %v3939, %v3939
        %v3976 = vpack.c.b16 %v3941, %v3940
        %v3977 = vpack.c.b16 %v3942, %v3942
        %v3978 = vpack.c.b16 %v3944, %v3943
        %v3979 = vpack.c.b16 %v3945, %v3945
        %v3980 = vpack.c.b16 %v3947, %v3946
        %v3981 = vpack.c.b16 %v3948, %v3948
        %v3982 = vpack.c.b16 %v3950, %v3949
        %v3983 = vpack.c.b16 %v3951, %v3951
        %v3984 = vpack.c.b16 %v3906, %v3905
        %v3985 = vpack.c.b16 %v3909, %v3908
        %v3986 = vpack.c.b16 %v3912, %v3911
        %v3987 = vpack.c.b16 %v3915, %v3914
        %v3988 = vpack.c.b16 %v3918, %v3917
        %v3989 = vpack.c.b16 %v3921, %v3920
        %v3990 = vpack.c.b16 %v3924, %v3923
        %v3991 = vpack.c.b16 %v3927, %v3926
        %v3992 = vpack.c.b16 %v3930, %v3929
        %v3993 = vpack.c.b16 %v3933, %v3932
        %v3994 = vpack.c.b16 %v3936, %v3935
        %v3995 = vpack.c.b16 %v3939, %v3938
        %v3996 = vpack.c.b16 %v3942, %v3941
        %v3997 = vpack.c.b16 %v3945, %v3944
        %v3998 = vpack.c.b16 %v3948, %v3947
        %v3999 = vpack.c.b16 %v3951, %v3950
        %v4001 = vshrl.u32 %v3984, 16
        %v4003 = vrot.slane %v4001, 4
        %v4004 = vshll.u32 %v3984, 16
        %v4006 = vrot.slane %v4004, 5
        %v4007 = vor.u32 %v4003, %v4006
        %v4009 = vshrl.u32 %v3985, 16
        %v4011 = vrot.slane %v4009, 4
        %v4012 = vshll.u32 %v3985, 16
        %v4014 = vrot.slane %v4012, 5
        %v4015 = vor.u32 %v4011, %v4014
        %v4017 = vshrl.u32 %v3986, 16
        %v4019 = vrot.slane %v4017, 4
        %v4020 = vshll.u32 %v3986, 16
        %v4022 = vrot.slane %v4020, 5
        %v4023 = vor.u32 %v4019, %v4022
        %v4025 = vshrl.u32 %v3987, 16
        %v4027 = vrot.slane %v4025, 4
        %v4028 = vshll.u32 %v3987, 16
        %v4030 = vrot.slane %v4028, 5
        %v4031 = vor.u32 %v4027, %v4030
        %v4033 = vshrl.u32 %v3988, 16
        %v4035 = vrot.slane %v4033, 4
        %v4036 = vshll.u32 %v3988, 16
        %v4038 = vrot.slane %v4036, 5
        %v4039 = vor.u32 %v4035, %v4038
        %v4041 = vshrl.u32 %v3989, 16
        %v4043 = vrot.slane %v4041, 4
        %v4044 = vshll.u32 %v3989, 16
        %v4046 = vrot.slane %v4044, 5
        %v4047 = vor.u32 %v4043, %v4046
        %v4049 = vshrl.u32 %v3990, 16
        %v4051 = vrot.slane %v4049, 4
        %v4052 = vshll.u32 %v3990, 16
        %v4054 = vrot.slane %v4052, 5
        %v4055 = vor.u32 %v4051, %v4054
        %v4057 = vshrl.u32 %v3991, 16
        %v4059 = vrot.slane %v4057, 4
        %v4060 = vshll.u32 %v3991, 16
        %v4062 = vrot.slane %v4060, 5
        %v4063 = vor.u32 %v4059, %v4062
        %v4065 = vshrl.u32 %v3992, 16
        %v4067 = vrot.slane %v4065, 4
        %v4068 = vshll.u32 %v3992, 16
        %v4070 = vrot.slane %v4068, 5
        %v4071 = vor.u32 %v4067, %v4070
        %v4073 = vshrl.u32 %v3993, 16
        %v4075 = vrot.slane %v4073, 4
        %v4076 = vshll.u32 %v3993, 16
        %v4078 = vrot.slane %v4076, 5
        %v4079 = vor.u32 %v4075, %v4078
        %v4081 = vshrl.u32 %v3994, 16
        %v4083 = vrot.slane %v4081, 4
        %v4084 = vshll.u32 %v3994, 16
        %v4086 = vrot.slane %v4084, 5
        %v4087 = vor.u32 %v4083, %v4086
        %v4089 = vshrl.u32 %v3995, 16
        %v4091 = vrot.slane %v4089, 4
        %v4092 = vshll.u32 %v3995, 16
        %v4094 = vrot.slane %v4092, 5
        %v4095 = vor.u32 %v4091, %v4094
        %v4097 = vshrl.u32 %v3996, 16
        %v4099 = vrot.slane %v4097, 4
        %v4100 = vshll.u32 %v3996, 16
        %v4102 = vrot.slane %v4100, 5
        %v4103 = vor.u32 %v4099, %v4102
        %v4105 = vshrl.u32 %v3997, 16
        %v4107 = vrot.slane %v4105, 4
        %v4108 = vshll.u32 %v3997, 16
        %v4110 = vrot.slane %v4108, 5
        %v4111 = vor.u32 %v4107, %v4110
        %v4113 = vshrl.u32 %v3998, 16
        %v4115 = vrot.slane %v4113, 4
        %v4116 = vshll.u32 %v3998, 16
        %v4118 = vrot.slane %v4116, 5
        %v4119 = vor.u32 %v4115, %v4118
        %v4121 = vshrl.u32 %v3999, 16
        %v4123 = vrot.slane %v4121, 4
        %v4124 = vshll.u32 %v3999, 16
        %v4126 = vrot.slane %v4124, 5
        %v4127 = vor.u32 %v4123, %v4126
        %v4144 = vunpack.c.l.b16 %v3795
        %v4145 = vunpack.c.l.b16 %v3799
        %v4146 = vunpack.c.l.b16 %v3803
        %v4147 = vunpack.c.l.b16 %v3807
        %v4148 = vunpack.c.l.b16 %v3811
        %v4149 = vunpack.c.l.b16 %v3815
        %v4150 = vunpack.c.l.b16 %v3819
        %v4151 = vunpack.c.l.b16 %v3823
        %v4152 = vunpack.c.l.b16 %v3827
        %v4153 = vunpack.c.l.b16 %v3831
        %v4154 = vunpack.c.l.b16 %v3835
        %v4155 = vunpack.c.l.b16 %v3839
        %v4156 = vunpack.c.l.b16 %v3843
        %v4157 = vunpack.c.l.b16 %v3847
        %v4158 = vunpack.c.l.b16 %v3851
        %v4159 = vunpack.c.l.b16 %v3855
        %v4160 = vpack.c.b16 %v4144, %v4144
        %v4161 = vpack.c.b16 %v4145, %v4145
        %v4162 = vpack.c.b16 %v4146, %v4146
        %v4163 = vpack.c.b16 %v4147, %v4147
        %v4164 = vpack.c.b16 %v4148, %v4148
        %v4165 = vpack.c.b16 %v4149, %v4149
        %v4166 = vpack.c.b16 %v4150, %v4150
        %v4167 = vpack.c.b16 %v4151, %v4151
        %v4168 = vpack.c.b16 %v4152, %v4152
        %v4169 = vpack.c.b16 %v4153, %v4153
        %v4170 = vpack.c.b16 %v4154, %v4154
        %v4171 = vpack.c.b16 %v4155, %v4155
        %v4172 = vpack.c.b16 %v4156, %v4156
        %v4173 = vpack.c.b16 %v4157, %v4157
        %v4174 = vpack.c.b16 %v4158, %v4158
        %v4175 = vpack.c.b16 %v4159, %v4159
        %v4176 = vrot.slane %v3984, 5
        %v4177 = vrot.slane %v4160, 5
        %v4178 = vsel %vm807, %v4176, %v4177
        %v4179 = vrot.slane %v3985, 5
        %v4180 = vrot.slane %v4161, 5
        %v4181 = vsel %vm807, %v4179, %v4180
        %v4182 = vrot.slane %v3986, 5
        %v4183 = vrot.slane %v4162, 5
        %v4184 = vsel %vm807, %v4182, %v4183
        %v4185 = vrot.slane %v3987, 5
        %v4186 = vrot.slane %v4163, 5
        %v4187 = vsel %vm807, %v4185, %v4186
        %v4188 = vrot.slane %v3988, 5
        %v4189 = vrot.slane %v4164, 5
        %v4190 = vsel %vm807, %v4188, %v4189
        %v4191 = vrot.slane %v3989, 5
        %v4192 = vrot.slane %v4165, 5
        %v4193 = vsel %vm807, %v4191, %v4192
        %v4194 = vrot.slane %v3990, 5
        %v4195 = vrot.slane %v4166, 5
        %v4196 = vsel %vm807, %v4194, %v4195
        %v4197 = vrot.slane %v3991, 5
        %v4198 = vrot.slane %v4167, 5
        %v4199 = vsel %vm807, %v4197, %v4198
        %v4200 = vrot.slane %v3992, 5
        %v4201 = vrot.slane %v4168, 5
        %v4202 = vsel %vm807, %v4200, %v4201
        %v4203 = vrot.slane %v3993, 5
        %v4204 = vrot.slane %v4169, 5
        %v4205 = vsel %vm807, %v4203, %v4204
        %v4206 = vrot.slane %v3994, 5
        %v4207 = vrot.slane %v4170, 5
        %v4208 = vsel %vm807, %v4206, %v4207
        %v4209 = vrot.slane %v3995, 5
        %v4210 = vrot.slane %v4171, 5
        %v4211 = vsel %vm807, %v4209, %v4210
        %v4212 = vrot.slane %v3996, 5
        %v4213 = vrot.slane %v4172, 5
        %v4214 = vsel %vm807, %v4212, %v4213
        %v4215 = vrot.slane %v3997, 5
        %v4216 = vrot.slane %v4173, 5
        %v4217 = vsel %vm807, %v4215, %v4216
        %v4218 = vrot.slane %v3998, 5
        %v4219 = vrot.slane %v4174, 5
        %v4220 = vsel %vm807, %v4218, %v4219
        %v4221 = vrot.slane %v3999, 5
        %v4222 = vrot.slane %v4175, 5
        %v4223 = vsel %vm807, %v4221, %v4222
        %v4225 = vshrl.u32 %v3952, 16
        %v4227 = vrot.slane %v4225, 3
        %v4228 = vshll.u32 %v3952, 16
        %v4230 = vrot.slane %v4228, 4
        %v4231 = vor.u32 %v4227, %v4230
        %v4233 = vshrl.u32 %v3953, 16
        %v4235 = vrot.slane %v4233, 3
        %v4236 = vshll.u32 %v3953, 16
        %v4238 = vrot.slane %v4236, 4
        %v4239 = vor.u32 %v4235, %v4238
        %v4240 = vsel %vm856, %v4231, %v4239
        %v4242 = vshrl.u32 %v4007, 16
        %v4244 = vrot.slane %v4242, 3
        %v4245 = vshll.u32 %v4007, 16
        %v4247 = vrot.slane %v4245, 4
        %v4248 = vor.u32 %v4244, %v4247
        %v4249 = vsel %vm856, %v4248, %v4248
        %v4251 = vshrl.u32 %v4176, 16
        %v4253 = vrot.slane %v4251, 3
        %v4254 = vshll.u32 %v4176, 16
        %v4256 = vrot.slane %v4254, 4
        %v4257 = vor.u32 %v4253, %v4256
        %v4259 = vshrl.u32 %v4178, 16
        %v4261 = vrot.slane %v4259, 3
        %v4262 = vshll.u32 %v4178, 16
        %v4264 = vrot.slane %v4262, 4
        %v4265 = vor.u32 %v4261, %v4264
        %v4266 = vsel %vm856, %v4257, %v4265
        %v4268 = vshrl.u32 %v3954, 16
        %v4270 = vrot.slane %v4268, 3
        %v4271 = vshll.u32 %v3954, 16
        %v4273 = vrot.slane %v4271, 4
        %v4274 = vor.u32 %v4270, %v4273
        %v4276 = vshrl.u32 %v3955, 16
        %v4278 = vrot.slane %v4276, 3
        %v4279 = vshll.u32 %v3955, 16
        %v4281 = vrot.slane %v4279, 4
        %v4282 = vor.u32 %v4278, %v4281
        %v4283 = vsel %vm856, %v4274, %v4282
        %v4285 = vshrl.u32 %v4015, 16
        %v4287 = vrot.slane %v4285, 3
        %v4288 = vshll.u32 %v4015, 16
        %v4290 = vrot.slane %v4288, 4
        %v4291 = vor.u32 %v4287, %v4290
        %v4292 = vsel %vm856, %v4291, %v4291
        %v4294 = vshrl.u32 %v4179, 16
        %v4296 = vrot.slane %v4294, 3
        %v4297 = vshll.u32 %v4179, 16
        %v4299 = vrot.slane %v4297, 4
        %v4300 = vor.u32 %v4296, %v4299
        %v4302 = vshrl.u32 %v4181, 16
        %v4304 = vrot.slane %v4302, 3
        %v4305 = vshll.u32 %v4181, 16
        %v4307 = vrot.slane %v4305, 4
        %v4308 = vor.u32 %v4304, %v4307
        %v4309 = vsel %vm856, %v4300, %v4308
        %v4311 = vshrl.u32 %v3956, 16
        %v4313 = vrot.slane %v4311, 3
        %v4314 = vshll.u32 %v3956, 16
        %v4316 = vrot.slane %v4314, 4
        %v4317 = vor.u32 %v4313, %v4316
        %v4319 = vshrl.u32 %v3957, 16
        %v4321 = vrot.slane %v4319, 3
        %v4322 = vshll.u32 %v3957, 16
        %v4324 = vrot.slane %v4322, 4
        %v4325 = vor.u32 %v4321, %v4324
        %v4326 = vsel %vm856, %v4317, %v4325
        %v4328 = vshrl.u32 %v4023, 16
        %v4330 = vrot.slane %v4328, 3
        %v4331 = vshll.u32 %v4023, 16
        %v4333 = vrot.slane %v4331, 4
        %v4334 = vor.u32 %v4330, %v4333
        %v4335 = vsel %vm856, %v4334, %v4334
        %v4337 = vshrl.u32 %v4182, 16
        %v4339 = vrot.slane %v4337, 3
        %v4340 = vshll.u32 %v4182, 16
        %v4342 = vrot.slane %v4340, 4
        %v4343 = vor.u32 %v4339, %v4342
        %v4345 = vshrl.u32 %v4184, 16
        %v4347 = vrot.slane %v4345, 3
        %v4348 = vshll.u32 %v4184, 16
        %v4350 = vrot.slane %v4348, 4
        %v4351 = vor.u32 %v4347, %v4350
        %v4352 = vsel %vm856, %v4343, %v4351
        %v4354 = vshrl.u32 %v3958, 16
        %v4356 = vrot.slane %v4354, 3
        %v4357 = vshll.u32 %v3958, 16
        %v4359 = vrot.slane %v4357, 4
        %v4360 = vor.u32 %v4356, %v4359
        %v4362 = vshrl.u32 %v3959, 16
        %v4364 = vrot.slane %v4362, 3
        %v4365 = vshll.u32 %v3959, 16
        %v4367 = vrot.slane %v4365, 4
        %v4368 = vor.u32 %v4364, %v4367
        %v4369 = vsel %vm856, %v4360, %v4368
        %v4371 = vshrl.u32 %v4031, 16
        %v4373 = vrot.slane %v4371, 3
        %v4374 = vshll.u32 %v4031, 16
        %v4376 = vrot.slane %v4374, 4
        %v4377 = vor.u32 %v4373, %v4376
        %v4378 = vsel %vm856, %v4377, %v4377
        %v4380 = vshrl.u32 %v4185, 16
        %v4382 = vrot.slane %v4380, 3
        %v4383 = vshll.u32 %v4185, 16
        %v4385 = vrot.slane %v4383, 4
        %v4386 = vor.u32 %v4382, %v4385
        %v4388 = vshrl.u32 %v4187, 16
        %v4390 = vrot.slane %v4388, 3
        %v4391 = vshll.u32 %v4187, 16
        %v4393 = vrot.slane %v4391, 4
        %v4394 = vor.u32 %v4390, %v4393
        %v4395 = vsel %vm856, %v4386, %v4394
        %v4397 = vshrl.u32 %v3960, 16
        %v4399 = vrot.slane %v4397, 3
        %v4400 = vshll.u32 %v3960, 16
        %v4402 = vrot.slane %v4400, 4
        %v4403 = vor.u32 %v4399, %v4402
        %v4405 = vshrl.u32 %v3961, 16
        %v4407 = vrot.slane %v4405, 3
        %v4408 = vshll.u32 %v3961, 16
        %v4410 = vrot.slane %v4408, 4
        %v4411 = vor.u32 %v4407, %v4410
        %v4412 = vsel %vm856, %v4403, %v4411
        %v4414 = vshrl.u32 %v4039, 16
        %v4416 = vrot.slane %v4414, 3
        %v4417 = vshll.u32 %v4039, 16
        %v4419 = vrot.slane %v4417, 4
        %v4420 = vor.u32 %v4416, %v4419
        %v4421 = vsel %vm856, %v4420, %v4420
        %v4423 = vshrl.u32 %v4188, 16
        %v4425 = vrot.slane %v4423, 3
        %v4426 = vshll.u32 %v4188, 16
        %v4428 = vrot.slane %v4426, 4
        %v4429 = vor.u32 %v4425, %v4428
        %v4431 = vshrl.u32 %v4190, 16
        %v4433 = vrot.slane %v4431, 3
        %v4434 = vshll.u32 %v4190, 16
        %v4436 = vrot.slane %v4434, 4
        %v4437 = vor.u32 %v4433, %v4436
        %v4438 = vsel %vm856, %v4429, %v4437
        %v4440 = vshrl.u32 %v3962, 16
        %v4442 = vrot.slane %v4440, 3
        %v4443 = vshll.u32 %v3962, 16
        %v4445 = vrot.slane %v4443, 4
        %v4446 = vor.u32 %v4442, %v4445
        %v4448 = vshrl.u32 %v3963, 16
        %v4450 = vrot.slane %v4448, 3
        %v4451 = vshll.u32 %v3963, 16
        %v4453 = vrot.slane %v4451, 4
        %v4454 = vor.u32 %v4450, %v4453
        %v4455 = vsel %vm856, %v4446, %v4454
        %v4457 = vshrl.u32 %v4047, 16
        %v4459 = vrot.slane %v4457, 3
        %v4460 = vshll.u32 %v4047, 16
        %v4462 = vrot.slane %v4460, 4
        %v4463 = vor.u32 %v4459, %v4462
        %v4464 = vsel %vm856, %v4463, %v4463
        %v4466 = vshrl.u32 %v4191, 16
        %v4468 = vrot.slane %v4466, 3
        %v4469 = vshll.u32 %v4191, 16
        %v4471 = vrot.slane %v4469, 4
        %v4472 = vor.u32 %v4468, %v4471
        %v4474 = vshrl.u32 %v4193, 16
        %v4476 = vrot.slane %v4474, 3
        %v4477 = vshll.u32 %v4193, 16
        %v4479 = vrot.slane %v4477, 4
        %v4480 = vor.u32 %v4476, %v4479
        %v4481 = vsel %vm856, %v4472, %v4480
        %v4483 = vshrl.u32 %v3964, 16
        %v4485 = vrot.slane %v4483, 3
        %v4486 = vshll.u32 %v3964, 16
        %v4488 = vrot.slane %v4486, 4
        %v4489 = vor.u32 %v4485, %v4488
        %v4491 = vshrl.u32 %v3965, 16
        %v4493 = vrot.slane %v4491, 3
        %v4494 = vshll.u32 %v3965, 16
        %v4496 = vrot.slane %v4494, 4
        %v4497 = vor.u32 %v4493, %v4496
        %v4498 = vsel %vm856, %v4489, %v4497
        %v4500 = vshrl.u32 %v4055, 16
        %v4502 = vrot.slane %v4500, 3
        %v4503 = vshll.u32 %v4055, 16
        %v4505 = vrot.slane %v4503, 4
        %v4506 = vor.u32 %v4502, %v4505
        %v4507 = vsel %vm856, %v4506, %v4506
        %v4509 = vshrl.u32 %v4194, 16
        %v4511 = vrot.slane %v4509, 3
        %v4512 = vshll.u32 %v4194, 16
        %v4514 = vrot.slane %v4512, 4
        %v4515 = vor.u32 %v4511, %v4514
        %v4517 = vshrl.u32 %v4196, 16
        %v4519 = vrot.slane %v4517, 3
        %v4520 = vshll.u32 %v4196, 16
        %v4522 = vrot.slane %v4520, 4
        %v4523 = vor.u32 %v4519, %v4522
        %v4524 = vsel %vm856, %v4515, %v4523
        %v4526 = vshrl.u32 %v3966, 16
        %v4528 = vrot.slane %v4526, 3
        %v4529 = vshll.u32 %v3966, 16
        %v4531 = vrot.slane %v4529, 4
        %v4532 = vor.u32 %v4528, %v4531
        %v4534 = vshrl.u32 %v3967, 16
        %v4536 = vrot.slane %v4534, 3
        %v4537 = vshll.u32 %v3967, 16
        %v4539 = vrot.slane %v4537, 4
        %v4540 = vor.u32 %v4536, %v4539
        %v4541 = vsel %vm856, %v4532, %v4540
        %v4543 = vshrl.u32 %v4063, 16
        %v4545 = vrot.slane %v4543, 3
        %v4546 = vshll.u32 %v4063, 16
        %v4548 = vrot.slane %v4546, 4
        %v4549 = vor.u32 %v4545, %v4548
        %v4550 = vsel %vm856, %v4549, %v4549
        %v4552 = vshrl.u32 %v4197, 16
        %v4554 = vrot.slane %v4552, 3
        %v4555 = vshll.u32 %v4197, 16
        %v4557 = vrot.slane %v4555, 4
        %v4558 = vor.u32 %v4554, %v4557
        %v4560 = vshrl.u32 %v4199, 16
        %v4562 = vrot.slane %v4560, 3
        %v4563 = vshll.u32 %v4199, 16
        %v4565 = vrot.slane %v4563, 4
        %v4566 = vor.u32 %v4562, %v4565
        %v4567 = vsel %vm856, %v4558, %v4566
        %v4569 = vshrl.u32 %v3968, 16
        %v4571 = vrot.slane %v4569, 3
        %v4572 = vshll.u32 %v3968, 16
        %v4574 = vrot.slane %v4572, 4
        %v4575 = vor.u32 %v4571, %v4574
        %v4577 = vshrl.u32 %v3969, 16
        %v4579 = vrot.slane %v4577, 3
        %v4580 = vshll.u32 %v3969, 16
        %v4582 = vrot.slane %v4580, 4
        %v4583 = vor.u32 %v4579, %v4582
        %v4584 = vsel %vm856, %v4575, %v4583
        %v4586 = vshrl.u32 %v4071, 16
        %v4588 = vrot.slane %v4586, 3
        %v4589 = vshll.u32 %v4071, 16
        %v4591 = vrot.slane %v4589, 4
        %v4592 = vor.u32 %v4588, %v4591
        %v4593 = vsel %vm856, %v4592, %v4592
        %v4595 = vshrl.u32 %v4200, 16
        %v4597 = vrot.slane %v4595, 3
        %v4598 = vshll.u32 %v4200, 16
        %v4600 = vrot.slane %v4598, 4
        %v4601 = vor.u32 %v4597, %v4600
        %v4603 = vshrl.u32 %v4202, 16
        %v4605 = vrot.slane %v4603, 3
        %v4606 = vshll.u32 %v4202, 16
        %v4608 = vrot.slane %v4606, 4
        %v4609 = vor.u32 %v4605, %v4608
        %v4610 = vsel %vm856, %v4601, %v4609
        %v4612 = vshrl.u32 %v3970, 16
        %v4614 = vrot.slane %v4612, 3
        %v4615 = vshll.u32 %v3970, 16
        %v4617 = vrot.slane %v4615, 4
        %v4618 = vor.u32 %v4614, %v4617
        %v4620 = vshrl.u32 %v3971, 16
        %v4622 = vrot.slane %v4620, 3
        %v4623 = vshll.u32 %v3971, 16
        %v4625 = vrot.slane %v4623, 4
        %v4626 = vor.u32 %v4622, %v4625
        %v4627 = vsel %vm856, %v4618, %v4626
        %v4629 = vshrl.u32 %v4079, 16
        %v4631 = vrot.slane %v4629, 3
        %v4632 = vshll.u32 %v4079, 16
        %v4634 = vrot.slane %v4632, 4
        %v4635 = vor.u32 %v4631, %v4634
        %v4636 = vsel %vm856, %v4635, %v4635
        %v4638 = vshrl.u32 %v4203, 16
        %v4640 = vrot.slane %v4638, 3
        %v4641 = vshll.u32 %v4203, 16
        %v4643 = vrot.slane %v4641, 4
        %v4644 = vor.u32 %v4640, %v4643
        %v4646 = vshrl.u32 %v4205, 16
        %v4648 = vrot.slane %v4646, 3
        %v4649 = vshll.u32 %v4205, 16
        %v4651 = vrot.slane %v4649, 4
        %v4652 = vor.u32 %v4648, %v4651
        %v4653 = vsel %vm856, %v4644, %v4652
        %v4655 = vshrl.u32 %v3972, 16
        %v4657 = vrot.slane %v4655, 3
        %v4658 = vshll.u32 %v3972, 16
        %v4660 = vrot.slane %v4658, 4
        %v4661 = vor.u32 %v4657, %v4660
        %v4663 = vshrl.u32 %v3973, 16
        %v4665 = vrot.slane %v4663, 3
        %v4666 = vshll.u32 %v3973, 16
        %v4668 = vrot.slane %v4666, 4
        %v4669 = vor.u32 %v4665, %v4668
        %v4670 = vsel %vm856, %v4661, %v4669
        %v4672 = vshrl.u32 %v4087, 16
        %v4674 = vrot.slane %v4672, 3
        %v4675 = vshll.u32 %v4087, 16
        %v4677 = vrot.slane %v4675, 4
        %v4678 = vor.u32 %v4674, %v4677
        %v4679 = vsel %vm856, %v4678, %v4678
        %v4681 = vshrl.u32 %v4206, 16
        %v4683 = vrot.slane %v4681, 3
        %v4684 = vshll.u32 %v4206, 16
        %v4686 = vrot.slane %v4684, 4
        %v4687 = vor.u32 %v4683, %v4686
        %v4689 = vshrl.u32 %v4208, 16
        %v4691 = vrot.slane %v4689, 3
        %v4692 = vshll.u32 %v4208, 16
        %v4694 = vrot.slane %v4692, 4
        %v4695 = vor.u32 %v4691, %v4694
        %v4696 = vsel %vm856, %v4687, %v4695
        %v4698 = vshrl.u32 %v3974, 16
        %v4700 = vrot.slane %v4698, 3
        %v4701 = vshll.u32 %v3974, 16
        %v4703 = vrot.slane %v4701, 4
        %v4704 = vor.u32 %v4700, %v4703
        %v4706 = vshrl.u32 %v3975, 16
        %v4708 = vrot.slane %v4706, 3
        %v4709 = vshll.u32 %v3975, 16
        %v4711 = vrot.slane %v4709, 4
        %v4712 = vor.u32 %v4708, %v4711
        %v4713 = vsel %vm856, %v4704, %v4712
        %v4715 = vshrl.u32 %v4095, 16
        %v4717 = vrot.slane %v4715, 3
        %v4718 = vshll.u32 %v4095, 16
        %v4720 = vrot.slane %v4718, 4
        %v4721 = vor.u32 %v4717, %v4720
        %v4722 = vsel %vm856, %v4721, %v4721
        %v4724 = vshrl.u32 %v4209, 16
        %v4726 = vrot.slane %v4724, 3
        %v4727 = vshll.u32 %v4209, 16
        %v4729 = vrot.slane %v4727, 4
        %v4730 = vor.u32 %v4726, %v4729
        %v4732 = vshrl.u32 %v4211, 16
        %v4734 = vrot.slane %v4732, 3
        %v4735 = vshll.u32 %v4211, 16
        %v4737 = vrot.slane %v4735, 4
        %v4738 = vor.u32 %v4734, %v4737
        %v4739 = vsel %vm856, %v4730, %v4738
        %v4741 = vshrl.u32 %v3976, 16
        %v4743 = vrot.slane %v4741, 3
        %v4744 = vshll.u32 %v3976, 16
        %v4746 = vrot.slane %v4744, 4
        %v4747 = vor.u32 %v4743, %v4746
        %v4749 = vshrl.u32 %v3977, 16
        %v4751 = vrot.slane %v4749, 3
        %v4752 = vshll.u32 %v3977, 16
        %v4754 = vrot.slane %v4752, 4
        %v4755 = vor.u32 %v4751, %v4754
        %v4756 = vsel %vm856, %v4747, %v4755
        %v4758 = vshrl.u32 %v4103, 16
        %v4760 = vrot.slane %v4758, 3
        %v4761 = vshll.u32 %v4103, 16
        %v4763 = vrot.slane %v4761, 4
        %v4764 = vor.u32 %v4760, %v4763
        %v4765 = vsel %vm856, %v4764, %v4764
        %v4767 = vshrl.u32 %v4212, 16
        %v4769 = vrot.slane %v4767, 3
        %v4770 = vshll.u32 %v4212, 16
        %v4772 = vrot.slane %v4770, 4
        %v4773 = vor.u32 %v4769, %v4772
        %v4775 = vshrl.u32 %v4214, 16
        %v4777 = vrot.slane %v4775, 3
        %v4778 = vshll.u32 %v4214, 16
        %v4780 = vrot.slane %v4778, 4
        %v4781 = vor.u32 %v4777, %v4780
        %v4782 = vsel %vm856, %v4773, %v4781
        %v4784 = vshrl.u32 %v3978, 16
        %v4786 = vrot.slane %v4784, 3
        %v4787 = vshll.u32 %v3978, 16
        %v4789 = vrot.slane %v4787, 4
        %v4790 = vor.u32 %v4786, %v4789
        %v4792 = vshrl.u32 %v3979, 16
        %v4794 = vrot.slane %v4792, 3
        %v4795 = vshll.u32 %v3979, 16
        %v4797 = vrot.slane %v4795, 4
        %v4798 = vor.u32 %v4794, %v4797
        %v4799 = vsel %vm856, %v4790, %v4798
        %v4801 = vshrl.u32 %v4111, 16
        %v4803 = vrot.slane %v4801, 3
        %v4804 = vshll.u32 %v4111, 16
        %v4806 = vrot.slane %v4804, 4
        %v4807 = vor.u32 %v4803, %v4806
        %v4808 = vsel %vm856, %v4807, %v4807
        %v4810 = vshrl.u32 %v4215, 16
        %v4812 = vrot.slane %v4810, 3
        %v4813 = vshll.u32 %v4215, 16
        %v4815 = vrot.slane %v4813, 4
        %v4816 = vor.u32 %v4812, %v4815
        %v4818 = vshrl.u32 %v4217, 16
        %v4820 = vrot.slane %v4818, 3
        %v4821 = vshll.u32 %v4217, 16
        %v4823 = vrot.slane %v4821, 4
        %v4824 = vor.u32 %v4820, %v4823
        %v4825 = vsel %vm856, %v4816, %v4824
        %v4827 = vshrl.u32 %v3980, 16
        %v4829 = vrot.slane %v4827, 3
        %v4830 = vshll.u32 %v3980, 16
        %v4832 = vrot.slane %v4830, 4
        %v4833 = vor.u32 %v4829, %v4832
        %v4835 = vshrl.u32 %v3981, 16
        %v4837 = vrot.slane %v4835, 3
        %v4838 = vshll.u32 %v3981, 16
        %v4840 = vrot.slane %v4838, 4
        %v4841 = vor.u32 %v4837, %v4840
        %v4842 = vsel %vm856, %v4833, %v4841
        %v4844 = vshrl.u32 %v4119, 16
        %v4846 = vrot.slane %v4844, 3
        %v4847 = vshll.u32 %v4119, 16
        %v4849 = vrot.slane %v4847, 4
        %v4850 = vor.u32 %v4846, %v4849
        %v4851 = vsel %vm856, %v4850, %v4850
        %v4853 = vshrl.u32 %v4218, 16
        %v4855 = vrot.slane %v4853, 3
        %v4856 = vshll.u32 %v4218, 16
        %v4858 = vrot.slane %v4856, 4
        %v4859 = vor.u32 %v4855, %v4858
        %v4861 = vshrl.u32 %v4220, 16
        %v4863 = vrot.slane %v4861, 3
        %v4864 = vshll.u32 %v4220, 16
        %v4866 = vrot.slane %v4864, 4
        %v4867 = vor.u32 %v4863, %v4866
        %v4868 = vsel %vm856, %v4859, %v4867
        %v4870 = vshrl.u32 %v3982, 16
        %v4872 = vrot.slane %v4870, 3
        %v4873 = vshll.u32 %v3982, 16
        %v4875 = vrot.slane %v4873, 4
        %v4876 = vor.u32 %v4872, %v4875
        %v4878 = vshrl.u32 %v3983, 16
        %v4880 = vrot.slane %v4878, 3
        %v4881 = vshll.u32 %v3983, 16
        %v4883 = vrot.slane %v4881, 4
        %v4884 = vor.u32 %v4880, %v4883
        %v4885 = vsel %vm856, %v4876, %v4884
        %v4887 = vshrl.u32 %v4127, 16
        %v4889 = vrot.slane %v4887, 3
        %v4890 = vshll.u32 %v4127, 16
        %v4892 = vrot.slane %v4890, 4
        %v4893 = vor.u32 %v4889, %v4892
        %v4894 = vsel %vm856, %v4893, %v4893
        %v4896 = vshrl.u32 %v4221, 16
        %v4898 = vrot.slane %v4896, 3
        %v4899 = vshll.u32 %v4221, 16
        %v4901 = vrot.slane %v4899, 4
        %v4902 = vor.u32 %v4898, %v4901
        %v4904 = vshrl.u32 %v4223, 16
        %v4906 = vrot.slane %v4904, 3
        %v4907 = vshll.u32 %v4223, 16
        %v4909 = vrot.slane %v4907, 4
        %v4910 = vor.u32 %v4906, %v4909
        %v4911 = vsel %vm856, %v4902, %v4910
        %s4960 = scalar_lea.vmem [#allocation6], 384
        %v4961 = vld [vmem:[%s4960] sm:$0xf]
        %v4962 = vld [vmem:[%s4960 + $0x4] sm:$0xf]
        %v4963 = vld [vmem:[%s4960 + $0x8] sm:$0xf]
        %v4964 = vld [vmem:[%s4960 + $0xc] sm:$0xf]
        %v4965 = vld [vmem:[%s4960 + $0x10] sm:$0xf]
        %v4966 = vld [vmem:[%s4960 + $0x14] sm:$0xf]
        %v4967 = vld [vmem:[%s4960 + $0x18] sm:$0xf]
        %v4968 = vld [vmem:[%s4960 + $0x1c] sm:$0xf]
        %v4969 = vld [vmem:[%s4960 + $0x20] sm:$0xf]
        %v4970 = vld [vmem:[%s4960 + $0x24] sm:$0xf]
        %v4971 = vld [vmem:[%s4960 + $0x28] sm:$0xf]
        %v4972 = vld [vmem:[%s4960 + $0x2c] sm:$0xf]
        %v4973 = vld [vmem:[%s4960 + $0x30] sm:$0xf]
        %v4974 = vld [vmem:[%s4960 + $0x34] sm:$0xf]
        %v4975 = vld [vmem:[%s4960 + $0x38] sm:$0xf]
        %v4976 = vld [vmem:[%s4960 + $0x3c] sm:$0xf]
        %v4977 = vld [vmem:[%s4960 + $0x40] sm:$0xf]
        %v4978 = vld [vmem:[%s4960 + $0x44] sm:$0xf]
        %v4979 = vld [vmem:[%s4960 + $0x48] sm:$0xf]
        %v4980 = vld [vmem:[%s4960 + $0x4c] sm:$0xf]
        %v4981 = vld [vmem:[%s4960 + $0x50] sm:$0xf]
        %v4982 = vld [vmem:[%s4960 + $0x54] sm:$0xf]
        %v4983 = vld [vmem:[%s4960 + $0x58] sm:$0xf]
        %v4984 = vld [vmem:[%s4960 + $0x5c] sm:$0xf]
        %v4985 = vld [vmem:[%s4960 + $0x60] sm:$0xf]
        %v4986 = vld [vmem:[%s4960 + $0x64] sm:$0xf]
        %v4987 = vld [vmem:[%s4960 + $0x68] sm:$0xf]
        %v4988 = vld [vmem:[%s4960 + $0x6c] sm:$0xf]
        %v4989 = vld [vmem:[%s4960 + $0x70] sm:$0xf]
        %v4990 = vld [vmem:[%s4960 + $0x74] sm:$0xf]
        %v4991 = vld [vmem:[%s4960 + $0x78] sm:$0xf]
        %v4992 = vld [vmem:[%s4960 + $0x7c] sm:$0xf]
        %v4993 = vld [vmem:[%s4960 + $0x80] sm:$0xf]
        %v4994 = vld [vmem:[%s4960 + $0x84] sm:$0xf]
        %v4995 = vld [vmem:[%s4960 + $0x88] sm:$0xf]
        %v4996 = vld [vmem:[%s4960 + $0x8c] sm:$0xf]
        %v4997 = vld [vmem:[%s4960 + $0x90] sm:$0xf]
        %v4998 = vld [vmem:[%s4960 + $0x94] sm:$0xf]
        %v4999 = vld [vmem:[%s4960 + $0x98] sm:$0xf]
        %v5000 = vld [vmem:[%s4960 + $0x9c] sm:$0xf]
        %v5001 = vld [vmem:[%s4960 + $0xa0] sm:$0xf]
        %v5002 = vld [vmem:[%s4960 + $0xa4] sm:$0xf]
        %v5003 = vld [vmem:[%s4960 + $0xa8] sm:$0xf]
        %v5004 = vld [vmem:[%s4960 + $0xac] sm:$0xf]
        %v5005 = vld [vmem:[%s4960 + $0xb0] sm:$0xf]
        %v5006 = vld [vmem:[%s4960 + $0xb4] sm:$0xf]
        %v5007 = vld [vmem:[%s4960 + $0xb8] sm:$0xf]
        %v5008 = vld [vmem:[%s4960 + $0xbc] sm:$0xf]
        %v5057 = vunpack.c.l.b16 %v4961
        %v5058 = vunpack.c.l.b16 %v4962
        %v5059 = vunpack.c.l.b16 %v4963
        %v5060 = vunpack.c.l.b16 %v4964
        %v5061 = vunpack.c.l.b16 %v4965
        %v5062 = vunpack.c.l.b16 %v4966
        %v5063 = vunpack.c.l.b16 %v4967
        %v5064 = vunpack.c.l.b16 %v4968
        %v5065 = vunpack.c.l.b16 %v4969
        %v5066 = vunpack.c.l.b16 %v4970
        %v5067 = vunpack.c.l.b16 %v4971
        %v5068 = vunpack.c.l.b16 %v4972
        %v5069 = vunpack.c.l.b16 %v4973
        %v5070 = vunpack.c.l.b16 %v4974
        %v5071 = vunpack.c.l.b16 %v4975
        %v5072 = vunpack.c.l.b16 %v4976
        %v5073 = vunpack.c.l.b16 %v4977
        %v5074 = vunpack.c.l.b16 %v4978
        %v5075 = vunpack.c.l.b16 %v4979
        %v5076 = vunpack.c.l.b16 %v4980
        %v5077 = vunpack.c.l.b16 %v4981
        %v5078 = vunpack.c.l.b16 %v4982
        %v5079 = vunpack.c.l.b16 %v4983
        %v5080 = vunpack.c.l.b16 %v4984
        %v5081 = vunpack.c.l.b16 %v4985
        %v5082 = vunpack.c.l.b16 %v4986
        %v5083 = vunpack.c.l.b16 %v4987
        %v5084 = vunpack.c.l.b16 %v4988
        %v5085 = vunpack.c.l.b16 %v4989
        %v5086 = vunpack.c.l.b16 %v4990
        %v5087 = vunpack.c.l.b16 %v4991
        %v5088 = vunpack.c.l.b16 %v4992
        %v5089 = vunpack.c.l.b16 %v4993
        %v5090 = vunpack.c.l.b16 %v4994
        %v5091 = vunpack.c.l.b16 %v4995
        %v5092 = vunpack.c.l.b16 %v4996
        %v5093 = vunpack.c.l.b16 %v4997
        %v5094 = vunpack.c.l.b16 %v4998
        %v5095 = vunpack.c.l.b16 %v4999
        %v5096 = vunpack.c.l.b16 %v5000
        %v5097 = vunpack.c.l.b16 %v5001
        %v5098 = vunpack.c.l.b16 %v5002
        %v5099 = vunpack.c.l.b16 %v5003
        %v5100 = vunpack.c.l.b16 %v5004
        %v5101 = vunpack.c.l.b16 %v5005
        %v5102 = vunpack.c.l.b16 %v5006
        %v5103 = vunpack.c.l.b16 %v5007
        %v5104 = vunpack.c.l.b16 %v5008
        %v5105 = vpack.c.b16 %v5058, %v5057
        %v5106 = vpack.c.b16 %v5060, %v5059
        %v5107 = vpack.c.b16 %v5062, %v5061
        %v5108 = vpack.c.b16 %v5064, %v5063
        %v5109 = vpack.c.b16 %v5066, %v5065
        %v5110 = vpack.c.b16 %v5068, %v5067
        %v5111 = vpack.c.b16 %v5070, %v5069
        %v5112 = vpack.c.b16 %v5072, %v5071
        %v5113 = vpack.c.b16 %v5074, %v5073
        %v5114 = vpack.c.b16 %v5076, %v5075
        %v5115 = vpack.c.b16 %v5078, %v5077
        %v5116 = vpack.c.b16 %v5080, %v5079
        %v5117 = vpack.c.b16 %v5082, %v5081
        %v5118 = vpack.c.b16 %v5084, %v5083
        %v5119 = vpack.c.b16 %v5086, %v5085
        %v5120 = vpack.c.b16 %v5088, %v5087
        %v5121 = vpack.c.b16 %v5090, %v5089
        %v5122 = vpack.c.b16 %v5092, %v5091
        %v5123 = vpack.c.b16 %v5094, %v5093
        %v5124 = vpack.c.b16 %v5096, %v5095
        %v5125 = vpack.c.b16 %v5098, %v5097
        %v5126 = vpack.c.b16 %v5100, %v5099
        %v5127 = vpack.c.b16 %v5102, %v5101
        %v5128 = vpack.c.b16 %v5104, %v5103
        %5153 = vmatprep.subr.bf16.mxu0 0
        %5154 = vmatpush1.bf16.msra.mxu0 %v5105
        %5155 = vmatprep.subr.bf16.mxu0 0
        %5156 = vmatpush1.bf16.msra.mxu0 %v5106
        %5157 = vmatprep.subr.bf16.mxu0 0
        %5158 = vmatpush1.bf16.msra.mxu0 %v5107
        %5159 = vmatprep.subr.bf16.mxu0 0
        %5160 = vmatpush1.bf16.msra.mxu0 %v5108
        %5161 = vmatprep.subr.bf16.mxu0 0
        %5162 = vmatpush1.bf16.msra.mxu0 %v5109
        %5163 = vmatprep.subr.bf16.mxu0 0
        %5164 = vmatpush1.bf16.msra.mxu0 %v5110
        %5165 = vmatprep.subr.bf16.mxu0 0
        %5166 = vmatpush1.bf16.msra.mxu0 %v5111
        %5167 = vmatprep.subr.bf16.mxu0 0
        %5168 = vmatpush1.bf16.msra.mxu0 %v5112
        %5169 = vmatprep.subr.bf16.mxu0 0
        %5170 = vmatpush1.bf16.msra.mxu0 %v5113
        %5171 = vmatprep.subr.bf16.mxu0 0
        %5172 = vmatpush1.bf16.msra.mxu0 %v5114
        %5173 = vmatprep.subr.bf16.mxu0 0
        %5174 = vmatpush1.bf16.msra.mxu0 %v5115
        %5175 = vmatprep.subr.bf16.mxu0 0
        %5176 = vmatpush1.bf16.msra.mxu0 %v5116
        %5177 = vmatprep.subr.bf16.mxu0 0
        %5178 = vmatpush1.bf16.msra.mxu0 %v5117
        %5179 = vmatprep.subr.bf16.mxu0 0
        %5180 = vmatpush1.bf16.msra.mxu0 %v5118
        %5181 = vmatprep.subr.bf16.mxu0 0
        %5182 = vmatpush1.bf16.msra.mxu0 %v5119
        %5183 = vmatprep.subr.bf16.mxu0 0
        %5184 = vmatpush1.bf16.msra.mxu0 %v5120
        %5185 = vmatprep.mubr.bf16.mxu0 %v4249
        %5186 = vmatmul.mubr.bf16.gmra.mrb[0].mxu0 %v4240
        %v5187 = vpop.f32.mrb[0].mxu0
        %v5188 = vadd.f32 0.0, %v5187
        %v5189 = vpop.f32.mrb[0].mxu0
        %v5190 = vpop.f32.mrb[0].mxu0
        %v5191 = vadd.f32 0.0, %v5190
        %v5192 = vpop.f32.mrb[0].mxu0
        %5193 = vmatprep.mubr.bf16.mxu0 %v4292
        %5194 = vmatmul.mubr.bf16.gmra.mrb[0].mxu0 %v4283
        %v5195 = vpop.f32.mrb[0].mxu0
        %v5196 = vadd.f32 0.0, %v5195
        %v5197 = vpop.f32.mrb[0].mxu0
        %v5198 = vpop.f32.mrb[0].mxu0
        %v5199 = vadd.f32 0.0, %v5198
        %v5200 = vpop.f32.mrb[0].mxu0
        %5201 = vmatprep.mubr.bf16.mxu0 %v4335
        %5202 = vmatmul.mubr.bf16.gmra.mrb[0].mxu0 %v4326
        %v5203 = vpop.f32.mrb[0].mxu0
        %v5204 = vadd.f32 0.0, %v5203
        %v5205 = vpop.f32.mrb[0].mxu0
        %v5206 = vpop.f32.mrb[0].mxu0
        %v5207 = vadd.f32 0.0, %v5206
        %v5208 = vpop.f32.mrb[0].mxu0
        %5209 = vmatprep.mubr.bf16.mxu0 %v4378
        %5210 = vmatmul.mubr.bf16.gmra.mrb[0].mxu0 %v4369
        %v5211 = vpop.f32.mrb[0].mxu0
        %v5212 = vadd.f32 0.0, %v5211
        %v5213 = vpop.f32.mrb[0].mxu0
        %v5214 = vpop.f32.mrb[0].mxu0
        %v5215 = vadd.f32 0.0, %v5214
        %v5216 = vpop.f32.mrb[0].mxu0
        %5217 = vmatprep.mubr.bf16.mxu0 %v4421
        %5218 = vmatmul.mubr.bf16.gmra.mrb[0].mxu0 %v4412
        %v5219 = vpop.f32.mrb[0].mxu0
        %v5220 = vadd.f32 0.0, %v5219
        %v5221 = vpop.f32.mrb[0].mxu0
        %v5222 = vpop.f32.mrb[0].mxu0
        %v5223 = vadd.f32 0.0, %v5222
        %v5224 = vpop.f32.mrb[0].mxu0
        %5225 = vmatprep.mubr.bf16.mxu0 %v4464
        %5226 = vmatmul.mubr.bf16.gmra.mrb[0].mxu0 %v4455
        %v5227 = vpop.f32.mrb[0].mxu0
        %v5228 = vadd.f32 0.0, %v5227
        %v5229 = vpop.f32.mrb[0].mxu0
        %v5230 = vpop.f32.mrb[0].mxu0
        %v5231 = vadd.f32 0.0, %v5230
        %v5232 = vpop.f32.mrb[0].mxu0
        %5233 = vmatprep.mubr.bf16.mxu0 %v4507
        %5234 = vmatmul.mubr.bf16.gmra.mrb[0].mxu0 %v4498
        %v5235 = vpop.f32.mrb[0].mxu0
        %v5236 = vadd.f32 0.0, %v5235
        %v5237 = vpop.f32.mrb[0].mxu0
        %v5238 = vpop.f32.mrb[0].mxu0
        %v5239 = vadd.f32 0.0, %v5238
        %v5240 = vpop.f32.mrb[0].mxu0
        %5241 = vmatprep.mubr.bf16.mxu0 %v4550
        %5242 = vmatmul.mubr.bf16.gmra.mrb[0].mxu0 %v4541
        %v5243 = vpop.f32.mrb[0].mxu0
        %v5244 = vadd.f32 0.0, %v5243
        %v5245 = vpop.f32.mrb[0].mxu0
        %v5246 = vpop.f32.mrb[0].mxu0
        %v5247 = vadd.f32 0.0, %v5246
        %v5248 = vpop.f32.mrb[0].mxu0
        %5249 = vmatprep.mubr.bf16.mxu0 %v4593
        %5250 = vmatmul.mubr.bf16.gmra.mrb[0].mxu0 %v4584
        %v5251 = vpop.f32.mrb[0].mxu0
        %v5252 = vadd.f32 0.0, %v5251
        %v5253 = vpop.f32.mrb[0].mxu0
        %v5254 = vpop.f32.mrb[0].mxu0
        %v5255 = vadd.f32 0.0, %v5254
        %v5256 = vpop.f32.mrb[0].mxu0
        %5257 = vmatprep.mubr.bf16.mxu0 %v4636
        %5258 = vmatmul.mubr.bf16.gmra.mrb[0].mxu0 %v4627
        %v5259 = vpop.f32.mrb[0].mxu0
        %v5260 = vadd.f32 0.0, %v5259
        %v5261 = vpop.f32.mrb[0].mxu0
        %v5262 = vpop.f32.mrb[0].mxu0
        %v5263 = vadd.f32 0.0, %v5262
        %v5264 = vpop.f32.mrb[0].mxu0
        %5265 = vmatprep.mubr.bf16.mxu0 %v4679
        %5266 = vmatmul.mubr.bf16.gmra.mrb[0].mxu0 %v4670
        %v5267 = vpop.f32.mrb[0].mxu0
        %v5268 = vadd.f32 0.0, %v5267
        %v5269 = vpop.f32.mrb[0].mxu0
        %v5270 = vpop.f32.mrb[0].mxu0
        %v5271 = vadd.f32 0.0, %v5270
        %v5272 = vpop.f32.mrb[0].mxu0
        %5273 = vmatprep.mubr.bf16.mxu0 %v4722
        %5274 = vmatmul.mubr.bf16.gmra.mrb[0].mxu0 %v4713
        %v5275 = vpop.f32.mrb[0].mxu0
        %v5276 = vadd.f32 0.0, %v5275
        %v5277 = vpop.f32.mrb[0].mxu0
        %v5278 = vpop.f32.mrb[0].mxu0
        %v5279 = vadd.f32 0.0, %v5278
        %v5280 = vpop.f32.mrb[0].mxu0
        %5281 = vmatprep.mubr.bf16.mxu0 %v4765
        %5282 = vmatmul.mubr.bf16.gmra.mrb[0].mxu0 %v4756
        %v5283 = vpop.f32.mrb[0].mxu0
        %v5284 = vadd.f32 0.0, %v5283
        %v5285 = vpop.f32.mrb[0].mxu0
        %v5286 = vpop.f32.mrb[0].mxu0
        %v5287 = vadd.f32 0.0, %v5286
        %v5288 = vpop.f32.mrb[0].mxu0
        %5289 = vmatprep.mubr.bf16.mxu0 %v4808
        %5290 = vmatmul.mubr.bf16.gmra.mrb[0].mxu0 %v4799
        %v5291 = vpop.f32.mrb[0].mxu0
        %v5292 = vadd.f32 0.0, %v5291
        %v5293 = vpop.f32.mrb[0].mxu0
        %v5294 = vpop.f32.mrb[0].mxu0
        %v5295 = vadd.f32 0.0, %v5294
        %v5296 = vpop.f32.mrb[0].mxu0
        %5297 = vmatprep.mubr.bf16.mxu0 %v4851
        %5298 = vmatmul.mubr.bf16.gmra.mrb[0].mxu0 %v4842
        %v5299 = vpop.f32.mrb[0].mxu0
        %v5300 = vadd.f32 0.0, %v5299
        %v5301 = vpop.f32.mrb[0].mxu0
        %v5302 = vpop.f32.mrb[0].mxu0
        %v5303 = vadd.f32 0.0, %v5302
        %v5304 = vpop.f32.mrb[0].mxu0
        %5305 = vmatprep.mubr.bf16.mxu0 %v4894
        %5306 = vmatmul.mubr.bf16.gmra.mrb[0].mxu0 %v4885
        %v5307 = vpop.f32.mrb[0].mxu0
        %v5308 = vadd.f32 0.0, %v5307
        %v5309 = vpop.f32.mrb[0].mxu0
        %v5310 = vpop.f32.mrb[0].mxu0
        %v5311 = vadd.f32 0.0, %v5310
        %v5312 = vpop.f32.mrb[0].mxu0
        %5313 = vdwg.mxu0
        %5314 = vmatprep.subr.bf16.mxu0 0
        %5315 = vmatpush1.bf16.msra.mxu0 %v5121
        %5316 = vmatprep.subr.bf16.mxu0 0
        %5317 = vmatpush1.bf16.msra.mxu0 %v5122
        %5318 = vmatprep.subr.bf16.mxu0 0
        %5319 = vmatpush1.bf16.msra.mxu0 %v5123
        %5320 = vmatprep.subr.bf16.mxu0 0
        %5321 = vmatpush1.bf16.msra.mxu0 %v5124
        %5322 = vmatprep.subr.bf16.mxu0 0
        %5323 = vmatpush1.bf16.msra.mxu0 %v5125
        %5324 = vmatprep.subr.bf16.mxu0 0
        %5325 = vmatpush1.bf16.msra.mxu0 %v5126
        %5326 = vmatprep.subr.bf16.mxu0 0
        %5327 = vmatpush1.bf16.msra.mxu0 %v5127
        %5328 = vmatprep.subr.bf16.mxu0 0
        %5329 = vmatpush1.bf16.msra.mxu0 %v5128
        %5330 = vmatprep.subr.bf16.mxu0 0
        %5331 = vmatpush1.bf16.msra.mxu0 0
        %5332 = vmatprep.subr.bf16.mxu0 0
        %5333 = vmatpush1.bf16.msra.mxu0 0
        %5334 = vmatprep.subr.bf16.mxu0 0
        %5335 = vmatpush1.bf16.msra.mxu0 0
        %5336 = vmatprep.subr.bf16.mxu0 0
        %5337 = vmatpush1.bf16.msra.mxu0 0
        %5338 = vmatprep.subr.bf16.mxu0 0
        %5339 = vmatpush1.bf16.msra.mxu0 0
        %5340 = vmatprep.subr.bf16.mxu0 0
        %5341 = vmatpush1.bf16.msra.mxu0 0
        %5342 = vmatprep.subr.bf16.mxu0 0
        %5343 = vmatpush1.bf16.msra.mxu0 0
        %5344 = vmatprep.subr.bf16.mxu0 0
        %5345 = vmatpush1.bf16.msra.mxu0 0
        %5346 = vmatprep.mubr.bf16.mxu0 0
        %5347 = vmatmul.mubr.bf16.gmra.mrb[0].mxu0 %v4266
        %v5348 = vpop.f32.mrb[0].mxu0
        %v5349 = vadd.f32 %v5188, %v5348
        %v5350 = vpop.f32.mrb[0].mxu0
        %v5351 = vpop.f32.mrb[0].mxu0
        %v5352 = vadd.f32 %v5191, %v5351
        %v5353 = vpop.f32.mrb[0].mxu0
        %5354 = vmatprep.mubr.bf16.mxu0 0
        %5355 = vmatmul.mubr.bf16.gmra.mrb[0].mxu0 %v4309
        %v5356 = vpop.f32.mrb[0].mxu0
        %v5357 = vadd.f32 %v5196, %v5356
        %v5358 = vpop.f32.mrb[0].mxu0
        %v5359 = vpop.f32.mrb[0].mxu0
        %v5360 = vadd.f32 %v5199, %v5359
        %v5361 = vpop.f32.mrb[0].mxu0
        %5362 = vmatprep.mubr.bf16.mxu0 0
        %5363 = vmatmul.mubr.bf16.gmra.mrb[0].mxu0 %v4352
        %v5364 = vpop.f32.mrb[0].mxu0
        %v5365 = vadd.f32 %v5204, %v5364
        %v5366 = vpop.f32.mrb[0].mxu0
        %v5367 = vpop.f32.mrb[0].mxu0
        %v5368 = vadd.f32 %v5207, %v5367
        %v5369 = vpop.f32.mrb[0].mxu0
        %5370 = vmatprep.mubr.bf16.mxu0 0
        %5371 = vmatmul.mubr.bf16.gmra.mrb[0].mxu0 %v4395
        %v5372 = vpop.f32.mrb[0].mxu0
        %v5373 = vadd.f32 %v5212, %v5372
        %v5374 = vpop.f32.mrb[0].mxu0
        %v5375 = vpop.f32.mrb[0].mxu0
        %v5376 = vadd.f32 %v5215, %v5375
        %v5377 = vpop.f32.mrb[0].mxu0
        %5378 = vmatprep.mubr.bf16.mxu0 0
        %5379 = vmatmul.mubr.bf16.gmra.mrb[0].mxu0 %v4438
        %v5380 = vpop.f32.mrb[0].mxu0
        %v5381 = vadd.f32 %v5220, %v5380
        %v5382 = vpop.f32.mrb[0].mxu0
        %v5383 = vpop.f32.mrb[0].mxu0
        %v5384 = vadd.f32 %v5223, %v5383
        %v5385 = vpop.f32.mrb[0].mxu0
        %5386 = vmatprep.mubr.bf16.mxu0 0
        %5387 = vmatmul.mubr.bf16.gmra.mrb[0].mxu0 %v4481
        %v5388 = vpop.f32.mrb[0].mxu0
        %v5389 = vadd.f32 %v5228, %v5388
        %v5390 = vpop.f32.mrb[0].mxu0
        %v5391 = vpop.f32.mrb[0].mxu0
        %v5392 = vadd.f32 %v5231, %v5391
        %v5393 = vpop.f32.mrb[0].mxu0
        %5394 = vmatprep.mubr.bf16.mxu0 0
        %5395 = vmatmul.mubr.bf16.gmra.mrb[0].mxu0 %v4524
        %v5396 = vpop.f32.mrb[0].mxu0
        %v5397 = vadd.f32 %v5236, %v5396
        %v5398 = vpop.f32.mrb[0].mxu0
        %v5399 = vpop.f32.mrb[0].mxu0
        %v5400 = vadd.f32 %v5239, %v5399
        %v5401 = vpop.f32.mrb[0].mxu0
        %5402 = vmatprep.mubr.bf16.mxu0 0
        %5403 = vmatmul.mubr.bf16.gmra.mrb[0].mxu0 %v4567
        %v5404 = vpop.f32.mrb[0].mxu0
        %v5405 = vadd.f32 %v5244, %v5404
        %v5406 = vpop.f32.mrb[0].mxu0
        %v5407 = vpop.f32.mrb[0].mxu0
        %v5408 = vadd.f32 %v5247, %v5407
        %v5409 = vpop.f32.mrb[0].mxu0
        %5410 = vmatprep.mubr.bf16.mxu0 0
        %5411 = vmatmul.mubr.bf16.gmra.mrb[0].mxu0 %v4610
        %v5412 = vpop.f32.mrb[0].mxu0
        %v5413 = vadd.f32 %v5252, %v5412
        %v5414 = vpop.f32.mrb[0].mxu0
        %v5415 = vpop.f32.mrb[0].mxu0
        %v5416 = vadd.f32 %v5255, %v5415
        %v5417 = vpop.f32.mrb[0].mxu0
        %5418 = vmatprep.mubr.bf16.mxu0 0
        %5419 = vmatmul.mubr.bf16.gmra.mrb[0].mxu0 %v4653
        %v5420 = vpop.f32.mrb[0].mxu0
        %v5421 = vadd.f32 %v5260, %v5420
        %v5422 = vpop.f32.mrb[0].mxu0
        %v5423 = vpop.f32.mrb[0].mxu0
        %v5424 = vadd.f32 %v5263, %v5423
        %v5425 = vpop.f32.mrb[0].mxu0
        %5426 = vmatprep.mubr.bf16.mxu0 0
        %5427 = vmatmul.mubr.bf16.gmra.mrb[0].mxu0 %v4696
        %v5428 = vpop.f32.mrb[0].mxu0
        %v5429 = vadd.f32 %v5268, %v5428
        %v5430 = vpop.f32.mrb[0].mxu0
        %v5431 = vpop.f32.mrb[0].mxu0
        %v5432 = vadd.f32 %v5271, %v5431
        %v5433 = vpop.f32.mrb[0].mxu0
        %5434 = vmatprep.mubr.bf16.mxu0 0
        %5435 = vmatmul.mubr.bf16.gmra.mrb[0].mxu0 %v4739
        %v5436 = vpop.f32.mrb[0].mxu0
        %v5437 = vadd.f32 %v5276, %v5436
        %v5438 = vpop.f32.mrb[0].mxu0
        %v5439 = vpop.f32.mrb[0].mxu0
        %v5440 = vadd.f32 %v5279, %v5439
        %v5441 = vpop.f32.mrb[0].mxu0
        %5442 = vmatprep.mubr.bf16.mxu0 0
        %5443 = vmatmul.mubr.bf16.gmra.mrb[0].mxu0 %v4782
        %v5444 = vpop.f32.mrb[0].mxu0
        %v5445 = vadd.f32 %v5284, %v5444
        %v5446 = vpop.f32.mrb[0].mxu0
        %v5447 = vpop.f32.mrb[0].mxu0
        %v5448 = vadd.f32 %v5287, %v5447
        %v5449 = vpop.f32.mrb[0].mxu0
        %5450 = vmatprep.mubr.bf16.mxu0 0
        %5451 = vmatmul.mubr.bf16.gmra.mrb[0].mxu0 %v4825
        %v5452 = vpop.f32.mrb[0].mxu0
        %v5453 = vadd.f32 %v5292, %v5452
        %v5454 = vpop.f32.mrb[0].mxu0
        %v5455 = vpop.f32.mrb[0].mxu0
        %v5456 = vadd.f32 %v5295, %v5455
        %v5457 = vpop.f32.mrb[0].mxu0
        %5458 = vmatprep.mubr.bf16.mxu0 0
        %5459 = vmatmul.mubr.bf16.gmra.mrb[0].mxu0 %v4868
        %v5460 = vpop.f32.mrb[0].mxu0
        %v5461 = vadd.f32 %v5300, %v5460
        %v5462 = vpop.f32.mrb[0].mxu0
        %v5463 = vpop.f32.mrb[0].mxu0
        %v5464 = vadd.f32 %v5303, %v5463
        %v5465 = vpop.f32.mrb[0].mxu0
        %5466 = vmatprep.mubr.bf16.mxu0 0
        %5467 = vmatmul.mubr.bf16.gmra.mrb[0].mxu0 %v4911
        %v5468 = vpop.f32.mrb[0].mxu0
        %v5469 = vadd.f32 %v5308, %v5468
        %v5470 = vpop.f32.mrb[0].mxu0
        %v5471 = vpop.f32.mrb[0].mxu0
        %v5472 = vadd.f32 %v5311, %v5471
        %v5473 = vpop.f32.mrb[0].mxu0
        %5474 = vdwg.mxu0
        %v5475 = vadd.f32 %v3665, %v5349
        %v5476 = vadd.f32 %v3668, %v5352
        %v5477 = vadd.f32 %v3673, %v5357
        %v5478 = vadd.f32 %v3676, %v5360
        %v5479 = vadd.f32 %v3681, %v5365
        %v5480 = vadd.f32 %v3684, %v5368
        %v5481 = vadd.f32 %v3689, %v5373
        %v5482 = vadd.f32 %v3692, %v5376
        %v5483 = vadd.f32 %v3697, %v5381
        %v5484 = vadd.f32 %v3700, %v5384
        %v5485 = vadd.f32 %v3705, %v5389
        %v5486 = vadd.f32 %v3708, %v5392
        %v5487 = vadd.f32 %v3713, %v5397
        %v5488 = vadd.f32 %v3716, %v5400
        %v5489 = vadd.f32 %v3721, %v5405
        %v5490 = vadd.f32 %v3724, %v5408
        %v5491 = vadd.f32 %v3729, %v5413
        %v5492 = vadd.f32 %v3732, %v5416
        %v5493 = vadd.f32 %v3737, %v5421
        %v5494 = vadd.f32 %v3740, %v5424
        %v5495 = vadd.f32 %v3745, %v5429
        %v5496 = vadd.f32 %v3748, %v5432
        %v5497 = vadd.f32 %v3753, %v5437
        %v5498 = vadd.f32 %v3756, %v5440
        %v5499 = vadd.f32 %v3761, %v5445
        %v5500 = vadd.f32 %v3764, %v5448
        %v5501 = vadd.f32 %v3769, %v5453
        %v5502 = vadd.f32 %v3772, %v5456
        %v5503 = vadd.f32 %v3777, %v5461
        %v5504 = vadd.f32 %v3780, %v5464
        %v5505 = vadd.f32 %v3785, %v5469
        %v5506 = vadd.f32 %v3788, %v5472
        %v5507 = vld [vmem:[%s2] sm:$0x1]
        %v5509 = vlaneseq
        %v5510 = vshrl.u32 %v5509, 7
        %v5511 = vsub.s32 0, %v5510
        %v5512 = vrot.slane %v5507, %v5511
        %v5514 = vmul.f32 %v5475, %v5512
        %v5515 = vmul.f32 %v5476, %v5512
        %v5516 = vmul.f32 %v5477, %v5512
        %v5517 = vmul.f32 %v5478, %v5512
        %v5518 = vmul.f32 %v5479, %v5512
        %v5519 = vmul.f32 %v5480, %v5512
        %v5520 = vmul.f32 %v5481, %v5512
        %v5521 = vmul.f32 %v5482, %v5512
        %v5522 = vmul.f32 %v5483, %v5512
        %v5523 = vmul.f32 %v5484, %v5512
        %v5524 = vmul.f32 %v5485, %v5512
        %v5525 = vmul.f32 %v5486, %v5512
        %v5526 = vmul.f32 %v5487, %v5512
        %v5527 = vmul.f32 %v5488, %v5512
        %v5528 = vmul.f32 %v5489, %v5512
        %v5529 = vmul.f32 %v5490, %v5512
        %v5530 = vmul.f32 %v5491, %v5512
        %v5531 = vmul.f32 %v5492, %v5512
        %v5532 = vmul.f32 %v5493, %v5512
        %v5533 = vmul.f32 %v5494, %v5512
        %v5534 = vmul.f32 %v5495, %v5512
        %v5535 = vmul.f32 %v5496, %v5512
        %v5536 = vmul.f32 %v5497, %v5512
        %v5537 = vmul.f32 %v5498, %v5512
        %v5538 = vmul.f32 %v5499, %v5512
        %v5539 = vmul.f32 %v5500, %v5512
        %v5540 = vmul.f32 %v5501, %v5512
        %v5541 = vmul.f32 %v5502, %v5512
        %v5542 = vmul.f32 %v5503, %v5512
        %v5543 = vmul.f32 %v5504, %v5512
        %v5544 = vmul.f32 %v5505, %v5512
        %v5545 = vmul.f32 %v5506, %v5512
        %v5546 = vld [vmem:[%s3] sm:$0x1]
        %v5548 = vlaneseq
        %v5549 = vshrl.u32 %v5548, 7
        %v5550 = vsub.s32 0, %v5549
        %v5551 = vrot.slane %v5546, %v5550
        %v5553 = vadd.f32 %v5514, %v5551
        %v5554 = vadd.f32 %v5515, %v5551
        %v5555 = vadd.f32 %v5516, %v5551
        %v5556 = vadd.f32 %v5517, %v5551
        %v5557 = vadd.f32 %v5518, %v5551
        %v5558 = vadd.f32 %v5519, %v5551
        %v5559 = vadd.f32 %v5520, %v5551
        %v5560 = vadd.f32 %v5521, %v5551
        %v5561 = vadd.f32 %v5522, %v5551
        %v5562 = vadd.f32 %v5523, %v5551
        %v5563 = vadd.f32 %v5524, %v5551
        %v5564 = vadd.f32 %v5525, %v5551
        %v5565 = vadd.f32 %v5526, %v5551
        %v5566 = vadd.f32 %v5527, %v5551
        %v5567 = vadd.f32 %v5528, %v5551
        %v5568 = vadd.f32 %v5529, %v5551
        %v5569 = vadd.f32 %v5530, %v5551
        %v5570 = vadd.f32 %v5531, %v5551
        %v5571 = vadd.f32 %v5532, %v5551
        %v5572 = vadd.f32 %v5533, %v5551
        %v5573 = vadd.f32 %v5534, %v5551
        %v5574 = vadd.f32 %v5535, %v5551
        %v5575 = vadd.f32 %v5536, %v5551
        %v5576 = vadd.f32 %v5537, %v5551
        %v5577 = vadd.f32 %v5538, %v5551
        %v5578 = vadd.f32 %v5539, %v5551
        %v5579 = vadd.f32 %v5540, %v5551
        %v5580 = vadd.f32 %v5541, %v5551
        %v5581 = vadd.f32 %v5542, %v5551
        %v5582 = vadd.f32 %v5543, %v5551
        %v5583 = vadd.f32 %v5544, %v5551
        %v5584 = vadd.f32 %v5545, %v5551
        %v5585 = vmax.f32 %v5553, 0.0
        %v5586 = vmax.f32 %v5554, 0.0
        %v5587 = vmax.f32 %v5555, 0.0
        %v5588 = vmax.f32 %v5556, 0.0
        %v5589 = vmax.f32 %v5557, 0.0
        %v5590 = vmax.f32 %v5558, 0.0
        %v5591 = vmax.f32 %v5559, 0.0
        %v5592 = vmax.f32 %v5560, 0.0
        %v5593 = vmax.f32 %v5561, 0.0
        %v5594 = vmax.f32 %v5562, 0.0
        %v5595 = vmax.f32 %v5563, 0.0
        %v5596 = vmax.f32 %v5564, 0.0
        %v5597 = vmax.f32 %v5565, 0.0
        %v5598 = vmax.f32 %v5566, 0.0
        %v5599 = vmax.f32 %v5567, 0.0
        %v5600 = vmax.f32 %v5568, 0.0
        %v5601 = vmax.f32 %v5569, 0.0
        %v5602 = vmax.f32 %v5570, 0.0
        %v5603 = vmax.f32 %v5571, 0.0
        %v5604 = vmax.f32 %v5572, 0.0
        %v5605 = vmax.f32 %v5573, 0.0
        %v5606 = vmax.f32 %v5574, 0.0
        %v5607 = vmax.f32 %v5575, 0.0
        %v5608 = vmax.f32 %v5576, 0.0
        %v5609 = vmax.f32 %v5577, 0.0
        %v5610 = vmax.f32 %v5578, 0.0
        %v5611 = vmax.f32 %v5579, 0.0
        %v5612 = vmax.f32 %v5580, 0.0
        %v5613 = vmax.f32 %v5581, 0.0
        %v5614 = vmax.f32 %v5582, 0.0
        %v5615 = vmax.f32 %v5583, 0.0
        %v5616 = vmax.f32 %v5584, 0.0
        %5617 = vst [vmem:[#allocation2] sm:$0xff] 0
        %5618 = vst [vmem:[#allocation2 + $0x8] sm:$0xff] 0
        %s5619 = scalar_lea.vmem [#allocation2], 272
        %5620 = vst [vmem:[%s5619] sm:$0xff] 0
        %5621 = vst [vmem:[%s5619 + $0x8] sm:$0xff] 0
        %5622 = vst [vmem:[#allocation2] sm:$0xf] 0
        %5623 = vst [vmem:[#allocation2 + $0x10] sm:$0xf] 0
        %5624 = vst [vmem:[#allocation2 + $0x20] sm:$0xf] 0
        %5625 = vst [vmem:[#allocation2 + $0x30] sm:$0xf] 0
        %5626 = vst [vmem:[#allocation2 + $0x40] sm:$0xf] 0
        %5627 = vst [vmem:[#allocation2 + $0x50] sm:$0xf] 0
        %5628 = vst [vmem:[#allocation2 + $0x60] sm:$0xf] 0
        %5629 = vst [vmem:[#allocation2 + $0x70] sm:$0xf] 0
        %5630 = vst [vmem:[#allocation2 + $0x80] sm:$0xf] 0
        %5631 = vst [vmem:[#allocation2 + $0x90] sm:$0xf] 0
        %5632 = vst [vmem:[#allocation2 + $0xa0] sm:$0xf] 0
        %5633 = vst [vmem:[#allocation2 + $0xb0] sm:$0xf] 0
        %5634 = vst [vmem:[#allocation2 + $0xc0] sm:$0xf] 0
        %5635 = vst [vmem:[#allocation2 + $0xd0] sm:$0xf] 0
        %5636 = vst [vmem:[#allocation2 + $0xe0] sm:$0xf] 0
        %5637 = vst [vmem:[#allocation2 + $0xf0] sm:$0xf] 0
        %5638 = vst [vmem:[#allocation2 + $0x100] sm:$0xf] 0
        %5639 = vst [vmem:[#allocation2 + $0x110] sm:$0xf] 0
        %vm5640 = vcmask 1044484
        %vm5641 = vmand %vm5640, %vm856
        %v5642 = vld [vmem:[#allocation2 + $0x8] sm:$0x10]
        %v5643 = vsel %vm5641, 0, %v5642
        %5644 = vst [vmem:[#allocation2 + $0x8] sm:$0x10] %v5643
        %v5645 = vld [vmem:[#allocation2 + $0x18] sm:$0x10]
        %v5646 = vsel %vm5641, 0, %v5645
        %5647 = vst [vmem:[#allocation2 + $0x18] sm:$0x10] %v5646
        %v5648 = vld [vmem:[#allocation2 + $0x28] sm:$0x10]
        %v5649 = vsel %vm5641, 0, %v5648
        %5650 = vst [vmem:[#allocation2 + $0x28] sm:$0x10] %v5649
        %v5651 = vld [vmem:[#allocation2 + $0x38] sm:$0x10]
        %v5652 = vsel %vm5641, 0, %v5651
        %5653 = vst [vmem:[#allocation2 + $0x38] sm:$0x10] %v5652
        %v5654 = vld [vmem:[#allocation2 + $0x48] sm:$0x10]
        %v5655 = vsel %vm5641, 0, %v5654
        %5656 = vst [vmem:[#allocation2 + $0x48] sm:$0x10] %v5655
        %v5657 = vld [vmem:[#allocation2 + $0x58] sm:$0x10]
        %v5658 = vsel %vm5641, 0, %v5657
        %5659 = vst [vmem:[#allocation2 + $0x58] sm:$0x10] %v5658
        %v5660 = vld [vmem:[#allocation2 + $0x68] sm:$0x10]
        %v5661 = vsel %vm5641, 0, %v5660
        %5662 = vst [vmem:[#allocation2 + $0x68] sm:$0x10] %v5661
        %v5663 = vld [vmem:[#allocation2 + $0x78] sm:$0x10]
        %v5664 = vsel %vm5641, 0, %v5663
        %5665 = vst [vmem:[#allocation2 + $0x78] sm:$0x10] %v5664
        %v5666 = vld [vmem:[#allocation2 + $0x88] sm:$0x10]
        %v5667 = vsel %vm5641, 0, %v5666
        %5668 = vst [vmem:[#allocation2 + $0x88] sm:$0x10] %v5667
        %v5669 = vld [vmem:[#allocation2 + $0x98] sm:$0x10]
        %v5670 = vsel %vm5641, 0, %v5669
        %5671 = vst [vmem:[#allocation2 + $0x98] sm:$0x10] %v5670
        %v5672 = vld [vmem:[#allocation2 + $0xa8] sm:$0x10]
        %v5673 = vsel %vm5641, 0, %v5672
        %5674 = vst [vmem:[#allocation2 + $0xa8] sm:$0x10] %v5673
        %v5675 = vld [vmem:[#allocation2 + $0xb8] sm:$0x10]
        %v5676 = vsel %vm5641, 0, %v5675
        %5677 = vst [vmem:[#allocation2 + $0xb8] sm:$0x10] %v5676
        %v5678 = vld [vmem:[#allocation2 + $0xc8] sm:$0x10]
        %v5679 = vsel %vm5641, 0, %v5678
        %5680 = vst [vmem:[#allocation2 + $0xc8] sm:$0x10] %v5679
        %v5681 = vld [vmem:[#allocation2 + $0xd8] sm:$0x10]
        %v5682 = vsel %vm5641, 0, %v5681
        %5683 = vst [vmem:[#allocation2 + $0xd8] sm:$0x10] %v5682
        %v5684 = vld [vmem:[#allocation2 + $0xe8] sm:$0x10]
        %v5685 = vsel %vm5641, 0, %v5684
        %5686 = vst [vmem:[#allocation2 + $0xe8] sm:$0x10] %v5685
        %v5687 = vld [vmem:[#allocation2 + $0xf8] sm:$0x10]
        %v5688 = vsel %vm5641, 0, %v5687
        %5689 = vst [vmem:[#allocation2 + $0xf8] sm:$0x10] %v5688
        %v5690 = vld [vmem:[#allocation2 + $0x108] sm:$0x10]
        %v5691 = vsel %vm5641, 0, %v5690
        %5692 = vst [vmem:[#allocation2 + $0x108] sm:$0x10] %v5691
        %v5693 = vld [vmem:[#allocation2 + $0x118] sm:$0x10]
        %v5694 = vsel %vm5641, 0, %v5693
        %5695 = vst [vmem:[#allocation2 + $0x118] sm:$0x10] %v5694
        %v5696 = vpack.c.bf16 %v5586, %v5585
        %v5697 = vpack.c.bf16 %v5588, %v5587
        %v5698 = vpack.c.bf16 %v5590, %v5589
        %v5699 = vpack.c.bf16 %v5592, %v5591
        %v5700 = vpack.c.bf16 %v5594, %v5593
        %v5701 = vpack.c.bf16 %v5596, %v5595
        %v5702 = vpack.c.bf16 %v5598, %v5597
        %v5703 = vpack.c.bf16 %v5600, %v5599
        %v5704 = vpack.c.bf16 %v5602, %v5601
        %v5705 = vpack.c.bf16 %v5604, %v5603
        %v5706 = vpack.c.bf16 %v5606, %v5605
        %v5707 = vpack.c.bf16 %v5608, %v5607
        %v5708 = vpack.c.bf16 %v5610, %v5609
        %v5709 = vpack.c.bf16 %v5612, %v5611
        %v5710 = vpack.c.bf16 %v5614, %v5613
        %v5711 = vpack.c.bf16 %v5616, %v5615
        %v5728 = vrot.slane %v5696, 4
        %v5729 = vrot.slane %v5697, 4
        %v5730 = vrot.slane %v5698, 4
        %v5731 = vrot.slane %v5699, 4
        %v5732 = vrot.slane %v5700, 4
        %v5733 = vrot.slane %v5701, 4
        %v5734 = vrot.slane %v5702, 4
        %v5735 = vrot.slane %v5703, 4
        %v5736 = vrot.slane %v5704, 4
        %v5737 = vrot.slane %v5705, 4
        %v5738 = vrot.slane %v5706, 4
        %v5739 = vrot.slane %v5707, 4
        %v5740 = vrot.slane %v5708, 4
        %v5741 = vrot.slane %v5709, 4
        %v5742 = vrot.slane %v5710, 4
        %v5743 = vrot.slane %v5711, 4
        %s5760 = scalar_lea.vmem [#allocation2], 16
        %5761 = vst [vmem:[%s5760] sm:$0xf0] %v5728
        %5762 = vst [vmem:[%s5760 + $0x8] sm:$0xf] %v5728
        %5763 = vst [vmem:[%s5760 + $0x10] sm:$0xf0] %v5729
        %5764 = vst [vmem:[%s5760 + $0x18] sm:$0xf] %v5729
        %5765 = vst [vmem:[%s5760 + $0x20] sm:$0xf0] %v5730
        %5766 = vst [vmem:[%s5760 + $0x28] sm:$0xf] %v5730
        %5767 = vst [vmem:[%s5760 + $0x30] sm:$0xf0] %v5731
        %5768 = vst [vmem:[%s5760 + $0x38] sm:$0xf] %v5731
        %5769 = vst [vmem:[%s5760 + $0x40] sm:$0xf0] %v5732
        %5770 = vst [vmem:[%s5760 + $0x48] sm:$0xf] %v5732
        %5771 = vst [vmem:[%s5760 + $0x50] sm:$0xf0] %v5733
        %5772 = vst [vmem:[%s5760 + $0x58] sm:$0xf] %v5733
        %5773 = vst [vmem:[%s5760 + $0x60] sm:$0xf0] %v5734
        %5774 = vst [vmem:[%s5760 + $0x68] sm:$0xf] %v5734
        %5775 = vst [vmem:[%s5760 + $0x70] sm:$0xf0] %v5735
        %5776 = vst [vmem:[%s5760 + $0x78] sm:$0xf] %v5735
        %5777 = vst [vmem:[%s5760 + $0x80] sm:$0xf0] %v5736
        %5778 = vst [vmem:[%s5760 + $0x88] sm:$0xf] %v5736
        %5779 = vst [vmem:[%s5760 + $0x90] sm:$0xf0] %v5737
        %5780 = vst [vmem:[%s5760 + $0x98] sm:$0xf] %v5737
        %5781 = vst [vmem:[%s5760 + $0xa0] sm:$0xf0] %v5738
        %5782 = vst [vmem:[%s5760 + $0xa8] sm:$0xf] %v5738
        %5783 = vst [vmem:[%s5760 + $0xb0] sm:$0xf0] %v5739
        %5784 = vst [vmem:[%s5760 + $0xb8] sm:$0xf] %v5739
        %5785 = vst [vmem:[%s5760 + $0xc0] sm:$0xf0] %v5740
        %5786 = vst [vmem:[%s5760 + $0xc8] sm:$0xf] %v5740
        %5787 = vst [vmem:[%s5760 + $0xd0] sm:$0xf0] %v5741
        %5788 = vst [vmem:[%s5760 + $0xd8] sm:$0xf] %v5741
        %5789 = vst [vmem:[%s5760 + $0xe0] sm:$0xf0] %v5742
        %5790 = vst [vmem:[%s5760 + $0xe8] sm:$0xf] %v5742
        %5791 = vst [vmem:[%s5760 + $0xf0] sm:$0xf0] %v5743
        %5792 = vst [vmem:[%s5760 + $0xf8] sm:$0xf] %v5743
        %v5793 = vld [vmem:[#allocation2] sm:$0xff]
        %v5794 = vld [vmem:[#allocation2 + $0x8] sm:$0xff]
        %v5795 = vld [vmem:[#allocation2 + $0x10] sm:$0xff]
        %v5796 = vld [vmem:[#allocation2 + $0x18] sm:$0xff]
        %v5797 = vld [vmem:[#allocation2 + $0x20] sm:$0xff]
        %v5798 = vld [vmem:[#allocation2 + $0x28] sm:$0xff]
        %v5799 = vld [vmem:[#allocation2 + $0x30] sm:$0xff]
        %v5800 = vld [vmem:[#allocation2 + $0x38] sm:$0xff]
        %v5801 = vld [vmem:[#allocation2 + $0x40] sm:$0xff]
        %v5802 = vld [vmem:[#allocation2 + $0x48] sm:$0xff]
        %v5803 = vld [vmem:[#allocation2 + $0x50] sm:$0xff]
        %v5804 = vld [vmem:[#allocation2 + $0x58] sm:$0xff]
        %v5805 = vld [vmem:[#allocation2 + $0x60] sm:$0xff]
        %v5806 = vld [vmem:[#allocation2 + $0x68] sm:$0xff]
        %v5807 = vld [vmem:[#allocation2 + $0x70] sm:$0xff]
        %v5808 = vld [vmem:[#allocation2 + $0x78] sm:$0xff]
        %v5809 = vld [vmem:[#allocation2 + $0x80] sm:$0xff]
        %v5810 = vld [vmem:[#allocation2 + $0x88] sm:$0xff]
        %v5811 = vld [vmem:[#allocation2 + $0x90] sm:$0xff]
        %v5812 = vld [vmem:[#allocation2 + $0x98] sm:$0xff]
        %v5813 = vld [vmem:[#allocation2 + $0xa0] sm:$0xff]
        %v5814 = vld [vmem:[#allocation2 + $0xa8] sm:$0xff]
        %v5815 = vld [vmem:[#allocation2 + $0xb0] sm:$0xff]
        %v5816 = vld [vmem:[#allocation2 + $0xb8] sm:$0xff]
        %v5817 = vld [vmem:[#allocation2 + $0xc0] sm:$0xff]
        %v5818 = vld [vmem:[#allocation2 + $0xc8] sm:$0xff]
        %v5819 = vld [vmem:[#allocation2 + $0xd0] sm:$0xff]
        %v5820 = vld [vmem:[#allocation2 + $0xd8] sm:$0xff]
        %v5821 = vld [vmem:[#allocation2 + $0xe0] sm:$0xff]
        %v5822 = vld [vmem:[#allocation2 + $0xe8] sm:$0xff]
        %v5823 = vld [vmem:[#allocation2 + $0xf0] sm:$0xff]
        %v5824 = vld [vmem:[#allocation2 + $0xf8] sm:$0xff]
        %vm5825 = vsmask.f32 7424
        %v5827 = vshrl.u32 %v5793, 16
        %v5829 = vshll.u32 %v5793, 16
        %v5831 = vrot.slane %v5829, 1
        %v5832 = vor.u32 %v5827, %v5831
        %v5834 = vshll.u32 %v5794, 16
        %v5836 = vrot.slane %v5834, 1
        %v5837 = vsel %vm5825, %v5832, %v5836
        %v5838 = vshrl.u32 %v5794, 16
        %v5840 = vor.u32 %v5838, %v5836
        %v5842 = vshrl.u32 %v5795, 16
        %v5844 = vshll.u32 %v5795, 16
        %v5846 = vrot.slane %v5844, 1
        %v5847 = vor.u32 %v5842, %v5846
        %v5849 = vshll.u32 %v5796, 16
        %v5851 = vrot.slane %v5849, 1
        %v5852 = vsel %vm5825, %v5847, %v5851
        %v5853 = vshrl.u32 %v5796, 16
        %v5855 = vor.u32 %v5853, %v5851
        %v5857 = vshrl.u32 %v5797, 16
        %v5859 = vshll.u32 %v5797, 16
        %v5861 = vrot.slane %v5859, 1
        %v5862 = vor.u32 %v5857, %v5861
        %v5864 = vshll.u32 %v5798, 16
        %v5866 = vrot.slane %v5864, 1
        %v5867 = vsel %vm5825, %v5862, %v5866
        %v5868 = vshrl.u32 %v5798, 16
        %v5870 = vor.u32 %v5868, %v5866
        %v5872 = vshrl.u32 %v5799, 16
        %v5874 = vshll.u32 %v5799, 16
        %v5876 = vrot.slane %v5874, 1
        %v5877 = vor.u32 %v5872, %v5876
        %v5879 = vshll.u32 %v5800, 16
        %v5881 = vrot.slane %v5879, 1
        %v5882 = vsel %vm5825, %v5877, %v5881
        %v5883 = vshrl.u32 %v5800, 16
        %v5885 = vor.u32 %v5883, %v5881
        %v5887 = vshrl.u32 %v5801, 16
        %v5889 = vshll.u32 %v5801, 16
        %v5891 = vrot.slane %v5889, 1
        %v5892 = vor.u32 %v5887, %v5891
        %v5894 = vshll.u32 %v5802, 16
        %v5896 = vrot.slane %v5894, 1
        %v5897 = vsel %vm5825, %v5892, %v5896
        %v5898 = vshrl.u32 %v5802, 16
        %v5900 = vor.u32 %v5898, %v5896
        %v5902 = vshrl.u32 %v5803, 16
        %v5904 = vshll.u32 %v5803, 16
        %v5906 = vrot.slane %v5904, 1
        %v5907 = vor.u32 %v5902, %v5906
        %v5909 = vshll.u32 %v5804, 16
        %v5911 = vrot.slane %v5909, 1
        %v5912 = vsel %vm5825, %v5907, %v5911
        %v5913 = vshrl.u32 %v5804, 16
        %v5915 = vor.u32 %v5913, %v5911
        %v5917 = vshrl.u32 %v5805, 16
        %v5919 = vshll.u32 %v5805, 16
        %v5921 = vrot.slane %v5919, 1
        %v5922 = vor.u32 %v5917, %v5921
        %v5924 = vshll.u32 %v5806, 16
        %v5926 = vrot.slane %v5924, 1
        %v5927 = vsel %vm5825, %v5922, %v5926
        %v5928 = vshrl.u32 %v5806, 16
        %v5930 = vor.u32 %v5928, %v5926
        %v5932 = vshrl.u32 %v5807, 16
        %v5934 = vshll.u32 %v5807, 16
        %v5936 = vrot.slane %v5934, 1
        %v5937 = vor.u32 %v5932, %v5936
        %v5939 = vshll.u32 %v5808, 16
        %v5941 = vrot.slane %v5939, 1
        %v5942 = vsel %vm5825, %v5937, %v5941
        %v5943 = vshrl.u32 %v5808, 16
        %v5945 = vor.u32 %v5943, %v5941
        %v5947 = vshrl.u32 %v5809, 16
        %v5949 = vshll.u32 %v5809, 16
        %v5951 = vrot.slane %v5949, 1
        %v5952 = vor.u32 %v5947, %v5951
        %v5954 = vshll.u32 %v5810, 16
        %v5956 = vrot.slane %v5954, 1
        %v5957 = vsel %vm5825, %v5952, %v5956
        %v5958 = vshrl.u32 %v5810, 16
        %v5960 = vor.u32 %v5958, %v5956
        %v5962 = vshrl.u32 %v5811, 16
        %v5964 = vshll.u32 %v5811, 16
        %v5966 = vrot.slane %v5964, 1
        %v5967 = vor.u32 %v5962, %v5966
        %v5969 = vshll.u32 %v5812, 16
        %v5971 = vrot.slane %v5969, 1
        %v5972 = vsel %vm5825, %v5967, %v5971
        %v5973 = vshrl.u32 %v5812, 16
        %v5975 = vor.u32 %v5973, %v5971
        %v5977 = vshrl.u32 %v5813, 16
        %v5979 = vshll.u32 %v5813, 16
        %v5981 = vrot.slane %v5979, 1
        %v5982 = vor.u32 %v5977, %v5981
        %v5984 = vshll.u32 %v5814, 16
        %v5986 = vrot.slane %v5984, 1
        %v5987 = vsel %vm5825, %v5982, %v5986
        %v5988 = vshrl.u32 %v5814, 16
        %v5990 = vor.u32 %v5988, %v5986
        %v5992 = vshrl.u32 %v5815, 16
        %v5994 = vshll.u32 %v5815, 16
        %v5996 = vrot.slane %v5994, 1
        %v5997 = vor.u32 %v5992, %v5996
        %v5999 = vshll.u32 %v5816, 16
        %v6001 = vrot.slane %v5999, 1
        %v6002 = vsel %vm5825, %v5997, %v6001
        %v6003 = vshrl.u32 %v5816, 16
        %v6005 = vor.u32 %v6003, %v6001
        %v6007 = vshrl.u32 %v5817, 16
        %v6009 = vshll.u32 %v5817, 16
        %v6011 = vrot.slane %v6009, 1
        %v6012 = vor.u32 %v6007, %v6011
        %v6014 = vshll.u32 %v5818, 16
        %v6016 = vrot.slane %v6014, 1
        %v6017 = vsel %vm5825, %v6012, %v6016
        %v6018 = vshrl.u32 %v5818, 16
        %v6020 = vor.u32 %v6018, %v6016
        %v6022 = vshrl.u32 %v5819, 16
        %v6024 = vshll.u32 %v5819, 16
        %v6026 = vrot.slane %v6024, 1
        %v6027 = vor.u32 %v6022, %v6026
        %v6029 = vshll.u32 %v5820, 16
        %v6031 = vrot.slane %v6029, 1
        %v6032 = vsel %vm5825, %v6027, %v6031
        %v6033 = vshrl.u32 %v5820, 16
        %v6035 = vor.u32 %v6033, %v6031
        %v6037 = vshrl.u32 %v5821, 16
        %v6039 = vshll.u32 %v5821, 16
        %v6041 = vrot.slane %v6039, 1
        %v6042 = vor.u32 %v6037, %v6041
        %v6044 = vshll.u32 %v5822, 16
        %v6046 = vrot.slane %v6044, 1
        %v6047 = vsel %vm5825, %v6042, %v6046
        %v6048 = vshrl.u32 %v5822, 16
        %v6050 = vor.u32 %v6048, %v6046
        %v6052 = vshrl.u32 %v5823, 16
        %v6054 = vshll.u32 %v5823, 16
        %v6056 = vrot.slane %v6054, 1
        %v6057 = vor.u32 %v6052, %v6056
        %v6059 = vshll.u32 %v5824, 16
        %v6061 = vrot.slane %v6059, 1
        %v6062 = vsel %vm5825, %v6057, %v6061
        %v6063 = vshrl.u32 %v5824, 16
        %v6065 = vor.u32 %v6063, %v6061
        %vm6098 = vcmask 1046528
        %v6099 = vrot.slane %v5793, 1
        %v6100 = vrot.slane %v5794, 1
        %v6101 = vsel %vm6098, %v6099, %v6100
        %v6102 = vrot.slane %v5795, 1
        %v6103 = vrot.slane %v5796, 1
        %v6104 = vsel %vm6098, %v6102, %v6103
        %v6105 = vrot.slane %v5797, 1
        %v6106 = vrot.slane %v5798, 1
        %v6107 = vsel %vm6098, %v6105, %v6106
        %v6108 = vrot.slane %v5799, 1
        %v6109 = vrot.slane %v5800, 1
        %v6110 = vsel %vm6098, %v6108, %v6109
        %v6111 = vrot.slane %v5801, 1
        %v6112 = vrot.slane %v5802, 1
        %v6113 = vsel %vm6098, %v6111, %v6112
        %v6114 = vrot.slane %v5803, 1
        %v6115 = vrot.slane %v5804, 1
        %v6116 = vsel %vm6098, %v6114, %v6115
        %v6117 = vrot.slane %v5805, 1
        %v6118 = vrot.slane %v5806, 1
        %v6119 = vsel %vm6098, %v6117, %v6118
        %v6120 = vrot.slane %v5807, 1
        %v6121 = vrot.slane %v5808, 1
        %v6122 = vsel %vm6098, %v6120, %v6121
        %v6123 = vrot.slane %v5809, 1
        %v6124 = vrot.slane %v5810, 1
        %v6125 = vsel %vm6098, %v6123, %v6124
        %v6126 = vrot.slane %v5811, 1
        %v6127 = vrot.slane %v5812, 1
        %v6128 = vsel %vm6098, %v6126, %v6127
        %v6129 = vrot.slane %v5813, 1
        %v6130 = vrot.slane %v5814, 1
        %v6131 = vsel %vm6098, %v6129, %v6130
        %v6132 = vrot.slane %v5815, 1
        %v6133 = vrot.slane %v5816, 1
        %v6134 = vsel %vm6098, %v6132, %v6133
        %v6135 = vrot.slane %v5817, 1
        %v6136 = vrot.slane %v5818, 1
        %v6137 = vsel %vm6098, %v6135, %v6136
        %v6138 = vrot.slane %v5819, 1
        %v6139 = vrot.slane %v5820, 1
        %v6140 = vsel %vm6098, %v6138, %v6139
        %v6141 = vrot.slane %v5821, 1
        %v6142 = vrot.slane %v5822, 1
        %v6143 = vsel %vm6098, %v6141, %v6142
        %v6144 = vrot.slane %v5823, 1
        %v6145 = vrot.slane %v5824, 1
        %v6146 = vsel %vm6098, %v6144, %v6145
        %v6147 = vrot.slane %v5827, 3
        %v6148 = vrot.slane %v5829, 4
        %v6149 = vor.u32 %v6147, %v6148
        %v6150 = vrot.slane %v5838, 3
        %v6151 = vrot.slane %v5834, 4
        %v6152 = vor.u32 %v6150, %v6151
        %v6153 = vsel %vm856, %v6149, %v6152
        %v6155 = vshrl.u32 %v5837, 16
        %v6157 = vrot.slane %v6155, 3
        %v6158 = vshll.u32 %v5837, 16
        %v6160 = vrot.slane %v6158, 4
        %v6161 = vor.u32 %v6157, %v6160
        %v6163 = vshrl.u32 %v5840, 16
        %v6165 = vrot.slane %v6163, 3
        %v6166 = vshll.u32 %v5840, 16
        %v6168 = vrot.slane %v6166, 4
        %v6169 = vor.u32 %v6165, %v6168
        %v6170 = vsel %vm856, %v6161, %v6169
        %v6172 = vshrl.u32 %v6101, 16
        %v6174 = vrot.slane %v6172, 3
        %v6175 = vshll.u32 %v6101, 16
        %v6177 = vrot.slane %v6175, 4
        %v6178 = vor.u32 %v6174, %v6177
        %v6180 = vshrl.u32 %v6100, 16
        %v6182 = vrot.slane %v6180, 3
        %v6183 = vshll.u32 %v6100, 16
        %v6185 = vrot.slane %v6183, 4
        %v6186 = vor.u32 %v6182, %v6185
        %v6187 = vsel %vm856, %v6178, %v6186
        %v6188 = vrot.slane %v5842, 3
        %v6189 = vrot.slane %v5844, 4
        %v6190 = vor.u32 %v6188, %v6189
        %v6191 = vrot.slane %v5853, 3
        %v6192 = vrot.slane %v5849, 4
        %v6193 = vor.u32 %v6191, %v6192
        %v6194 = vsel %vm856, %v6190, %v6193
        %v6196 = vshrl.u32 %v5852, 16
        %v6198 = vrot.slane %v6196, 3
        %v6199 = vshll.u32 %v5852, 16
        %v6201 = vrot.slane %v6199, 4
        %v6202 = vor.u32 %v6198, %v6201
        %v6204 = vshrl.u32 %v5855, 16
        %v6206 = vrot.slane %v6204, 3
        %v6207 = vshll.u32 %v5855, 16
        %v6209 = vrot.slane %v6207, 4
        %v6210 = vor.u32 %v6206, %v6209
        %v6211 = vsel %vm856, %v6202, %v6210
        %v6213 = vshrl.u32 %v6104, 16
        %v6215 = vrot.slane %v6213, 3
        %v6216 = vshll.u32 %v6104, 16
        %v6218 = vrot.slane %v6216, 4
        %v6219 = vor.u32 %v6215, %v6218
        %v6221 = vshrl.u32 %v6103, 16
        %v6223 = vrot.slane %v6221, 3
        %v6224 = vshll.u32 %v6103, 16
        %v6226 = vrot.slane %v6224, 4
        %v6227 = vor.u32 %v6223, %v6226
        %v6228 = vsel %vm856, %v6219, %v6227
        %v6229 = vrot.slane %v5857, 3
        %v6230 = vrot.slane %v5859, 4
        %v6231 = vor.u32 %v6229, %v6230
        %v6232 = vrot.slane %v5868, 3
        %v6233 = vrot.slane %v5864, 4
        %v6234 = vor.u32 %v6232, %v6233
        %v6235 = vsel %vm856, %v6231, %v6234
        %v6237 = vshrl.u32 %v5867, 16
        %v6239 = vrot.slane %v6237, 3
        %v6240 = vshll.u32 %v5867, 16
        %v6242 = vrot.slane %v6240, 4
        %v6243 = vor.u32 %v6239, %v6242
        %v6245 = vshrl.u32 %v5870, 16
        %v6247 = vrot.slane %v6245, 3
        %v6248 = vshll.u32 %v5870, 16
        %v6250 = vrot.slane %v6248, 4
        %v6251 = vor.u32 %v6247, %v6250
        %v6252 = vsel %vm856, %v6243, %v6251
        %v6254 = vshrl.u32 %v6107, 16
        %v6256 = vrot.slane %v6254, 3
        %v6257 = vshll.u32 %v6107, 16
        %v6259 = vrot.slane %v6257, 4
        %v6260 = vor.u32 %v6256, %v6259
        %v6262 = vshrl.u32 %v6106, 16
        %v6264 = vrot.slane %v6262, 3
        %v6265 = vshll.u32 %v6106, 16
        %v6267 = vrot.slane %v6265, 4
        %v6268 = vor.u32 %v6264, %v6267
        %v6269 = vsel %vm856, %v6260, %v6268
        %v6270 = vrot.slane %v5872, 3
        %v6271 = vrot.slane %v5874, 4
        %v6272 = vor.u32 %v6270, %v6271
        %v6273 = vrot.slane %v5883, 3
        %v6274 = vrot.slane %v5879, 4
        %v6275 = vor.u32 %v6273, %v6274
        %v6276 = vsel %vm856, %v6272, %v6275
        %v6278 = vshrl.u32 %v5882, 16
        %v6280 = vrot.slane %v6278, 3
        %v6281 = vshll.u32 %v5882, 16
        %v6283 = vrot.slane %v6281, 4
        %v6284 = vor.u32 %v6280, %v6283
        %v6286 = vshrl.u32 %v5885, 16
        %v6288 = vrot.slane %v6286, 3
        %v6289 = vshll.u32 %v5885, 16
        %v6291 = vrot.slane %v6289, 4
        %v6292 = vor.u32 %v6288, %v6291
        %v6293 = vsel %vm856, %v6284, %v6292
        %v6295 = vshrl.u32 %v6110, 16
        %v6297 = vrot.slane %v6295, 3
        %v6298 = vshll.u32 %v6110, 16
        %v6300 = vrot.slane %v6298, 4
        %v6301 = vor.u32 %v6297, %v6300
        %v6303 = vshrl.u32 %v6109, 16
        %v6305 = vrot.slane %v6303, 3
        %v6306 = vshll.u32 %v6109, 16
        %v6308 = vrot.slane %v6306, 4
        %v6309 = vor.u32 %v6305, %v6308
        %v6310 = vsel %vm856, %v6301, %v6309
        %v6311 = vrot.slane %v5887, 3
        %v6312 = vrot.slane %v5889, 4
        %v6313 = vor.u32 %v6311, %v6312
        %v6314 = vrot.slane %v5898, 3
        %v6315 = vrot.slane %v5894, 4
        %v6316 = vor.u32 %v6314, %v6315
        %v6317 = vsel %vm856, %v6313, %v6316
        %v6319 = vshrl.u32 %v5897, 16
        %v6321 = vrot.slane %v6319, 3
        %v6322 = vshll.u32 %v5897, 16
        %v6324 = vrot.slane %v6322, 4
        %v6325 = vor.u32 %v6321, %v6324
        %v6327 = vshrl.u32 %v5900, 16
        %v6329 = vrot.slane %v6327, 3
        %v6330 = vshll.u32 %v5900, 16
        %v6332 = vrot.slane %v6330, 4
        %v6333 = vor.u32 %v6329, %v6332
        %v6334 = vsel %vm856, %v6325, %v6333
        %v6336 = vshrl.u32 %v6113, 16
        %v6338 = vrot.slane %v6336, 3
        %v6339 = vshll.u32 %v6113, 16
        %v6341 = vrot.slane %v6339, 4
        %v6342 = vor.u32 %v6338, %v6341
        %v6344 = vshrl.u32 %v6112, 16
        %v6346 = vrot.slane %v6344, 3
        %v6347 = vshll.u32 %v6112, 16
        %v6349 = vrot.slane %v6347, 4
        %v6350 = vor.u32 %v6346, %v6349
        %v6351 = vsel %vm856, %v6342, %v6350
        %v6352 = vrot.slane %v5902, 3
        %v6353 = vrot.slane %v5904, 4
        %v6354 = vor.u32 %v6352, %v6353
        %v6355 = vrot.slane %v5913, 3
        %v6356 = vrot.slane %v5909, 4
        %v6357 = vor.u32 %v6355, %v6356
        %v6358 = vsel %vm856, %v6354, %v6357
        %v6360 = vshrl.u32 %v5912, 16
        %v6362 = vrot.slane %v6360, 3
        %v6363 = vshll.u32 %v5912, 16
        %v6365 = vrot.slane %v6363, 4
        %v6366 = vor.u32 %v6362, %v6365
        %v6368 = vshrl.u32 %v5915, 16
        %v6370 = vrot.slane %v6368, 3
        %v6371 = vshll.u32 %v5915, 16
        %v6373 = vrot.slane %v6371, 4
        %v6374 = vor.u32 %v6370, %v6373
        %v6375 = vsel %vm856, %v6366, %v6374
        %v6377 = vshrl.u32 %v6116, 16
        %v6379 = vrot.slane %v6377, 3
        %v6380 = vshll.u32 %v6116, 16
        %v6382 = vrot.slane %v6380, 4
        %v6383 = vor.u32 %v6379, %v6382
        %v6385 = vshrl.u32 %v6115, 16
        %v6387 = vrot.slane %v6385, 3
        %v6388 = vshll.u32 %v6115, 16
        %v6390 = vrot.slane %v6388, 4
        %v6391 = vor.u32 %v6387, %v6390
        %v6392 = vsel %vm856, %v6383, %v6391
        %v6393 = vrot.slane %v5917, 3
        %v6394 = vrot.slane %v5919, 4
        %v6395 = vor.u32 %v6393, %v6394
        %v6396 = vrot.slane %v5928, 3
        %v6397 = vrot.slane %v5924, 4
        %v6398 = vor.u32 %v6396, %v6397
        %v6399 = vsel %vm856, %v6395, %v6398
        %v6401 = vshrl.u32 %v5927, 16
        %v6403 = vrot.slane %v6401, 3
        %v6404 = vshll.u32 %v5927, 16
        %v6406 = vrot.slane %v6404, 4
        %v6407 = vor.u32 %v6403, %v6406
        %v6409 = vshrl.u32 %v5930, 16
        %v6411 = vrot.slane %v6409, 3
        %v6412 = vshll.u32 %v5930, 16
        %v6414 = vrot.slane %v6412, 4
        %v6415 = vor.u32 %v6411, %v6414
        %v6416 = vsel %vm856, %v6407, %v6415
        %v6418 = vshrl.u32 %v6119, 16
        %v6420 = vrot.slane %v6418, 3
        %v6421 = vshll.u32 %v6119, 16
        %v6423 = vrot.slane %v6421, 4
        %v6424 = vor.u32 %v6420, %v6423
        %v6426 = vshrl.u32 %v6118, 16
        %v6428 = vrot.slane %v6426, 3
        %v6429 = vshll.u32 %v6118, 16
        %v6431 = vrot.slane %v6429, 4
        %v6432 = vor.u32 %v6428, %v6431
        %v6433 = vsel %vm856, %v6424, %v6432
        %v6434 = vrot.slane %v5932, 3
        %v6435 = vrot.slane %v5934, 4
        %v6436 = vor.u32 %v6434, %v6435
        %v6437 = vrot.slane %v5943, 3
        %v6438 = vrot.slane %v5939, 4
        %v6439 = vor.u32 %v6437, %v6438
        %v6440 = vsel %vm856, %v6436, %v6439
        %v6442 = vshrl.u32 %v5942, 16
        %v6444 = vrot.slane %v6442, 3
        %v6445 = vshll.u32 %v5942, 16
        %v6447 = vrot.slane %v6445, 4
        %v6448 = vor.u32 %v6444, %v6447
        %v6450 = vshrl.u32 %v5945, 16
        %v6452 = vrot.slane %v6450, 3
        %v6453 = vshll.u32 %v5945, 16
        %v6455 = vrot.slane %v6453, 4
        %v6456 = vor.u32 %v6452, %v6455
        %v6457 = vsel %vm856, %v6448, %v6456
        %v6459 = vshrl.u32 %v6122, 16
        %v6461 = vrot.slane %v6459, 3
        %v6462 = vshll.u32 %v6122, 16
        %v6464 = vrot.slane %v6462, 4
        %v6465 = vor.u32 %v6461, %v6464
        %v6467 = vshrl.u32 %v6121, 16
        %v6469 = vrot.slane %v6467, 3
        %v6470 = vshll.u32 %v6121, 16
        %v6472 = vrot.slane %v6470, 4
        %v6473 = vor.u32 %v6469, %v6472
        %v6474 = vsel %vm856, %v6465, %v6473
        %v6475 = vrot.slane %v5947, 3
        %v6476 = vrot.slane %v5949, 4
        %v6477 = vor.u32 %v6475, %v6476
        %v6478 = vrot.slane %v5958, 3
        %v6479 = vrot.slane %v5954, 4
        %v6480 = vor.u32 %v6478, %v6479
        %v6481 = vsel %vm856, %v6477, %v6480
        %v6483 = vshrl.u32 %v5957, 16
        %v6485 = vrot.slane %v6483, 3
        %v6486 = vshll.u32 %v5957, 16
        %v6488 = vrot.slane %v6486, 4
        %v6489 = vor.u32 %v6485, %v6488
        %v6491 = vshrl.u32 %v5960, 16
        %v6493 = vrot.slane %v6491, 3
        %v6494 = vshll.u32 %v5960, 16
        %v6496 = vrot.slane %v6494, 4
        %v6497 = vor.u32 %v6493, %v6496
        %v6498 = vsel %vm856, %v6489, %v6497
        %v6500 = vshrl.u32 %v6125, 16
        %v6502 = vrot.slane %v6500, 3
        %v6503 = vshll.u32 %v6125, 16
        %v6505 = vrot.slane %v6503, 4
        %v6506 = vor.u32 %v6502, %v6505
        %v6508 = vshrl.u32 %v6124, 16
        %v6510 = vrot.slane %v6508, 3
        %v6511 = vshll.u32 %v6124, 16
        %v6513 = vrot.slane %v6511, 4
        %v6514 = vor.u32 %v6510, %v6513
        %v6515 = vsel %vm856, %v6506, %v6514
        %v6516 = vrot.slane %v5962, 3
        %v6517 = vrot.slane %v5964, 4
        %v6518 = vor.u32 %v6516, %v6517
        %v6519 = vrot.slane %v5973, 3
        %v6520 = vrot.slane %v5969, 4
        %v6521 = vor.u32 %v6519, %v6520
        %v6522 = vsel %vm856, %v6518, %v6521
        %v6524 = vshrl.u32 %v5972, 16
        %v6526 = vrot.slane %v6524, 3
        %v6527 = vshll.u32 %v5972, 16
        %v6529 = vrot.slane %v6527, 4
        %v6530 = vor.u32 %v6526, %v6529
        %v6532 = vshrl.u32 %v5975, 16
        %v6534 = vrot.slane %v6532, 3
        %v6535 = vshll.u32 %v5975, 16
        %v6537 = vrot.slane %v6535, 4
        %v6538 = vor.u32 %v6534, %v6537
        %v6539 = vsel %vm856, %v6530, %v6538
        %v6541 = vshrl.u32 %v6128, 16
        %v6543 = vrot.slane %v6541, 3
        %v6544 = vshll.u32 %v6128, 16
        %v6546 = vrot.slane %v6544, 4
        %v6547 = vor.u32 %v6543, %v6546
        %v6549 = vshrl.u32 %v6127, 16
        %v6551 = vrot.slane %v6549, 3
        %v6552 = vshll.u32 %v6127, 16
        %v6554 = vrot.slane %v6552, 4
        %v6555 = vor.u32 %v6551, %v6554
        %v6556 = vsel %vm856, %v6547, %v6555
        %v6557 = vrot.slane %v5977, 3
        %v6558 = vrot.slane %v5979, 4
        %v6559 = vor.u32 %v6557, %v6558
        %v6560 = vrot.slane %v5988, 3
        %v6561 = vrot.slane %v5984, 4
        %v6562 = vor.u32 %v6560, %v6561
        %v6563 = vsel %vm856, %v6559, %v6562
        %v6565 = vshrl.u32 %v5987, 16
        %v6567 = vrot.slane %v6565, 3
        %v6568 = vshll.u32 %v5987, 16
        %v6570 = vrot.slane %v6568, 4
        %v6571 = vor.u32 %v6567, %v6570
        %v6573 = vshrl.u32 %v5990, 16
        %v6575 = vrot.slane %v6573, 3
        %v6576 = vshll.u32 %v5990, 16
        %v6578 = vrot.slane %v6576, 4
        %v6579 = vor.u32 %v6575, %v6578
        %v6580 = vsel %vm856, %v6571, %v6579
        %v6582 = vshrl.u32 %v6131, 16
        %v6584 = vrot.slane %v6582, 3
        %v6585 = vshll.u32 %v6131, 16
        %v6587 = vrot.slane %v6585, 4
        %v6588 = vor.u32 %v6584, %v6587
        %v6590 = vshrl.u32 %v6130, 16
        %v6592 = vrot.slane %v6590, 3
        %v6593 = vshll.u32 %v6130, 16
        %v6595 = vrot.slane %v6593, 4
        %v6596 = vor.u32 %v6592, %v6595
        %v6597 = vsel %vm856, %v6588, %v6596
        %v6598 = vrot.slane %v5992, 3
        %v6599 = vrot.slane %v5994, 4
        %v6600 = vor.u32 %v6598, %v6599
        %v6601 = vrot.slane %v6003, 3
        %v6602 = vrot.slane %v5999, 4
        %v6603 = vor.u32 %v6601, %v6602
        %v6604 = vsel %vm856, %v6600, %v6603
        %v6606 = vshrl.u32 %v6002, 16
        %v6608 = vrot.slane %v6606, 3
        %v6609 = vshll.u32 %v6002, 16
        %v6611 = vrot.slane %v6609, 4
        %v6612 = vor.u32 %v6608, %v6611
        %v6614 = vshrl.u32 %v6005, 16
        %v6616 = vrot.slane %v6614, 3
        %v6617 = vshll.u32 %v6005, 16
        %v6619 = vrot.slane %v6617, 4
        %v6620 = vor.u32 %v6616, %v6619
        %v6621 = vsel %vm856, %v6612, %v6620
        %v6623 = vshrl.u32 %v6134, 16
        %v6625 = vrot.slane %v6623, 3
        %v6626 = vshll.u32 %v6134, 16
        %v6628 = vrot.slane %v6626, 4
        %v6629 = vor.u32 %v6625, %v6628
        %v6631 = vshrl.u32 %v6133, 16
        %v6633 = vrot.slane %v6631, 3
        %v6634 = vshll.u32 %v6133, 16
        %v6636 = vrot.slane %v6634, 4
        %v6637 = vor.u32 %v6633, %v6636
        %v6638 = vsel %vm856, %v6629, %v6637
        %v6639 = vrot.slane %v6007, 3
        %v6640 = vrot.slane %v6009, 4
        %v6641 = vor.u32 %v6639, %v6640
        %v6642 = vrot.slane %v6018, 3
        %v6643 = vrot.slane %v6014, 4
        %v6644 = vor.u32 %v6642, %v6643
        %v6645 = vsel %vm856, %v6641, %v6644
        %v6647 = vshrl.u32 %v6017, 16
        %v6649 = vrot.slane %v6647, 3
        %v6650 = vshll.u32 %v6017, 16
        %v6652 = vrot.slane %v6650, 4
        %v6653 = vor.u32 %v6649, %v6652
        %v6655 = vshrl.u32 %v6020, 16
        %v6657 = vrot.slane %v6655, 3
        %v6658 = vshll.u32 %v6020, 16
        %v6660 = vrot.slane %v6658, 4
        %v6661 = vor.u32 %v6657, %v6660
        %v6662 = vsel %vm856, %v6653, %v6661
        %v6664 = vshrl.u32 %v6137, 16
        %v6666 = vrot.slane %v6664, 3
        %v6667 = vshll.u32 %v6137, 16
        %v6669 = vrot.slane %v6667, 4
        %v6670 = vor.u32 %v6666, %v6669
        %v6672 = vshrl.u32 %v6136, 16
        %v6674 = vrot.slane %v6672, 3
        %v6675 = vshll.u32 %v6136, 16
        %v6677 = vrot.slane %v6675, 4
        %v6678 = vor.u32 %v6674, %v6677
        %v6679 = vsel %vm856, %v6670, %v6678
        %v6680 = vrot.slane %v6022, 3
        %v6681 = vrot.slane %v6024, 4
        %v6682 = vor.u32 %v6680, %v6681
        %v6683 = vrot.slane %v6033, 3
        %v6684 = vrot.slane %v6029, 4
        %v6685 = vor.u32 %v6683, %v6684
        %v6686 = vsel %vm856, %v6682, %v6685
        %v6688 = vshrl.u32 %v6032, 16
        %v6690 = vrot.slane %v6688, 3
        %v6691 = vshll.u32 %v6032, 16
        %v6693 = vrot.slane %v6691, 4
        %v6694 = vor.u32 %v6690, %v6693
        %v6696 = vshrl.u32 %v6035, 16
        %v6698 = vrot.slane %v6696, 3
        %v6699 = vshll.u32 %v6035, 16
        %v6701 = vrot.slane %v6699, 4
        %v6702 = vor.u32 %v6698, %v6701
        %v6703 = vsel %vm856, %v6694, %v6702
        %v6705 = vshrl.u32 %v6140, 16
        %v6707 = vrot.slane %v6705, 3
        %v6708 = vshll.u32 %v6140, 16
        %v6710 = vrot.slane %v6708, 4
        %v6711 = vor.u32 %v6707, %v6710
        %v6713 = vshrl.u32 %v6139, 16
        %v6715 = vrot.slane %v6713, 3
        %v6716 = vshll.u32 %v6139, 16
        %v6718 = vrot.slane %v6716, 4
        %v6719 = vor.u32 %v6715, %v6718
        %v6720 = vsel %vm856, %v6711, %v6719
        %v6721 = vrot.slane %v6037, 3
        %v6722 = vrot.slane %v6039, 4
        %v6723 = vor.u32 %v6721, %v6722
        %v6724 = vrot.slane %v6048, 3
        %v6725 = vrot.slane %v6044, 4
        %v6726 = vor.u32 %v6724, %v6725
        %v6727 = vsel %vm856, %v6723, %v6726
        %v6729 = vshrl.u32 %v6047, 16
        %v6731 = vrot.slane %v6729, 3
        %v6732 = vshll.u32 %v6047, 16
        %v6734 = vrot.slane %v6732, 4
        %v6735 = vor.u32 %v6731, %v6734
        %v6737 = vshrl.u32 %v6050, 16
        %v6739 = vrot.slane %v6737, 3
        %v6740 = vshll.u32 %v6050, 16
        %v6742 = vrot.slane %v6740, 4
        %v6743 = vor.u32 %v6739, %v6742
        %v6744 = vsel %vm856, %v6735, %v6743
        %v6746 = vshrl.u32 %v6143, 16
        %v6748 = vrot.slane %v6746, 3
        %v6749 = vshll.u32 %v6143, 16
        %v6751 = vrot.slane %v6749, 4
        %v6752 = vor.u32 %v6748, %v6751
        %v6754 = vshrl.u32 %v6142, 16
        %v6756 = vrot.slane %v6754, 3
        %v6757 = vshll.u32 %v6142, 16
        %v6759 = vrot.slane %v6757, 4
        %v6760 = vor.u32 %v6756, %v6759
        %v6761 = vsel %vm856, %v6752, %v6760
        %v6762 = vrot.slane %v6052, 3
        %v6763 = vrot.slane %v6054, 4
        %v6764 = vor.u32 %v6762, %v6763
        %v6765 = vrot.slane %v6063, 3
        %v6766 = vrot.slane %v6059, 4
        %v6767 = vor.u32 %v6765, %v6766
        %v6768 = vsel %vm856, %v6764, %v6767
        %v6770 = vshrl.u32 %v6062, 16
        %v6772 = vrot.slane %v6770, 3
        %v6773 = vshll.u32 %v6062, 16
        %v6775 = vrot.slane %v6773, 4
        %v6776 = vor.u32 %v6772, %v6775
        %v6778 = vshrl.u32 %v6065, 16
        %v6780 = vrot.slane %v6778, 3
        %v6781 = vshll.u32 %v6065, 16
        %v6783 = vrot.slane %v6781, 4
        %v6784 = vor.u32 %v6780, %v6783
        %v6785 = vsel %vm856, %v6776, %v6784
        %v6787 = vshrl.u32 %v6146, 16
        %v6789 = vrot.slane %v6787, 3
        %v6790 = vshll.u32 %v6146, 16
        %v6792 = vrot.slane %v6790, 4
        %v6793 = vor.u32 %v6789, %v6792
        %v6795 = vshrl.u32 %v6145, 16
        %v6797 = vrot.slane %v6795, 3
        %v6798 = vshll.u32 %v6145, 16
        %v6800 = vrot.slane %v6798, 4
        %v6801 = vor.u32 %v6797, %v6800
        %v6802 = vsel %vm856, %v6793, %v6801
        %v6851 = vld [vmem:[#allocation8] sm:$0xf]
        %v6852 = vld [vmem:[#allocation8 + $0x4] sm:$0xf]
        %v6853 = vld [vmem:[#allocation8 + $0x8] sm:$0xf]
        %v6854 = vld [vmem:[#allocation8 + $0xc] sm:$0xf]
        %v6855 = vld [vmem:[#allocation8 + $0x10] sm:$0xf]
        %v6856 = vld [vmem:[#allocation8 + $0x14] sm:$0xf]
        %v6857 = vld [vmem:[#allocation8 + $0x18] sm:$0xf]
        %v6858 = vld [vmem:[#allocation8 + $0x1c] sm:$0xf]
        %v6859 = vld [vmem:[#allocation8 + $0x20] sm:$0xf]
        %v6860 = vld [vmem:[#allocation8 + $0x24] sm:$0xf]
        %v6861 = vld [vmem:[#allocation8 + $0x28] sm:$0xf]
        %v6862 = vld [vmem:[#allocation8 + $0x2c] sm:$0xf]
        %v6863 = vld [vmem:[#allocation8 + $0x30] sm:$0xf]
        %v6864 = vld [vmem:[#allocation8 + $0x34] sm:$0xf]
        %v6865 = vld [vmem:[#allocation8 + $0x38] sm:$0xf]
        %v6866 = vld [vmem:[#allocation8 + $0x3c] sm:$0xf]
        %v6867 = vld [vmem:[#allocation8 + $0x40] sm:$0xf]
        %v6868 = vld [vmem:[#allocation8 + $0x44] sm:$0xf]
        %v6869 = vld [vmem:[#allocation8 + $0x48] sm:$0xf]
        %v6870 = vld [vmem:[#allocation8 + $0x4c] sm:$0xf]
        %v6871 = vld [vmem:[#allocation8 + $0x50] sm:$0xf]
        %v6872 = vld [vmem:[#allocation8 + $0x54] sm:$0xf]
        %v6873 = vld [vmem:[#allocation8 + $0x58] sm:$0xf]
        %v6874 = vld [vmem:[#allocation8 + $0x5c] sm:$0xf]
        %v6875 = vld [vmem:[#allocation8 + $0x60] sm:$0xf]
        %v6876 = vld [vmem:[#allocation8 + $0x64] sm:$0xf]
        %v6877 = vld [vmem:[#allocation8 + $0x68] sm:$0xf]
        %v6878 = vld [vmem:[#allocation8 + $0x6c] sm:$0xf]
        %v6879 = vld [vmem:[#allocation8 + $0x70] sm:$0xf]
        %v6880 = vld [vmem:[#allocation8 + $0x74] sm:$0xf]
        %v6881 = vld [vmem:[#allocation8 + $0x78] sm:$0xf]
        %v6882 = vld [vmem:[#allocation8 + $0x7c] sm:$0xf]
        %v6883 = vld [vmem:[#allocation8 + $0x80] sm:$0xf]
        %v6884 = vld [vmem:[#allocation8 + $0x84] sm:$0xf]
        %v6885 = vld [vmem:[#allocation8 + $0x88] sm:$0xf]
        %v6886 = vld [vmem:[#allocation8 + $0x8c] sm:$0xf]
        %v6887 = vld [vmem:[#allocation8 + $0x90] sm:$0xf]
        %v6888 = vld [vmem:[#allocation8 + $0x94] sm:$0xf]
        %v6889 = vld [vmem:[#allocation8 + $0x98] sm:$0xf]
        %v6890 = vld [vmem:[#allocation8 + $0x9c] sm:$0xf]
        %v6891 = vld [vmem:[#allocation8 + $0xa0] sm:$0xf]
        %v6892 = vld [vmem:[#allocation8 + $0xa4] sm:$0xf]
        %v6893 = vld [vmem:[#allocation8 + $0xa8] sm:$0xf]
        %v6894 = vld [vmem:[#allocation8 + $0xac] sm:$0xf]
        %v6895 = vld [vmem:[#allocation8 + $0xb0] sm:$0xf]
        %v6896 = vld [vmem:[#allocation8 + $0xb4] sm:$0xf]
        %v6897 = vld [vmem:[#allocation8 + $0xb8] sm:$0xf]
        %v6898 = vld [vmem:[#allocation8 + $0xbc] sm:$0xf]
        %v6899 = vld [vmem:[%s5760] sm:$0xff]
        %v6900 = vld [vmem:[%s5760 + $0x8] sm:$0xff]
        %v6901 = vld [vmem:[%s5760 + $0x10] sm:$0xff]
        %v6902 = vld [vmem:[%s5760 + $0x18] sm:$0xff]
        %v6903 = vld [vmem:[%s5760 + $0x20] sm:$0xff]
        %v6904 = vld [vmem:[%s5760 + $0x28] sm:$0xff]
        %v6905 = vld [vmem:[%s5760 + $0x30] sm:$0xff]
        %v6906 = vld [vmem:[%s5760 + $0x38] sm:$0xff]
        %v6907 = vld [vmem:[%s5760 + $0x40] sm:$0xff]
        %v6908 = vld [vmem:[%s5760 + $0x48] sm:$0xff]
        %v6909 = vld [vmem:[%s5760 + $0x50] sm:$0xff]
        %v6910 = vld [vmem:[%s5760 + $0x58] sm:$0xff]
        %v6911 = vld [vmem:[%s5760 + $0x60] sm:$0xff]
        %v6912 = vld [vmem:[%s5760 + $0x68] sm:$0xff]
        %v6913 = vld [vmem:[%s5760 + $0x70] sm:$0xff]
        %v6914 = vld [vmem:[%s5760 + $0x78] sm:$0xff]
        %v6915 = vld [vmem:[%s5760 + $0x80] sm:$0xff]
        %v6916 = vld [vmem:[%s5760 + $0x88] sm:$0xff]
        %v6917 = vld [vmem:[%s5760 + $0x90] sm:$0xff]
        %v6918 = vld [vmem:[%s5760 + $0x98] sm:$0xff]
        %v6919 = vld [vmem:[%s5760 + $0xa0] sm:$0xff]
        %v6920 = vld [vmem:[%s5760 + $0xa8] sm:$0xff]
        %v6921 = vld [vmem:[%s5760 + $0xb0] sm:$0xff]
        %v6922 = vld [vmem:[%s5760 + $0xb8] sm:$0xff]
        %v6923 = vld [vmem:[%s5760 + $0xc0] sm:$0xff]
        %v6924 = vld [vmem:[%s5760 + $0xc8] sm:$0xff]
        %v6925 = vld [vmem:[%s5760 + $0xd0] sm:$0xff]
        %v6926 = vld [vmem:[%s5760 + $0xd8] sm:$0xff]
        %v6927 = vld [vmem:[%s5760 + $0xe0] sm:$0xff]
        %v6928 = vld [vmem:[%s5760 + $0xe8] sm:$0xff]
        %v6929 = vld [vmem:[%s5760 + $0xf0] sm:$0xff]
        %v6930 = vld [vmem:[%s5760 + $0xf8] sm:$0xff]
        %v6932 = vshrl.u32 %v6899, 16
        %v6934 = vshll.u32 %v6899, 16
        %v6936 = vrot.slane %v6934, 1
        %v6937 = vor.u32 %v6932, %v6936
        %v6939 = vshll.u32 %v6900, 16
        %v6941 = vrot.slane %v6939, 1
        %v6942 = vsel %vm5825, %v6937, %v6941
        %v6943 = vshrl.u32 %v6900, 16
        %v6945 = vor.u32 %v6943, %v6941
        %v6947 = vshrl.u32 %v6901, 16
        %v6949 = vshll.u32 %v6901, 16
        %v6951 = vrot.slane %v6949, 1
        %v6952 = vor.u32 %v6947, %v6951
        %v6954 = vshll.u32 %v6902, 16
        %v6956 = vrot.slane %v6954, 1
        %v6957 = vsel %vm5825, %v6952, %v6956
        %v6958 = vshrl.u32 %v6902, 16
        %v6960 = vor.u32 %v6958, %v6956
        %v6962 = vshrl.u32 %v6903, 16
        %v6964 = vshll.u32 %v6903, 16
        %v6966 = vrot.slane %v6964, 1
        %v6967 = vor.u32 %v6962, %v6966
        %v6969 = vshll.u32 %v6904, 16
        %v6971 = vrot.slane %v6969, 1
        %v6972 = vsel %vm5825, %v6967, %v6971
        %v6973 = vshrl.u32 %v6904, 16
        %v6975 = vor.u32 %v6973, %v6971
        %v6977 = vshrl.u32 %v6905, 16
        %v6979 = vshll.u32 %v6905, 16
        %v6981 = vrot.slane %v6979, 1
        %v6982 = vor.u32 %v6977, %v6981
        %v6984 = vshll.u32 %v6906, 16
        %v6986 = vrot.slane %v6984, 1
        %v6987 = vsel %vm5825, %v6982, %v6986
        %v6988 = vshrl.u32 %v6906, 16
        %v6990 = vor.u32 %v6988, %v6986
        %v6992 = vshrl.u32 %v6907, 16
        %v6994 = vshll.u32 %v6907, 16
        %v6996 = vrot.slane %v6994, 1
        %v6997 = vor.u32 %v6992, %v6996
        %v6999 = vshll.u32 %v6908, 16
        %v7001 = vrot.slane %v6999, 1
        %v7002 = vsel %vm5825, %v6997, %v7001
        %v7003 = vshrl.u32 %v6908, 16
        %v7005 = vor.u32 %v7003, %v7001
        %v7007 = vshrl.u32 %v6909, 16
        %v7009 = vshll.u32 %v6909, 16
        %v7011 = vrot.slane %v7009, 1
        %v7012 = vor.u32 %v7007, %v7011
        %v7014 = vshll.u32 %v6910, 16
        %v7016 = vrot.slane %v7014, 1
        %v7017 = vsel %vm5825, %v7012, %v7016
        %v7018 = vshrl.u32 %v6910, 16
        %v7020 = vor.u32 %v7018, %v7016
        %v7022 = vshrl.u32 %v6911, 16
        %v7024 = vshll.u32 %v6911, 16
        %v7026 = vrot.slane %v7024, 1
        %v7027 = vor.u32 %v7022, %v7026
        %v7029 = vshll.u32 %v6912, 16
        %v7031 = vrot.slane %v7029, 1
        %v7032 = vsel %vm5825, %v7027, %v7031
        %v7033 = vshrl.u32 %v6912, 16
        %v7035 = vor.u32 %v7033, %v7031
        %v7037 = vshrl.u32 %v6913, 16
        %v7039 = vshll.u32 %v6913, 16
        %v7041 = vrot.slane %v7039, 1
        %v7042 = vor.u32 %v7037, %v7041
        %v7044 = vshll.u32 %v6914, 16
        %v7046 = vrot.slane %v7044, 1
        %v7047 = vsel %vm5825, %v7042, %v7046
        %v7048 = vshrl.u32 %v6914, 16
        %v7050 = vor.u32 %v7048, %v7046
        %v7052 = vshrl.u32 %v6915, 16
        %v7054 = vshll.u32 %v6915, 16
        %v7056 = vrot.slane %v7054, 1
        %v7057 = vor.u32 %v7052, %v7056
        %v7059 = vshll.u32 %v6916, 16
        %v7061 = vrot.slane %v7059, 1
        %v7062 = vsel %vm5825, %v7057, %v7061
        %v7063 = vshrl.u32 %v6916, 16
        %v7065 = vor.u32 %v7063, %v7061
        %v7067 = vshrl.u32 %v6917, 16
        %v7069 = vshll.u32 %v6917, 16
        %v7071 = vrot.slane %v7069, 1
        %v7072 = vor.u32 %v7067, %v7071
        %v7074 = vshll.u32 %v6918, 16
        %v7076 = vrot.slane %v7074, 1
        %v7077 = vsel %vm5825, %v7072, %v7076
        %v7078 = vshrl.u32 %v6918, 16
        %v7080 = vor.u32 %v7078, %v7076
        %v7082 = vshrl.u32 %v6919, 16
        %v7084 = vshll.u32 %v6919, 16
        %v7086 = vrot.slane %v7084, 1
        %v7087 = vor.u32 %v7082, %v7086
        %v7089 = vshll.u32 %v6920, 16
        %v7091 = vrot.slane %v7089, 1
        %v7092 = vsel %vm5825, %v7087, %v7091
        %v7093 = vshrl.u32 %v6920, 16
        %v7095 = vor.u32 %v7093, %v7091
        %v7097 = vshrl.u32 %v6921, 16
        %v7099 = vshll.u32 %v6921, 16
        %v7101 = vrot.slane %v7099, 1
        %v7102 = vor.u32 %v7097, %v7101
        %v7104 = vshll.u32 %v6922, 16
        %v7106 = vrot.slane %v7104, 1
        %v7107 = vsel %vm5825, %v7102, %v7106
        %v7108 = vshrl.u32 %v6922, 16
        %v7110 = vor.u32 %v7108, %v7106
        %v7112 = vshrl.u32 %v6923, 16
        %v7114 = vshll.u32 %v6923, 16
        %v7116 = vrot.slane %v7114, 1
        %v7117 = vor.u32 %v7112, %v7116
        %v7119 = vshll.u32 %v6924, 16
        %v7121 = vrot.slane %v7119, 1
        %v7122 = vsel %vm5825, %v7117, %v7121
        %v7123 = vshrl.u32 %v6924, 16
        %v7125 = vor.u32 %v7123, %v7121
        %v7127 = vshrl.u32 %v6925, 16
        %v7129 = vshll.u32 %v6925, 16
        %v7131 = vrot.slane %v7129, 1
        %v7132 = vor.u32 %v7127, %v7131
        %v7134 = vshll.u32 %v6926, 16
        %v7136 = vrot.slane %v7134, 1
        %v7137 = vsel %vm5825, %v7132, %v7136
        %v7138 = vshrl.u32 %v6926, 16
        %v7140 = vor.u32 %v7138, %v7136
        %v7142 = vshrl.u32 %v6927, 16
        %v7144 = vshll.u32 %v6927, 16
        %v7146 = vrot.slane %v7144, 1
        %v7147 = vor.u32 %v7142, %v7146
        %v7149 = vshll.u32 %v6928, 16
        %v7151 = vrot.slane %v7149, 1
        %v7152 = vsel %vm5825, %v7147, %v7151
        %v7153 = vshrl.u32 %v6928, 16
        %v7155 = vor.u32 %v7153, %v7151
        %v7157 = vshrl.u32 %v6929, 16
        %v7159 = vshll.u32 %v6929, 16
        %v7161 = vrot.slane %v7159, 1
        %v7162 = vor.u32 %v7157, %v7161
        %v7164 = vshll.u32 %v6930, 16
        %v7166 = vrot.slane %v7164, 1
        %v7167 = vsel %vm5825, %v7162, %v7166
        %v7168 = vshrl.u32 %v6930, 16
        %v7170 = vor.u32 %v7168, %v7166
        %v7203 = vrot.slane %v6899, 1
        %v7204 = vrot.slane %v6900, 1
        %v7205 = vsel %vm6098, %v7203, %v7204
        %v7206 = vrot.slane %v6901, 1
        %v7207 = vrot.slane %v6902, 1
        %v7208 = vsel %vm6098, %v7206, %v7207
        %v7209 = vrot.slane %v6903, 1
        %v7210 = vrot.slane %v6904, 1
        %v7211 = vsel %vm6098, %v7209, %v7210
        %v7212 = vrot.slane %v6905, 1
        %v7213 = vrot.slane %v6906, 1
        %v7214 = vsel %vm6098, %v7212, %v7213
        %v7215 = vrot.slane %v6907, 1
        %v7216 = vrot.slane %v6908, 1
        %v7217 = vsel %vm6098, %v7215, %v7216
        %v7218 = vrot.slane %v6909, 1
        %v7219 = vrot.slane %v6910, 1
        %v7220 = vsel %vm6098, %v7218, %v7219
        %v7221 = vrot.slane %v6911, 1
        %v7222 = vrot.slane %v6912, 1
        %v7223 = vsel %vm6098, %v7221, %v7222
        %v7224 = vrot.slane %v6913, 1
        %v7225 = vrot.slane %v6914, 1
        %v7226 = vsel %vm6098, %v7224, %v7225
        %v7227 = vrot.slane %v6915, 1
        %v7228 = vrot.slane %v6916, 1
        %v7229 = vsel %vm6098, %v7227, %v7228
        %v7230 = vrot.slane %v6917, 1
        %v7231 = vrot.slane %v6918, 1
        %v7232 = vsel %vm6098, %v7230, %v7231
        %v7233 = vrot.slane %v6919, 1
        %v7234 = vrot.slane %v6920, 1
        %v7235 = vsel %vm6098, %v7233, %v7234
        %v7236 = vrot.slane %v6921, 1
        %v7237 = vrot.slane %v6922, 1
        %v7238 = vsel %vm6098, %v7236, %v7237
        %v7239 = vrot.slane %v6923, 1
        %v7240 = vrot.slane %v6924, 1
        %v7241 = vsel %vm6098, %v7239, %v7240
        %v7242 = vrot.slane %v6925, 1
        %v7243 = vrot.slane %v6926, 1
        %v7244 = vsel %vm6098, %v7242, %v7243
        %v7245 = vrot.slane %v6927, 1
        %v7246 = vrot.slane %v6928, 1
        %v7247 = vsel %vm6098, %v7245, %v7246
        %v7248 = vrot.slane %v6929, 1
        %v7249 = vrot.slane %v6930, 1
        %v7250 = vsel %vm6098, %v7248, %v7249
        %v7251 = vrot.slane %v6932, 3
        %v7252 = vrot.slane %v6934, 4
        %v7253 = vor.u32 %v7251, %v7252
        %v7254 = vrot.slane %v6943, 3
        %v7255 = vrot.slane %v6939, 4
        %v7256 = vor.u32 %v7254, %v7255
        %v7257 = vsel %vm856, %v7253, %v7256
        %v7259 = vshrl.u32 %v6942, 16
        %v7261 = vrot.slane %v7259, 3
        %v7262 = vshll.u32 %v6942, 16
        %v7264 = vrot.slane %v7262, 4
        %v7265 = vor.u32 %v7261, %v7264
        %v7267 = vshrl.u32 %v6945, 16
        %v7269 = vrot.slane %v7267, 3
        %v7270 = vshll.u32 %v6945, 16
        %v7272 = vrot.slane %v7270, 4
        %v7273 = vor.u32 %v7269, %v7272
        %v7274 = vsel %vm856, %v7265, %v7273
        %v7276 = vshrl.u32 %v7205, 16
        %v7278 = vrot.slane %v7276, 3
        %v7279 = vshll.u32 %v7205, 16
        %v7281 = vrot.slane %v7279, 4
        %v7282 = vor.u32 %v7278, %v7281
        %v7284 = vshrl.u32 %v7204, 16
        %v7286 = vrot.slane %v7284, 3
        %v7287 = vshll.u32 %v7204, 16
        %v7289 = vrot.slane %v7287, 4
        %v7290 = vor.u32 %v7286, %v7289
        %v7291 = vsel %vm856, %v7282, %v7290
        %v7292 = vrot.slane %v6947, 3
        %v7293 = vrot.slane %v6949, 4
        %v7294 = vor.u32 %v7292, %v7293
        %v7295 = vrot.slane %v6958, 3
        %v7296 = vrot.slane %v6954, 4
        %v7297 = vor.u32 %v7295, %v7296
        %v7298 = vsel %vm856, %v7294, %v7297
        %v7300 = vshrl.u32 %v6957, 16
        %v7302 = vrot.slane %v7300, 3
        %v7303 = vshll.u32 %v6957, 16
        %v7305 = vrot.slane %v7303, 4
        %v7306 = vor.u32 %v7302, %v7305
        %v7308 = vshrl.u32 %v6960, 16
        %v7310 = vrot.slane %v7308, 3
        %v7311 = vshll.u32 %v6960, 16
        %v7313 = vrot.slane %v7311, 4
        %v7314 = vor.u32 %v7310, %v7313
        %v7315 = vsel %vm856, %v7306, %v7314
        %v7317 = vshrl.u32 %v7208, 16
        %v7319 = vrot.slane %v7317, 3
        %v7320 = vshll.u32 %v7208, 16
        %v7322 = vrot.slane %v7320, 4
        %v7323 = vor.u32 %v7319, %v7322
        %v7325 = vshrl.u32 %v7207, 16
        %v7327 = vrot.slane %v7325, 3
        %v7328 = vshll.u32 %v7207, 16
        %v7330 = vrot.slane %v7328, 4
        %v7331 = vor.u32 %v7327, %v7330
        %v7332 = vsel %vm856, %v7323, %v7331
        %v7333 = vrot.slane %v6962, 3
        %v7334 = vrot.slane %v6964, 4
        %v7335 = vor.u32 %v7333, %v7334
        %v7336 = vrot.slane %v6973, 3
        %v7337 = vrot.slane %v6969, 4
        %v7338 = vor.u32 %v7336, %v7337
        %v7339 = vsel %vm856, %v7335, %v7338
        %v7341 = vshrl.u32 %v6972, 16
        %v7343 = vrot.slane %v7341, 3
        %v7344 = vshll.u32 %v6972, 16
        %v7346 = vrot.slane %v7344, 4
        %v7347 = vor.u32 %v7343, %v7346
        %v7349 = vshrl.u32 %v6975, 16
        %v7351 = vrot.slane %v7349, 3
        %v7352 = vshll.u32 %v6975, 16
        %v7354 = vrot.slane %v7352, 4
        %v7355 = vor.u32 %v7351, %v7354
        %v7356 = vsel %vm856, %v7347, %v7355
        %v7358 = vshrl.u32 %v7211, 16
        %v7360 = vrot.slane %v7358, 3
        %v7361 = vshll.u32 %v7211, 16
        %v7363 = vrot.slane %v7361, 4
        %v7364 = vor.u32 %v7360, %v7363
        %v7366 = vshrl.u32 %v7210, 16
        %v7368 = vrot.slane %v7366, 3
        %v7369 = vshll.u32 %v7210, 16
        %v7371 = vrot.slane %v7369, 4
        %v7372 = vor.u32 %v7368, %v7371
        %v7373 = vsel %vm856, %v7364, %v7372
        %v7374 = vrot.slane %v6977, 3
        %v7375 = vrot.slane %v6979, 4
        %v7376 = vor.u32 %v7374, %v7375
        %v7377 = vrot.slane %v6988, 3
        %v7378 = vrot.slane %v6984, 4
        %v7379 = vor.u32 %v7377, %v7378
        %v7380 = vsel %vm856, %v7376, %v7379
        %v7382 = vshrl.u32 %v6987, 16
        %v7384 = vrot.slane %v7382, 3
        %v7385 = vshll.u32 %v6987, 16
        %v7387 = vrot.slane %v7385, 4
        %v7388 = vor.u32 %v7384, %v7387
        %v7390 = vshrl.u32 %v6990, 16
        %v7392 = vrot.slane %v7390, 3
        %v7393 = vshll.u32 %v6990, 16
        %v7395 = vrot.slane %v7393, 4
        %v7396 = vor.u32 %v7392, %v7395
        %v7397 = vsel %vm856, %v7388, %v7396
        %v7399 = vshrl.u32 %v7214, 16
        %v7401 = vrot.slane %v7399, 3
        %v7402 = vshll.u32 %v7214, 16
        %v7404 = vrot.slane %v7402, 4
        %v7405 = vor.u32 %v7401, %v7404
        %v7407 = vshrl.u32 %v7213, 16
        %v7409 = vrot.slane %v7407, 3
        %v7410 = vshll.u32 %v7213, 16
        %v7412 = vrot.slane %v7410, 4
        %v7413 = vor.u32 %v7409, %v7412
        %v7414 = vsel %vm856, %v7405, %v7413
        %v7415 = vrot.slane %v6992, 3
        %v7416 = vrot.slane %v6994, 4
        %v7417 = vor.u32 %v7415, %v7416
        %v7418 = vrot.slane %v7003, 3
        %v7419 = vrot.slane %v6999, 4
        %v7420 = vor.u32 %v7418, %v7419
        %v7421 = vsel %vm856, %v7417, %v7420
        %v7423 = vshrl.u32 %v7002, 16
        %v7425 = vrot.slane %v7423, 3
        %v7426 = vshll.u32 %v7002, 16
        %v7428 = vrot.slane %v7426, 4
        %v7429 = vor.u32 %v7425, %v7428
        %v7431 = vshrl.u32 %v7005, 16
        %v7433 = vrot.slane %v7431, 3
        %v7434 = vshll.u32 %v7005, 16
        %v7436 = vrot.slane %v7434, 4
        %v7437 = vor.u32 %v7433, %v7436
        %v7438 = vsel %vm856, %v7429, %v7437
        %v7440 = vshrl.u32 %v7217, 16
        %v7442 = vrot.slane %v7440, 3
        %v7443 = vshll.u32 %v7217, 16
        %v7445 = vrot.slane %v7443, 4
        %v7446 = vor.u32 %v7442, %v7445
        %v7448 = vshrl.u32 %v7216, 16
        %v7450 = vrot.slane %v7448, 3
        %v7451 = vshll.u32 %v7216, 16
        %v7453 = vrot.slane %v7451, 4
        %v7454 = vor.u32 %v7450, %v7453
        %v7455 = vsel %vm856, %v7446, %v7454
        %v7456 = vrot.slane %v7007, 3
        %v7457 = vrot.slane %v7009, 4
        %v7458 = vor.u32 %v7456, %v7457
        %v7459 = vrot.slane %v7018, 3
        %v7460 = vrot.slane %v7014, 4
        %v7461 = vor.u32 %v7459, %v7460
        %v7462 = vsel %vm856, %v7458, %v7461
        %v7464 = vshrl.u32 %v7017, 16
        %v7466 = vrot.slane %v7464, 3
        %v7467 = vshll.u32 %v7017, 16
        %v7469 = vrot.slane %v7467, 4
        %v7470 = vor.u32 %v7466, %v7469
        %v7472 = vshrl.u32 %v7020, 16
        %v7474 = vrot.slane %v7472, 3
        %v7475 = vshll.u32 %v7020, 16
        %v7477 = vrot.slane %v7475, 4
        %v7478 = vor.u32 %v7474, %v7477
        %v7479 = vsel %vm856, %v7470, %v7478
        %v7481 = vshrl.u32 %v7220, 16
        %v7483 = vrot.slane %v7481, 3
        %v7484 = vshll.u32 %v7220, 16
        %v7486 = vrot.slane %v7484, 4
        %v7487 = vor.u32 %v7483, %v7486
        %v7489 = vshrl.u32 %v7219, 16
        %v7491 = vrot.slane %v7489, 3
        %v7492 = vshll.u32 %v7219, 16
        %v7494 = vrot.slane %v7492, 4
        %v7495 = vor.u32 %v7491, %v7494
        %v7496 = vsel %vm856, %v7487, %v7495
        %v7497 = vrot.slane %v7022, 3
        %v7498 = vrot.slane %v7024, 4
        %v7499 = vor.u32 %v7497, %v7498
        %v7500 = vrot.slane %v7033, 3
        %v7501 = vrot.slane %v7029, 4
        %v7502 = vor.u32 %v7500, %v7501
        %v7503 = vsel %vm856, %v7499, %v7502
        %v7505 = vshrl.u32 %v7032, 16
        %v7507 = vrot.slane %v7505, 3
        %v7508 = vshll.u32 %v7032, 16
        %v7510 = vrot.slane %v7508, 4
        %v7511 = vor.u32 %v7507, %v7510
        %v7513 = vshrl.u32 %v7035, 16
        %v7515 = vrot.slane %v7513, 3
        %v7516 = vshll.u32 %v7035, 16
        %v7518 = vrot.slane %v7516, 4
        %v7519 = vor.u32 %v7515, %v7518
        %v7520 = vsel %vm856, %v7511, %v7519
        %v7522 = vshrl.u32 %v7223, 16
        %v7524 = vrot.slane %v7522, 3
        %v7525 = vshll.u32 %v7223, 16
        %v7527 = vrot.slane %v7525, 4
        %v7528 = vor.u32 %v7524, %v7527
        %v7530 = vshrl.u32 %v7222, 16
        %v7532 = vrot.slane %v7530, 3
        %v7533 = vshll.u32 %v7222, 16
        %v7535 = vrot.slane %v7533, 4
        %v7536 = vor.u32 %v7532, %v7535
        %v7537 = vsel %vm856, %v7528, %v7536
        %v7538 = vrot.slane %v7037, 3
        %v7539 = vrot.slane %v7039, 4
        %v7540 = vor.u32 %v7538, %v7539
        %v7541 = vrot.slane %v7048, 3
        %v7542 = vrot.slane %v7044, 4
        %v7543 = vor.u32 %v7541, %v7542
        %v7544 = vsel %vm856, %v7540, %v7543
        %v7546 = vshrl.u32 %v7047, 16
        %v7548 = vrot.slane %v7546, 3
        %v7549 = vshll.u32 %v7047, 16
        %v7551 = vrot.slane %v7549, 4
        %v7552 = vor.u32 %v7548, %v7551
        %v7554 = vshrl.u32 %v7050, 16
        %v7556 = vrot.slane %v7554, 3
        %v7557 = vshll.u32 %v7050, 16
        %v7559 = vrot.slane %v7557, 4
        %v7560 = vor.u32 %v7556, %v7559
        %v7561 = vsel %vm856, %v7552, %v7560
        %v7563 = vshrl.u32 %v7226, 16
        %v7565 = vrot.slane %v7563, 3
        %v7566 = vshll.u32 %v7226, 16
        %v7568 = vrot.slane %v7566, 4
        %v7569 = vor.u32 %v7565, %v7568
        %v7571 = vshrl.u32 %v7225, 16
        %v7573 = vrot.slane %v7571, 3
        %v7574 = vshll.u32 %v7225, 16
        %v7576 = vrot.slane %v7574, 4
        %v7577 = vor.u32 %v7573, %v7576
        %v7578 = vsel %vm856, %v7569, %v7577
        %v7579 = vrot.slane %v7052, 3
        %v7580 = vrot.slane %v7054, 4
        %v7581 = vor.u32 %v7579, %v7580
        %v7582 = vrot.slane %v7063, 3
        %v7583 = vrot.slane %v7059, 4
        %v7584 = vor.u32 %v7582, %v7583
        %v7585 = vsel %vm856, %v7581, %v7584
        %v7587 = vshrl.u32 %v7062, 16
        %v7589 = vrot.slane %v7587, 3
        %v7590 = vshll.u32 %v7062, 16
        %v7592 = vrot.slane %v7590, 4
        %v7593 = vor.u32 %v7589, %v7592
        %v7595 = vshrl.u32 %v7065, 16
        %v7597 = vrot.slane %v7595, 3
        %v7598 = vshll.u32 %v7065, 16
        %v7600 = vrot.slane %v7598, 4
        %v7601 = vor.u32 %v7597, %v7600
        %v7602 = vsel %vm856, %v7593, %v7601
        %v7604 = vshrl.u32 %v7229, 16
        %v7606 = vrot.slane %v7604, 3
        %v7607 = vshll.u32 %v7229, 16
        %v7609 = vrot.slane %v7607, 4
        %v7610 = vor.u32 %v7606, %v7609
        %v7612 = vshrl.u32 %v7228, 16
        %v7614 = vrot.slane %v7612, 3
        %v7615 = vshll.u32 %v7228, 16
        %v7617 = vrot.slane %v7615, 4
        %v7618 = vor.u32 %v7614, %v7617
        %v7619 = vsel %vm856, %v7610, %v7618
        %v7620 = vrot.slane %v7067, 3
        %v7621 = vrot.slane %v7069, 4
        %v7622 = vor.u32 %v7620, %v7621
        %v7623 = vrot.slane %v7078, 3
        %v7624 = vrot.slane %v7074, 4
        %v7625 = vor.u32 %v7623, %v7624
        %v7626 = vsel %vm856, %v7622, %v7625
        %v7628 = vshrl.u32 %v7077, 16
        %v7630 = vrot.slane %v7628, 3
        %v7631 = vshll.u32 %v7077, 16
        %v7633 = vrot.slane %v7631, 4
        %v7634 = vor.u32 %v7630, %v7633
        %v7636 = vshrl.u32 %v7080, 16
        %v7638 = vrot.slane %v7636, 3
        %v7639 = vshll.u32 %v7080, 16
        %v7641 = vrot.slane %v7639, 4
        %v7642 = vor.u32 %v7638, %v7641
        %v7643 = vsel %vm856, %v7634, %v7642
        %v7645 = vshrl.u32 %v7232, 16
        %v7647 = vrot.slane %v7645, 3
        %v7648 = vshll.u32 %v7232, 16
        %v7650 = vrot.slane %v7648, 4
        %v7651 = vor.u32 %v7647, %v7650
        %v7653 = vshrl.u32 %v7231, 16
        %v7655 = vrot.slane %v7653, 3
        %v7656 = vshll.u32 %v7231, 16
        %v7658 = vrot.slane %v7656, 4
        %v7659 = vor.u32 %v7655, %v7658
        %v7660 = vsel %vm856, %v7651, %v7659
        %v7661 = vrot.slane %v7082, 3
        %v7662 = vrot.slane %v7084, 4
        %v7663 = vor.u32 %v7661, %v7662
        %v7664 = vrot.slane %v7093, 3
        %v7665 = vrot.slane %v7089, 4
        %v7666 = vor.u32 %v7664, %v7665
        %v7667 = vsel %vm856, %v7663, %v7666
        %v7669 = vshrl.u32 %v7092, 16
        %v7671 = vrot.slane %v7669, 3
        %v7672 = vshll.u32 %v7092, 16
        %v7674 = vrot.slane %v7672, 4
        %v7675 = vor.u32 %v7671, %v7674
        %v7677 = vshrl.u32 %v7095, 16
        %v7679 = vrot.slane %v7677, 3
        %v7680 = vshll.u32 %v7095, 16
        %v7682 = vrot.slane %v7680, 4
        %v7683 = vor.u32 %v7679, %v7682
        %v7684 = vsel %vm856, %v7675, %v7683
        %v7686 = vshrl.u32 %v7235, 16
        %v7688 = vrot.slane %v7686, 3
        %v7689 = vshll.u32 %v7235, 16
        %v7691 = vrot.slane %v7689, 4
        %v7692 = vor.u32 %v7688, %v7691
        %v7694 = vshrl.u32 %v7234, 16
        %v7696 = vrot.slane %v7694, 3
        %v7697 = vshll.u32 %v7234, 16
        %v7699 = vrot.slane %v7697, 4
        %v7700 = vor.u32 %v7696, %v7699
        %v7701 = vsel %vm856, %v7692, %v7700
        %v7702 = vrot.slane %v7097, 3
        %v7703 = vrot.slane %v7099, 4
        %v7704 = vor.u32 %v7702, %v7703
        %v7705 = vrot.slane %v7108, 3
        %v7706 = vrot.slane %v7104, 4
        %v7707 = vor.u32 %v7705, %v7706
        %v7708 = vsel %vm856, %v7704, %v7707
        %v7710 = vshrl.u32 %v7107, 16
        %v7712 = vrot.slane %v7710, 3
        %v7713 = vshll.u32 %v7107, 16
        %v7715 = vrot.slane %v7713, 4
        %v7716 = vor.u32 %v7712, %v7715
        %v7718 = vshrl.u32 %v7110, 16
        %v7720 = vrot.slane %v7718, 3
        %v7721 = vshll.u32 %v7110, 16
        %v7723 = vrot.slane %v7721, 4
        %v7724 = vor.u32 %v7720, %v7723
        %v7725 = vsel %vm856, %v7716, %v7724
        %v7727 = vshrl.u32 %v7238, 16
        %v7729 = vrot.slane %v7727, 3
        %v7730 = vshll.u32 %v7238, 16
        %v7732 = vrot.slane %v7730, 4
        %v7733 = vor.u32 %v7729, %v7732
        %v7735 = vshrl.u32 %v7237, 16
        %v7737 = vrot.slane %v7735, 3
        %v7738 = vshll.u32 %v7237, 16
        %v7740 = vrot.slane %v7738, 4
        %v7741 = vor.u32 %v7737, %v7740
        %v7742 = vsel %vm856, %v7733, %v7741
        %v7743 = vrot.slane %v7112, 3
        %v7744 = vrot.slane %v7114, 4
        %v7745 = vor.u32 %v7743, %v7744
        %v7746 = vrot.slane %v7123, 3
        %v7747 = vrot.slane %v7119, 4
        %v7748 = vor.u32 %v7746, %v7747
        %v7749 = vsel %vm856, %v7745, %v7748
        %v7751 = vshrl.u32 %v7122, 16
        %v7753 = vrot.slane %v7751, 3
        %v7754 = vshll.u32 %v7122, 16
        %v7756 = vrot.slane %v7754, 4
        %v7757 = vor.u32 %v7753, %v7756
        %v7759 = vshrl.u32 %v7125, 16
        %v7761 = vrot.slane %v7759, 3
        %v7762 = vshll.u32 %v7125, 16
        %v7764 = vrot.slane %v7762, 4
        %v7765 = vor.u32 %v7761, %v7764
        %v7766 = vsel %vm856, %v7757, %v7765
        %v7768 = vshrl.u32 %v7241, 16
        %v7770 = vrot.slane %v7768, 3
        %v7771 = vshll.u32 %v7241, 16
        %v7773 = vrot.slane %v7771, 4
        %v7774 = vor.u32 %v7770, %v7773
        %v7776 = vshrl.u32 %v7240, 16
        %v7778 = vrot.slane %v7776, 3
        %v7779 = vshll.u32 %v7240, 16
        %v7781 = vrot.slane %v7779, 4
        %v7782 = vor.u32 %v7778, %v7781
        %v7783 = vsel %vm856, %v7774, %v7782
        %v7784 = vrot.slane %v7127, 3
        %v7785 = vrot.slane %v7129, 4
        %v7786 = vor.u32 %v7784, %v7785
        %v7787 = vrot.slane %v7138, 3
        %v7788 = vrot.slane %v7134, 4
        %v7789 = vor.u32 %v7787, %v7788
        %v7790 = vsel %vm856, %v7786, %v7789
        %v7792 = vshrl.u32 %v7137, 16
        %v7794 = vrot.slane %v7792, 3
        %v7795 = vshll.u32 %v7137, 16
        %v7797 = vrot.slane %v7795, 4
        %v7798 = vor.u32 %v7794, %v7797
        %v7800 = vshrl.u32 %v7140, 16
        %v7802 = vrot.slane %v7800, 3
        %v7803 = vshll.u32 %v7140, 16
        %v7805 = vrot.slane %v7803, 4
        %v7806 = vor.u32 %v7802, %v7805
        %v7807 = vsel %vm856, %v7798, %v7806
        %v7809 = vshrl.u32 %v7244, 16
        %v7811 = vrot.slane %v7809, 3
        %v7812 = vshll.u32 %v7244, 16
        %v7814 = vrot.slane %v7812, 4
        %v7815 = vor.u32 %v7811, %v7814
        %v7817 = vshrl.u32 %v7243, 16
        %v7819 = vrot.slane %v7817, 3
        %v7820 = vshll.u32 %v7243, 16
        %v7822 = vrot.slane %v7820, 4
        %v7823 = vor.u32 %v7819, %v7822
        %v7824 = vsel %vm856, %v7815, %v7823
        %v7825 = vrot.slane %v7142, 3
        %v7826 = vrot.slane %v7144, 4
        %v7827 = vor.u32 %v7825, %v7826
        %v7828 = vrot.slane %v7153, 3
        %v7829 = vrot.slane %v7149, 4
        %v7830 = vor.u32 %v7828, %v7829
        %v7831 = vsel %vm856, %v7827, %v7830
        %v7833 = vshrl.u32 %v7152, 16
        %v7835 = vrot.slane %v7833, 3
        %v7836 = vshll.u32 %v7152, 16
        %v7838 = vrot.slane %v7836, 4
        %v7839 = vor.u32 %v7835, %v7838
        %v7841 = vshrl.u32 %v7155, 16
        %v7843 = vrot.slane %v7841, 3
        %v7844 = vshll.u32 %v7155, 16
        %v7846 = vrot.slane %v7844, 4
        %v7847 = vor.u32 %v7843, %v7846
        %v7848 = vsel %vm856, %v7839, %v7847
        %v7850 = vshrl.u32 %v7247, 16
        %v7852 = vrot.slane %v7850, 3
        %v7853 = vshll.u32 %v7247, 16
        %v7855 = vrot.slane %v7853, 4
        %v7856 = vor.u32 %v7852, %v7855
        %v7858 = vshrl.u32 %v7246, 16
        %v7860 = vrot.slane %v7858, 3
        %v7861 = vshll.u32 %v7246, 16
        %v7863 = vrot.slane %v7861, 4
        %v7864 = vor.u32 %v7860, %v7863
        %v7865 = vsel %vm856, %v7856, %v7864
        %v7866 = vrot.slane %v7157, 3
        %v7867 = vrot.slane %v7159, 4
        %v7868 = vor.u32 %v7866, %v7867
        %v7869 = vrot.slane %v7168, 3
        %v7870 = vrot.slane %v7164, 4
        %v7871 = vor.u32 %v7869, %v7870
        %v7872 = vsel %vm856, %v7868, %v7871
        %v7874 = vshrl.u32 %v7167, 16
        %v7876 = vrot.slane %v7874, 3
        %v7877 = vshll.u32 %v7167, 16
        %v7879 = vrot.slane %v7877, 4
        %v7880 = vor.u32 %v7876, %v7879
        %v7882 = vshrl.u32 %v7170, 16
        %v7884 = vrot.slane %v7882, 3
        %v7885 = vshll.u32 %v7170, 16
        %v7887 = vrot.slane %v7885, 4
        %v7888 = vor.u32 %v7884, %v7887
        %v7889 = vsel %vm856, %v7880, %v7888
        %v7891 = vshrl.u32 %v7250, 16
        %v7893 = vrot.slane %v7891, 3
        %v7894 = vshll.u32 %v7250, 16
        %v7896 = vrot.slane %v7894, 4
        %v7897 = vor.u32 %v7893, %v7896
        %v7899 = vshrl.u32 %v7249, 16
        %v7901 = vrot.slane %v7899, 3
        %v7902 = vshll.u32 %v7249, 16
        %v7904 = vrot.slane %v7902, 4
        %v7905 = vor.u32 %v7901, %v7904
        %v7906 = vsel %vm856, %v7897, %v7905
        %s7955 = scalar_lea.vmem [#allocation8], 192
        %v7956 = vld [vmem:[%s7955] sm:$0xf]
        %v7957 = vld [vmem:[%s7955 + $0x4] sm:$0xf]
        %v7958 = vld [vmem:[%s7955 + $0x8] sm:$0xf]
        %v7959 = vld [vmem:[%s7955 + $0xc] sm:$0xf]
        %v7960 = vld [vmem:[%s7955 + $0x10] sm:$0xf]
        %v7961 = vld [vmem:[%s7955 + $0x14] sm:$0xf]
        %v7962 = vld [vmem:[%s7955 + $0x18] sm:$0xf]
        %v7963 = vld [vmem:[%s7955 + $0x1c] sm:$0xf]
        %v7964 = vld [vmem:[%s7955 + $0x20] sm:$0xf]
        %v7965 = vld [vmem:[%s7955 + $0x24] sm:$0xf]
        %v7966 = vld [vmem:[%s7955 + $0x28] sm:$0xf]
        %v7967 = vld [vmem:[%s7955 + $0x2c] sm:$0xf]
        %v7968 = vld [vmem:[%s7955 + $0x30] sm:$0xf]
        %v7969 = vld [vmem:[%s7955 + $0x34] sm:$0xf]
        %v7970 = vld [vmem:[%s7955 + $0x38] sm:$0xf]
        %v7971 = vld [vmem:[%s7955 + $0x3c] sm:$0xf]
        %v7972 = vld [vmem:[%s7955 + $0x40] sm:$0xf]
        %v7973 = vld [vmem:[%s7955 + $0x44] sm:$0xf]
        %v7974 = vld [vmem:[%s7955 + $0x48] sm:$0xf]
        %v7975 = vld [vmem:[%s7955 + $0x4c] sm:$0xf]
        %v7976 = vld [vmem:[%s7955 + $0x50] sm:$0xf]
        %v7977 = vld [vmem:[%s7955 + $0x54] sm:$0xf]
        %v7978 = vld [vmem:[%s7955 + $0x58] sm:$0xf]
        %v7979 = vld [vmem:[%s7955 + $0x5c] sm:$0xf]
        %v7980 = vld [vmem:[%s7955 + $0x60] sm:$0xf]
        %v7981 = vld [vmem:[%s7955 + $0x64] sm:$0xf]
        %v7982 = vld [vmem:[%s7955 + $0x68] sm:$0xf]
        %v7983 = vld [vmem:[%s7955 + $0x6c] sm:$0xf]
        %v7984 = vld [vmem:[%s7955 + $0x70] sm:$0xf]
        %v7985 = vld [vmem:[%s7955 + $0x74] sm:$0xf]
        %v7986 = vld [vmem:[%s7955 + $0x78] sm:$0xf]
        %v7987 = vld [vmem:[%s7955 + $0x7c] sm:$0xf]
        %v7988 = vld [vmem:[%s7955 + $0x80] sm:$0xf]
        %v7989 = vld [vmem:[%s7955 + $0x84] sm:$0xf]
        %v7990 = vld [vmem:[%s7955 + $0x88] sm:$0xf]
        %v7991 = vld [vmem:[%s7955 + $0x8c] sm:$0xf]
        %v7992 = vld [vmem:[%s7955 + $0x90] sm:$0xf]
        %v7993 = vld [vmem:[%s7955 + $0x94] sm:$0xf]
        %v7994 = vld [vmem:[%s7955 + $0x98] sm:$0xf]
        %v7995 = vld [vmem:[%s7955 + $0x9c] sm:$0xf]
        %v7996 = vld [vmem:[%s7955 + $0xa0] sm:$0xf]
        %v7997 = vld [vmem:[%s7955 + $0xa4] sm:$0xf]
        %v7998 = vld [vmem:[%s7955 + $0xa8] sm:$0xf]
        %v7999 = vld [vmem:[%s7955 + $0xac] sm:$0xf]
        %v8000 = vld [vmem:[%s7955 + $0xb0] sm:$0xf]
        %v8001 = vld [vmem:[%s7955 + $0xb4] sm:$0xf]
        %v8002 = vld [vmem:[%s7955 + $0xb8] sm:$0xf]
        %v8003 = vld [vmem:[%s7955 + $0xbc] sm:$0xf]
        %v8052 = vunpack.c.l.b16 %v7956
        %v8053 = vunpack.c.l.b16 %v7957
        %v8054 = vunpack.c.l.b16 %v7958
        %v8055 = vunpack.c.l.b16 %v7959
        %v8056 = vunpack.c.l.b16 %v7960
        %v8057 = vunpack.c.l.b16 %v7961
        %v8058 = vunpack.c.l.b16 %v7962
        %v8059 = vunpack.c.l.b16 %v7963
        %v8060 = vunpack.c.l.b16 %v7964
        %v8061 = vunpack.c.l.b16 %v7965
        %v8062 = vunpack.c.l.b16 %v7966
        %v8063 = vunpack.c.l.b16 %v7967
        %v8064 = vunpack.c.l.b16 %v7968
        %v8065 = vunpack.c.l.b16 %v7969
        %v8066 = vunpack.c.l.b16 %v7970
        %v8067 = vunpack.c.l.b16 %v7971
        %v8068 = vunpack.c.l.b16 %v7972
        %v8069 = vunpack.c.l.b16 %v7973
        %v8070 = vunpack.c.l.b16 %v7974
        %v8071 = vunpack.c.l.b16 %v7975
        %v8072 = vunpack.c.l.b16 %v7976
        %v8073 = vunpack.c.l.b16 %v7977
        %v8074 = vunpack.c.l.b16 %v7978
        %v8075 = vunpack.c.l.b16 %v7979
        %v8076 = vunpack.c.l.b16 %v7980
        %v8077 = vunpack.c.l.b16 %v7981
        %v8078 = vunpack.c.l.b16 %v7982
        %v8079 = vunpack.c.l.b16 %v7983
        %v8080 = vunpack.c.l.b16 %v7984
        %v8081 = vunpack.c.l.b16 %v7985
        %v8082 = vunpack.c.l.b16 %v7986
        %v8083 = vunpack.c.l.b16 %v7987
        %v8084 = vunpack.c.l.b16 %v7988
        %v8085 = vunpack.c.l.b16 %v7989
        %v8086 = vunpack.c.l.b16 %v7990
        %v8087 = vunpack.c.l.b16 %v7991
        %v8088 = vunpack.c.l.b16 %v7992
        %v8089 = vunpack.c.l.b16 %v7993
        %v8090 = vunpack.c.l.b16 %v7994
        %v8091 = vunpack.c.l.b16 %v7995
        %v8092 = vunpack.c.l.b16 %v7996
        %v8093 = vunpack.c.l.b16 %v7997
        %v8094 = vunpack.c.l.b16 %v7998
        %v8095 = vunpack.c.l.b16 %v7999
        %v8096 = vunpack.c.l.b16 %v8000
        %v8097 = vunpack.c.l.b16 %v8001
        %v8098 = vunpack.c.l.b16 %v8002
        %v8099 = vunpack.c.l.b16 %v8003
        %v8100 = vpack.c.b16 %v8053, %v8052
        %v8101 = vpack.c.b16 %v8055, %v8054
        %v8102 = vpack.c.b16 %v8057, %v8056
        %v8103 = vpack.c.b16 %v8059, %v8058
        %v8104 = vpack.c.b16 %v8061, %v8060
        %v8105 = vpack.c.b16 %v8063, %v8062
        %v8106 = vpack.c.b16 %v8065, %v8064
        %v8107 = vpack.c.b16 %v8067, %v8066
        %v8108 = vpack.c.b16 %v8069, %v8068
        %v8109 = vpack.c.b16 %v8071, %v8070
        %v8110 = vpack.c.b16 %v8073, %v8072
        %v8111 = vpack.c.b16 %v8075, %v8074
        %v8112 = vpack.c.b16 %v8077, %v8076
        %v8113 = vpack.c.b16 %v8079, %v8078
        %v8114 = vpack.c.b16 %v8081, %v8080
        %v8115 = vpack.c.b16 %v8083, %v8082
        %v8116 = vpack.c.b16 %v8085, %v8084
        %v8117 = vpack.c.b16 %v8087, %v8086
        %v8118 = vpack.c.b16 %v8089, %v8088
        %v8119 = vpack.c.b16 %v8091, %v8090
        %v8120 = vpack.c.b16 %v8093, %v8092
        %v8121 = vpack.c.b16 %v8095, %v8094
        %v8122 = vpack.c.b16 %v8097, %v8096
        %v8123 = vpack.c.b16 %v8099, %v8098
        %8148 = vmatprep.subr.bf16.mxu0 0
        %8149 = vmatpush1.bf16.msra.mxu0 %v8100
        %8150 = vmatprep.subr.bf16.mxu0 0
        %8151 = vmatpush1.bf16.msra.mxu0 %v8101
        %8152 = vmatprep.subr.bf16.mxu0 0
        %8153 = vmatpush1.bf16.msra.mxu0 %v8102
        %8154 = vmatprep.subr.bf16.mxu0 0
        %8155 = vmatpush1.bf16.msra.mxu0 %v8103
        %8156 = vmatprep.subr.bf16.mxu0 0
        %8157 = vmatpush1.bf16.msra.mxu0 %v8104
        %8158 = vmatprep.subr.bf16.mxu0 0
        %8159 = vmatpush1.bf16.msra.mxu0 %v8105
        %8160 = vmatprep.subr.bf16.mxu0 0
        %8161 = vmatpush1.bf16.msra.mxu0 %v8106
        %8162 = vmatprep.subr.bf16.mxu0 0
        %8163 = vmatpush1.bf16.msra.mxu0 %v8107
        %8164 = vmatprep.subr.bf16.mxu0 0
        %8165 = vmatpush1.bf16.msra.mxu0 %v8108
        %8166 = vmatprep.subr.bf16.mxu0 0
        %8167 = vmatpush1.bf16.msra.mxu0 %v8109
        %8168 = vmatprep.subr.bf16.mxu0 0
        %8169 = vmatpush1.bf16.msra.mxu0 %v8110
        %8170 = vmatprep.subr.bf16.mxu0 0
        %8171 = vmatpush1.bf16.msra.mxu0 %v8111
        %8172 = vmatprep.subr.bf16.mxu0 0
        %8173 = vmatpush1.bf16.msra.mxu0 %v8112
        %8174 = vmatprep.subr.bf16.mxu0 0
        %8175 = vmatpush1.bf16.msra.mxu0 %v8113
        %8176 = vmatprep.subr.bf16.mxu0 0
        %8177 = vmatpush1.bf16.msra.mxu0 %v8114
        %8178 = vmatprep.subr.bf16.mxu0 0
        %8179 = vmatpush1.bf16.msra.mxu0 %v8115
        %8180 = vmatprep.mubr.bf16.mxu0 %v7274
        %8181 = vmatmul.mubr.bf16.gmra.mrb[0].mxu0 %v7257
        %v8182 = vpop.f32.mrb[0].mxu0
        %v8183 = vadd.f32 0.0, %v8182
        %v8184 = vpop.f32.mrb[0].mxu0
        %v8185 = vpop.f32.mrb[0].mxu0
        %v8186 = vadd.f32 0.0, %v8185
        %v8187 = vpop.f32.mrb[0].mxu0
        %8188 = vmatprep.mubr.bf16.mxu0 %v7315
        %8189 = vmatmul.mubr.bf16.gmra.mrb[0].mxu0 %v7298
        %v8190 = vpop.f32.mrb[0].mxu0
        %v8191 = vadd.f32 0.0, %v8190
        %v8192 = vpop.f32.mrb[0].mxu0
        %v8193 = vpop.f32.mrb[0].mxu0
        %v8194 = vadd.f32 0.0, %v8193
        %v8195 = vpop.f32.mrb[0].mxu0
        %8196 = vmatprep.mubr.bf16.mxu0 %v7356
        %8197 = vmatmul.mubr.bf16.gmra.mrb[0].mxu0 %v7339
        %v8198 = vpop.f32.mrb[0].mxu0
        %v8199 = vadd.f32 0.0, %v8198
        %v8200 = vpop.f32.mrb[0].mxu0
        %v8201 = vpop.f32.mrb[0].mxu0
        %v8202 = vadd.f32 0.0, %v8201
        %v8203 = vpop.f32.mrb[0].mxu0
        %8204 = vmatprep.mubr.bf16.mxu0 %v7397
        %8205 = vmatmul.mubr.bf16.gmra.mrb[0].mxu0 %v7380
        %v8206 = vpop.f32.mrb[0].mxu0
        %v8207 = vadd.f32 0.0, %v8206
        %v8208 = vpop.f32.mrb[0].mxu0
        %v8209 = vpop.f32.mrb[0].mxu0
        %v8210 = vadd.f32 0.0, %v8209
        %v8211 = vpop.f32.mrb[0].mxu0
        %8212 = vmatprep.mubr.bf16.mxu0 %v7438
        %8213 = vmatmul.mubr.bf16.gmra.mrb[0].mxu0 %v7421
        %v8214 = vpop.f32.mrb[0].mxu0
        %v8215 = vadd.f32 0.0, %v8214
        %v8216 = vpop.f32.mrb[0].mxu0
        %v8217 = vpop.f32.mrb[0].mxu0
        %v8218 = vadd.f32 0.0, %v8217
        %v8219 = vpop.f32.mrb[0].mxu0
        %8220 = vmatprep.mubr.bf16.mxu0 %v7479
        %8221 = vmatmul.mubr.bf16.gmra.mrb[0].mxu0 %v7462
        %v8222 = vpop.f32.mrb[0].mxu0
        %v8223 = vadd.f32 0.0, %v8222
        %v8224 = vpop.f32.mrb[0].mxu0
        %v8225 = vpop.f32.mrb[0].mxu0
        %v8226 = vadd.f32 0.0, %v8225
        %v8227 = vpop.f32.mrb[0].mxu0
        %8228 = vmatprep.mubr.bf16.mxu0 %v7520
        %8229 = vmatmul.mubr.bf16.gmra.mrb[0].mxu0 %v7503
        %v8230 = vpop.f32.mrb[0].mxu0
        %v8231 = vadd.f32 0.0, %v8230
        %v8232 = vpop.f32.mrb[0].mxu0
        %v8233 = vpop.f32.mrb[0].mxu0
        %v8234 = vadd.f32 0.0, %v8233
        %v8235 = vpop.f32.mrb[0].mxu0
        %8236 = vmatprep.mubr.bf16.mxu0 %v7561
        %8237 = vmatmul.mubr.bf16.gmra.mrb[0].mxu0 %v7544
        %v8238 = vpop.f32.mrb[0].mxu0
        %v8239 = vadd.f32 0.0, %v8238
        %v8240 = vpop.f32.mrb[0].mxu0
        %v8241 = vpop.f32.mrb[0].mxu0
        %v8242 = vadd.f32 0.0, %v8241
        %v8243 = vpop.f32.mrb[0].mxu0
        %8244 = vmatprep.mubr.bf16.mxu0 %v7602
        %8245 = vmatmul.mubr.bf16.gmra.mrb[0].mxu0 %v7585
        %v8246 = vpop.f32.mrb[0].mxu0
        %v8247 = vadd.f32 0.0, %v8246
        %v8248 = vpop.f32.mrb[0].mxu0
        %v8249 = vpop.f32.mrb[0].mxu0
        %v8250 = vadd.f32 0.0, %v8249
        %v8251 = vpop.f32.mrb[0].mxu0
        %8252 = vmatprep.mubr.bf16.mxu0 %v7643
        %8253 = vmatmul.mubr.bf16.gmra.mrb[0].mxu0 %v7626
        %v8254 = vpop.f32.mrb[0].mxu0
        %v8255 = vadd.f32 0.0, %v8254
        %v8256 = vpop.f32.mrb[0].mxu0
        %v8257 = vpop.f32.mrb[0].mxu0
        %v8258 = vadd.f32 0.0, %v8257
        %v8259 = vpop.f32.mrb[0].mxu0
        %8260 = vmatprep.mubr.bf16.mxu0 %v7684
        %8261 = vmatmul.mubr.bf16.gmra.mrb[0].mxu0 %v7667
        %v8262 = vpop.f32.mrb[0].mxu0
        %v8263 = vadd.f32 0.0, %v8262
        %v8264 = vpop.f32.mrb[0].mxu0
        %v8265 = vpop.f32.mrb[0].mxu0
        %v8266 = vadd.f32 0.0, %v8265
        %v8267 = vpop.f32.mrb[0].mxu0
        %8268 = vmatprep.mubr.bf16.mxu0 %v7725
        %8269 = vmatmul.mubr.bf16.gmra.mrb[0].mxu0 %v7708
        %v8270 = vpop.f32.mrb[0].mxu0
        %v8271 = vadd.f32 0.0, %v8270
        %v8272 = vpop.f32.mrb[0].mxu0
        %v8273 = vpop.f32.mrb[0].mxu0
        %v8274 = vadd.f32 0.0, %v8273
        %v8275 = vpop.f32.mrb[0].mxu0
        %8276 = vmatprep.mubr.bf16.mxu0 %v7766
        %8277 = vmatmul.mubr.bf16.gmra.mrb[0].mxu0 %v7749
        %v8278 = vpop.f32.mrb[0].mxu0
        %v8279 = vadd.f32 0.0, %v8278
        %v8280 = vpop.f32.mrb[0].mxu0
        %v8281 = vpop.f32.mrb[0].mxu0
        %v8282 = vadd.f32 0.0, %v8281
        %v8283 = vpop.f32.mrb[0].mxu0
        %8284 = vmatprep.mubr.bf16.mxu0 %v7807
        %8285 = vmatmul.mubr.bf16.gmra.mrb[0].mxu0 %v7790
        %v8286 = vpop.f32.mrb[0].mxu0
        %v8287 = vadd.f32 0.0, %v8286
        %v8288 = vpop.f32.mrb[0].mxu0
        %v8289 = vpop.f32.mrb[0].mxu0
        %v8290 = vadd.f32 0.0, %v8289
        %v8291 = vpop.f32.mrb[0].mxu0
        %8292 = vmatprep.mubr.bf16.mxu0 %v7848
        %8293 = vmatmul.mubr.bf16.gmra.mrb[0].mxu0 %v7831
        %v8294 = vpop.f32.mrb[0].mxu0
        %v8295 = vadd.f32 0.0, %v8294
        %v8296 = vpop.f32.mrb[0].mxu0
        %v8297 = vpop.f32.mrb[0].mxu0
        %v8298 = vadd.f32 0.0, %v8297
        %v8299 = vpop.f32.mrb[0].mxu0
        %8300 = vmatprep.mubr.bf16.mxu0 %v7889
        %8301 = vmatmul.mubr.bf16.gmra.mrb[0].mxu0 %v7872
        %v8302 = vpop.f32.mrb[0].mxu0
        %v8303 = vadd.f32 0.0, %v8302
        %v8304 = vpop.f32.mrb[0].mxu0
        %v8305 = vpop.f32.mrb[0].mxu0
        %v8306 = vadd.f32 0.0, %v8305
        %v8307 = vpop.f32.mrb[0].mxu0
        %8308 = vdwg.mxu0
        %8309 = vmatprep.subr.bf16.mxu0 0
        %8310 = vmatpush1.bf16.msra.mxu0 %v8116
        %8311 = vmatprep.subr.bf16.mxu0 0
        %8312 = vmatpush1.bf16.msra.mxu0 %v8117
        %8313 = vmatprep.subr.bf16.mxu0 0
        %8314 = vmatpush1.bf16.msra.mxu0 %v8118
        %8315 = vmatprep.subr.bf16.mxu0 0
        %8316 = vmatpush1.bf16.msra.mxu0 %v8119
        %8317 = vmatprep.subr.bf16.mxu0 0
        %8318 = vmatpush1.bf16.msra.mxu0 %v8120
        %8319 = vmatprep.subr.bf16.mxu0 0
        %8320 = vmatpush1.bf16.msra.mxu0 %v8121
        %8321 = vmatprep.subr.bf16.mxu0 0
        %8322 = vmatpush1.bf16.msra.mxu0 %v8122
        %8323 = vmatprep.subr.bf16.mxu0 0
        %8324 = vmatpush1.bf16.msra.mxu0 %v8123
        %8325 = vmatprep.subr.bf16.mxu0 0
        %8326 = vmatpush1.bf16.msra.mxu0 0
        %8327 = vmatprep.subr.bf16.mxu0 0
        %8328 = vmatpush1.bf16.msra.mxu0 0
        %8329 = vmatprep.subr.bf16.mxu0 0
        %8330 = vmatpush1.bf16.msra.mxu0 0
        %8331 = vmatprep.subr.bf16.mxu0 0
        %8332 = vmatpush1.bf16.msra.mxu0 0
        %8333 = vmatprep.subr.bf16.mxu0 0
        %8334 = vmatpush1.bf16.msra.mxu0 0
        %8335 = vmatprep.subr.bf16.mxu0 0
        %8336 = vmatpush1.bf16.msra.mxu0 0
        %8337 = vmatprep.subr.bf16.mxu0 0
        %8338 = vmatpush1.bf16.msra.mxu0 0
        %8339 = vmatprep.subr.bf16.mxu0 0
        %8340 = vmatpush1.bf16.msra.mxu0 0
        %8341 = vmatprep.mubr.bf16.mxu0 0
        %8342 = vmatmul.mubr.bf16.gmra.mrb[0].mxu0 %v7291
        %v8343 = vpop.f32.mrb[0].mxu0
        %v8344 = vadd.f32 %v8183, %v8343
        %v8345 = vpop.f32.mrb[0].mxu0
        %v8346 = vpop.f32.mrb[0].mxu0
        %v8347 = vadd.f32 %v8186, %v8346
        %v8348 = vpop.f32.mrb[0].mxu0
        %8349 = vmatprep.mubr.bf16.mxu0 0
        %8350 = vmatmul.mubr.bf16.gmra.mrb[0].mxu0 %v7332
        %v8351 = vpop.f32.mrb[0].mxu0
        %v8352 = vadd.f32 %v8191, %v8351
        %v8353 = vpop.f32.mrb[0].mxu0
        %v8354 = vpop.f32.mrb[0].mxu0
        %v8355 = vadd.f32 %v8194, %v8354
        %v8356 = vpop.f32.mrb[0].mxu0
        %8357 = vmatprep.mubr.bf16.mxu0 0
        %8358 = vmatmul.mubr.bf16.gmra.mrb[0].mxu0 %v7373
        %v8359 = vpop.f32.mrb[0].mxu0
        %v8360 = vadd.f32 %v8199, %v8359
        %v8361 = vpop.f32.mrb[0].mxu0
        %v8362 = vpop.f32.mrb[0].mxu0
        %v8363 = vadd.f32 %v8202, %v8362
        %v8364 = vpop.f32.mrb[0].mxu0
        %8365 = vmatprep.mubr.bf16.mxu0 0
        %8366 = vmatmul.mubr.bf16.gmra.mrb[0].mxu0 %v7414
        %v8367 = vpop.f32.mrb[0].mxu0
        %v8368 = vadd.f32 %v8207, %v8367
        %v8369 = vpop.f32.mrb[0].mxu0
        %v8370 = vpop.f32.mrb[0].mxu0
        %v8371 = vadd.f32 %v8210, %v8370
        %v8372 = vpop.f32.mrb[0].mxu0
        %8373 = vmatprep.mubr.bf16.mxu0 0
        %8374 = vmatmul.mubr.bf16.gmra.mrb[0].mxu0 %v7455
        %v8375 = vpop.f32.mrb[0].mxu0
        %v8376 = vadd.f32 %v8215, %v8375
        %v8377 = vpop.f32.mrb[0].mxu0
        %v8378 = vpop.f32.mrb[0].mxu0
        %v8379 = vadd.f32 %v8218, %v8378
        %v8380 = vpop.f32.mrb[0].mxu0
        %8381 = vmatprep.mubr.bf16.mxu0 0
        %8382 = vmatmul.mubr.bf16.gmra.mrb[0].mxu0 %v7496
        %v8383 = vpop.f32.mrb[0].mxu0
        %v8384 = vadd.f32 %v8223, %v8383
        %v8385 = vpop.f32.mrb[0].mxu0
        %v8386 = vpop.f32.mrb[0].mxu0
        %v8387 = vadd.f32 %v8226, %v8386
        %v8388 = vpop.f32.mrb[0].mxu0
        %8389 = vmatprep.mubr.bf16.mxu0 0
        %8390 = vmatmul.mubr.bf16.gmra.mrb[0].mxu0 %v7537
        %v8391 = vpop.f32.mrb[0].mxu0
        %v8392 = vadd.f32 %v8231, %v8391
        %v8393 = vpop.f32.mrb[0].mxu0
        %v8394 = vpop.f32.mrb[0].mxu0
        %v8395 = vadd.f32 %v8234, %v8394
        %v8396 = vpop.f32.mrb[0].mxu0
        %8397 = vmatprep.mubr.bf16.mxu0 0
        %8398 = vmatmul.mubr.bf16.gmra.mrb[0].mxu0 %v7578
        %v8399 = vpop.f32.mrb[0].mxu0
        %v8400 = vadd.f32 %v8239, %v8399
        %v8401 = vpop.f32.mrb[0].mxu0
        %v8402 = vpop.f32.mrb[0].mxu0
        %v8403 = vadd.f32 %v8242, %v8402
        %v8404 = vpop.f32.mrb[0].mxu0
        %8405 = vmatprep.mubr.bf16.mxu0 0
        %8406 = vmatmul.mubr.bf16.gmra.mrb[0].mxu0 %v7619
        %v8407 = vpop.f32.mrb[0].mxu0
        %v8408 = vadd.f32 %v8247, %v8407
        %v8409 = vpop.f32.mrb[0].mxu0
        %v8410 = vpop.f32.mrb[0].mxu0
        %v8411 = vadd.f32 %v8250, %v8410
        %v8412 = vpop.f32.mrb[0].mxu0
        %8413 = vmatprep.mubr.bf16.mxu0 0
        %8414 = vmatmul.mubr.bf16.gmra.mrb[0].mxu0 %v7660
        %v8415 = vpop.f32.mrb[0].mxu0
        %v8416 = vadd.f32 %v8255, %v8415
        %v8417 = vpop.f32.mrb[0].mxu0
        %v8418 = vpop.f32.mrb[0].mxu0
        %v8419 = vadd.f32 %v8258, %v8418
        %v8420 = vpop.f32.mrb[0].mxu0
        %8421 = vmatprep.mubr.bf16.mxu0 0
        %8422 = vmatmul.mubr.bf16.gmra.mrb[0].mxu0 %v7701
        %v8423 = vpop.f32.mrb[0].mxu0
        %v8424 = vadd.f32 %v8263, %v8423
        %v8425 = vpop.f32.mrb[0].mxu0
        %v8426 = vpop.f32.mrb[0].mxu0
        %v8427 = vadd.f32 %v8266, %v8426
        %v8428 = vpop.f32.mrb[0].mxu0
        %8429 = vmatprep.mubr.bf16.mxu0 0
        %8430 = vmatmul.mubr.bf16.gmra.mrb[0].mxu0 %v7742
        %v8431 = vpop.f32.mrb[0].mxu0
        %v8432 = vadd.f32 %v8271, %v8431
        %v8433 = vpop.f32.mrb[0].mxu0
        %v8434 = vpop.f32.mrb[0].mxu0
        %v8435 = vadd.f32 %v8274, %v8434
        %v8436 = vpop.f32.mrb[0].mxu0
        %8437 = vmatprep.mubr.bf16.mxu0 0
        %8438 = vmatmul.mubr.bf16.gmra.mrb[0].mxu0 %v7783
        %v8439 = vpop.f32.mrb[0].mxu0
        %v8440 = vadd.f32 %v8279, %v8439
        %v8441 = vpop.f32.mrb[0].mxu0
        %v8442 = vpop.f32.mrb[0].mxu0
        %v8443 = vadd.f32 %v8282, %v8442
        %v8444 = vpop.f32.mrb[0].mxu0
        %8445 = vmatprep.mubr.bf16.mxu0 0
        %8446 = vmatmul.mubr.bf16.gmra.mrb[0].mxu0 %v7824
        %v8447 = vpop.f32.mrb[0].mxu0
        %v8448 = vadd.f32 %v8287, %v8447
        %v8449 = vpop.f32.mrb[0].mxu0
        %v8450 = vpop.f32.mrb[0].mxu0
        %v8451 = vadd.f32 %v8290, %v8450
        %v8452 = vpop.f32.mrb[0].mxu0
        %8453 = vmatprep.mubr.bf16.mxu0 0
        %8454 = vmatmul.mubr.bf16.gmra.mrb[0].mxu0 %v7865
        %v8455 = vpop.f32.mrb[0].mxu0
        %v8456 = vadd.f32 %v8295, %v8455
        %v8457 = vpop.f32.mrb[0].mxu0
        %v8458 = vpop.f32.mrb[0].mxu0
        %v8459 = vadd.f32 %v8298, %v8458
        %v8460 = vpop.f32.mrb[0].mxu0
        %8461 = vmatprep.mubr.bf16.mxu0 0
        %8462 = vmatmul.mubr.bf16.gmra.mrb[0].mxu0 %v7906
        %v8463 = vpop.f32.mrb[0].mxu0
        %v8464 = vadd.f32 %v8303, %v8463
        %v8465 = vpop.f32.mrb[0].mxu0
        %v8466 = vpop.f32.mrb[0].mxu0
        %v8467 = vadd.f32 %v8306, %v8466
        %v8468 = vpop.f32.mrb[0].mxu0
        %8469 = vdwg.mxu0
        %v8518 = vunpack.c.l.b16 %v6851
        %v8519 = vunpack.c.l.b16 %v6852
        %v8520 = vunpack.c.l.b16 %v6853
        %v8521 = vunpack.c.l.b16 %v6854
        %v8522 = vunpack.c.l.b16 %v6855
        %v8523 = vunpack.c.l.b16 %v6856
        %v8524 = vunpack.c.l.b16 %v6857
        %v8525 = vunpack.c.l.b16 %v6858
        %v8526 = vunpack.c.l.b16 %v6859
        %v8527 = vunpack.c.l.b16 %v6860
        %v8528 = vunpack.c.l.b16 %v6861
        %v8529 = vunpack.c.l.b16 %v6862
        %v8530 = vunpack.c.l.b16 %v6863
        %v8531 = vunpack.c.l.b16 %v6864
        %v8532 = vunpack.c.l.b16 %v6865
        %v8533 = vunpack.c.l.b16 %v6866
        %v8534 = vunpack.c.l.b16 %v6867
        %v8535 = vunpack.c.l.b16 %v6868
        %v8536 = vunpack.c.l.b16 %v6869
        %v8537 = vunpack.c.l.b16 %v6870
        %v8538 = vunpack.c.l.b16 %v6871
        %v8539 = vunpack.c.l.b16 %v6872
        %v8540 = vunpack.c.l.b16 %v6873
        %v8541 = vunpack.c.l.b16 %v6874
        %v8542 = vunpack.c.l.b16 %v6875
        %v8543 = vunpack.c.l.b16 %v6876
        %v8544 = vunpack.c.l.b16 %v6877
        %v8545 = vunpack.c.l.b16 %v6878
        %v8546 = vunpack.c.l.b16 %v6879
        %v8547 = vunpack.c.l.b16 %v6880
        %v8548 = vunpack.c.l.b16 %v6881
        %v8549 = vunpack.c.l.b16 %v6882
        %v8550 = vunpack.c.l.b16 %v6883
        %v8551 = vunpack.c.l.b16 %v6884
        %v8552 = vunpack.c.l.b16 %v6885
        %v8553 = vunpack.c.l.b16 %v6886
        %v8554 = vunpack.c.l.b16 %v6887
        %v8555 = vunpack.c.l.b16 %v6888
        %v8556 = vunpack.c.l.b16 %v6889
        %v8557 = vunpack.c.l.b16 %v6890
        %v8558 = vunpack.c.l.b16 %v6891
        %v8559 = vunpack.c.l.b16 %v6892
        %v8560 = vunpack.c.l.b16 %v6893
        %v8561 = vunpack.c.l.b16 %v6894
        %v8562 = vunpack.c.l.b16 %v6895
        %v8563 = vunpack.c.l.b16 %v6896
        %v8564 = vunpack.c.l.b16 %v6897
        %v8565 = vunpack.c.l.b16 %v6898
        %v8566 = vpack.c.b16 %v8519, %v8518
        %v8567 = vpack.c.b16 %v8521, %v8520
        %v8568 = vpack.c.b16 %v8523, %v8522
        %v8569 = vpack.c.b16 %v8525, %v8524
        %v8570 = vpack.c.b16 %v8527, %v8526
        %v8571 = vpack.c.b16 %v8529, %v8528
        %v8572 = vpack.c.b16 %v8531, %v8530
        %v8573 = vpack.c.b16 %v8533, %v8532
        %v8574 = vpack.c.b16 %v8535, %v8534
        %v8575 = vpack.c.b16 %v8537, %v8536
        %v8576 = vpack.c.b16 %v8539, %v8538
        %v8577 = vpack.c.b16 %v8541, %v8540
        %v8578 = vpack.c.b16 %v8543, %v8542
        %v8579 = vpack.c.b16 %v8545, %v8544
        %v8580 = vpack.c.b16 %v8547, %v8546
        %v8581 = vpack.c.b16 %v8549, %v8548
        %v8582 = vpack.c.b16 %v8551, %v8550
        %v8583 = vpack.c.b16 %v8553, %v8552
        %v8584 = vpack.c.b16 %v8555, %v8554
        %v8585 = vpack.c.b16 %v8557, %v8556
        %v8586 = vpack.c.b16 %v8559, %v8558
        %v8587 = vpack.c.b16 %v8561, %v8560
        %v8588 = vpack.c.b16 %v8563, %v8562
        %v8589 = vpack.c.b16 %v8565, %v8564
        %8614 = vmatprep.subr.bf16.mxu0 0
        %8615 = vmatpush1.bf16.msra.mxu0 %v8566
        %8616 = vmatprep.subr.bf16.mxu0 0
        %8617 = vmatpush1.bf16.msra.mxu0 %v8567
        %8618 = vmatprep.subr.bf16.mxu0 0
        %8619 = vmatpush1.bf16.msra.mxu0 %v8568
        %8620 = vmatprep.subr.bf16.mxu0 0
        %8621 = vmatpush1.bf16.msra.mxu0 %v8569
        %8622 = vmatprep.subr.bf16.mxu0 0
        %8623 = vmatpush1.bf16.msra.mxu0 %v8570
        %8624 = vmatprep.subr.bf16.mxu0 0
        %8625 = vmatpush1.bf16.msra.mxu0 %v8571
        %8626 = vmatprep.subr.bf16.mxu0 0
        %8627 = vmatpush1.bf16.msra.mxu0 %v8572
        %8628 = vmatprep.subr.bf16.mxu0 0
        %8629 = vmatpush1.bf16.msra.mxu0 %v8573
        %8630 = vmatprep.subr.bf16.mxu0 0
        %8631 = vmatpush1.bf16.msra.mxu0 %v8574
        %8632 = vmatprep.subr.bf16.mxu0 0
        %8633 = vmatpush1.bf16.msra.mxu0 %v8575
        %8634 = vmatprep.subr.bf16.mxu0 0
        %8635 = vmatpush1.bf16.msra.mxu0 %v8576
        %8636 = vmatprep.subr.bf16.mxu0 0
        %8637 = vmatpush1.bf16.msra.mxu0 %v8577
        %8638 = vmatprep.subr.bf16.mxu0 0
        %8639 = vmatpush1.bf16.msra.mxu0 %v8578
        %8640 = vmatprep.subr.bf16.mxu0 0
        %8641 = vmatpush1.bf16.msra.mxu0 %v8579
        %8642 = vmatprep.subr.bf16.mxu0 0
        %8643 = vmatpush1.bf16.msra.mxu0 %v8580
        %8644 = vmatprep.subr.bf16.mxu0 0
        %8645 = vmatpush1.bf16.msra.mxu0 %v8581
        %8646 = vmatprep.mubr.bf16.mxu0 %v6170
        %8647 = vmatmul.mubr.bf16.gmra.mrb[0].mxu0 %v6153
        %v8648 = vpop.f32.mrb[0].mxu0
        %v8649 = vadd.f32 %v8344, %v8648
        %v8650 = vpop.f32.mrb[0].mxu0
        %v8651 = vpop.f32.mrb[0].mxu0
        %v8652 = vadd.f32 %v8347, %v8651
        %v8653 = vpop.f32.mrb[0].mxu0
        %8654 = vmatprep.mubr.bf16.mxu0 %v6211
        %8655 = vmatmul.mubr.bf16.gmra.mrb[0].mxu0 %v6194
        %v8656 = vpop.f32.mrb[0].mxu0
        %v8657 = vadd.f32 %v8352, %v8656
        %v8658 = vpop.f32.mrb[0].mxu0
        %v8659 = vpop.f32.mrb[0].mxu0
        %v8660 = vadd.f32 %v8355, %v8659
        %v8661 = vpop.f32.mrb[0].mxu0
        %8662 = vmatprep.mubr.bf16.mxu0 %v6252
        %8663 = vmatmul.mubr.bf16.gmra.mrb[0].mxu0 %v6235
        %v8664 = vpop.f32.mrb[0].mxu0
        %v8665 = vadd.f32 %v8360, %v8664
        %v8666 = vpop.f32.mrb[0].mxu0
        %v8667 = vpop.f32.mrb[0].mxu0
        %v8668 = vadd.f32 %v8363, %v8667
        %v8669 = vpop.f32.mrb[0].mxu0
        %8670 = vmatprep.mubr.bf16.mxu0 %v6293
        %8671 = vmatmul.mubr.bf16.gmra.mrb[0].mxu0 %v6276
        %v8672 = vpop.f32.mrb[0].mxu0
        %v8673 = vadd.f32 %v8368, %v8672
        %v8674 = vpop.f32.mrb[0].mxu0
        %v8675 = vpop.f32.mrb[0].mxu0
        %v8676 = vadd.f32 %v8371, %v8675
        %v8677 = vpop.f32.mrb[0].mxu0
        %8678 = vmatprep.mubr.bf16.mxu0 %v6334
        %8679 = vmatmul.mubr.bf16.gmra.mrb[0].mxu0 %v6317
        %v8680 = vpop.f32.mrb[0].mxu0
        %v8681 = vadd.f32 %v8376, %v8680
        %v8682 = vpop.f32.mrb[0].mxu0
        %v8683 = vpop.f32.mrb[0].mxu0
        %v8684 = vadd.f32 %v8379, %v8683
        %v8685 = vpop.f32.mrb[0].mxu0
        %8686 = vmatprep.mubr.bf16.mxu0 %v6375
        %8687 = vmatmul.mubr.bf16.gmra.mrb[0].mxu0 %v6358
        %v8688 = vpop.f32.mrb[0].mxu0
        %v8689 = vadd.f32 %v8384, %v8688
        %v8690 = vpop.f32.mrb[0].mxu0
        %v8691 = vpop.f32.mrb[0].mxu0
        %v8692 = vadd.f32 %v8387, %v8691
        %v8693 = vpop.f32.mrb[0].mxu0
        %8694 = vmatprep.mubr.bf16.mxu0 %v6416
        %8695 = vmatmul.mubr.bf16.gmra.mrb[0].mxu0 %v6399
        %v8696 = vpop.f32.mrb[0].mxu0
        %v8697 = vadd.f32 %v8392, %v8696
        %v8698 = vpop.f32.mrb[0].mxu0
        %v8699 = vpop.f32.mrb[0].mxu0
        %v8700 = vadd.f32 %v8395, %v8699
        %v8701 = vpop.f32.mrb[0].mxu0
        %8702 = vmatprep.mubr.bf16.mxu0 %v6457
        %8703 = vmatmul.mubr.bf16.gmra.mrb[0].mxu0 %v6440
        %v8704 = vpop.f32.mrb[0].mxu0
        %v8705 = vadd.f32 %v8400, %v8704
        %v8706 = vpop.f32.mrb[0].mxu0
        %v8707 = vpop.f32.mrb[0].mxu0
        %v8708 = vadd.f32 %v8403, %v8707
        %v8709 = vpop.f32.mrb[0].mxu0
        %8710 = vmatprep.mubr.bf16.mxu0 %v6498
        %8711 = vmatmul.mubr.bf16.gmra.mrb[0].mxu0 %v6481
        %v8712 = vpop.f32.mrb[0].mxu0
        %v8713 = vadd.f32 %v8408, %v8712
        %v8714 = vpop.f32.mrb[0].mxu0
        %v8715 = vpop.f32.mrb[0].mxu0
        %v8716 = vadd.f32 %v8411, %v8715
        %v8717 = vpop.f32.mrb[0].mxu0
        %8718 = vmatprep.mubr.bf16.mxu0 %v6539
        %8719 = vmatmul.mubr.bf16.gmra.mrb[0].mxu0 %v6522
        %v8720 = vpop.f32.mrb[0].mxu0
        %v8721 = vadd.f32 %v8416, %v8720
        %v8722 = vpop.f32.mrb[0].mxu0
        %v8723 = vpop.f32.mrb[0].mxu0
        %v8724 = vadd.f32 %v8419, %v8723
        %v8725 = vpop.f32.mrb[0].mxu0
        %8726 = vmatprep.mubr.bf16.mxu0 %v6580
        %8727 = vmatmul.mubr.bf16.gmra.mrb[0].mxu0 %v6563
        %v8728 = vpop.f32.mrb[0].mxu0
        %v8729 = vadd.f32 %v8424, %v8728
        %v8730 = vpop.f32.mrb[0].mxu0
        %v8731 = vpop.f32.mrb[0].mxu0
        %v8732 = vadd.f32 %v8427, %v8731
        %v8733 = vpop.f32.mrb[0].mxu0
        %8734 = vmatprep.mubr.bf16.mxu0 %v6621
        %8735 = vmatmul.mubr.bf16.gmra.mrb[0].mxu0 %v6604
        %v8736 = vpop.f32.mrb[0].mxu0
        %v8737 = vadd.f32 %v8432, %v8736
        %v8738 = vpop.f32.mrb[0].mxu0
        %v8739 = vpop.f32.mrb[0].mxu0
        %v8740 = vadd.f32 %v8435, %v8739
        %v8741 = vpop.f32.mrb[0].mxu0
        %8742 = vmatprep.mubr.bf16.mxu0 %v6662
        %8743 = vmatmul.mubr.bf16.gmra.mrb[0].mxu0 %v6645
        %v8744 = vpop.f32.mrb[0].mxu0
        %v8745 = vadd.f32 %v8440, %v8744
        %v8746 = vpop.f32.mrb[0].mxu0
        %v8747 = vpop.f32.mrb[0].mxu0
        %v8748 = vadd.f32 %v8443, %v8747
        %v8749 = vpop.f32.mrb[0].mxu0
        %8750 = vmatprep.mubr.bf16.mxu0 %v6703
        %8751 = vmatmul.mubr.bf16.gmra.mrb[0].mxu0 %v6686
        %v8752 = vpop.f32.mrb[0].mxu0
        %v8753 = vadd.f32 %v8448, %v8752
        %v8754 = vpop.f32.mrb[0].mxu0
        %v8755 = vpop.f32.mrb[0].mxu0
        %v8756 = vadd.f32 %v8451, %v8755
        %v8757 = vpop.f32.mrb[0].mxu0
        %8758 = vmatprep.mubr.bf16.mxu0 %v6744
        %8759 = vmatmul.mubr.bf16.gmra.mrb[0].mxu0 %v6727
        %v8760 = vpop.f32.mrb[0].mxu0
        %v8761 = vadd.f32 %v8456, %v8760
        %v8762 = vpop.f32.mrb[0].mxu0
        %v8763 = vpop.f32.mrb[0].mxu0
        %v8764 = vadd.f32 %v8459, %v8763
        %v8765 = vpop.f32.mrb[0].mxu0
        %8766 = vmatprep.mubr.bf16.mxu0 %v6785
        %8767 = vmatmul.mubr.bf16.gmra.mrb[0].mxu0 %v6768
        %v8768 = vpop.f32.mrb[0].mxu0
        %v8769 = vadd.f32 %v8464, %v8768
        %v8770 = vpop.f32.mrb[0].mxu0
        %v8771 = vpop.f32.mrb[0].mxu0
        %v8772 = vadd.f32 %v8467, %v8771
        %v8773 = vpop.f32.mrb[0].mxu0
        %8774 = vdwg.mxu0
        %8775 = vmatprep.subr.bf16.mxu0 0
        %8776 = vmatpush1.bf16.msra.mxu0 %v8582
        %8777 = vmatprep.subr.bf16.mxu0 0
        %8778 = vmatpush1.bf16.msra.mxu0 %v8583
        %8779 = vmatprep.subr.bf16.mxu0 0
        %8780 = vmatpush1.bf16.msra.mxu0 %v8584
        %8781 = vmatprep.subr.bf16.mxu0 0
        %8782 = vmatpush1.bf16.msra.mxu0 %v8585
        %8783 = vmatprep.subr.bf16.mxu0 0
        %8784 = vmatpush1.bf16.msra.mxu0 %v8586
        %8785 = vmatprep.subr.bf16.mxu0 0
        %8786 = vmatpush1.bf16.msra.mxu0 %v8587
        %8787 = vmatprep.subr.bf16.mxu0 0
        %8788 = vmatpush1.bf16.msra.mxu0 %v8588
        %8789 = vmatprep.subr.bf16.mxu0 0
        %8790 = vmatpush1.bf16.msra.mxu0 %v8589
        %8791 = vmatprep.subr.bf16.mxu0 0
        %8792 = vmatpush1.bf16.msra.mxu0 0
        %8793 = vmatprep.subr.bf16.mxu0 0
        %8794 = vmatpush1.bf16.msra.mxu0 0
        %8795 = vmatprep.subr.bf16.mxu0 0
        %8796 = vmatpush1.bf16.msra.mxu0 0
        %8797 = vmatprep.subr.bf16.mxu0 0
        %8798 = vmatpush1.bf16.msra.mxu0 0
        %8799 = vmatprep.subr.bf16.mxu0 0
        %8800 = vmatpush1.bf16.msra.mxu0 0
        %8801 = vmatprep.subr.bf16.mxu0 0
        %8802 = vmatpush1.bf16.msra.mxu0 0
        %8803 = vmatprep.subr.bf16.mxu0 0
        %8804 = vmatpush1.bf16.msra.mxu0 0
        %8805 = vmatprep.subr.bf16.mxu0 0
        %8806 = vmatpush1.bf16.msra.mxu0 0
        %8807 = vmatprep.mubr.bf16.mxu0 0
        %8808 = vmatmul.mubr.bf16.gmra.mrb[0].mxu0 %v6187
        %v8809 = vpop.f32.mrb[0].mxu0
        %v8810 = vadd.f32 %v8649, %v8809
        %v8811 = vpop.f32.mrb[0].mxu0
        %v8812 = vpop.f32.mrb[0].mxu0
        %v8813 = vadd.f32 %v8652, %v8812
        %v8814 = vpop.f32.mrb[0].mxu0
        %8815 = vmatprep.mubr.bf16.mxu0 0
        %8816 = vmatmul.mubr.bf16.gmra.mrb[0].mxu0 %v6228
        %v8817 = vpop.f32.mrb[0].mxu0
        %v8818 = vadd.f32 %v8657, %v8817
        %v8819 = vpop.f32.mrb[0].mxu0
        %v8820 = vpop.f32.mrb[0].mxu0
        %v8821 = vadd.f32 %v8660, %v8820
        %v8822 = vpop.f32.mrb[0].mxu0
        %8823 = vmatprep.mubr.bf16.mxu0 0
        %8824 = vmatmul.mubr.bf16.gmra.mrb[0].mxu0 %v6269
        %v8825 = vpop.f32.mrb[0].mxu0
        %v8826 = vadd.f32 %v8665, %v8825
        %v8827 = vpop.f32.mrb[0].mxu0
        %v8828 = vpop.f32.mrb[0].mxu0
        %v8829 = vadd.f32 %v8668, %v8828
        %v8830 = vpop.f32.mrb[0].mxu0
        %8831 = vmatprep.mubr.bf16.mxu0 0
        %8832 = vmatmul.mubr.bf16.gmra.mrb[0].mxu0 %v6310
        %v8833 = vpop.f32.mrb[0].mxu0
        %v8834 = vadd.f32 %v8673, %v8833
        %v8835 = vpop.f32.mrb[0].mxu0
        %v8836 = vpop.f32.mrb[0].mxu0
        %v8837 = vadd.f32 %v8676, %v8836
        %v8838 = vpop.f32.mrb[0].mxu0
        %8839 = vmatprep.mubr.bf16.mxu0 0
        %8840 = vmatmul.mubr.bf16.gmra.mrb[0].mxu0 %v6351
        %v8841 = vpop.f32.mrb[0].mxu0
        %v8842 = vadd.f32 %v8681, %v8841
        %v8843 = vpop.f32.mrb[0].mxu0
        %v8844 = vpop.f32.mrb[0].mxu0
        %v8845 = vadd.f32 %v8684, %v8844
        %v8846 = vpop.f32.mrb[0].mxu0
        %8847 = vmatprep.mubr.bf16.mxu0 0
        %8848 = vmatmul.mubr.bf16.gmra.mrb[0].mxu0 %v6392
        %v8849 = vpop.f32.mrb[0].mxu0
        %v8850 = vadd.f32 %v8689, %v8849
        %v8851 = vpop.f32.mrb[0].mxu0
        %v8852 = vpop.f32.mrb[0].mxu0
        %v8853 = vadd.f32 %v8692, %v8852
        %v8854 = vpop.f32.mrb[0].mxu0
        %8855 = vmatprep.mubr.bf16.mxu0 0
        %8856 = vmatmul.mubr.bf16.gmra.mrb[0].mxu0 %v6433
        %v8857 = vpop.f32.mrb[0].mxu0
        %v8858 = vadd.f32 %v8697, %v8857
        %v8859 = vpop.f32.mrb[0].mxu0
        %v8860 = vpop.f32.mrb[0].mxu0
        %v8861 = vadd.f32 %v8700, %v8860
        %v8862 = vpop.f32.mrb[0].mxu0
        %8863 = vmatprep.mubr.bf16.mxu0 0
        %8864 = vmatmul.mubr.bf16.gmra.mrb[0].mxu0 %v6474
        %v8865 = vpop.f32.mrb[0].mxu0
        %v8866 = vadd.f32 %v8705, %v8865
        %v8867 = vpop.f32.mrb[0].mxu0
        %v8868 = vpop.f32.mrb[0].mxu0
        %v8869 = vadd.f32 %v8708, %v8868
        %v8870 = vpop.f32.mrb[0].mxu0
        %8871 = vmatprep.mubr.bf16.mxu0 0
        %8872 = vmatmul.mubr.bf16.gmra.mrb[0].mxu0 %v6515
        %v8873 = vpop.f32.mrb[0].mxu0
        %v8874 = vadd.f32 %v8713, %v8873
        %v8875 = vpop.f32.mrb[0].mxu0
        %v8876 = vpop.f32.mrb[0].mxu0
        %v8877 = vadd.f32 %v8716, %v8876
        %v8878 = vpop.f32.mrb[0].mxu0
        %8879 = vmatprep.mubr.bf16.mxu0 0
        %8880 = vmatmul.mubr.bf16.gmra.mrb[0].mxu0 %v6556
        %v8881 = vpop.f32.mrb[0].mxu0
        %v8882 = vadd.f32 %v8721, %v8881
        %v8883 = vpop.f32.mrb[0].mxu0
        %v8884 = vpop.f32.mrb[0].mxu0
        %v8885 = vadd.f32 %v8724, %v8884
        %v8886 = vpop.f32.mrb[0].mxu0
        %8887 = vmatprep.mubr.bf16.mxu0 0
        %8888 = vmatmul.mubr.bf16.gmra.mrb[0].mxu0 %v6597
        %v8889 = vpop.f32.mrb[0].mxu0
        %v8890 = vadd.f32 %v8729, %v8889
        %v8891 = vpop.f32.mrb[0].mxu0
        %v8892 = vpop.f32.mrb[0].mxu0
        %v8893 = vadd.f32 %v8732, %v8892
        %v8894 = vpop.f32.mrb[0].mxu0
        %8895 = vmatprep.mubr.bf16.mxu0 0
        %8896 = vmatmul.mubr.bf16.gmra.mrb[0].mxu0 %v6638
        %v8897 = vpop.f32.mrb[0].mxu0
        %v8898 = vadd.f32 %v8737, %v8897
        %v8899 = vpop.f32.mrb[0].mxu0
        %v8900 = vpop.f32.mrb[0].mxu0
        %v8901 = vadd.f32 %v8740, %v8900
        %v8902 = vpop.f32.mrb[0].mxu0
        %8903 = vmatprep.mubr.bf16.mxu0 0
        %8904 = vmatmul.mubr.bf16.gmra.mrb[0].mxu0 %v6679
        %v8905 = vpop.f32.mrb[0].mxu0
        %v8906 = vadd.f32 %v8745, %v8905
        %v8907 = vpop.f32.mrb[0].mxu0
        %v8908 = vpop.f32.mrb[0].mxu0
        %v8909 = vadd.f32 %v8748, %v8908
        %v8910 = vpop.f32.mrb[0].mxu0
        %8911 = vmatprep.mubr.bf16.mxu0 0
        %8912 = vmatmul.mubr.bf16.gmra.mrb[0].mxu0 %v6720
        %v8913 = vpop.f32.mrb[0].mxu0
        %v8914 = vadd.f32 %v8753, %v8913
        %v8915 = vpop.f32.mrb[0].mxu0
        %v8916 = vpop.f32.mrb[0].mxu0
        %v8917 = vadd.f32 %v8756, %v8916
        %v8918 = vpop.f32.mrb[0].mxu0
        %8919 = vmatprep.mubr.bf16.mxu0 0
        %8920 = vmatmul.mubr.bf16.gmra.mrb[0].mxu0 %v6761
        %v8921 = vpop.f32.mrb[0].mxu0
        %v8922 = vadd.f32 %v8761, %v8921
        %v8923 = vpop.f32.mrb[0].mxu0
        %v8924 = vpop.f32.mrb[0].mxu0
        %v8925 = vadd.f32 %v8764, %v8924
        %v8926 = vpop.f32.mrb[0].mxu0
        %8927 = vmatprep.mubr.bf16.mxu0 0
        %8928 = vmatmul.mubr.bf16.gmra.mrb[0].mxu0 %v6802
        %v8929 = vpop.f32.mrb[0].mxu0
        %v8930 = vadd.f32 %v8769, %v8929
        %v8931 = vpop.f32.mrb[0].mxu0
        %v8932 = vpop.f32.mrb[0].mxu0
        %v8933 = vadd.f32 %v8772, %v8932
        %v8934 = vpop.f32.mrb[0].mxu0
        %8935 = vdwg.mxu0
        %s8936 = scalar_lea.vmem [#allocation2], 32
        %v8937 = vld [vmem:[%s8936] sm:$0xff]
        %v8938 = vld [vmem:[%s8936 + $0x8] sm:$0xff]
        %v8939 = vld [vmem:[%s8936 + $0x10] sm:$0xff]
        %v8940 = vld [vmem:[%s8936 + $0x18] sm:$0xff]
        %v8941 = vld [vmem:[%s8936 + $0x20] sm:$0xff]
        %v8942 = vld [vmem:[%s8936 + $0x28] sm:$0xff]
        %v8943 = vld [vmem:[%s8936 + $0x30] sm:$0xff]
        %v8944 = vld [vmem:[%s8936 + $0x38] sm:$0xff]
        %v8945 = vld [vmem:[%s8936 + $0x40] sm:$0xff]
        %v8946 = vld [vmem:[%s8936 + $0x48] sm:$0xff]
        %v8947 = vld [vmem:[%s8936 + $0x50] sm:$0xff]
        %v8948 = vld [vmem:[%s8936 + $0x58] sm:$0xff]
        %v8949 = vld [vmem:[%s8936 + $0x60] sm:$0xff]
        %v8950 = vld [vmem:[%s8936 + $0x68] sm:$0xff]
        %v8951 = vld [vmem:[%s8936 + $0x70] sm:$0xff]
        %v8952 = vld [vmem:[%s8936 + $0x78] sm:$0xff]
        %v8953 = vld [vmem:[%s8936 + $0x80] sm:$0xff]
        %v8954 = vld [vmem:[%s8936 + $0x88] sm:$0xff]
        %v8955 = vld [vmem:[%s8936 + $0x90] sm:$0xff]
        %v8956 = vld [vmem:[%s8936 + $0x98] sm:$0xff]
        %v8957 = vld [vmem:[%s8936 + $0xa0] sm:$0xff]
        %v8958 = vld [vmem:[%s8936 + $0xa8] sm:$0xff]
        %v8959 = vld [vmem:[%s8936 + $0xb0] sm:$0xff]
        %v8960 = vld [vmem:[%s8936 + $0xb8] sm:$0xff]
        %v8961 = vld [vmem:[%s8936 + $0xc0] sm:$0xff]
        %v8962 = vld [vmem:[%s8936 + $0xc8] sm:$0xff]
        %v8963 = vld [vmem:[%s8936 + $0xd0] sm:$0xff]
        %v8964 = vld [vmem:[%s8936 + $0xd8] sm:$0xff]
        %v8965 = vld [vmem:[%s8936 + $0xe0] sm:$0xff]
        %v8966 = vld [vmem:[%s8936 + $0xe8] sm:$0xff]
        %v8967 = vld [vmem:[%s8936 + $0xf0] sm:$0xff]
        %v8968 = vld [vmem:[%s8936 + $0xf8] sm:$0xff]
        %v8970 = vshrl.u32 %v8937, 16
        %v8972 = vshll.u32 %v8937, 16
        %v8974 = vrot.slane %v8972, 1
        %v8975 = vor.u32 %v8970, %v8974
        %v8977 = vshll.u32 %v8938, 16
        %v8979 = vrot.slane %v8977, 1
        %v8980 = vsel %vm5825, %v8975, %v8979
        %v8981 = vshrl.u32 %v8938, 16
        %v8983 = vor.u32 %v8981, %v8979
        %v8985 = vshrl.u32 %v8939, 16
        %v8987 = vshll.u32 %v8939, 16
        %v8989 = vrot.slane %v8987, 1
        %v8990 = vor.u32 %v8985, %v8989
        %v8992 = vshll.u32 %v8940, 16
        %v8994 = vrot.slane %v8992, 1
        %v8995 = vsel %vm5825, %v8990, %v8994
        %v8996 = vshrl.u32 %v8940, 16
        %v8998 = vor.u32 %v8996, %v8994
        %v9000 = vshrl.u32 %v8941, 16
        %v9002 = vshll.u32 %v8941, 16
        %v9004 = vrot.slane %v9002, 1
        %v9005 = vor.u32 %v9000, %v9004
        %v9007 = vshll.u32 %v8942, 16
        %v9009 = vrot.slane %v9007, 1
        %v9010 = vsel %vm5825, %v9005, %v9009
        %v9011 = vshrl.u32 %v8942, 16
        %v9013 = vor.u32 %v9011, %v9009
        %v9015 = vshrl.u32 %v8943, 16
        %v9017 = vshll.u32 %v8943, 16
        %v9019 = vrot.slane %v9017, 1
        %v9020 = vor.u32 %v9015, %v9019
        %v9022 = vshll.u32 %v8944, 16
        %v9024 = vrot.slane %v9022, 1
        %v9025 = vsel %vm5825, %v9020, %v9024
        %v9026 = vshrl.u32 %v8944, 16
        %v9028 = vor.u32 %v9026, %v9024
        %v9030 = vshrl.u32 %v8945, 16
        %v9032 = vshll.u32 %v8945, 16
        %v9034 = vrot.slane %v9032, 1
        %v9035 = vor.u32 %v9030, %v9034
        %v9037 = vshll.u32 %v8946, 16
        %v9039 = vrot.slane %v9037, 1
        %v9040 = vsel %vm5825, %v9035, %v9039
        %v9041 = vshrl.u32 %v8946, 16
        %v9043 = vor.u32 %v9041, %v9039
        %v9045 = vshrl.u32 %v8947, 16
        %v9047 = vshll.u32 %v8947, 16
        %v9049 = vrot.slane %v9047, 1
        %v9050 = vor.u32 %v9045, %v9049
        %v9052 = vshll.u32 %v8948, 16
        %v9054 = vrot.slane %v9052, 1
        %v9055 = vsel %vm5825, %v9050, %v9054
        %v9056 = vshrl.u32 %v8948, 16
        %v9058 = vor.u32 %v9056, %v9054
        %v9060 = vshrl.u32 %v8949, 16
        %v9062 = vshll.u32 %v8949, 16
        %v9064 = vrot.slane %v9062, 1
        %v9065 = vor.u32 %v9060, %v9064
        %v9067 = vshll.u32 %v8950, 16
        %v9069 = vrot.slane %v9067, 1
        %v9070 = vsel %vm5825, %v9065, %v9069
        %v9071 = vshrl.u32 %v8950, 16
        %v9073 = vor.u32 %v9071, %v9069
        %v9075 = vshrl.u32 %v8951, 16
        %v9077 = vshll.u32 %v8951, 16
        %v9079 = vrot.slane %v9077, 1
        %v9080 = vor.u32 %v9075, %v9079
        %v9082 = vshll.u32 %v8952, 16
        %v9084 = vrot.slane %v9082, 1
        %v9085 = vsel %vm5825, %v9080, %v9084
        %v9086 = vshrl.u32 %v8952, 16
        %v9088 = vor.u32 %v9086, %v9084
        %v9090 = vshrl.u32 %v8953, 16
        %v9092 = vshll.u32 %v8953, 16
        %v9094 = vrot.slane %v9092, 1
        %v9095 = vor.u32 %v9090, %v9094
        %v9097 = vshll.u32 %v8954, 16
        %v9099 = vrot.slane %v9097, 1
        %v9100 = vsel %vm5825, %v9095, %v9099
        %v9101 = vshrl.u32 %v8954, 16
        %v9103 = vor.u32 %v9101, %v9099
        %v9105 = vshrl.u32 %v8955, 16
        %v9107 = vshll.u32 %v8955, 16
        %v9109 = vrot.slane %v9107, 1
        %v9110 = vor.u32 %v9105, %v9109
        %v9112 = vshll.u32 %v8956, 16
        %v9114 = vrot.slane %v9112, 1
        %v9115 = vsel %vm5825, %v9110, %v9114
        %v9116 = vshrl.u32 %v8956, 16
        %v9118 = vor.u32 %v9116, %v9114
        %v9120 = vshrl.u32 %v8957, 16
        %v9122 = vshll.u32 %v8957, 16
        %v9124 = vrot.slane %v9122, 1
        %v9125 = vor.u32 %v9120, %v9124
        %v9127 = vshll.u32 %v8958, 16
        %v9129 = vrot.slane %v9127, 1
        %v9130 = vsel %vm5825, %v9125, %v9129
        %v9131 = vshrl.u32 %v8958, 16
        %v9133 = vor.u32 %v9131, %v9129
        %v9135 = vshrl.u32 %v8959, 16
        %v9137 = vshll.u32 %v8959, 16
        %v9139 = vrot.slane %v9137, 1
        %v9140 = vor.u32 %v9135, %v9139
        %v9142 = vshll.u32 %v8960, 16
        %v9144 = vrot.slane %v9142, 1
        %v9145 = vsel %vm5825, %v9140, %v9144
        %v9146 = vshrl.u32 %v8960, 16
        %v9148 = vor.u32 %v9146, %v9144
        %v9150 = vshrl.u32 %v8961, 16
        %v9152 = vshll.u32 %v8961, 16
        %v9154 = vrot.slane %v9152, 1
        %v9155 = vor.u32 %v9150, %v9154
        %v9157 = vshll.u32 %v8962, 16
        %v9159 = vrot.slane %v9157, 1
        %v9160 = vsel %vm5825, %v9155, %v9159
        %v9161 = vshrl.u32 %v8962, 16
        %v9163 = vor.u32 %v9161, %v9159
        %v9165 = vshrl.u32 %v8963, 16
        %v9167 = vshll.u32 %v8963, 16
        %v9169 = vrot.slane %v9167, 1
        %v9170 = vor.u32 %v9165, %v9169
        %v9172 = vshll.u32 %v8964, 16
        %v9174 = vrot.slane %v9172, 1
        %v9175 = vsel %vm5825, %v9170, %v9174
        %v9176 = vshrl.u32 %v8964, 16
        %v9178 = vor.u32 %v9176, %v9174
        %v9180 = vshrl.u32 %v8965, 16
        %v9182 = vshll.u32 %v8965, 16
        %v9184 = vrot.slane %v9182, 1
        %v9185 = vor.u32 %v9180, %v9184
        %v9187 = vshll.u32 %v8966, 16
        %v9189 = vrot.slane %v9187, 1
        %v9190 = vsel %vm5825, %v9185, %v9189
        %v9191 = vshrl.u32 %v8966, 16
        %v9193 = vor.u32 %v9191, %v9189
        %v9195 = vshrl.u32 %v8967, 16
        %v9197 = vshll.u32 %v8967, 16
        %v9199 = vrot.slane %v9197, 1
        %v9200 = vor.u32 %v9195, %v9199
        %v9202 = vshll.u32 %v8968, 16
        %v9204 = vrot.slane %v9202, 1
        %v9205 = vsel %vm5825, %v9200, %v9204
        %v9206 = vshrl.u32 %v8968, 16
        %v9208 = vor.u32 %v9206, %v9204
        %v9241 = vrot.slane %v8937, 1
        %v9242 = vrot.slane %v8938, 1
        %v9243 = vsel %vm6098, %v9241, %v9242
        %v9244 = vrot.slane %v8939, 1
        %v9245 = vrot.slane %v8940, 1
        %v9246 = vsel %vm6098, %v9244, %v9245
        %v9247 = vrot.slane %v8941, 1
        %v9248 = vrot.slane %v8942, 1
        %v9249 = vsel %vm6098, %v9247, %v9248
        %v9250 = vrot.slane %v8943, 1
        %v9251 = vrot.slane %v8944, 1
        %v9252 = vsel %vm6098, %v9250, %v9251
        %v9253 = vrot.slane %v8945, 1
        %v9254 = vrot.slane %v8946, 1
        %v9255 = vsel %vm6098, %v9253, %v9254
        %v9256 = vrot.slane %v8947, 1
        %v9257 = vrot.slane %v8948, 1
        %v9258 = vsel %vm6098, %v9256, %v9257
        %v9259 = vrot.slane %v8949, 1
        %v9260 = vrot.slane %v8950, 1
        %v9261 = vsel %vm6098, %v9259, %v9260
        %v9262 = vrot.slane %v8951, 1
        %v9263 = vrot.slane %v8952, 1
        %v9264 = vsel %vm6098, %v9262, %v9263
        %v9265 = vrot.slane %v8953, 1
        %v9266 = vrot.slane %v8954, 1
        %v9267 = vsel %vm6098, %v9265, %v9266
        %v9268 = vrot.slane %v8955, 1
        %v9269 = vrot.slane %v8956, 1
        %v9270 = vsel %vm6098, %v9268, %v9269
        %v9271 = vrot.slane %v8957, 1
        %v9272 = vrot.slane %v8958, 1
        %v9273 = vsel %vm6098, %v9271, %v9272
        %v9274 = vrot.slane %v8959, 1
        %v9275 = vrot.slane %v8960, 1
        %v9276 = vsel %vm6098, %v9274, %v9275
        %v9277 = vrot.slane %v8961, 1
        %v9278 = vrot.slane %v8962, 1
        %v9279 = vsel %vm6098, %v9277, %v9278
        %v9280 = vrot.slane %v8963, 1
        %v9281 = vrot.slane %v8964, 1
        %v9282 = vsel %vm6098, %v9280, %v9281
        %v9283 = vrot.slane %v8965, 1
        %v9284 = vrot.slane %v8966, 1
        %v9285 = vsel %vm6098, %v9283, %v9284
        %v9286 = vrot.slane %v8967, 1
        %v9287 = vrot.slane %v8968, 1
        %v9288 = vsel %vm6098, %v9286, %v9287
        %v9289 = vrot.slane %v8970, 3
        %v9290 = vrot.slane %v8972, 4
        %v9291 = vor.u32 %v9289, %v9290
        %v9292 = vrot.slane %v8981, 3
        %v9293 = vrot.slane %v8977, 4
        %v9294 = vor.u32 %v9292, %v9293
        %v9295 = vsel %vm856, %v9291, %v9294
        %v9297 = vshrl.u32 %v8980, 16
        %v9299 = vrot.slane %v9297, 3
        %v9300 = vshll.u32 %v8980, 16
        %v9302 = vrot.slane %v9300, 4
        %v9303 = vor.u32 %v9299, %v9302
        %v9305 = vshrl.u32 %v8983, 16
        %v9307 = vrot.slane %v9305, 3
        %v9308 = vshll.u32 %v8983, 16
        %v9310 = vrot.slane %v9308, 4
        %v9311 = vor.u32 %v9307, %v9310
        %v9312 = vsel %vm856, %v9303, %v9311
        %v9314 = vshrl.u32 %v9243, 16
        %v9316 = vrot.slane %v9314, 3
        %v9317 = vshll.u32 %v9243, 16
        %v9319 = vrot.slane %v9317, 4
        %v9320 = vor.u32 %v9316, %v9319
        %v9322 = vshrl.u32 %v9242, 16
        %v9324 = vrot.slane %v9322, 3
        %v9325 = vshll.u32 %v9242, 16
        %v9327 = vrot.slane %v9325, 4
        %v9328 = vor.u32 %v9324, %v9327
        %v9329 = vsel %vm856, %v9320, %v9328
        %v9330 = vrot.slane %v8985, 3
        %v9331 = vrot.slane %v8987, 4
        %v9332 = vor.u32 %v9330, %v9331
        %v9333 = vrot.slane %v8996, 3
        %v9334 = vrot.slane %v8992, 4
        %v9335 = vor.u32 %v9333, %v9334
        %v9336 = vsel %vm856, %v9332, %v9335
        %v9338 = vshrl.u32 %v8995, 16
        %v9340 = vrot.slane %v9338, 3
        %v9341 = vshll.u32 %v8995, 16
        %v9343 = vrot.slane %v9341, 4
        %v9344 = vor.u32 %v9340, %v9343
        %v9346 = vshrl.u32 %v8998, 16
        %v9348 = vrot.slane %v9346, 3
        %v9349 = vshll.u32 %v8998, 16
        %v9351 = vrot.slane %v9349, 4
        %v9352 = vor.u32 %v9348, %v9351
        %v9353 = vsel %vm856, %v9344, %v9352
        %v9355 = vshrl.u32 %v9246, 16
        %v9357 = vrot.slane %v9355, 3
        %v9358 = vshll.u32 %v9246, 16
        %v9360 = vrot.slane %v9358, 4
        %v9361 = vor.u32 %v9357, %v9360
        %v9363 = vshrl.u32 %v9245, 16
        %v9365 = vrot.slane %v9363, 3
        %v9366 = vshll.u32 %v9245, 16
        %v9368 = vrot.slane %v9366, 4
        %v9369 = vor.u32 %v9365, %v9368
        %v9370 = vsel %vm856, %v9361, %v9369
        %v9371 = vrot.slane %v9000, 3
        %v9372 = vrot.slane %v9002, 4
        %v9373 = vor.u32 %v9371, %v9372
        %v9374 = vrot.slane %v9011, 3
        %v9375 = vrot.slane %v9007, 4
        %v9376 = vor.u32 %v9374, %v9375
        %v9377 = vsel %vm856, %v9373, %v9376
        %v9379 = vshrl.u32 %v9010, 16
        %v9381 = vrot.slane %v9379, 3
        %v9382 = vshll.u32 %v9010, 16
        %v9384 = vrot.slane %v9382, 4
        %v9385 = vor.u32 %v9381, %v9384
        %v9387 = vshrl.u32 %v9013, 16
        %v9389 = vrot.slane %v9387, 3
        %v9390 = vshll.u32 %v9013, 16
        %v9392 = vrot.slane %v9390, 4
        %v9393 = vor.u32 %v9389, %v9392
        %v9394 = vsel %vm856, %v9385, %v9393
        %v9396 = vshrl.u32 %v9249, 16
        %v9398 = vrot.slane %v9396, 3
        %v9399 = vshll.u32 %v9249, 16
        %v9401 = vrot.slane %v9399, 4
        %v9402 = vor.u32 %v9398, %v9401
        %v9404 = vshrl.u32 %v9248, 16
        %v9406 = vrot.slane %v9404, 3
        %v9407 = vshll.u32 %v9248, 16
        %v9409 = vrot.slane %v9407, 4
        %v9410 = vor.u32 %v9406, %v9409
        %v9411 = vsel %vm856, %v9402, %v9410
        %v9412 = vrot.slane %v9015, 3
        %v9413 = vrot.slane %v9017, 4
        %v9414 = vor.u32 %v9412, %v9413
        %v9415 = vrot.slane %v9026, 3
        %v9416 = vrot.slane %v9022, 4
        %v9417 = vor.u32 %v9415, %v9416
        %v9418 = vsel %vm856, %v9414, %v9417
        %v9420 = vshrl.u32 %v9025, 16
        %v9422 = vrot.slane %v9420, 3
        %v9423 = vshll.u32 %v9025, 16
        %v9425 = vrot.slane %v9423, 4
        %v9426 = vor.u32 %v9422, %v9425
        %v9428 = vshrl.u32 %v9028, 16
        %v9430 = vrot.slane %v9428, 3
        %v9431 = vshll.u32 %v9028, 16
        %v9433 = vrot.slane %v9431, 4
        %v9434 = vor.u32 %v9430, %v9433
        %v9435 = vsel %vm856, %v9426, %v9434
        %v9437 = vshrl.u32 %v9252, 16
        %v9439 = vrot.slane %v9437, 3
        %v9440 = vshll.u32 %v9252, 16
        %v9442 = vrot.slane %v9440, 4
        %v9443 = vor.u32 %v9439, %v9442
        %v9445 = vshrl.u32 %v9251, 16
        %v9447 = vrot.slane %v9445, 3
        %v9448 = vshll.u32 %v9251, 16
        %v9450 = vrot.slane %v9448, 4
        %v9451 = vor.u32 %v9447, %v9450
        %v9452 = vsel %vm856, %v9443, %v9451
        %v9453 = vrot.slane %v9030, 3
        %v9454 = vrot.slane %v9032, 4
        %v9455 = vor.u32 %v9453, %v9454
        %v9456 = vrot.slane %v9041, 3
        %v9457 = vrot.slane %v9037, 4
        %v9458 = vor.u32 %v9456, %v9457
        %v9459 = vsel %vm856, %v9455, %v9458
        %v9461 = vshrl.u32 %v9040, 16
        %v9463 = vrot.slane %v9461, 3
        %v9464 = vshll.u32 %v9040, 16
        %v9466 = vrot.slane %v9464, 4
        %v9467 = vor.u32 %v9463, %v9466
        %v9469 = vshrl.u32 %v9043, 16
        %v9471 = vrot.slane %v9469, 3
        %v9472 = vshll.u32 %v9043, 16
        %v9474 = vrot.slane %v9472, 4
        %v9475 = vor.u32 %v9471, %v9474
        %v9476 = vsel %vm856, %v9467, %v9475
        %v9478 = vshrl.u32 %v9255, 16
        %v9480 = vrot.slane %v9478, 3
        %v9481 = vshll.u32 %v9255, 16
        %v9483 = vrot.slane %v9481, 4
        %v9484 = vor.u32 %v9480, %v9483
        %v9486 = vshrl.u32 %v9254, 16
        %v9488 = vrot.slane %v9486, 3
        %v9489 = vshll.u32 %v9254, 16
        %v9491 = vrot.slane %v9489, 4
        %v9492 = vor.u32 %v9488, %v9491
        %v9493 = vsel %vm856, %v9484, %v9492
        %v9494 = vrot.slane %v9045, 3
        %v9495 = vrot.slane %v9047, 4
        %v9496 = vor.u32 %v9494, %v9495
        %v9497 = vrot.slane %v9056, 3
        %v9498 = vrot.slane %v9052, 4
        %v9499 = vor.u32 %v9497, %v9498
        %v9500 = vsel %vm856, %v9496, %v9499
        %v9502 = vshrl.u32 %v9055, 16
        %v9504 = vrot.slane %v9502, 3
        %v9505 = vshll.u32 %v9055, 16
        %v9507 = vrot.slane %v9505, 4
        %v9508 = vor.u32 %v9504, %v9507
        %v9510 = vshrl.u32 %v9058, 16
        %v9512 = vrot.slane %v9510, 3
        %v9513 = vshll.u32 %v9058, 16
        %v9515 = vrot.slane %v9513, 4
        %v9516 = vor.u32 %v9512, %v9515
        %v9517 = vsel %vm856, %v9508, %v9516
        %v9519 = vshrl.u32 %v9258, 16
        %v9521 = vrot.slane %v9519, 3
        %v9522 = vshll.u32 %v9258, 16
        %v9524 = vrot.slane %v9522, 4
        %v9525 = vor.u32 %v9521, %v9524
        %v9527 = vshrl.u32 %v9257, 16
        %v9529 = vrot.slane %v9527, 3
        %v9530 = vshll.u32 %v9257, 16
        %v9532 = vrot.slane %v9530, 4
        %v9533 = vor.u32 %v9529, %v9532
        %v9534 = vsel %vm856, %v9525, %v9533
        %v9535 = vrot.slane %v9060, 3
        %v9536 = vrot.slane %v9062, 4
        %v9537 = vor.u32 %v9535, %v9536
        %v9538 = vrot.slane %v9071, 3
        %v9539 = vrot.slane %v9067, 4
        %v9540 = vor.u32 %v9538, %v9539
        %v9541 = vsel %vm856, %v9537, %v9540
        %v9543 = vshrl.u32 %v9070, 16
        %v9545 = vrot.slane %v9543, 3
        %v9546 = vshll.u32 %v9070, 16
        %v9548 = vrot.slane %v9546, 4
        %v9549 = vor.u32 %v9545, %v9548
        %v9551 = vshrl.u32 %v9073, 16
        %v9553 = vrot.slane %v9551, 3
        %v9554 = vshll.u32 %v9073, 16
        %v9556 = vrot.slane %v9554, 4
        %v9557 = vor.u32 %v9553, %v9556
        %v9558 = vsel %vm856, %v9549, %v9557
        %v9560 = vshrl.u32 %v9261, 16
        %v9562 = vrot.slane %v9560, 3
        %v9563 = vshll.u32 %v9261, 16
        %v9565 = vrot.slane %v9563, 4
        %v9566 = vor.u32 %v9562, %v9565
        %v9568 = vshrl.u32 %v9260, 16
        %v9570 = vrot.slane %v9568, 3
        %v9571 = vshll.u32 %v9260, 16
        %v9573 = vrot.slane %v9571, 4
        %v9574 = vor.u32 %v9570, %v9573
        %v9575 = vsel %vm856, %v9566, %v9574
        %v9576 = vrot.slane %v9075, 3
        %v9577 = vrot.slane %v9077, 4
        %v9578 = vor.u32 %v9576, %v9577
        %v9579 = vrot.slane %v9086, 3
        %v9580 = vrot.slane %v9082, 4
        %v9581 = vor.u32 %v9579, %v9580
        %v9582 = vsel %vm856, %v9578, %v9581
        %v9584 = vshrl.u32 %v9085, 16
        %v9586 = vrot.slane %v9584, 3
        %v9587 = vshll.u32 %v9085, 16
        %v9589 = vrot.slane %v9587, 4
        %v9590 = vor.u32 %v9586, %v9589
        %v9592 = vshrl.u32 %v9088, 16
        %v9594 = vrot.slane %v9592, 3
        %v9595 = vshll.u32 %v9088, 16
        %v9597 = vrot.slane %v9595, 4
        %v9598 = vor.u32 %v9594, %v9597
        %v9599 = vsel %vm856, %v9590, %v9598
        %v9601 = vshrl.u32 %v9264, 16
        %v9603 = vrot.slane %v9601, 3
        %v9604 = vshll.u32 %v9264, 16
        %v9606 = vrot.slane %v9604, 4
        %v9607 = vor.u32 %v9603, %v9606
        %v9609 = vshrl.u32 %v9263, 16
        %v9611 = vrot.slane %v9609, 3
        %v9612 = vshll.u32 %v9263, 16
        %v9614 = vrot.slane %v9612, 4
        %v9615 = vor.u32 %v9611, %v9614
        %v9616 = vsel %vm856, %v9607, %v9615
        %v9617 = vrot.slane %v9090, 3
        %v9618 = vrot.slane %v9092, 4
        %v9619 = vor.u32 %v9617, %v9618
        %v9620 = vrot.slane %v9101, 3
        %v9621 = vrot.slane %v9097, 4
        %v9622 = vor.u32 %v9620, %v9621
        %v9623 = vsel %vm856, %v9619, %v9622
        %v9625 = vshrl.u32 %v9100, 16
        %v9627 = vrot.slane %v9625, 3
        %v9628 = vshll.u32 %v9100, 16
        %v9630 = vrot.slane %v9628, 4
        %v9631 = vor.u32 %v9627, %v9630
        %v9633 = vshrl.u32 %v9103, 16
        %v9635 = vrot.slane %v9633, 3
        %v9636 = vshll.u32 %v9103, 16
        %v9638 = vrot.slane %v9636, 4
        %v9639 = vor.u32 %v9635, %v9638
        %v9640 = vsel %vm856, %v9631, %v9639
        %v9642 = vshrl.u32 %v9267, 16
        %v9644 = vrot.slane %v9642, 3
        %v9645 = vshll.u32 %v9267, 16
        %v9647 = vrot.slane %v9645, 4
        %v9648 = vor.u32 %v9644, %v9647
        %v9650 = vshrl.u32 %v9266, 16
        %v9652 = vrot.slane %v9650, 3
        %v9653 = vshll.u32 %v9266, 16
        %v9655 = vrot.slane %v9653, 4
        %v9656 = vor.u32 %v9652, %v9655
        %v9657 = vsel %vm856, %v9648, %v9656
        %v9658 = vrot.slane %v9105, 3
        %v9659 = vrot.slane %v9107, 4
        %v9660 = vor.u32 %v9658, %v9659
        %v9661 = vrot.slane %v9116, 3
        %v9662 = vrot.slane %v9112, 4
        %v9663 = vor.u32 %v9661, %v9662
        %v9664 = vsel %vm856, %v9660, %v9663
        %v9666 = vshrl.u32 %v9115, 16
        %v9668 = vrot.slane %v9666, 3
        %v9669 = vshll.u32 %v9115, 16
        %v9671 = vrot.slane %v9669, 4
        %v9672 = vor.u32 %v9668, %v9671
        %v9674 = vshrl.u32 %v9118, 16
        %v9676 = vrot.slane %v9674, 3
        %v9677 = vshll.u32 %v9118, 16
        %v9679 = vrot.slane %v9677, 4
        %v9680 = vor.u32 %v9676, %v9679
        %v9681 = vsel %vm856, %v9672, %v9680
        %v9683 = vshrl.u32 %v9270, 16
        %v9685 = vrot.slane %v9683, 3
        %v9686 = vshll.u32 %v9270, 16
        %v9688 = vrot.slane %v9686, 4
        %v9689 = vor.u32 %v9685, %v9688
        %v9691 = vshrl.u32 %v9269, 16
        %v9693 = vrot.slane %v9691, 3
        %v9694 = vshll.u32 %v9269, 16
        %v9696 = vrot.slane %v9694, 4
        %v9697 = vor.u32 %v9693, %v9696
        %v9698 = vsel %vm856, %v9689, %v9697
        %v9699 = vrot.slane %v9120, 3
        %v9700 = vrot.slane %v9122, 4
        %v9701 = vor.u32 %v9699, %v9700
        %v9702 = vrot.slane %v9131, 3
        %v9703 = vrot.slane %v9127, 4
        %v9704 = vor.u32 %v9702, %v9703
        %v9705 = vsel %vm856, %v9701, %v9704
        %v9707 = vshrl.u32 %v9130, 16
        %v9709 = vrot.slane %v9707, 3
        %v9710 = vshll.u32 %v9130, 16
        %v9712 = vrot.slane %v9710, 4
        %v9713 = vor.u32 %v9709, %v9712
        %v9715 = vshrl.u32 %v9133, 16
        %v9717 = vrot.slane %v9715, 3
        %v9718 = vshll.u32 %v9133, 16
        %v9720 = vrot.slane %v9718, 4
        %v9721 = vor.u32 %v9717, %v9720
        %v9722 = vsel %vm856, %v9713, %v9721
        %v9724 = vshrl.u32 %v9273, 16
        %v9726 = vrot.slane %v9724, 3
        %v9727 = vshll.u32 %v9273, 16
        %v9729 = vrot.slane %v9727, 4
        %v9730 = vor.u32 %v9726, %v9729
        %v9732 = vshrl.u32 %v9272, 16
        %v9734 = vrot.slane %v9732, 3
        %v9735 = vshll.u32 %v9272, 16
        %v9737 = vrot.slane %v9735, 4
        %v9738 = vor.u32 %v9734, %v9737
        %v9739 = vsel %vm856, %v9730, %v9738
        %v9740 = vrot.slane %v9135, 3
        %v9741 = vrot.slane %v9137, 4
        %v9742 = vor.u32 %v9740, %v9741
        %v9743 = vrot.slane %v9146, 3
        %v9744 = vrot.slane %v9142, 4
        %v9745 = vor.u32 %v9743, %v9744
        %v9746 = vsel %vm856, %v9742, %v9745
        %v9748 = vshrl.u32 %v9145, 16
        %v9750 = vrot.slane %v9748, 3
        %v9751 = vshll.u32 %v9145, 16
        %v9753 = vrot.slane %v9751, 4
        %v9754 = vor.u32 %v9750, %v9753
        %v9756 = vshrl.u32 %v9148, 16
        %v9758 = vrot.slane %v9756, 3
        %v9759 = vshll.u32 %v9148, 16
        %v9761 = vrot.slane %v9759, 4
        %v9762 = vor.u32 %v9758, %v9761
        %v9763 = vsel %vm856, %v9754, %v9762
        %v9765 = vshrl.u32 %v9276, 16
        %v9767 = vrot.slane %v9765, 3
        %v9768 = vshll.u32 %v9276, 16
        %v9770 = vrot.slane %v9768, 4
        %v9771 = vor.u32 %v9767, %v9770
        %v9773 = vshrl.u32 %v9275, 16
        %v9775 = vrot.slane %v9773, 3
        %v9776 = vshll.u32 %v9275, 16
        %v9778 = vrot.slane %v9776, 4
        %v9779 = vor.u32 %v9775, %v9778
        %v9780 = vsel %vm856, %v9771, %v9779
        %v9781 = vrot.slane %v9150, 3
        %v9782 = vrot.slane %v9152, 4
        %v9783 = vor.u32 %v9781, %v9782
        %v9784 = vrot.slane %v9161, 3
        %v9785 = vrot.slane %v9157, 4
        %v9786 = vor.u32 %v9784, %v9785
        %v9787 = vsel %vm856, %v9783, %v9786
        %v9789 = vshrl.u32 %v9160, 16
        %v9791 = vrot.slane %v9789, 3
        %v9792 = vshll.u32 %v9160, 16
        %v9794 = vrot.slane %v9792, 4
        %v9795 = vor.u32 %v9791, %v9794
        %v9797 = vshrl.u32 %v9163, 16
        %v9799 = vrot.slane %v9797, 3
        %v9800 = vshll.u32 %v9163, 16
        %v9802 = vrot.slane %v9800, 4
        %v9803 = vor.u32 %v9799, %v9802
        %v9804 = vsel %vm856, %v9795, %v9803
        %v9806 = vshrl.u32 %v9279, 16
        %v9808 = vrot.slane %v9806, 3
        %v9809 = vshll.u32 %v9279, 16
        %v9811 = vrot.slane %v9809, 4
        %v9812 = vor.u32 %v9808, %v9811
        %v9814 = vshrl.u32 %v9278, 16
        %v9816 = vrot.slane %v9814, 3
        %v9817 = vshll.u32 %v9278, 16
        %v9819 = vrot.slane %v9817, 4
        %v9820 = vor.u32 %v9816, %v9819
        %v9821 = vsel %vm856, %v9812, %v9820
        %v9822 = vrot.slane %v9165, 3
        %v9823 = vrot.slane %v9167, 4
        %v9824 = vor.u32 %v9822, %v9823
        %v9825 = vrot.slane %v9176, 3
        %v9826 = vrot.slane %v9172, 4
        %v9827 = vor.u32 %v9825, %v9826
        %v9828 = vsel %vm856, %v9824, %v9827
        %v9830 = vshrl.u32 %v9175, 16
        %v9832 = vrot.slane %v9830, 3
        %v9833 = vshll.u32 %v9175, 16
        %v9835 = vrot.slane %v9833, 4
        %v9836 = vor.u32 %v9832, %v9835
        %v9838 = vshrl.u32 %v9178, 16
        %v9840 = vrot.slane %v9838, 3
        %v9841 = vshll.u32 %v9178, 16
        %v9843 = vrot.slane %v9841, 4
        %v9844 = vor.u32 %v9840, %v9843
        %v9845 = vsel %vm856, %v9836, %v9844
        %v9847 = vshrl.u32 %v9282, 16
        %v9849 = vrot.slane %v9847, 3
        %v9850 = vshll.u32 %v9282, 16
        %v9852 = vrot.slane %v9850, 4
        %v9853 = vor.u32 %v9849, %v9852
        %v9855 = vshrl.u32 %v9281, 16
        %v9857 = vrot.slane %v9855, 3
        %v9858 = vshll.u32 %v9281, 16
        %v9860 = vrot.slane %v9858, 4
        %v9861 = vor.u32 %v9857, %v9860
        %v9862 = vsel %vm856, %v9853, %v9861
        %v9863 = vrot.slane %v9180, 3
        %v9864 = vrot.slane %v9182, 4
        %v9865 = vor.u32 %v9863, %v9864
        %v9866 = vrot.slane %v9191, 3
        %v9867 = vrot.slane %v9187, 4
        %v9868 = vor.u32 %v9866, %v9867
        %v9869 = vsel %vm856, %v9865, %v9868
        %v9871 = vshrl.u32 %v9190, 16
        %v9873 = vrot.slane %v9871, 3
        %v9874 = vshll.u32 %v9190, 16
        %v9876 = vrot.slane %v9874, 4
        %v9877 = vor.u32 %v9873, %v9876
        %v9879 = vshrl.u32 %v9193, 16
        %v9881 = vrot.slane %v9879, 3
        %v9882 = vshll.u32 %v9193, 16
        %v9884 = vrot.slane %v9882, 4
        %v9885 = vor.u32 %v9881, %v9884
        %v9886 = vsel %vm856, %v9877, %v9885
        %v9888 = vshrl.u32 %v9285, 16
        %v9890 = vrot.slane %v9888, 3
        %v9891 = vshll.u32 %v9285, 16
        %v9893 = vrot.slane %v9891, 4
        %v9894 = vor.u32 %v9890, %v9893
        %v9896 = vshrl.u32 %v9284, 16
        %v9898 = vrot.slane %v9896, 3
        %v9899 = vshll.u32 %v9284, 16
        %v9901 = vrot.slane %v9899, 4
        %v9902 = vor.u32 %v9898, %v9901
        %v9903 = vsel %vm856, %v9894, %v9902
        %v9904 = vrot.slane %v9195, 3
        %v9905 = vrot.slane %v9197, 4
        %v9906 = vor.u32 %v9904, %v9905
        %v9907 = vrot.slane %v9206, 3
        %v9908 = vrot.slane %v9202, 4
        %v9909 = vor.u32 %v9907, %v9908
        %v9910 = vsel %vm856, %v9906, %v9909
        %v9912 = vshrl.u32 %v9205, 16
        %v9914 = vrot.slane %v9912, 3
        %v9915 = vshll.u32 %v9205, 16
        %v9917 = vrot.slane %v9915, 4
        %v9918 = vor.u32 %v9914, %v9917
        %v9920 = vshrl.u32 %v9208, 16
        %v9922 = vrot.slane %v9920, 3
        %v9923 = vshll.u32 %v9208, 16
        %v9925 = vrot.slane %v9923, 4
        %v9926 = vor.u32 %v9922, %v9925
        %v9927 = vsel %vm856, %v9918, %v9926
        %v9929 = vshrl.u32 %v9288, 16
        %v9931 = vrot.slane %v9929, 3
        %v9932 = vshll.u32 %v9288, 16
        %v9934 = vrot.slane %v9932, 4
        %v9935 = vor.u32 %v9931, %v9934
        %v9937 = vshrl.u32 %v9287, 16
        %v9939 = vrot.slane %v9937, 3
        %v9940 = vshll.u32 %v9287, 16
        %v9942 = vrot.slane %v9940, 4
        %v9943 = vor.u32 %v9939, %v9942
        %v9944 = vsel %vm856, %v9935, %v9943
        %s9993 = scalar_lea.vmem [#allocation8], 384
        %v9994 = vld [vmem:[%s9993] sm:$0xf]
        %v9995 = vld [vmem:[%s9993 + $0x4] sm:$0xf]
        %v9996 = vld [vmem:[%s9993 + $0x8] sm:$0xf]
        %v9997 = vld [vmem:[%s9993 + $0xc] sm:$0xf]
        %v9998 = vld [vmem:[%s9993 + $0x10] sm:$0xf]
        %v9999 = vld [vmem:[%s9993 + $0x14] sm:$0xf]
        %v10000 = vld [vmem:[%s9993 + $0x18] sm:$0xf]
        %v10001 = vld [vmem:[%s9993 + $0x1c] sm:$0xf]
        %v10002 = vld [vmem:[%s9993 + $0x20] sm:$0xf]
        %v10003 = vld [vmem:[%s9993 + $0x24] sm:$0xf]
        %v10004 = vld [vmem:[%s9993 + $0x28] sm:$0xf]
        %v10005 = vld [vmem:[%s9993 + $0x2c] sm:$0xf]
        %v10006 = vld [vmem:[%s9993 + $0x30] sm:$0xf]
        %v10007 = vld [vmem:[%s9993 + $0x34] sm:$0xf]
        %v10008 = vld [vmem:[%s9993 + $0x38] sm:$0xf]
        %v10009 = vld [vmem:[%s9993 + $0x3c] sm:$0xf]
        %v10010 = vld [vmem:[%s9993 + $0x40] sm:$0xf]
        %v10011 = vld [vmem:[%s9993 + $0x44] sm:$0xf]
        %v10012 = vld [vmem:[%s9993 + $0x48] sm:$0xf]
        %v10013 = vld [vmem:[%s9993 + $0x4c] sm:$0xf]
        %v10014 = vld [vmem:[%s9993 + $0x50] sm:$0xf]
        %v10015 = vld [vmem:[%s9993 + $0x54] sm:$0xf]
        %v10016 = vld [vmem:[%s9993 + $0x58] sm:$0xf]
        %v10017 = vld [vmem:[%s9993 + $0x5c] sm:$0xf]
        %v10018 = vld [vmem:[%s9993 + $0x60] sm:$0xf]
        %v10019 = vld [vmem:[%s9993 + $0x64] sm:$0xf]
        %v10020 = vld [vmem:[%s9993 + $0x68] sm:$0xf]
        %v10021 = vld [vmem:[%s9993 + $0x6c] sm:$0xf]
        %v10022 = vld [vmem:[%s9993 + $0x70] sm:$0xf]
        %v10023 = vld [vmem:[%s9993 + $0x74] sm:$0xf]
        %v10024 = vld [vmem:[%s9993 + $0x78] sm:$0xf]
        %v10025 = vld [vmem:[%s9993 + $0x7c] sm:$0xf]
        %v10026 = vld [vmem:[%s9993 + $0x80] sm:$0xf]
        %v10027 = vld [vmem:[%s9993 + $0x84] sm:$0xf]
        %v10028 = vld [vmem:[%s9993 + $0x88] sm:$0xf]
        %v10029 = vld [vmem:[%s9993 + $0x8c] sm:$0xf]
        %v10030 = vld [vmem:[%s9993 + $0x90] sm:$0xf]
        %v10031 = vld [vmem:[%s9993 + $0x94] sm:$0xf]
        %v10032 = vld [vmem:[%s9993 + $0x98] sm:$0xf]
        %v10033 = vld [vmem:[%s9993 + $0x9c] sm:$0xf]
        %v10034 = vld [vmem:[%s9993 + $0xa0] sm:$0xf]
        %v10035 = vld [vmem:[%s9993 + $0xa4] sm:$0xf]
        %v10036 = vld [vmem:[%s9993 + $0xa8] sm:$0xf]
        %v10037 = vld [vmem:[%s9993 + $0xac] sm:$0xf]
        %v10038 = vld [vmem:[%s9993 + $0xb0] sm:$0xf]
        %v10039 = vld [vmem:[%s9993 + $0xb4] sm:$0xf]
        %v10040 = vld [vmem:[%s9993 + $0xb8] sm:$0xf]
        %v10041 = vld [vmem:[%s9993 + $0xbc] sm:$0xf]
        %v10090 = vunpack.c.l.b16 %v9994
        %v10091 = vunpack.c.l.b16 %v9995
        %v10092 = vunpack.c.l.b16 %v9996
        %v10093 = vunpack.c.l.b16 %v9997
        %v10094 = vunpack.c.l.b16 %v9998
        %v10095 = vunpack.c.l.b16 %v9999
        %v10096 = vunpack.c.l.b16 %v10000
        %v10097 = vunpack.c.l.b16 %v10001
        %v10098 = vunpack.c.l.b16 %v10002
        %v10099 = vunpack.c.l.b16 %v10003
        %v10100 = vunpack.c.l.b16 %v10004
        %v10101 = vunpack.c.l.b16 %v10005
        %v10102 = vunpack.c.l.b16 %v10006
        %v10103 = vunpack.c.l.b16 %v10007
        %v10104 = vunpack.c.l.b16 %v10008
        %v10105 = vunpack.c.l.b16 %v10009
        %v10106 = vunpack.c.l.b16 %v10010
        %v10107 = vunpack.c.l.b16 %v10011
        %v10108 = vunpack.c.l.b16 %v10012
        %v10109 = vunpack.c.l.b16 %v10013
        %v10110 = vunpack.c.l.b16 %v10014
        %v10111 = vunpack.c.l.b16 %v10015
        %v10112 = vunpack.c.l.b16 %v10016
        %v10113 = vunpack.c.l.b16 %v10017
        %v10114 = vunpack.c.l.b16 %v10018
        %v10115 = vunpack.c.l.b16 %v10019
        %v10116 = vunpack.c.l.b16 %v10020
        %v10117 = vunpack.c.l.b16 %v10021
        %v10118 = vunpack.c.l.b16 %v10022
        %v10119 = vunpack.c.l.b16 %v10023
        %v10120 = vunpack.c.l.b16 %v10024
        %v10121 = vunpack.c.l.b16 %v10025
        %v10122 = vunpack.c.l.b16 %v10026
        %v10123 = vunpack.c.l.b16 %v10027
        %v10124 = vunpack.c.l.b16 %v10028
        %v10125 = vunpack.c.l.b16 %v10029
        %v10126 = vunpack.c.l.b16 %v10030
        %v10127 = vunpack.c.l.b16 %v10031
        %v10128 = vunpack.c.l.b16 %v10032
        %v10129 = vunpack.c.l.b16 %v10033
        %v10130 = vunpack.c.l.b16 %v10034
        %v10131 = vunpack.c.l.b16 %v10035
        %v10132 = vunpack.c.l.b16 %v10036
        %v10133 = vunpack.c.l.b16 %v10037
        %v10134 = vunpack.c.l.b16 %v10038
        %v10135 = vunpack.c.l.b16 %v10039
        %v10136 = vunpack.c.l.b16 %v10040
        %v10137 = vunpack.c.l.b16 %v10041
        %v10138 = vpack.c.b16 %v10091, %v10090
        %v10139 = vpack.c.b16 %v10093, %v10092
        %v10140 = vpack.c.b16 %v10095, %v10094
        %v10141 = vpack.c.b16 %v10097, %v10096
        %v10142 = vpack.c.b16 %v10099, %v10098
        %v10143 = vpack.c.b16 %v10101, %v10100
        %v10144 = vpack.c.b16 %v10103, %v10102
        %v10145 = vpack.c.b16 %v10105, %v10104
        %v10146 = vpack.c.b16 %v10107, %v10106
        %v10147 = vpack.c.b16 %v10109, %v10108
        %v10148 = vpack.c.b16 %v10111, %v10110
        %v10149 = vpack.c.b16 %v10113, %v10112
        %v10150 = vpack.c.b16 %v10115, %v10114
        %v10151 = vpack.c.b16 %v10117, %v10116
        %v10152 = vpack.c.b16 %v10119, %v10118
        %v10153 = vpack.c.b16 %v10121, %v10120
        %v10154 = vpack.c.b16 %v10123, %v10122
        %v10155 = vpack.c.b16 %v10125, %v10124
        %v10156 = vpack.c.b16 %v10127, %v10126
        %v10157 = vpack.c.b16 %v10129, %v10128
        %v10158 = vpack.c.b16 %v10131, %v10130
        %v10159 = vpack.c.b16 %v10133, %v10132
        %v10160 = vpack.c.b16 %v10135, %v10134
        %v10161 = vpack.c.b16 %v10137, %v10136
        %10186 = vmatprep.subr.bf16.mxu0 0
        %10187 = vmatpush1.bf16.msra.mxu0 %v10138
        %10188 = vmatprep.subr.bf16.mxu0 0
        %10189 = vmatpush1.bf16.msra.mxu0 %v10139
        %10190 = vmatprep.subr.bf16.mxu0 0
        %10191 = vmatpush1.bf16.msra.mxu0 %v10140
        %10192 = vmatprep.subr.bf16.mxu0 0
        %10193 = vmatpush1.bf16.msra.mxu0 %v10141
        %10194 = vmatprep.subr.bf16.mxu0 0
        %10195 = vmatpush1.bf16.msra.mxu0 %v10142
        %10196 = vmatprep.subr.bf16.mxu0 0
        %10197 = vmatpush1.bf16.msra.mxu0 %v10143
        %10198 = vmatprep.subr.bf16.mxu0 0
        %10199 = vmatpush1.bf16.msra.mxu0 %v10144
        %10200 = vmatprep.subr.bf16.mxu0 0
        %10201 = vmatpush1.bf16.msra.mxu0 %v10145
        %10202 = vmatprep.subr.bf16.mxu0 0
        %10203 = vmatpush1.bf16.msra.mxu0 %v10146
        %10204 = vmatprep.subr.bf16.mxu0 0
        %10205 = vmatpush1.bf16.msra.mxu0 %v10147
        %10206 = vmatprep.subr.bf16.mxu0 0
        %10207 = vmatpush1.bf16.msra.mxu0 %v10148
        %10208 = vmatprep.subr.bf16.mxu0 0
        %10209 = vmatpush1.bf16.msra.mxu0 %v10149
        %10210 = vmatprep.subr.bf16.mxu0 0
        %10211 = vmatpush1.bf16.msra.mxu0 %v10150
        %10212 = vmatprep.subr.bf16.mxu0 0
        %10213 = vmatpush1.bf16.msra.mxu0 %v10151
        %10214 = vmatprep.subr.bf16.mxu0 0
        %10215 = vmatpush1.bf16.msra.mxu0 %v10152
        %10216 = vmatprep.subr.bf16.mxu0 0
        %10217 = vmatpush1.bf16.msra.mxu0 %v10153
        %10218 = vmatprep.mubr.bf16.mxu0 %v9312
        %10219 = vmatmul.mubr.bf16.gmra.mrb[0].mxu0 %v9295
        %v10220 = vpop.f32.mrb[0].mxu0
        %v10221 = vadd.f32 0.0, %v10220
        %v10222 = vpop.f32.mrb[0].mxu0
        %v10223 = vpop.f32.mrb[0].mxu0
        %v10224 = vadd.f32 0.0, %v10223
        %v10225 = vpop.f32.mrb[0].mxu0
        %10226 = vmatprep.mubr.bf16.mxu0 %v9353
        %10227 = vmatmul.mubr.bf16.gmra.mrb[0].mxu0 %v9336
        %v10228 = vpop.f32.mrb[0].mxu0
        %v10229 = vadd.f32 0.0, %v10228
        %v10230 = vpop.f32.mrb[0].mxu0
        %v10231 = vpop.f32.mrb[0].mxu0
        %v10232 = vadd.f32 0.0, %v10231
        %v10233 = vpop.f32.mrb[0].mxu0
        %10234 = vmatprep.mubr.bf16.mxu0 %v9394
        %10235 = vmatmul.mubr.bf16.gmra.mrb[0].mxu0 %v9377
        %v10236 = vpop.f32.mrb[0].mxu0
        %v10237 = vadd.f32 0.0, %v10236
        %v10238 = vpop.f32.mrb[0].mxu0
        %v10239 = vpop.f32.mrb[0].mxu0
        %v10240 = vadd.f32 0.0, %v10239
        %v10241 = vpop.f32.mrb[0].mxu0
        %10242 = vmatprep.mubr.bf16.mxu0 %v9435
        %10243 = vmatmul.mubr.bf16.gmra.mrb[0].mxu0 %v9418
        %v10244 = vpop.f32.mrb[0].mxu0
        %v10245 = vadd.f32 0.0, %v10244
        %v10246 = vpop.f32.mrb[0].mxu0
        %v10247 = vpop.f32.mrb[0].mxu0
        %v10248 = vadd.f32 0.0, %v10247
        %v10249 = vpop.f32.mrb[0].mxu0
        %10250 = vmatprep.mubr.bf16.mxu0 %v9476
        %10251 = vmatmul.mubr.bf16.gmra.mrb[0].mxu0 %v9459
        %v10252 = vpop.f32.mrb[0].mxu0
        %v10253 = vadd.f32 0.0, %v10252
        %v10254 = vpop.f32.mrb[0].mxu0
        %v10255 = vpop.f32.mrb[0].mxu0
        %v10256 = vadd.f32 0.0, %v10255
        %v10257 = vpop.f32.mrb[0].mxu0
        %10258 = vmatprep.mubr.bf16.mxu0 %v9517
        %10259 = vmatmul.mubr.bf16.gmra.mrb[0].mxu0 %v9500
        %v10260 = vpop.f32.mrb[0].mxu0
        %v10261 = vadd.f32 0.0, %v10260
        %v10262 = vpop.f32.mrb[0].mxu0
        %v10263 = vpop.f32.mrb[0].mxu0
        %v10264 = vadd.f32 0.0, %v10263
        %v10265 = vpop.f32.mrb[0].mxu0
        %10266 = vmatprep.mubr.bf16.mxu0 %v9558
        %10267 = vmatmul.mubr.bf16.gmra.mrb[0].mxu0 %v9541
        %v10268 = vpop.f32.mrb[0].mxu0
        %v10269 = vadd.f32 0.0, %v10268
        %v10270 = vpop.f32.mrb[0].mxu0
        %v10271 = vpop.f32.mrb[0].mxu0
        %v10272 = vadd.f32 0.0, %v10271
        %v10273 = vpop.f32.mrb[0].mxu0
        %10274 = vmatprep.mubr.bf16.mxu0 %v9599
        %10275 = vmatmul.mubr.bf16.gmra.mrb[0].mxu0 %v9582
        %v10276 = vpop.f32.mrb[0].mxu0
        %v10277 = vadd.f32 0.0, %v10276
        %v10278 = vpop.f32.mrb[0].mxu0
        %v10279 = vpop.f32.mrb[0].mxu0
        %v10280 = vadd.f32 0.0, %v10279
        %v10281 = vpop.f32.mrb[0].mxu0
        %10282 = vmatprep.mubr.bf16.mxu0 %v9640
        %10283 = vmatmul.mubr.bf16.gmra.mrb[0].mxu0 %v9623
        %v10284 = vpop.f32.mrb[0].mxu0
        %v10285 = vadd.f32 0.0, %v10284
        %v10286 = vpop.f32.mrb[0].mxu0
        %v10287 = vpop.f32.mrb[0].mxu0
        %v10288 = vadd.f32 0.0, %v10287
        %v10289 = vpop.f32.mrb[0].mxu0
        %10290 = vmatprep.mubr.bf16.mxu0 %v9681
        %10291 = vmatmul.mubr.bf16.gmra.mrb[0].mxu0 %v9664
        %v10292 = vpop.f32.mrb[0].mxu0
        %v10293 = vadd.f32 0.0, %v10292
        %v10294 = vpop.f32.mrb[0].mxu0
        %v10295 = vpop.f32.mrb[0].mxu0
        %v10296 = vadd.f32 0.0, %v10295
        %v10297 = vpop.f32.mrb[0].mxu0
        %10298 = vmatprep.mubr.bf16.mxu0 %v9722
        %10299 = vmatmul.mubr.bf16.gmra.mrb[0].mxu0 %v9705
        %v10300 = vpop.f32.mrb[0].mxu0
        %v10301 = vadd.f32 0.0, %v10300
        %v10302 = vpop.f32.mrb[0].mxu0
        %v10303 = vpop.f32.mrb[0].mxu0
        %v10304 = vadd.f32 0.0, %v10303
        %v10305 = vpop.f32.mrb[0].mxu0
        %10306 = vmatprep.mubr.bf16.mxu0 %v9763
        %10307 = vmatmul.mubr.bf16.gmra.mrb[0].mxu0 %v9746
        %v10308 = vpop.f32.mrb[0].mxu0
        %v10309 = vadd.f32 0.0, %v10308
        %v10310 = vpop.f32.mrb[0].mxu0
        %v10311 = vpop.f32.mrb[0].mxu0
        %v10312 = vadd.f32 0.0, %v10311
        %v10313 = vpop.f32.mrb[0].mxu0
        %10314 = vmatprep.mubr.bf16.mxu0 %v9804
        %10315 = vmatmul.mubr.bf16.gmra.mrb[0].mxu0 %v9787
        %v10316 = vpop.f32.mrb[0].mxu0
        %v10317 = vadd.f32 0.0, %v10316
        %v10318 = vpop.f32.mrb[0].mxu0
        %v10319 = vpop.f32.mrb[0].mxu0
        %v10320 = vadd.f32 0.0, %v10319
        %v10321 = vpop.f32.mrb[0].mxu0
        %10322 = vmatprep.mubr.bf16.mxu0 %v9845
        %10323 = vmatmul.mubr.bf16.gmra.mrb[0].mxu0 %v9828
        %v10324 = vpop.f32.mrb[0].mxu0
        %v10325 = vadd.f32 0.0, %v10324
        %v10326 = vpop.f32.mrb[0].mxu0
        %v10327 = vpop.f32.mrb[0].mxu0
        %v10328 = vadd.f32 0.0, %v10327
        %v10329 = vpop.f32.mrb[0].mxu0
        %10330 = vmatprep.mubr.bf16.mxu0 %v9886
        %10331 = vmatmul.mubr.bf16.gmra.mrb[0].mxu0 %v9869
        %v10332 = vpop.f32.mrb[0].mxu0
        %v10333 = vadd.f32 0.0, %v10332
        %v10334 = vpop.f32.mrb[0].mxu0
        %v10335 = vpop.f32.mrb[0].mxu0
        %v10336 = vadd.f32 0.0, %v10335
        %v10337 = vpop.f32.mrb[0].mxu0
        %10338 = vmatprep.mubr.bf16.mxu0 %v9927
        %10339 = vmatmul.mubr.bf16.gmra.mrb[0].mxu0 %v9910
        %v10340 = vpop.f32.mrb[0].mxu0
        %v10341 = vadd.f32 0.0, %v10340
        %v10342 = vpop.f32.mrb[0].mxu0
        %v10343 = vpop.f32.mrb[0].mxu0
        %v10344 = vadd.f32 0.0, %v10343
        %v10345 = vpop.f32.mrb[0].mxu0
        %10346 = vdwg.mxu0
        %10347 = vmatprep.subr.bf16.mxu0 0
        %10348 = vmatpush1.bf16.msra.mxu0 %v10154
        %10349 = vmatprep.subr.bf16.mxu0 0
        %10350 = vmatpush1.bf16.msra.mxu0 %v10155
        %10351 = vmatprep.subr.bf16.mxu0 0
        %10352 = vmatpush1.bf16.msra.mxu0 %v10156
        %10353 = vmatprep.subr.bf16.mxu0 0
        %10354 = vmatpush1.bf16.msra.mxu0 %v10157
        %10355 = vmatprep.subr.bf16.mxu0 0
        %10356 = vmatpush1.bf16.msra.mxu0 %v10158
        %10357 = vmatprep.subr.bf16.mxu0 0
        %10358 = vmatpush1.bf16.msra.mxu0 %v10159
        %10359 = vmatprep.subr.bf16.mxu0 0
        %10360 = vmatpush1.bf16.msra.mxu0 %v10160
        %10361 = vmatprep.subr.bf16.mxu0 0
        %10362 = vmatpush1.bf16.msra.mxu0 %v10161
        %10363 = vmatprep.subr.bf16.mxu0 0
        %10364 = vmatpush1.bf16.msra.mxu0 0
        %10365 = vmatprep.subr.bf16.mxu0 0
        %10366 = vmatpush1.bf16.msra.mxu0 0
        %10367 = vmatprep.subr.bf16.mxu0 0
        %10368 = vmatpush1.bf16.msra.mxu0 0
        %10369 = vmatprep.subr.bf16.mxu0 0
        %10370 = vmatpush1.bf16.msra.mxu0 0
        %10371 = vmatprep.subr.bf16.mxu0 0
        %10372 = vmatpush1.bf16.msra.mxu0 0
        %10373 = vmatprep.subr.bf16.mxu0 0
        %10374 = vmatpush1.bf16.msra.mxu0 0
        %10375 = vmatprep.subr.bf16.mxu0 0
        %10376 = vmatpush1.bf16.msra.mxu0 0
        %10377 = vmatprep.subr.bf16.mxu0 0
        %10378 = vmatpush1.bf16.msra.mxu0 0
        %10379 = vmatprep.mubr.bf16.mxu0 0
        %10380 = vmatmul.mubr.bf16.gmra.mrb[0].mxu0 %v9329
        %v10381 = vpop.f32.mrb[0].mxu0
        %v10382 = vadd.f32 %v10221, %v10381
        %v10383 = vpop.f32.mrb[0].mxu0
        %v10384 = vpop.f32.mrb[0].mxu0
        %v10385 = vadd.f32 %v10224, %v10384
        %v10386 = vpop.f32.mrb[0].mxu0
        %10387 = vmatprep.mubr.bf16.mxu0 0
        %10388 = vmatmul.mubr.bf16.gmra.mrb[0].mxu0 %v9370
        %v10389 = vpop.f32.mrb[0].mxu0
        %v10390 = vadd.f32 %v10229, %v10389
        %v10391 = vpop.f32.mrb[0].mxu0
        %v10392 = vpop.f32.mrb[0].mxu0
        %v10393 = vadd.f32 %v10232, %v10392
        %v10394 = vpop.f32.mrb[0].mxu0
        %10395 = vmatprep.mubr.bf16.mxu0 0
        %10396 = vmatmul.mubr.bf16.gmra.mrb[0].mxu0 %v9411
        %v10397 = vpop.f32.mrb[0].mxu0
        %v10398 = vadd.f32 %v10237, %v10397
        %v10399 = vpop.f32.mrb[0].mxu0
        %v10400 = vpop.f32.mrb[0].mxu0
        %v10401 = vadd.f32 %v10240, %v10400
        %v10402 = vpop.f32.mrb[0].mxu0
        %10403 = vmatprep.mubr.bf16.mxu0 0
        %10404 = vmatmul.mubr.bf16.gmra.mrb[0].mxu0 %v9452
        %v10405 = vpop.f32.mrb[0].mxu0
        %v10406 = vadd.f32 %v10245, %v10405
        %v10407 = vpop.f32.mrb[0].mxu0
        %v10408 = vpop.f32.mrb[0].mxu0
        %v10409 = vadd.f32 %v10248, %v10408
        %v10410 = vpop.f32.mrb[0].mxu0
        %10411 = vmatprep.mubr.bf16.mxu0 0
        %10412 = vmatmul.mubr.bf16.gmra.mrb[0].mxu0 %v9493
        %v10413 = vpop.f32.mrb[0].mxu0
        %v10414 = vadd.f32 %v10253, %v10413
        %v10415 = vpop.f32.mrb[0].mxu0
        %v10416 = vpop.f32.mrb[0].mxu0
        %v10417 = vadd.f32 %v10256, %v10416
        %v10418 = vpop.f32.mrb[0].mxu0
        %10419 = vmatprep.mubr.bf16.mxu0 0
        %10420 = vmatmul.mubr.bf16.gmra.mrb[0].mxu0 %v9534
        %v10421 = vpop.f32.mrb[0].mxu0
        %v10422 = vadd.f32 %v10261, %v10421
        %v10423 = vpop.f32.mrb[0].mxu0
        %v10424 = vpop.f32.mrb[0].mxu0
        %v10425 = vadd.f32 %v10264, %v10424
        %v10426 = vpop.f32.mrb[0].mxu0
        %10427 = vmatprep.mubr.bf16.mxu0 0
        %10428 = vmatmul.mubr.bf16.gmra.mrb[0].mxu0 %v9575
        %v10429 = vpop.f32.mrb[0].mxu0
        %v10430 = vadd.f32 %v10269, %v10429
        %v10431 = vpop.f32.mrb[0].mxu0
        %v10432 = vpop.f32.mrb[0].mxu0
        %v10433 = vadd.f32 %v10272, %v10432
        %v10434 = vpop.f32.mrb[0].mxu0
        %10435 = vmatprep.mubr.bf16.mxu0 0
        %10436 = vmatmul.mubr.bf16.gmra.mrb[0].mxu0 %v9616
        %v10437 = vpop.f32.mrb[0].mxu0
        %v10438 = vadd.f32 %v10277, %v10437
        %v10439 = vpop.f32.mrb[0].mxu0
        %v10440 = vpop.f32.mrb[0].mxu0
        %v10441 = vadd.f32 %v10280, %v10440
        %v10442 = vpop.f32.mrb[0].mxu0
        %10443 = vmatprep.mubr.bf16.mxu0 0
        %10444 = vmatmul.mubr.bf16.gmra.mrb[0].mxu0 %v9657
        %v10445 = vpop.f32.mrb[0].mxu0
        %v10446 = vadd.f32 %v10285, %v10445
        %v10447 = vpop.f32.mrb[0].mxu0
        %v10448 = vpop.f32.mrb[0].mxu0
        %v10449 = vadd.f32 %v10288, %v10448
        %v10450 = vpop.f32.mrb[0].mxu0
        %10451 = vmatprep.mubr.bf16.mxu0 0
        %10452 = vmatmul.mubr.bf16.gmra.mrb[0].mxu0 %v9698
        %v10453 = vpop.f32.mrb[0].mxu0
        %v10454 = vadd.f32 %v10293, %v10453
        %v10455 = vpop.f32.mrb[0].mxu0
        %v10456 = vpop.f32.mrb[0].mxu0
        %v10457 = vadd.f32 %v10296, %v10456
        %v10458 = vpop.f32.mrb[0].mxu0
        %10459 = vmatprep.mubr.bf16.mxu0 0
        %10460 = vmatmul.mubr.bf16.gmra.mrb[0].mxu0 %v9739
        %v10461 = vpop.f32.mrb[0].mxu0
        %v10462 = vadd.f32 %v10301, %v10461
        %v10463 = vpop.f32.mrb[0].mxu0
        %v10464 = vpop.f32.mrb[0].mxu0
        %v10465 = vadd.f32 %v10304, %v10464
        %v10466 = vpop.f32.mrb[0].mxu0
        %10467 = vmatprep.mubr.bf16.mxu0 0
        %10468 = vmatmul.mubr.bf16.gmra.mrb[0].mxu0 %v9780
        %v10469 = vpop.f32.mrb[0].mxu0
        %v10470 = vadd.f32 %v10309, %v10469
        %v10471 = vpop.f32.mrb[0].mxu0
        %v10472 = vpop.f32.mrb[0].mxu0
        %v10473 = vadd.f32 %v10312, %v10472
        %v10474 = vpop.f32.mrb[0].mxu0
        %10475 = vmatprep.mubr.bf16.mxu0 0
        %10476 = vmatmul.mubr.bf16.gmra.mrb[0].mxu0 %v9821
        %v10477 = vpop.f32.mrb[0].mxu0
        %v10478 = vadd.f32 %v10317, %v10477
        %v10479 = vpop.f32.mrb[0].mxu0
        %v10480 = vpop.f32.mrb[0].mxu0
        %v10481 = vadd.f32 %v10320, %v10480
        %v10482 = vpop.f32.mrb[0].mxu0
        %10483 = vmatprep.mubr.bf16.mxu0 0
        %10484 = vmatmul.mubr.bf16.gmra.mrb[0].mxu0 %v9862
        %v10485 = vpop.f32.mrb[0].mxu0
        %v10486 = vadd.f32 %v10325, %v10485
        %v10487 = vpop.f32.mrb[0].mxu0
        %v10488 = vpop.f32.mrb[0].mxu0
        %v10489 = vadd.f32 %v10328, %v10488
        %v10490 = vpop.f32.mrb[0].mxu0
        %10491 = vmatprep.mubr.bf16.mxu0 0
        %10492 = vmatmul.mubr.bf16.gmra.mrb[0].mxu0 %v9903
        %v10493 = vpop.f32.mrb[0].mxu0
        %v10494 = vadd.f32 %v10333, %v10493
        %v10495 = vpop.f32.mrb[0].mxu0
        %v10496 = vpop.f32.mrb[0].mxu0
        %v10497 = vadd.f32 %v10336, %v10496
        %v10498 = vpop.f32.mrb[0].mxu0
        %10499 = vmatprep.mubr.bf16.mxu0 0
        %10500 = vmatmul.mubr.bf16.gmra.mrb[0].mxu0 %v9944
        %v10501 = vpop.f32.mrb[0].mxu0
        %v10502 = vadd.f32 %v10341, %v10501
        %v10503 = vpop.f32.mrb[0].mxu0
        %v10504 = vpop.f32.mrb[0].mxu0
        %v10505 = vadd.f32 %v10344, %v10504
        %v10506 = vpop.f32.mrb[0].mxu0
        %10507 = vdwg.mxu0
        %v10508 = vadd.f32 %v8810, %v10382
        %v10509 = vadd.f32 %v8813, %v10385
        %v10510 = vadd.f32 %v8818, %v10390
        %v10511 = vadd.f32 %v8821, %v10393
        %v10512 = vadd.f32 %v8826, %v10398
        %v10513 = vadd.f32 %v8829, %v10401
        %v10514 = vadd.f32 %v8834, %v10406
        %v10515 = vadd.f32 %v8837, %v10409
        %v10516 = vadd.f32 %v8842, %v10414
        %v10517 = vadd.f32 %v8845, %v10417
        %v10518 = vadd.f32 %v8850, %v10422
        %v10519 = vadd.f32 %v8853, %v10425
        %v10520 = vadd.f32 %v8858, %v10430
        %v10521 = vadd.f32 %v8861, %v10433
        %v10522 = vadd.f32 %v8866, %v10438
        %v10523 = vadd.f32 %v8869, %v10441
        %v10524 = vadd.f32 %v8874, %v10446
        %v10525 = vadd.f32 %v8877, %v10449
        %v10526 = vadd.f32 %v8882, %v10454
        %v10527 = vadd.f32 %v8885, %v10457
        %v10528 = vadd.f32 %v8890, %v10462
        %v10529 = vadd.f32 %v8893, %v10465
        %v10530 = vadd.f32 %v8898, %v10470
        %v10531 = vadd.f32 %v8901, %v10473
        %v10532 = vadd.f32 %v8906, %v10478
        %v10533 = vadd.f32 %v8909, %v10481
        %v10534 = vadd.f32 %v8914, %v10486
        %v10535 = vadd.f32 %v8917, %v10489
        %v10536 = vadd.f32 %v8922, %v10494
        %v10537 = vadd.f32 %v8925, %v10497
        %v10538 = vadd.f32 %v8930, %v10502
        %v10539 = vadd.f32 %v8933, %v10505
        %v10540 = vld [vmem:[%s5] sm:$0x1]
        %v10542 = vlaneseq
        %v10543 = vshrl.u32 %v10542, 7
        %v10544 = vsub.s32 0, %v10543
        %v10545 = vrot.slane %v10540, %v10544
        %v10547 = vmul.f32 %v10508, %v10545
        %v10548 = vmul.f32 %v10509, %v10545
        %v10549 = vmul.f32 %v10510, %v10545
        %v10550 = vmul.f32 %v10511, %v10545
        %v10551 = vmul.f32 %v10512, %v10545
        %v10552 = vmul.f32 %v10513, %v10545
        %v10553 = vmul.f32 %v10514, %v10545
        %v10554 = vmul.f32 %v10515, %v10545
        %v10555 = vmul.f32 %v10516, %v10545
        %v10556 = vmul.f32 %v10517, %v10545
        %v10557 = vmul.f32 %v10518, %v10545
        %v10558 = vmul.f32 %v10519, %v10545
        %v10559 = vmul.f32 %v10520, %v10545
        %v10560 = vmul.f32 %v10521, %v10545
        %v10561 = vmul.f32 %v10522, %v10545
        %v10562 = vmul.f32 %v10523, %v10545
        %v10563 = vmul.f32 %v10524, %v10545
        %v10564 = vmul.f32 %v10525, %v10545
        %v10565 = vmul.f32 %v10526, %v10545
        %v10566 = vmul.f32 %v10527, %v10545
        %v10567 = vmul.f32 %v10528, %v10545
        %v10568 = vmul.f32 %v10529, %v10545
        %v10569 = vmul.f32 %v10530, %v10545
        %v10570 = vmul.f32 %v10531, %v10545
        %v10571 = vmul.f32 %v10532, %v10545
        %v10572 = vmul.f32 %v10533, %v10545
        %v10573 = vmul.f32 %v10534, %v10545
        %v10574 = vmul.f32 %v10535, %v10545
        %v10575 = vmul.f32 %v10536, %v10545
        %v10576 = vmul.f32 %v10537, %v10545
        %v10577 = vmul.f32 %v10538, %v10545
        %v10578 = vmul.f32 %v10539, %v10545
        %v10579 = vld [vmem:[%s6] sm:$0x1]
        %v10581 = vlaneseq
        %v10582 = vshrl.u32 %v10581, 7
        %v10583 = vsub.s32 0, %v10582
        %v10584 = vrot.slane %v10579, %v10583
        %v10586 = vadd.f32 %v10547, %v10584
        %v10587 = vadd.f32 %v10548, %v10584
        %v10588 = vadd.f32 %v10549, %v10584
        %v10589 = vadd.f32 %v10550, %v10584
        %v10590 = vadd.f32 %v10551, %v10584
        %v10591 = vadd.f32 %v10552, %v10584
        %v10592 = vadd.f32 %v10553, %v10584
        %v10593 = vadd.f32 %v10554, %v10584
        %v10594 = vadd.f32 %v10555, %v10584
        %v10595 = vadd.f32 %v10556, %v10584
        %v10596 = vadd.f32 %v10557, %v10584
        %v10597 = vadd.f32 %v10558, %v10584
        %v10598 = vadd.f32 %v10559, %v10584
        %v10599 = vadd.f32 %v10560, %v10584
        %v10600 = vadd.f32 %v10561, %v10584
        %v10601 = vadd.f32 %v10562, %v10584
        %v10602 = vadd.f32 %v10563, %v10584
        %v10603 = vadd.f32 %v10564, %v10584
        %v10604 = vadd.f32 %v10565, %v10584
        %v10605 = vadd.f32 %v10566, %v10584
        %v10606 = vadd.f32 %v10567, %v10584
        %v10607 = vadd.f32 %v10568, %v10584
        %v10608 = vadd.f32 %v10569, %v10584
        %v10609 = vadd.f32 %v10570, %v10584
        %v10610 = vadd.f32 %v10571, %v10584
        %v10611 = vadd.f32 %v10572, %v10584
        %v10612 = vadd.f32 %v10573, %v10584
        %v10613 = vadd.f32 %v10574, %v10584
        %v10614 = vadd.f32 %v10575, %v10584
        %v10615 = vadd.f32 %v10576, %v10584
        %v10616 = vadd.f32 %v10577, %v10584
        %v10617 = vadd.f32 %v10578, %v10584
        %v10618 = vld [vmem:[%s1641 + $0x4] sm:$0xf]
        %v10619 = vld [vmem:[%s1641 + $0x8] sm:$0xf]
        %v10620 = vld [vmem:[%s1641 + $0x14] sm:$0xf]
        %v10621 = vld [vmem:[%s1641 + $0x18] sm:$0xf]
        %v10622 = vld [vmem:[%s1641 + $0x24] sm:$0xf]
        %v10623 = vld [vmem:[%s1641 + $0x28] sm:$0xf]
        %v10624 = vld [vmem:[%s1641 + $0x34] sm:$0xf]
        %v10625 = vld [vmem:[%s1641 + $0x38] sm:$0xf]
        %v10626 = vld [vmem:[%s1641 + $0x44] sm:$0xf]
        %v10627 = vld [vmem:[%s1641 + $0x48] sm:$0xf]
        %v10628 = vld [vmem:[%s1641 + $0x54] sm:$0xf]
        %v10629 = vld [vmem:[%s1641 + $0x58] sm:$0xf]
        %v10630 = vld [vmem:[%s1641 + $0x64] sm:$0xf]
        %v10631 = vld [vmem:[%s1641 + $0x68] sm:$0xf]
        %v10632 = vld [vmem:[%s1641 + $0x74] sm:$0xf]
        %v10633 = vld [vmem:[%s1641 + $0x78] sm:$0xf]
        %v10634 = vld [vmem:[%s1641 + $0x84] sm:$0xf]
        %v10635 = vld [vmem:[%s1641 + $0x88] sm:$0xf]
        %v10636 = vld [vmem:[%s1641 + $0x94] sm:$0xf]
        %v10637 = vld [vmem:[%s1641 + $0x98] sm:$0xf]
        %v10638 = vld [vmem:[%s1641 + $0xa4] sm:$0xf]
        %v10639 = vld [vmem:[%s1641 + $0xa8] sm:$0xf]
        %v10640 = vld [vmem:[%s1641 + $0xb4] sm:$0xf]
        %v10641 = vld [vmem:[%s1641 + $0xb8] sm:$0xf]
        %v10642 = vld [vmem:[%s1641 + $0xc4] sm:$0xf]
        %v10643 = vld [vmem:[%s1641 + $0xc8] sm:$0xf]
        %v10644 = vld [vmem:[%s1641 + $0xd4] sm:$0xf]
        %v10645 = vld [vmem:[%s1641 + $0xd8] sm:$0xf]
        %v10646 = vld [vmem:[%s1641 + $0xe4] sm:$0xf]
        %v10647 = vld [vmem:[%s1641 + $0xe8] sm:$0xf]
        %v10648 = vld [vmem:[%s1641 + $0xf4] sm:$0xf]
        %v10649 = vld [vmem:[%s1641 + $0xf8] sm:$0xf]
        %v10650 = vld [vmem:[#allocation9] sm:$0xf]
        %v10651 = vld [vmem:[#allocation9 + $0x4] sm:$0xf]
        %v10652 = vld [vmem:[#allocation9 + $0x8] sm:$0xf]
        %v10653 = vld [vmem:[#allocation9 + $0xc] sm:$0xf]
        %v10654 = vld [vmem:[#allocation9 + $0x10] sm:$0xf]
        %v10655 = vld [vmem:[#allocation9 + $0x14] sm:$0xf]
        %v10656 = vld [vmem:[#allocation9 + $0x18] sm:$0xf]
        %v10657 = vld [vmem:[#allocation9 + $0x1c] sm:$0xf]
        %v10658 = vld [vmem:[#allocation9 + $0x20] sm:$0xf]
        %v10659 = vld [vmem:[#allocation9 + $0x24] sm:$0xf]
        %v10660 = vld [vmem:[#allocation9 + $0x28] sm:$0xf]
        %v10661 = vld [vmem:[#allocation9 + $0x2c] sm:$0xf]
        %v10662 = vld [vmem:[#allocation9 + $0x30] sm:$0xf]
        %v10663 = vld [vmem:[#allocation9 + $0x34] sm:$0xf]
        %v10664 = vld [vmem:[#allocation9 + $0x38] sm:$0xf]
        %v10665 = vld [vmem:[#allocation9 + $0x3c] sm:$0xf]
        %v10698 = vunpack.c.l.b16 %v10618
        %v10699 = vunpack.c.l.b16 %v10619
        %v10700 = vunpack.c.l.b16 %v10620
        %v10701 = vunpack.c.l.b16 %v10621
        %v10702 = vunpack.c.l.b16 %v10622
        %v10703 = vunpack.c.l.b16 %v10623
        %v10704 = vunpack.c.l.b16 %v10624
        %v10705 = vunpack.c.l.b16 %v10625
        %v10706 = vunpack.c.l.b16 %v10626
        %v10707 = vunpack.c.l.b16 %v10627
        %v10708 = vunpack.c.l.b16 %v10628
        %v10709 = vunpack.c.l.b16 %v10629
        %v10710 = vunpack.c.l.b16 %v10630
        %v10711 = vunpack.c.l.b16 %v10631
        %v10712 = vunpack.c.l.b16 %v10632
        %v10713 = vunpack.c.l.b16 %v10633
        %v10714 = vunpack.c.l.b16 %v10634
        %v10715 = vunpack.c.l.b16 %v10635
        %v10716 = vunpack.c.l.b16 %v10636
        %v10717 = vunpack.c.l.b16 %v10637
        %v10718 = vunpack.c.l.b16 %v10638
        %v10719 = vunpack.c.l.b16 %v10639
        %v10720 = vunpack.c.l.b16 %v10640
        %v10721 = vunpack.c.l.b16 %v10641
        %v10722 = vunpack.c.l.b16 %v10642
        %v10723 = vunpack.c.l.b16 %v10643
        %v10724 = vunpack.c.l.b16 %v10644
        %v10725 = vunpack.c.l.b16 %v10645
        %v10726 = vunpack.c.l.b16 %v10646
        %v10727 = vunpack.c.l.b16 %v10647
        %v10728 = vunpack.c.l.b16 %v10648
        %v10729 = vunpack.c.l.b16 %v10649
        %v10730 = vpack.c.b16 %v10699, %v10698
        %v10731 = vpack.c.b16 %v10701, %v10700
        %v10732 = vpack.c.b16 %v10703, %v10702
        %v10733 = vpack.c.b16 %v10705, %v10704
        %v10734 = vpack.c.b16 %v10707, %v10706
        %v10735 = vpack.c.b16 %v10709, %v10708
        %v10736 = vpack.c.b16 %v10711, %v10710
        %v10737 = vpack.c.b16 %v10713, %v10712
        %v10738 = vpack.c.b16 %v10715, %v10714
        %v10739 = vpack.c.b16 %v10717, %v10716
        %v10740 = vpack.c.b16 %v10719, %v10718
        %v10741 = vpack.c.b16 %v10721, %v10720
        %v10742 = vpack.c.b16 %v10723, %v10722
        %v10743 = vpack.c.b16 %v10725, %v10724
        %v10744 = vpack.c.b16 %v10727, %v10726
        %v10745 = vpack.c.b16 %v10729, %v10728
        %v10778 = vunpack.c.l.b16 %v10650
        %v10779 = vunpack.c.l.b16 %v10651
        %v10780 = vunpack.c.l.b16 %v10652
        %v10781 = vunpack.c.l.b16 %v10653
        %v10782 = vunpack.c.l.b16 %v10654
        %v10783 = vunpack.c.l.b16 %v10655
        %v10784 = vunpack.c.l.b16 %v10656
        %v10785 = vunpack.c.l.b16 %v10657
        %v10786 = vunpack.c.l.b16 %v10658
        %v10787 = vunpack.c.l.b16 %v10659
        %v10788 = vunpack.c.l.b16 %v10660
        %v10789 = vunpack.c.l.b16 %v10661
        %v10790 = vunpack.c.l.b16 %v10662
        %v10791 = vunpack.c.l.b16 %v10663
        %v10792 = vunpack.c.l.b16 %v10664
        %v10793 = vunpack.c.l.b16 %v10665
        %v10794 = vpack.c.b16 %v10779, %v10778
        %v10795 = vpack.c.b16 %v10781, %v10780
        %v10796 = vpack.c.b16 %v10783, %v10782
        %v10797 = vpack.c.b16 %v10785, %v10784
        %v10798 = vpack.c.b16 %v10787, %v10786
        %v10799 = vpack.c.b16 %v10789, %v10788
        %v10800 = vpack.c.b16 %v10791, %v10790
        %v10801 = vpack.c.b16 %v10793, %v10792
        %10810 = vmatprep.subr.bf16.mxu0 0
        %10811 = vmatpush1.bf16.msra.mxu0 %v10794
        %10812 = vmatprep.subr.bf16.mxu0 0
        %10813 = vmatpush1.bf16.msra.mxu0 %v10795
        %10814 = vmatprep.subr.bf16.mxu0 0
        %10815 = vmatpush1.bf16.msra.mxu0 %v10796
        %10816 = vmatprep.subr.bf16.mxu0 0
        %10817 = vmatpush1.bf16.msra.mxu0 %v10797
        %10818 = vmatprep.subr.bf16.mxu0 0
        %10819 = vmatpush1.bf16.msra.mxu0 %v10798
        %10820 = vmatprep.subr.bf16.mxu0 0
        %10821 = vmatpush1.bf16.msra.mxu0 %v10799
        %10822 = vmatprep.subr.bf16.mxu0 0
        %10823 = vmatpush1.bf16.msra.mxu0 %v10800
        %10824 = vmatprep.subr.bf16.mxu0 0
        %10825 = vmatpush1.bf16.msra.mxu0 %v10801
        %10826 = vmatprep.subr.bf16.mxu0 0
        %10827 = vmatpush1.bf16.msra.mxu0 0
        %10828 = vmatprep.subr.bf16.mxu0 0
        %10829 = vmatpush1.bf16.msra.mxu0 0
        %10830 = vmatprep.subr.bf16.mxu0 0
        %10831 = vmatpush1.bf16.msra.mxu0 0
        %10832 = vmatprep.subr.bf16.mxu0 0
        %10833 = vmatpush1.bf16.msra.mxu0 0
        %10834 = vmatprep.subr.bf16.mxu0 0
        %10835 = vmatpush1.bf16.msra.mxu0 0
        %10836 = vmatprep.subr.bf16.mxu0 0
        %10837 = vmatpush1.bf16.msra.mxu0 0
        %10838 = vmatprep.subr.bf16.mxu0 0
        %10839 = vmatpush1.bf16.msra.mxu0 0
        %10840 = vmatprep.subr.bf16.mxu0 0
        %10841 = vmatpush1.bf16.msra.mxu0 0
        %10842 = vmatprep.mubr.bf16.mxu0 0
        %10843 = vmatmul.mubr.bf16.gmra.mrb[0].mxu0 %v10730
        %v10844 = vpop.f32.mrb[0].mxu0
        %v10845 = vadd.f32 0.0, %v10844
        %v10846 = vpop.f32.mrb[0].mxu0
        %v10847 = vpop.f32.mrb[0].mxu0
        %v10848 = vadd.f32 0.0, %v10847
        %v10849 = vpop.f32.mrb[0].mxu0
        %10850 = vmatprep.mubr.bf16.mxu0 0
        %10851 = vmatmul.mubr.bf16.gmra.mrb[0].mxu0 %v10731
        %v10852 = vpop.f32.mrb[0].mxu0
        %v10853 = vadd.f32 0.0, %v10852
        %v10854 = vpop.f32.mrb[0].mxu0
        %v10855 = vpop.f32.mrb[0].mxu0
        %v10856 = vadd.f32 0.0, %v10855
        %v10857 = vpop.f32.mrb[0].mxu0
        %10858 = vmatprep.mubr.bf16.mxu0 0
        %10859 = vmatmul.mubr.bf16.gmra.mrb[0].mxu0 %v10732
        %v10860 = vpop.f32.mrb[0].mxu0
        %v10861 = vadd.f32 0.0, %v10860
        %v10862 = vpop.f32.mrb[0].mxu0
        %v10863 = vpop.f32.mrb[0].mxu0
        %v10864 = vadd.f32 0.0, %v10863
        %v10865 = vpop.f32.mrb[0].mxu0
        %10866 = vmatprep.mubr.bf16.mxu0 0
        %10867 = vmatmul.mubr.bf16.gmra.mrb[0].mxu0 %v10733
        %v10868 = vpop.f32.mrb[0].mxu0
        %v10869 = vadd.f32 0.0, %v10868
        %v10870 = vpop.f32.mrb[0].mxu0
        %v10871 = vpop.f32.mrb[0].mxu0
        %v10872 = vadd.f32 0.0, %v10871
        %v10873 = vpop.f32.mrb[0].mxu0
        %10874 = vmatprep.mubr.bf16.mxu0 0
        %10875 = vmatmul.mubr.bf16.gmra.mrb[0].mxu0 %v10734
        %v10876 = vpop.f32.mrb[0].mxu0
        %v10877 = vadd.f32 0.0, %v10876
        %v10878 = vpop.f32.mrb[0].mxu0
        %v10879 = vpop.f32.mrb[0].mxu0
        %v10880 = vadd.f32 0.0, %v10879
        %v10881 = vpop.f32.mrb[0].mxu0
        %10882 = vmatprep.mubr.bf16.mxu0 0
        %10883 = vmatmul.mubr.bf16.gmra.mrb[0].mxu0 %v10735
        %v10884 = vpop.f32.mrb[0].mxu0
        %v10885 = vadd.f32 0.0, %v10884
        %v10886 = vpop.f32.mrb[0].mxu0
        %v10887 = vpop.f32.mrb[0].mxu0
        %v10888 = vadd.f32 0.0, %v10887
        %v10889 = vpop.f32.mrb[0].mxu0
        %10890 = vmatprep.mubr.bf16.mxu0 0
        %10891 = vmatmul.mubr.bf16.gmra.mrb[0].mxu0 %v10736
        %v10892 = vpop.f32.mrb[0].mxu0
        %v10893 = vadd.f32 0.0, %v10892
        %v10894 = vpop.f32.mrb[0].mxu0
        %v10895 = vpop.f32.mrb[0].mxu0
        %v10896 = vadd.f32 0.0, %v10895
        %v10897 = vpop.f32.mrb[0].mxu0
        %10898 = vmatprep.mubr.bf16.mxu0 0
        %10899 = vmatmul.mubr.bf16.gmra.mrb[0].mxu0 %v10737
        %v10900 = vpop.f32.mrb[0].mxu0
        %v10901 = vadd.f32 0.0, %v10900
        %v10902 = vpop.f32.mrb[0].mxu0
        %v10903 = vpop.f32.mrb[0].mxu0
        %v10904 = vadd.f32 0.0, %v10903
        %v10905 = vpop.f32.mrb[0].mxu0
        %10906 = vmatprep.mubr.bf16.mxu0 0
        %10907 = vmatmul.mubr.bf16.gmra.mrb[0].mxu0 %v10738
        %v10908 = vpop.f32.mrb[0].mxu0
        %v10909 = vadd.f32 0.0, %v10908
        %v10910 = vpop.f32.mrb[0].mxu0
        %v10911 = vpop.f32.mrb[0].mxu0
        %v10912 = vadd.f32 0.0, %v10911
        %v10913 = vpop.f32.mrb[0].mxu0
        %10914 = vmatprep.mubr.bf16.mxu0 0
        %10915 = vmatmul.mubr.bf16.gmra.mrb[0].mxu0 %v10739
        %v10916 = vpop.f32.mrb[0].mxu0
        %v10917 = vadd.f32 0.0, %v10916
        %v10918 = vpop.f32.mrb[0].mxu0
        %v10919 = vpop.f32.mrb[0].mxu0
        %v10920 = vadd.f32 0.0, %v10919
        %v10921 = vpop.f32.mrb[0].mxu0
        %10922 = vmatprep.mubr.bf16.mxu0 0
        %10923 = vmatmul.mubr.bf16.gmra.mrb[0].mxu0 %v10740
        %v10924 = vpop.f32.mrb[0].mxu0
        %v10925 = vadd.f32 0.0, %v10924
        %v10926 = vpop.f32.mrb[0].mxu0
        %v10927 = vpop.f32.mrb[0].mxu0
        %v10928 = vadd.f32 0.0, %v10927
        %v10929 = vpop.f32.mrb[0].mxu0
        %10930 = vmatprep.mubr.bf16.mxu0 0
        %10931 = vmatmul.mubr.bf16.gmra.mrb[0].mxu0 %v10741
        %v10932 = vpop.f32.mrb[0].mxu0
        %v10933 = vadd.f32 0.0, %v10932
        %v10934 = vpop.f32.mrb[0].mxu0
        %v10935 = vpop.f32.mrb[0].mxu0
        %v10936 = vadd.f32 0.0, %v10935
        %v10937 = vpop.f32.mrb[0].mxu0
        %10938 = vmatprep.mubr.bf16.mxu0 0
        %10939 = vmatmul.mubr.bf16.gmra.mrb[0].mxu0 %v10742
        %v10940 = vpop.f32.mrb[0].mxu0
        %v10941 = vadd.f32 0.0, %v10940
        %v10942 = vpop.f32.mrb[0].mxu0
        %v10943 = vpop.f32.mrb[0].mxu0
        %v10944 = vadd.f32 0.0, %v10943
        %v10945 = vpop.f32.mrb[0].mxu0
        %10946 = vmatprep.mubr.bf16.mxu0 0
        %10947 = vmatmul.mubr.bf16.gmra.mrb[0].mxu0 %v10743
        %v10948 = vpop.f32.mrb[0].mxu0
        %v10949 = vadd.f32 0.0, %v10948
        %v10950 = vpop.f32.mrb[0].mxu0
        %v10951 = vpop.f32.mrb[0].mxu0
        %v10952 = vadd.f32 0.0, %v10951
        %v10953 = vpop.f32.mrb[0].mxu0
        %10954 = vmatprep.mubr.bf16.mxu0 0
        %10955 = vmatmul.mubr.bf16.gmra.mrb[0].mxu0 %v10744
        %v10956 = vpop.f32.mrb[0].mxu0
        %v10957 = vadd.f32 0.0, %v10956
        %v10958 = vpop.f32.mrb[0].mxu0
        %v10959 = vpop.f32.mrb[0].mxu0
        %v10960 = vadd.f32 0.0, %v10959
        %v10961 = vpop.f32.mrb[0].mxu0
        %10962 = vmatprep.mubr.bf16.mxu0 0
        %10963 = vmatmul.mubr.bf16.gmra.mrb[0].mxu0 %v10745
        %v10964 = vpop.f32.mrb[0].mxu0
        %v10965 = vadd.f32 0.0, %v10964
        %v10966 = vpop.f32.mrb[0].mxu0
        %v10967 = vpop.f32.mrb[0].mxu0
        %v10968 = vadd.f32 0.0, %v10967
        %v10969 = vpop.f32.mrb[0].mxu0
        %10970 = vdwg.mxu0
        %v10971 = vld [vmem:[%s8] sm:$0x1]
        %v10973 = vlaneseq
        %v10974 = vshrl.u32 %v10973, 7
        %v10975 = vsub.s32 0, %v10974
        %v10976 = vrot.slane %v10971, %v10975
        %v10978 = vmul.f32 %v10845, %v10976
        %v10979 = vmul.f32 %v10848, %v10976
        %v10980 = vmul.f32 %v10853, %v10976
        %v10981 = vmul.f32 %v10856, %v10976
        %v10982 = vmul.f32 %v10861, %v10976
        %v10983 = vmul.f32 %v10864, %v10976
        %v10984 = vmul.f32 %v10869, %v10976
        %v10985 = vmul.f32 %v10872, %v10976
        %v10986 = vmul.f32 %v10877, %v10976
        %v10987 = vmul.f32 %v10880, %v10976
        %v10988 = vmul.f32 %v10885, %v10976
        %v10989 = vmul.f32 %v10888, %v10976
        %v10990 = vmul.f32 %v10893, %v10976
        %v10991 = vmul.f32 %v10896, %v10976
        %v10992 = vmul.f32 %v10901, %v10976
        %v10993 = vmul.f32 %v10904, %v10976
        %v10994 = vmul.f32 %v10909, %v10976
        %v10995 = vmul.f32 %v10912, %v10976
        %v10996 = vmul.f32 %v10917, %v10976
        %v10997 = vmul.f32 %v10920, %v10976
        %v10998 = vmul.f32 %v10925, %v10976
        %v10999 = vmul.f32 %v10928, %v10976
        %v11000 = vmul.f32 %v10933, %v10976
        %v11001 = vmul.f32 %v10936, %v10976
        %v11002 = vmul.f32 %v10941, %v10976
        %v11003 = vmul.f32 %v10944, %v10976
        %v11004 = vmul.f32 %v10949, %v10976
        %v11005 = vmul.f32 %v10952, %v10976
        %v11006 = vmul.f32 %v10957, %v10976
        %v11007 = vmul.f32 %v10960, %v10976
        %v11008 = vmul.f32 %v10965, %v10976
        %v11009 = vmul.f32 %v10968, %v10976
        %v11010 = vld [vmem:[%s9] sm:$0x1]
        %v11012 = vlaneseq
        %v11013 = vshrl.u32 %v11012, 7
        %v11014 = vsub.s32 0, %v11013
        %v11015 = vrot.slane %v11010, %v11014
        %v11017 = vadd.f32 %v10978, %v11015
        %v11018 = vadd.f32 %v10979, %v11015
        %v11019 = vadd.f32 %v10980, %v11015
        %v11020 = vadd.f32 %v10981, %v11015
        %v11021 = vadd.f32 %v10982, %v11015
        %v11022 = vadd.f32 %v10983, %v11015
        %v11023 = vadd.f32 %v10984, %v11015
        %v11024 = vadd.f32 %v10985, %v11015
        %v11025 = vadd.f32 %v10986, %v11015
        %v11026 = vadd.f32 %v10987, %v11015
        %v11027 = vadd.f32 %v10988, %v11015
        %v11028 = vadd.f32 %v10989, %v11015
        %v11029 = vadd.f32 %v10990, %v11015
        %v11030 = vadd.f32 %v10991, %v11015
        %v11031 = vadd.f32 %v10992, %v11015
        %v11032 = vadd.f32 %v10993, %v11015
        %v11033 = vadd.f32 %v10994, %v11015
        %v11034 = vadd.f32 %v10995, %v11015
        %v11035 = vadd.f32 %v10996, %v11015
        %v11036 = vadd.f32 %v10997, %v11015
        %v11037 = vadd.f32 %v10998, %v11015
        %v11038 = vadd.f32 %v10999, %v11015
        %v11039 = vadd.f32 %v11000, %v11015
        %v11040 = vadd.f32 %v11001, %v11015
        %v11041 = vadd.f32 %v11002, %v11015
        %v11042 = vadd.f32 %v11003, %v11015
        %v11043 = vadd.f32 %v11004, %v11015
        %v11044 = vadd.f32 %v11005, %v11015
        %v11045 = vadd.f32 %v11006, %v11015
        %v11046 = vadd.f32 %v11007, %v11015
        %v11047 = vadd.f32 %v11008, %v11015
        %v11048 = vadd.f32 %v11009, %v11015
        %v11049 = vadd.f32 %v10586, %v11017
        %v11050 = vadd.f32 %v10587, %v11018
        %v11051 = vadd.f32 %v10588, %v11019
        %v11052 = vadd.f32 %v10589, %v11020
        %v11053 = vadd.f32 %v10590, %v11021
        %v11054 = vadd.f32 %v10591, %v11022
        %v11055 = vadd.f32 %v10592, %v11023
        %v11056 = vadd.f32 %v10593, %v11024
        %v11057 = vadd.f32 %v10594, %v11025
        %v11058 = vadd.f32 %v10595, %v11026
        %v11059 = vadd.f32 %v10596, %v11027
        %v11060 = vadd.f32 %v10597, %v11028
        %v11061 = vadd.f32 %v10598, %v11029
        %v11062 = vadd.f32 %v10599, %v11030
        %v11063 = vadd.f32 %v10600, %v11031
        %v11064 = vadd.f32 %v10601, %v11032
        %v11065 = vadd.f32 %v10602, %v11033
        %v11066 = vadd.f32 %v10603, %v11034
        %v11067 = vadd.f32 %v10604, %v11035
        %v11068 = vadd.f32 %v10605, %v11036
        %v11069 = vadd.f32 %v10606, %v11037
        %v11070 = vadd.f32 %v10607, %v11038
        %v11071 = vadd.f32 %v10608, %v11039
        %v11072 = vadd.f32 %v10609, %v11040
        %v11073 = vadd.f32 %v10610, %v11041
        %v11074 = vadd.f32 %v10611, %v11042
        %v11075 = vadd.f32 %v10612, %v11043
        %v11076 = vadd.f32 %v10613, %v11044
        %v11077 = vadd.f32 %v10614, %v11045
        %v11078 = vadd.f32 %v10615, %v11046
        %v11079 = vadd.f32 %v10616, %v11047
        %v11080 = vadd.f32 %v10617, %v11048
        %v11081 = vmax.f32 %v11049, 0.0
        %v11082 = vmax.f32 %v11050, 0.0
        %v11083 = vmax.f32 %v11051, 0.0
        %v11084 = vmax.f32 %v11052, 0.0
        %v11085 = vmax.f32 %v11053, 0.0
        %v11086 = vmax.f32 %v11054, 0.0
        %v11087 = vmax.f32 %v11055, 0.0
        %v11088 = vmax.f32 %v11056, 0.0
        %v11089 = vmax.f32 %v11057, 0.0
        %v11090 = vmax.f32 %v11058, 0.0
        %v11091 = vmax.f32 %v11059, 0.0
        %v11092 = vmax.f32 %v11060, 0.0
        %v11093 = vmax.f32 %v11061, 0.0
        %v11094 = vmax.f32 %v11062, 0.0
        %v11095 = vmax.f32 %v11063, 0.0
        %v11096 = vmax.f32 %v11064, 0.0
        %v11097 = vmax.f32 %v11065, 0.0
        %v11098 = vmax.f32 %v11066, 0.0
        %v11099 = vmax.f32 %v11067, 0.0
        %v11100 = vmax.f32 %v11068, 0.0
        %v11101 = vmax.f32 %v11069, 0.0
        %v11102 = vmax.f32 %v11070, 0.0
        %v11103 = vmax.f32 %v11071, 0.0
        %v11104 = vmax.f32 %v11072, 0.0
        %v11105 = vmax.f32 %v11073, 0.0
        %v11106 = vmax.f32 %v11074, 0.0
        %v11107 = vmax.f32 %v11075, 0.0
        %v11108 = vmax.f32 %v11076, 0.0
        %v11109 = vmax.f32 %v11077, 0.0
        %v11110 = vmax.f32 %v11078, 0.0
        %v11111 = vmax.f32 %v11079, 0.0
        %v11112 = vmax.f32 %v11080, 0.0
        %v11113 = vpack.c.bf16 %v11082, %v11081
        %v11114 = vpack.c.bf16 %v11084, %v11083
        %v11115 = vpack.c.bf16 %v11086, %v11085
        %v11116 = vpack.c.bf16 %v11088, %v11087
        %v11117 = vpack.c.bf16 %v11090, %v11089
        %v11118 = vpack.c.bf16 %v11092, %v11091
        %v11119 = vpack.c.bf16 %v11094, %v11093
        %v11120 = vpack.c.bf16 %v11096, %v11095
        %v11121 = vpack.c.bf16 %v11098, %v11097
        %v11122 = vpack.c.bf16 %v11100, %v11099
        %v11123 = vpack.c.bf16 %v11102, %v11101
        %v11124 = vpack.c.bf16 %v11104, %v11103
        %v11125 = vpack.c.bf16 %v11106, %v11105
        %v11126 = vpack.c.bf16 %v11108, %v11107
        %v11127 = vpack.c.bf16 %v11110, %v11109
        %v11128 = vpack.c.bf16 %v11112, %v11111
        %v11145 = vunpack.c.l.b16 %v11113
        %v11146 = vunpack.c.h.b16 %v11113
        %v11147 = vunpack.c.l.b16 %v11114
        %v11148 = vunpack.c.h.b16 %v11114
        %v11149 = vunpack.c.l.b16 %v11115
        %v11150 = vunpack.c.h.b16 %v11115
        %v11151 = vunpack.c.l.b16 %v11116
        %v11152 = vunpack.c.h.b16 %v11116
        %v11153 = vunpack.c.l.b16 %v11117
        %v11154 = vunpack.c.h.b16 %v11117
        %v11155 = vunpack.c.l.b16 %v11118
        %v11156 = vunpack.c.h.b16 %v11118
        %v11157 = vunpack.c.l.b16 %v11119
        %v11158 = vunpack.c.h.b16 %v11119
        %v11159 = vunpack.c.l.b16 %v11120
        %v11160 = vunpack.c.h.b16 %v11120
        %v11161 = vunpack.c.l.b16 %v11121
        %v11162 = vunpack.c.h.b16 %v11121
        %v11163 = vunpack.c.l.b16 %v11122
        %v11164 = vunpack.c.h.b16 %v11122
        %v11165 = vunpack.c.l.b16 %v11123
        %v11166 = vunpack.c.h.b16 %v11123
        %v11167 = vunpack.c.l.b16 %v11124
        %v11168 = vunpack.c.h.b16 %v11124
        %v11169 = vunpack.c.l.b16 %v11125
        %v11170 = vunpack.c.h.b16 %v11125
        %v11171 = vunpack.c.l.b16 %v11126
        %v11172 = vunpack.c.h.b16 %v11126
        %v11173 = vunpack.c.l.b16 %v11127
        %v11174 = vunpack.c.h.b16 %v11127
        %v11175 = vunpack.c.l.b16 %v11128
        %v11176 = vunpack.c.h.b16 %v11128
        %v11177 = vpack.c.b16 %v11145, %v11145
        %v11178 = vpack.c.b16 %v11146, %v11146
        %v11179 = vpack.c.b16 %v11147, %v11147
        %v11180 = vpack.c.b16 %v11148, %v11148
        %v11181 = vpack.c.b16 %v11149, %v11149
        %v11182 = vpack.c.b16 %v11150, %v11150
        %v11183 = vpack.c.b16 %v11151, %v11151
        %v11184 = vpack.c.b16 %v11152, %v11152
        %v11185 = vpack.c.b16 %v11153, %v11153
        %v11186 = vpack.c.b16 %v11154, %v11154
        %v11187 = vpack.c.b16 %v11155, %v11155
        %v11188 = vpack.c.b16 %v11156, %v11156
        %v11189 = vpack.c.b16 %v11157, %v11157
        %v11190 = vpack.c.b16 %v11158, %v11158
        %v11191 = vpack.c.b16 %v11159, %v11159
        %v11192 = vpack.c.b16 %v11160, %v11160
        %v11193 = vpack.c.b16 %v11161, %v11161
        %v11194 = vpack.c.b16 %v11162, %v11162
        %v11195 = vpack.c.b16 %v11163, %v11163
        %v11196 = vpack.c.b16 %v11164, %v11164
        %v11197 = vpack.c.b16 %v11165, %v11165
        %v11198 = vpack.c.b16 %v11166, %v11166
        %v11199 = vpack.c.b16 %v11167, %v11167
        %v11200 = vpack.c.b16 %v11168, %v11168
        %v11201 = vpack.c.b16 %v11169, %v11169
        %v11202 = vpack.c.b16 %v11170, %v11170
        %v11203 = vpack.c.b16 %v11171, %v11171
        %v11204 = vpack.c.b16 %v11172, %v11172
        %v11205 = vpack.c.b16 %v11173, %v11173
        %v11206 = vpack.c.b16 %v11174, %v11174
        %v11207 = vpack.c.b16 %v11175, %v11175
        %v11208 = vpack.c.b16 %v11176, %v11176
        %11241 = vst [vmem:[%s421] sm:$0xf] %v11177
        %11242 = vst [vmem:[%s421 + $0x4] sm:$0xf] %v11178
        %11243 = vst [vmem:[%s421 + $0x8] sm:$0xf] %v11179
        %11244 = vst [vmem:[%s421 + $0xc] sm:$0xf] %v11180
        %11245 = vst [vmem:[%s421 + $0x10] sm:$0xf] %v11181
        %11246 = vst [vmem:[%s421 + $0x14] sm:$0xf] %v11182
        %11247 = vst [vmem:[%s421 + $0x18] sm:$0xf] %v11183
        %11248 = vst [vmem:[%s421 + $0x1c] sm:$0xf] %v11184
        %11249 = vst [vmem:[%s421 + $0x20] sm:$0xf] %v11185
        %11250 = vst [vmem:[%s421 + $0x24] sm:$0xf] %v11186
        %11251 = vst [vmem:[%s421 + $0x28] sm:$0xf] %v11187
        %11252 = vst [vmem:[%s421 + $0x2c] sm:$0xf] %v11188
        %11253 = vst [vmem:[%s421 + $0x30] sm:$0xf] %v11189
        %11254 = vst [vmem:[%s421 + $0x34] sm:$0xf] %v11190
        %11255 = vst [vmem:[%s421 + $0x38] sm:$0xf] %v11191
        %11256 = vst [vmem:[%s421 + $0x3c] sm:$0xf] %v11192
        %11257 = vst [vmem:[%s421 + $0x40] sm:$0xf] %v11193
        %11258 = vst [vmem:[%s421 + $0x44] sm:$0xf] %v11194
        %11259 = vst [vmem:[%s421 + $0x48] sm:$0xf] %v11195
        %11260 = vst [vmem:[%s421 + $0x4c] sm:$0xf] %v11196
        %11261 = vst [vmem:[%s421 + $0x50] sm:$0xf] %v11197
        %11262 = vst [vmem:[%s421 + $0x54] sm:$0xf] %v11198
        %11263 = vst [vmem:[%s421 + $0x58] sm:$0xf] %v11199
        %11264 = vst [vmem:[%s421 + $0x5c] sm:$0xf] %v11200
        %11265 = vst [vmem:[%s421 + $0x60] sm:$0xf] %v11201
        %11266 = vst [vmem:[%s421 + $0x64] sm:$0xf] %v11202
        %11267 = vst [vmem:[%s421 + $0x68] sm:$0xf] %v11203
        %11268 = vst [vmem:[%s421 + $0x6c] sm:$0xf] %v11204
        %11269 = vst [vmem:[%s421 + $0x70] sm:$0xf] %v11205
        %11270 = vst [vmem:[%s421 + $0x74] sm:$0xf] %v11206
        %11271 = vst [vmem:[%s421 + $0x78] sm:$0xf] %v11207
        %11272 = vst [vmem:[%s421 + $0x7c] sm:$0xf] %v11208
        %s11273 = sand.u32 %s252, 1
        %s11274 = scalar_lea.sflag [#allocation5], %s11273
        %s11275 = sand.u32 %s252, 1
        %s11276 = smul.addr %s11275, 128
        %s11277 = scalar_lea.vmem [#allocation11], %s11276
        // Predicated region
        $region77: #{tpu_custom_call.1} parent=59 // pred_check
          %p11278 = pneg %p262
        $region78: #{tpu_custom_call.1} parent=59 // pred_check_branch
          %11280 = sbr.rel (%p11278) target = $region80
        $region79: #{tpu_custom_call.1} parent=59 // pred_region
          %s11282 = ssub.s32 2048, 2048
          %11283 = vsyncadd %s11274, %s11282
          %s11284 = smul.addr %s29, 32
          %s11285 = smul.addr %s11284, 64
          %s11286 = scalar_lea.hbm %s10, %s11285
          %s11287 = sshll.u32 %s11277, 4
          %s11288 = int_to_ptr.vmem [resolvable:$true] %s11287
          %11293 = dma.vmem_to_hbm [thread:$0]  %s11288, 2048, %s11286, %s11274, 64, 64, 4
        $region80: #{tpu_custom_call.1} parent=59 // pred_fallthru
          _
      $region60: #{tpu_custom_call.1} parent=5 // pred_fallthru
        _
      %p11294 = scmp.le.s32.totalorder 2, %s24
      // Predicated region
      $region81: #{tpu_custom_call.1} parent=5 // pred_check
        %p11295 = pneg %p11294
      $region82: #{tpu_custom_call.1} parent=5 // pred_check_branch
        %11297 = sbr.rel (%p11295) target = $region84
      $region83: #{tpu_custom_call.1} parent=5 // pred_region
        %s11298 = ssub.s32 %s24, 2
        // Predicated region
        $region85: #{tpu_custom_call.1} parent=83 // pred_check
          %p11299 = pneg %p268
        $region86: #{tpu_custom_call.1} parent=83 // pred_check_branch
          %11301 = sbr.rel (%p11299) target = $region88
        $region87: #{tpu_custom_call.1} parent=83 // pred_region
          %s11302 = sand.u32 %s253, 1
          %s11303 = scalar_lea.sflag [#allocation5], %s11302
          %s11304 = sand.u32 %s253, 1
          %s11305 = smul.addr %s11304, 128
          %s11306 = scalar_lea.vmem [#allocation11], %s11305
          %11307 = dma.done %s11303, 2048
        $region88: #{tpu_custom_call.1} parent=83 // pred_fallthru
          _
      $region84: #{tpu_custom_call.1} parent=5 // pred_fallthru
        _
    $region6: #{tpu_custom_call.1} parent=1 // loop_footer
      %s28 = sadd.s32 1, %s24
    $region7: #{tpu_custom_call.1} parent=1 // loop_footer_branch
      %23 = sbr.rel target = $region3
    $region8: #{tpu_custom_call.1} parent=1 // loop_exit
      _
    %11308 = vsyncpa [#allocation4], 1
    %s11309 = scalar_lea.sflag [#allocation4], 1
    %11310 = vsyncpa %s11309, 1
    %11311 = vsyncpa [#allocation7], 1
    %11312 = vsyncpa [#allocation10], 1
    %11313 = vsyncpa [#allocation5], 1
    %s11314 = scalar_lea.sflag [#allocation5], 1
    %11315 = vsyncpa %s11314, 1

</llo_original>
